<compile_context>
chip_gen: v6e
topology: v6e:2x2x1
jax: 0.10.0
libtpu: 0.0.40
codegen_flags: <defaults>
</compile_context>

<pallas_src>
import functools

import jax
import jax.numpy as jnp
from jax import lax
from jax.experimental import pallas as pl
from jax.experimental.pallas import tpu as pltpu

K = 11                  # conv kernel size
PAD = K // 2            # conv padding (5)
KP = 16                 # layer-1 patch width (11 taps zero-padded to 16 lanes)
CP = 128                # all layer channels padded to 128 lanes
NTAP = 6                # tap groups after pair packing (ceil(11/2))
GAP = 8                 # zero rows around each sample segment (8-row aligned)
BN_EPS = 1e-5
CHANS = [(1, 16), (16, 32), (32, 32), (32, 64), (64, 64), (64, 128), (128, 128)]

_VMEM = pl.BlockSpec(memory_space=pltpu.MemorySpace.VMEM)


def _round8(x):
    return (x + 7) // 8 * 8


def _buffer_layout(B, L1):
    """Row layout of the pair-packed bf16 activation scratch (2*CP lanes wide).

    One region per conv-layer output (layers 1..6).  Each sample gets n pair-rows,
    surrounded by >= GAP zero rows (the zeros double as the conv 'same' padding).
    All segment starts / strides are multiples of 8 -> aligned main stores.
    """
    n_list = []
    n = L1 // 2                     # pair rows of layer-1 output
    for _ in range(6):
        n_list.append(n)
        n //= 2
    starts = []
    pos = GAP
    for n in n_list:
        stride = _round8(n + GAP)
        starts.append(tuple(pos + b * stride for b in range(B)))
        pos += B * stride
    return tuple(n_list), tuple(starts), _round8(pos)


# ----------------------------------------------------------------------------
# Fused kernel
# ----------------------------------------------------------------------------
def fused_discriminator_kernel(p1_ref, w1_ref, wst_ref, se_ref, so_ref,
                               g_ref, bt_ref, a_ref, fcw_ref, fcb_ref,
                               out_ref, buf,
                               *, B, n_list, starts, tot_rows):
    """Whole timeDiscriminator forward, single block, activations kept in VMEM.

    p1_ref : (B*L1, KP)          f32  layer-1 im2col patches (Cin == 1), batch folded
    w1_ref : (KP, CP)            bf16 layer-1 weight (taps padded 11->16, cout padded)
    wst_ref: (6, NTAP, 2*CP, CP) bf16 layers 2..7 tap-group weights (pair-packed cin)
    se_ref / so_ref: (Mmax/2, Mmax) bf16 exact 0/1 even/odd row-selection matrices
    g_ref / bt_ref / a_ref: (7, CP) f32 BN gamma / BN beta / PReLU alpha (zero padded)
    fcw_ref: (L7, CP)            f32  FC weight rearranged to channels-last order
    fcb_ref: (1, 1)              f32  FC bias
    out_ref: (B, 1)              f32
    buf    : (tot_rows, 2*CP)    bf16 pair-packed activation scratch
    """
    f32, bf16 = jnp.float32, jnp.bfloat16

    # Zero the scratch once: gap rows double as the conv zero padding.
    buf[...] = jnp.zeros((tot_rows, 2 * CP), bf16)

    def bn_prelu(y, layer_idx):
        # Training-mode BatchNorm1d (batch stats, biased var) + per-channel PReLU, f32.
        inv_n = 1.0 / float(y.shape[0])            # elements per channel = B * L_out
        s1 = jnp.sum(y, axis=0, keepdims=True)
        s2 = jnp.sum(y * y, axis=0, keepdims=True)
        mu = s1 * inv_n
        var = jnp.maximum(s2 * inv_n - mu * mu, 0.0)
        gamma = g_ref[layer_idx:layer_idx + 1, :]
        beta = bt_ref[layer_idx:layer_idx + 1, :]
        alpha = a_ref[layer_idx:layer_idx + 1, :]
        scale = gamma * lax.rsqrt(var + BN_EPS)
        shift = beta - mu * scale
        z = y * scale + shift
        return jnp.where(z > 0, z, alpha * z)

    def pack_and_store(z, region):
        # z: (B*L_out, CP) f32 -> pair-packed bf16 rows [z[2j] || z[2j+1]] per sample.
        m = z.shape[0]
        half = m // 2
        zb = z.astype(bf16)                         # single activation cast per layer
        # Exact even/odd row selection done on the MXU (no strided slices needed).
        ev = jnp.dot(se_ref[:half, :m], zb, preferred_element_type=f32).astype(bf16)
        od = jnp.dot(so_ref[:half, :m], zb, preferred_element_type=f32).astype(bf16)
        n_out = half // B
        for b in range(B):
            row0 = starts[region][b]                # multiple of 8 (aligned store)
            buf[pl.ds(row0, n_out), :] = jnp.concatenate(
                [ev[b * n_out:(b + 1) * n_out, :],
                 od[b * n_out:(b + 1) * n_out, :]], axis=1)

    # ---- layer 1: one batch-folded dot over host-built (B*L1, KP) patches ----------
    y = jnp.dot(p1_ref[...].astype(bf16), w1_ref[...], preferred_element_type=f32)
    z = bn_prelu(y, 0)
    pack_and_store(z, 0)

    # ---- layers 2..7: 6 dense tap-group dots per layer (K = 256), batch folded ------
    for li in range(6):
        n_in = n_list[li]                           # pair rows per sample == L_out
        acc = None
        for d in range(NTAP):
            off = d - 3                             # tap-group row offset
            lhs = jnp.concatenate(
                [buf[pl.ds(starts[li][b] + off, n_in), :] for b in range(B)],
                axis=0)                             # (B*n_in, 2*CP) bf16, dense reads
            part = jnp.dot(lhs, wst_ref[li, d], preferred_element_type=f32)
            acc = part if acc is None else acc + part
        z = bn_prelu(acc, li + 1)
        if li < 5:
            pack_and_store(z, li + 1)
    # z now holds layer-7 output: (B*L7, CP) f32, channels-last, batch folded.

    # ---- final Linear as multiply + reduce (no N=1 matmul) --------------------------
    wfc = fcw_ref[...]                              # (L7, CP)
    bias = fcb_ref[...]                             # (1, 1)
    L7 = wfc.shape[0]
    outs = []
    for b in range(B):
        vb = z[b * L7:(b + 1) * L7, :] * wfc
        outs.append(jnp.sum(vb, keepdims=True))     # (1, 1)
    out_ref[...] = jnp.concatenate(outs, axis=0) + bias


# ----------------------------------------------------------------------------
# One-time parameter preparation (hoisted out of the per-forward path)
# ----------------------------------------------------------------------------
def _spectral_norm(w, iters=50):
    """W / sigma_max(W.reshape(Cout, -1)); converged power iteration (deterministic)."""
    w2 = w.reshape(w.shape[0], -1).astype(jnp.float32)
    v = jnp.ones((w2.shape[1],), jnp.float32)
    v = v / jnp.linalg.norm(v)

    def body(_, v):
        u = w2 @ v
        u = u / (jnp.linalg.norm(u) + 1e-12)
        v = w2.T @ u
        v = v / (jnp.linalg.norm(v) + 1e-12)
        return v

    v = lax.fori_loop(0, iters, body, v)
    sigma = jnp.linalg.norm(w2 @ v)
    return w / sigma


def init_params(key, win_size=256):
    params = {"convs": []}
    for (cin, cout) in CHANS:
        key, kw, kb = jax.random.split(key, 3)
        w = jax.random.normal(kw, (cout, cin, K), jnp.float32) * 0.1
        # conv bias kept for module parity; it cancels exactly under training-mode BN
        b = jax.random.normal(kb, (cout,), jnp.float32) * 0.01
        gamma = jnp.ones((cout,), jnp.float32)
        beta = jnp.zeros((cout,), jnp.float32)
        alpha = jnp.full((cout,), 0.25, jnp.float32)
        params["convs"].append(dict(w=w, b=b, gamma=gamma, beta=beta, alpha=alpha))
    key, kw, kb = jax.random.split(key, 3)
    params["fc_w"] = jax.random.normal(kw, (1, win_size), jnp.float32) * 0.05
    params["fc_b"] = jax.random.normal(kb, (1,), jnp.float32) * 0.01
    return params


def prepare_params(params):
    """Spectral-normalize, pad channels to 128, pack conv taps into pair groups, bf16."""
    convs = params["convs"]

    # layer 1 (Cin == 1): (Cout,1,11) -> (KP, CP); taps padded 11->16 to match patches.
    w1 = _spectral_norm(convs[0]["w"])[:, 0, :].T                      # (11, Cout1)
    w1p = jnp.zeros((KP, CP), jnp.float32).at[:K, : w1.shape[1]].set(w1)

    # layers 2..7: tap-group weights for pair-packed inputs.
    # out[l] = sum_{d=-3..2} P[l+d] @ W2[d],  P[j] = [x[2j] || x[2j+1]],
    # W2[d] = [ W_tap(2d-1) over even slot ; W_tap(2d) over odd slot ]  (tap -1 -> 0).
    wst = []
    for layer in convs[1:]:
        w = _spectral_norm(layer["w"])                                 # (Cout, Cin, 11)
        cout, cin, _ = w.shape
        blocks = []
        for d in range(NTAP):
            blk = jnp.zeros((2 * CP, CP), jnp.float32)
            t_even, t_odd = 2 * d - 1, 2 * d
            if t_even >= 0:
                blk = blk.at[:cin, :cout].set(w[:, :, t_even].T)
            blk = blk.at[CP:CP + cin, :cout].set(w[:, :, t_odd].T)
            blocks.append(blk)
        wst.append(jnp.stack(blocks))
    wst = jnp.stack(wst, axis=0).astype(jnp.bfloat16)                  # (6,NTAP,2CP,CP)

    def pad_vec(v):
        return jnp.zeros((CP,), jnp.float32).at[: v.shape[0]].set(v)

    gammas = jnp.stack([pad_vec(l["gamma"]) for l in convs])           # (7, CP)
    betas = jnp.stack([pad_vec(l["beta"]) for l in convs])
    alphas = jnp.stack([pad_vec(l["alpha"]) for l in convs])
    # Invariant: padded channel lanes of gamma/beta/alpha must stay exactly zero so the
    # padded lanes can never leak into the FC lane reduction.
    for (_, cout), g, b, a in zip(CHANS, gammas, betas, alphas):
        assert float(jnp.abs(g[cout:]).sum()) == 0.0
        assert float(jnp.abs(b[cout:]).sum()) == 0.0
        assert float(jnp.abs(a[cout:]).sum()) == 0.0

    # NOTE: conv biases are intentionally dropped: training-mode BatchNorm subtracts the
    # batch mean, so they cancel exactly and have no effect on the output.
    win = params["fc_w"].shape[1]
    lf = win // CP
    # PyTorch x.view(-1, win_size) flattens (C, Lf) row-major: f = c*Lf + l.
    wfc = _spectral_norm(params["fc_w"]).reshape(CP, lf).T             # (Lf, CP)
    return dict(w1=w1p.astype(jnp.bfloat16), wstack=wst,
                gammas=gammas, betas=betas, alphas=alphas,
                fc_w=wfc.astype(jnp.float32),
                fc_b=params["fc_b"].reshape(1, 1).astype(jnp.float32))


# ----------------------------------------------------------------------------
# Forward (one pallas_call per forward)
# ----------------------------------------------------------------------------
@functools.partial(jax.jit, static_argnames=("win_size",))
def time_discriminator_forward(prep, inpt, win_size=256):
    assert inpt.shape[-1] == win_size, "The size of inpt tensor is not valid!"
    assert win_size % 256 == 0
    x = inpt if inpt.ndim == 3 else inpt[:, None, :]                   # (B, 1, L)
    B = x.shape[0]
    L1 = win_size // 2                                                 # layer-1 out len
    n_list, starts, tot_rows = _buffer_layout(B, L1)

    # Tiny glue im2col for layer 1 only (Cin == 1), batch folded: (B*L1, KP) f32.
    xp = jnp.pad(x[:, 0, :].astype(jnp.float32), ((0, 0), (PAD, PAD)))
    patches = jnp.stack([xp[:, t: t + win_size: 2] for t in range(K)], axis=-1)
    patches = jnp.pad(patches, ((0, 0), (0, 0), (0, KP - K))).reshape(B * L1, KP)

    # Exact 0/1 even/odd row-selection matrices (largest needed size; sliced in-kernel).
    m_max = B * L1
    half = m_max // 2
    cols = jnp.arange(m_max)[None, :]
    rows2 = 2 * jnp.arange(half)[:, None]
    sel_even = (cols == rows2).astype(jnp.bfloat16)                    # (m/2, m)
    sel_odd = (cols == rows2 + 1).astype(jnp.bfloat16)

    kernel = functools.partial(
        fused_discriminator_kernel,
        B=B, n_list=n_list, starts=starts, tot_rows=tot_rows)

    # Advisory cost estimate for XLA scheduling around the custom call.
    flops = 2 * (B * L1) * KP * CP
    for n in n_list:
        flops += 2 * NTAP * (B * n) * (2 * CP) * CP
    for m in [B * L1] + [B * n for n in n_list[:-1]]:
        flops += 2 * 2 * (m // 2) * m * CP                             # selection dots
    flops += 2 * B * n_list[-1] * CP                                   # final linear
    bytes_accessed = int(patches.size * 4 + prep["w1"].size * 2
                         + prep["wstack"].size * 2
                         + sel_even.size * 2 + sel_odd.size * 2
                         + 3 * prep["gammas"].size * 4
                         + prep["fc_w"].size * 4 + 4 + B * 4)

    return pl.pallas_call(
        kernel,
        out_shape=jax.ShapeDtypeStruct((B, 1), jnp.float32),
        in_specs=[_VMEM] * 10,
        out_specs=_VMEM,
        scratch_shapes=[pltpu.VMEM((tot_rows, 2 * CP), jnp.bfloat16)],
        compiler_params=pltpu.CompilerParams(vmem_limit_bytes=32 * 1024 * 1024),
        cost_estimate=pl.CostEstimate(flops=flops, transcendentals=7 * CP,
                                      bytes_accessed=bytes_accessed),
    )(patches, prep["w1"], prep["wstack"], sel_even, sel_odd,
      prep["gammas"], prep["betas"], prep["alphas"], prep["fc_w"], prep["fc_b"])


# ----------------------------------------------------------------------------
if __name__ == "__main__":
    WIN, B = 256, 2
    key = jax.random.PRNGKey(0)
    key, kp, kx = jax.random.split(key, 3)
    params = init_params(kp, win_size=WIN)
    prep = prepare_params(params)          # one-time: spectral norm + layout prep
    x = jax.random.normal(kx, (B, 1, WIN), jnp.float32)

    out = time_discriminator_forward(prep, x, win_size=WIN)
    out = jax.block_until_ready(out)
    assert out.shape == (B, 1) and out.dtype == jnp.float32
    assert bool(jnp.all(jnp.isfinite(out)))
    print("KERNEL_OK")
</pallas_src>

<mosaic_0001>
module attributes {stable_mosaic.version = 11 : i64} {
  func.func @fused_discriminator_kernel(%arg0: memref<256x16xf32, #tpu.memory_space<vmem>>, %arg1: memref<16x128xbf16, #tpu.memory_space<vmem>>, %arg2: memref<6x6x256x128xbf16, #tpu.memory_space<vmem>>, %arg3: memref<128x256xbf16, #tpu.memory_space<vmem>>, %arg4: memref<128x256xbf16, #tpu.memory_space<vmem>>, %arg5: memref<7x128xf32, #tpu.memory_space<vmem>>, %arg6: memref<7x128xf32, #tpu.memory_space<vmem>>, %arg7: memref<7x128xf32, #tpu.memory_space<vmem>>, %arg8: memref<2x128xf32, #tpu.memory_space<vmem>>, %arg9: memref<1x1xf32, #tpu.memory_space<vmem>>, %arg10: memref<2x1xf32, #tpu.memory_space<vmem>>, %arg11: memref<376x256xbf16, #tpu.memory_space<vmem>>) attributes {dimension_semantics = [], scalar_prefetch = 0 : i64, scratch_operands = 1 : i64, tpu.core_type = #tpu.core_type<tc>} {
    %cst = arith.constant 0.000000e+00 : bf16
    %0 = vector.broadcast %cst : bf16 to vector<376x256xbf16>
    %c0 = arith.constant 0 : index
    %c0_0 = arith.constant 0 : index
    %1 = vector.load %arg11[%c0, %c0_0] : memref<376x256xbf16, #tpu.memory_space<vmem>>, vector<376x256xbf16>
    tpu.vector_store %arg11[%c0, %c0_0], %0 {strides = array<i32>} : memref<376x256xbf16, #tpu.memory_space<vmem>>, vector<376x256xbf16>,
    %c0_1 = arith.constant 0 : index
    %c0_2 = arith.constant 0 : index
    %2 = vector.load %arg0[%c0_1, %c0_2] : memref<256x16xf32, #tpu.memory_space<vmem>>, vector<256x16xf32>
    %3 = arith.truncf %2 : vector<256x16xf32> to vector<256x16xbf16>
    %c0_3 = arith.constant 0 : index
    %c0_4 = arith.constant 0 : index
    %4 = vector.load %arg1[%c0_3, %c0_4] : memref<16x128xbf16, #tpu.memory_space<vmem>>, vector<16x128xbf16>
    %cst_5 = arith.constant dense<0.000000e+00> : vector<256x128xf32>
    %5 = tpu.matmul %3, %4, %cst_5 {dimension_numbers = #tpu.dot_dimension_numbers<[1], [0], [0], [1], [0, 0, 1, 1], [], []>} : vector<256x16xbf16>, vector<16x128xbf16>, vector<256x128xf32> -> vector<256x128xf32>
    %cst_6 = arith.constant dense<0.000000e+00> : vector<128xf32>
    %6 = vector.multi_reduction <add>, %5, %cst_6 [0] : vector<256x128xf32> to vector<128xf32>
    %7 = vector.shape_cast %6 : vector<128xf32> to vector<1x128xf32>
    %8 = arith.mulf %5, %5 : vector<256x128xf32>
    %cst_7 = arith.constant dense<0.000000e+00> : vector<128xf32>
    %9 = vector.multi_reduction <add>, %8, %cst_7 [0] : vector<256x128xf32> to vector<128xf32>
    %10 = vector.shape_cast %9 : vector<128xf32> to vector<1x128xf32>
    %cst_8 = arith.constant 3.906250e-03 : f32
    %11 = vector.broadcast %cst_8 : f32 to vector<1x128xf32>
    %12 = arith.mulf %7, %11 : vector<1x128xf32>
    %cst_9 = arith.constant 3.906250e-03 : f32
    %13 = vector.broadcast %cst_9 : f32 to vector<1x128xf32>
    %14 = arith.mulf %10, %13 : vector<1x128xf32>
    %15 = arith.mulf %12, %12 : vector<1x128xf32>
    %16 = arith.subf %14, %15 : vector<1x128xf32>
    %cst_10 = arith.constant 0.000000e+00 : f32
    %17 = vector.broadcast %cst_10 : f32 to vector<1x128xf32>
    %18 = arith.maximumf %16, %17 : vector<1x128xf32>
    %c0_11 = arith.constant 0 : index
    %c0_12 = arith.constant 0 : index
    %19 = vector.load %arg5[%c0_11, %c0_12] : memref<7x128xf32, #tpu.memory_space<vmem>>, vector<1x128xf32>
    %c0_13 = arith.constant 0 : index
    %c0_14 = arith.constant 0 : index
    %20 = vector.load %arg6[%c0_13, %c0_14] : memref<7x128xf32, #tpu.memory_space<vmem>>, vector<1x128xf32>
    %c0_15 = arith.constant 0 : index
    %c0_16 = arith.constant 0 : index
    %21 = vector.load %arg7[%c0_15, %c0_16] : memref<7x128xf32, #tpu.memory_space<vmem>>, vector<1x128xf32>
    %cst_17 = arith.constant 9.99999974E-6 : f32
    %22 = vector.broadcast %cst_17 : f32 to vector<1x128xf32>
    %23 = arith.addf %18, %22 : vector<1x128xf32>
    %24 = math.rsqrt %23 : vector<1x128xf32>
    %25 = arith.mulf %19, %24 : vector<1x128xf32>
    %26 = arith.mulf %12, %25 : vector<1x128xf32>
    %27 = arith.subf %20, %26 : vector<1x128xf32>
    %28 = vector.broadcast %25 : vector<1x128xf32> to vector<256x128xf32>
    %29 = arith.mulf %5, %28 : vector<256x128xf32>
    %30 = vector.broadcast %27 : vector<1x128xf32> to vector<256x128xf32>
    %31 = arith.addf %29, %30 : vector<256x128xf32>
    %cst_18 = arith.constant 0.000000e+00 : f32
    %32 = vector.broadcast %cst_18 : f32 to vector<256x128xf32>
    %33 = arith.cmpf ogt, %31, %32 : vector<256x128xf32>
    %34 = vector.broadcast %21 : vector<1x128xf32> to vector<256x128xf32>
    %35 = arith.mulf %34, %31 : vector<256x128xf32>
    %36 = arith.select %33, %31, %35 : vector<256x128xi1>, vector<256x128xf32>
    %37 = arith.truncf %36 : vector<256x128xf32> to vector<256x128xbf16>
    %c0_19 = arith.constant 0 : index
    %c0_20 = arith.constant 0 : index
    %38 = vector.load %arg3[%c0_19, %c0_20] : memref<128x256xbf16, #tpu.memory_space<vmem>>, vector<128x256xbf16>
    %cst_21 = arith.constant dense<0.000000e+00> : vector<128x128xf32>
    %39 = tpu.matmul %38, %37, %cst_21 {dimension_numbers = #tpu.dot_dimension_numbers<[1], [0], [0], [1], [0, 0, 1, 1], [], []>} : vector<128x256xbf16>, vector<256x128xbf16>, vector<128x128xf32> -> vector<128x128xf32>
    %40 = arith.truncf %39 : vector<128x128xf32> to vector<128x128xbf16>
    %c0_22 = arith.constant 0 : index
    %c0_23 = arith.constant 0 : index
    %41 = vector.load %arg4[%c0_22, %c0_23] : memref<128x256xbf16, #tpu.memory_space<vmem>>, vector<128x256xbf16>
    %cst_24 = arith.constant dense<0.000000e+00> : vector<128x128xf32>
    %42 = tpu.matmul %41, %37, %cst_24 {dimension_numbers = #tpu.dot_dimension_numbers<[1], [0], [0], [1], [0, 0, 1, 1], [], []>} : vector<128x256xbf16>, vector<256x128xbf16>, vector<128x128xf32> -> vector<128x128xf32>
    %43 = arith.truncf %42 : vector<128x128xf32> to vector<128x128xbf16>
    %44 = vector.extract_strided_slice %40 {offsets = [0, 0], sizes = [64, 128], strides = [1, 1]} : vector<128x128xbf16> to vector<64x128xbf16>
    %45 = vector.extract_strided_slice %43 {offsets = [0, 0], sizes = [64, 128], strides = [1, 1]} : vector<128x128xbf16> to vector<64x128xbf16>
    %46 = tpu.concatenate %44, %45 in 1 : vector<64x128xbf16>, vector<64x128xbf16> -> vector<64x256xbf16>
    %c8 = arith.constant 8 : index
    %c0_25 = arith.constant 0 : index
    %47 = vector.load %arg11[%c8, %c0_25] : memref<376x256xbf16, #tpu.memory_space<vmem>>, vector<64x256xbf16>
    tpu.vector_store %arg11[%c8, %c0_25], %46 {strides = array<i32>} : memref<376x256xbf16, #tpu.memory_space<vmem>>, vector<64x256xbf16>,
    %48 = vector.extract_strided_slice %40 {offsets = [64, 0], sizes = [64, 128], strides = [1, 1]} : vector<128x128xbf16> to vector<64x128xbf16>
    %49 = vector.extract_strided_slice %43 {offsets = [64, 0], sizes = [64, 128], strides = [1, 1]} : vector<128x128xbf16> to vector<64x128xbf16>
    %50 = tpu.concatenate %48, %49 in 1 : vector<64x128xbf16>, vector<64x128xbf16> -> vector<64x256xbf16>
    %c80 = arith.constant 80 : index
    %c0_26 = arith.constant 0 : index
    %51 = vector.load %arg11[%c80, %c0_26] : memref<376x256xbf16, #tpu.memory_space<vmem>>, vector<64x256xbf16>
    tpu.vector_store %arg11[%c80, %c0_26], %50 {strides = array<i32>} : memref<376x256xbf16, #tpu.memory_space<vmem>>, vector<64x256xbf16>,
    %c5 = arith.constant 5 : index
    %c0_27 = arith.constant 0 : index
    %52 = vector.load %arg11[%c5, %c0_27] : memref<376x256xbf16, #tpu.memory_space<vmem>>, vector<64x256xbf16>
    %c77 = arith.constant 77 : index
    %c0_28 = arith.constant 0 : index
    %53 = vector.load %arg11[%c77, %c0_28] : memref<376x256xbf16, #tpu.memory_space<vmem>>, vector<64x256xbf16>
    %54 = tpu.concatenate %52, %53 in 0 : vector<64x256xbf16>, vector<64x256xbf16> -> vector<128x256xbf16>
    %c0_29 = arith.constant 0 : index
    %c0_30 = arith.constant 0 : index
    %c0_31 = arith.constant 0 : index
    %c0_32 = arith.constant 0 : index
    %55 = vector.load %arg2[%c0_29, %c0_30, %c0_31, %c0_32] : memref<6x6x256x128xbf16, #tpu.memory_space<vmem>>, vector<1x1x256x128xbf16>
    %56 = vector.shape_cast %55 : vector<1x1x256x128xbf16> to vector<256x128xbf16>
    %cst_33 = arith.constant dense<0.000000e+00> : vector<128x128xf32>
    %57 = tpu.matmul %54, %56, %cst_33 {dimension_numbers = #tpu.dot_dimension_numbers<[1], [0], [0], [1], [0, 0, 1, 1], [], []>} : vector<128x256xbf16>, vector<256x128xbf16>, vector<128x128xf32> -> vector<128x128xf32>
    %c6 = arith.constant 6 : index
    %c0_34 = arith.constant 0 : index
    %58 = vector.load %arg11[%c6, %c0_34] : memref<376x256xbf16, #tpu.memory_space<vmem>>, vector<64x256xbf16>
    %c78 = arith.constant 78 : index
    %c0_35 = arith.constant 0 : index
    %59 = vector.load %arg11[%c78, %c0_35] : memref<376x256xbf16, #tpu.memory_space<vmem>>, vector<64x256xbf16>
    %60 = tpu.concatenate %58, %59 in 0 : vector<64x256xbf16>, vector<64x256xbf16> -> vector<128x256xbf16>
    %c0_36 = arith.constant 0 : index
    %c1 = arith.constant 1 : index
    %c0_37 = arith.constant 0 : index
    %c0_38 = arith.constant 0 : index
    %61 = vector.load %arg2[%c0_36, %c1, %c0_37, %c0_38] : memref<6x6x256x128xbf16, #tpu.memory_space<vmem>>, vector<1x1x256x128xbf16>
    %62 = vector.shape_cast %61 : vector<1x1x256x128xbf16> to vector<256x128xbf16>
    %cst_39 = arith.constant dense<0.000000e+00> : vector<128x128xf32>
    %63 = tpu.matmul %60, %62, %cst_39 {dimension_numbers = #tpu.dot_dimension_numbers<[1], [0], [0], [1], [0, 0, 1, 1], [], []>} : vector<128x256xbf16>, vector<256x128xbf16>, vector<128x128xf32> -> vector<128x128xf32>
    %64 = arith.addf %57, %63 : vector<128x128xf32>
    %c7 = arith.constant 7 : index
    %c0_40 = arith.constant 0 : index
    %65 = vector.load %arg11[%c7, %c0_40] : memref<376x256xbf16, #tpu.memory_space<vmem>>, vector<64x256xbf16>
    %c79 = arith.constant 79 : index
    %c0_41 = arith.constant 0 : index
    %66 = vector.load %arg11[%c79, %c0_41] : memref<376x256xbf16, #tpu.memory_space<vmem>>, vector<64x256xbf16>
    %67 = tpu.concatenate %65, %66 in 0 : vector<64x256xbf16>, vector<64x256xbf16> -> vector<128x256xbf16>
    %c0_42 = arith.constant 0 : index
    %c2 = arith.constant 2 : index
    %c0_43 = arith.constant 0 : index
    %c0_44 = arith.constant 0 : index
    %68 = vector.load %arg2[%c0_42, %c2, %c0_43, %c0_44] : memref<6x6x256x128xbf16, #tpu.memory_space<vmem>>, vector<1x1x256x128xbf16>
    %69 = vector.shape_cast %68 : vector<1x1x256x128xbf16> to vector<256x128xbf16>
    %cst_45 = arith.constant dense<0.000000e+00> : vector<128x128xf32>
    %70 = tpu.matmul %67, %69, %cst_45 {dimension_numbers = #tpu.dot_dimension_numbers<[1], [0], [0], [1], [0, 0, 1, 1], [], []>} : vector<128x256xbf16>, vector<256x128xbf16>, vector<128x128xf32> -> vector<128x128xf32>
    %71 = arith.addf %64, %70 : vector<128x128xf32>
    %c8_46 = arith.constant 8 : index
    %c0_47 = arith.constant 0 : index
    %72 = vector.load %arg11[%c8_46, %c0_47] : memref<376x256xbf16, #tpu.memory_space<vmem>>, vector<64x256xbf16>
    %c80_48 = arith.constant 80 : index
    %c0_49 = arith.constant 0 : index
    %73 = vector.load %arg11[%c80_48, %c0_49] : memref<376x256xbf16, #tpu.memory_space<vmem>>, vector<64x256xbf16>
    %74 = tpu.concatenate %72, %73 in 0 : vector<64x256xbf16>, vector<64x256xbf16> -> vector<128x256xbf16>
    %c0_50 = arith.constant 0 : index
    %c3 = arith.constant 3 : index
    %c0_51 = arith.constant 0 : index
    %c0_52 = arith.constant 0 : index
    %75 = vector.load %arg2[%c0_50, %c3, %c0_51, %c0_52] : memref<6x6x256x128xbf16, #tpu.memory_space<vmem>>, vector<1x1x256x128xbf16>
    %76 = vector.shape_cast %75 : vector<1x1x256x128xbf16> to vector<256x128xbf16>
    %cst_53 = arith.constant dense<0.000000e+00> : vector<128x128xf32>
    %77 = tpu.matmul %74, %76, %cst_53 {dimension_numbers = #tpu.dot_dimension_numbers<[1], [0], [0], [1], [0, 0, 1, 1], [], []>} : vector<128x256xbf16>, vector<256x128xbf16>, vector<128x128xf32> -> vector<128x128xf32>
    %78 = arith.addf %71, %77 : vector<128x128xf32>
    %c9 = arith.constant 9 : index
    %c0_54 = arith.constant 0 : index
    %79 = vector.load %arg11[%c9, %c0_54] : memref<376x256xbf16, #tpu.memory_space<vmem>>, vector<64x256xbf16>
    %c81 = arith.constant 81 : index
    %c0_55 = arith.constant 0 : index
    %80 = vector.load %arg11[%c81, %c0_55] : memref<376x256xbf16, #tpu.memory_space<vmem>>, vector<64x256xbf16>
    %81 = tpu.concatenate %79, %80 in 0 : vector<64x256xbf16>, vector<64x256xbf16> -> vector<128x256xbf16>
    %c0_56 = arith.constant 0 : index
    %c4 = arith.constant 4 : index
    %c0_57 = arith.constant 0 : index
    %c0_58 = arith.constant 0 : index
    %82 = vector.load %arg2[%c0_56, %c4, %c0_57, %c0_58] : memref<6x6x256x128xbf16, #tpu.memory_space<vmem>>, vector<1x1x256x128xbf16>
    %83 = vector.shape_cast %82 : vector<1x1x256x128xbf16> to vector<256x128xbf16>
    %cst_59 = arith.constant dense<0.000000e+00> : vector<128x128xf32>
    %84 = tpu.matmul %81, %83, %cst_59 {dimension_numbers = #tpu.dot_dimension_numbers<[1], [0], [0], [1], [0, 0, 1, 1], [], []>} : vector<128x256xbf16>, vector<256x128xbf16>, vector<128x128xf32> -> vector<128x128xf32>
    %85 = arith.addf %78, %84 : vector<128x128xf32>
    %c10 = arith.constant 10 : index
    %c0_60 = arith.constant 0 : index
    %86 = vector.load %arg11[%c10, %c0_60] : memref<376x256xbf16, #tpu.memory_space<vmem>>, vector<64x256xbf16>
    %c82 = arith.constant 82 : index
    %c0_61 = arith.constant 0 : index
    %87 = vector.load %arg11[%c82, %c0_61] : memref<376x256xbf16, #tpu.memory_space<vmem>>, vector<64x256xbf16>
    %88 = tpu.concatenate %86, %87 in 0 : vector<64x256xbf16>, vector<64x256xbf16> -> vector<128x256xbf16>
    %c0_62 = arith.constant 0 : index
    %c5_63 = arith.constant 5 : index
    %c0_64 = arith.constant 0 : index
    %c0_65 = arith.constant 0 : index
    %89 = vector.load %arg2[%c0_62, %c5_63, %c0_64, %c0_65] : memref<6x6x256x128xbf16, #tpu.memory_space<vmem>>, vector<1x1x256x128xbf16>
    %90 = vector.shape_cast %89 : vector<1x1x256x128xbf16> to vector<256x128xbf16>
    %cst_66 = arith.constant dense<0.000000e+00> : vector<128x128xf32>
    %91 = tpu.matmul %88, %90, %cst_66 {dimension_numbers = #tpu.dot_dimension_numbers<[1], [0], [0], [1], [0, 0, 1, 1], [], []>} : vector<128x256xbf16>, vector<256x128xbf16>, vector<128x128xf32> -> vector<128x128xf32>
    %92 = arith.addf %85, %91 : vector<128x128xf32>
    %cst_67 = arith.constant dense<0.000000e+00> : vector<128xf32>
    %93 = vector.multi_reduction <add>, %92, %cst_67 [0] : vector<128x128xf32> to vector<128xf32>
    %94 = vector.shape_cast %93 : vector<128xf32> to vector<1x128xf32>
    %95 = arith.mulf %92, %92 : vector<128x128xf32>
    %cst_68 = arith.constant dense<0.000000e+00> : vector<128xf32>
    %96 = vector.multi_reduction <add>, %95, %cst_68 [0] : vector<128x128xf32> to vector<128xf32>
    %97 = vector.shape_cast %96 : vector<128xf32> to vector<1x128xf32>
    %cst_69 = arith.constant 7.812500e-03 : f32
    %98 = vector.broadcast %cst_69 : f32 to vector<1x128xf32>
    %99 = arith.mulf %94, %98 : vector<1x128xf32>
    %cst_70 = arith.constant 7.812500e-03 : f32
    %100 = vector.broadcast %cst_70 : f32 to vector<1x128xf32>
    %101 = arith.mulf %97, %100 : vector<1x128xf32>
    %102 = arith.mulf %99, %99 : vector<1x128xf32>
    %103 = arith.subf %101, %102 : vector<1x128xf32>
    %cst_71 = arith.constant 0.000000e+00 : f32
    %104 = vector.broadcast %cst_71 : f32 to vector<1x128xf32>
    %105 = arith.maximumf %103, %104 : vector<1x128xf32>
    %c1_72 = arith.constant 1 : index
    %c0_73 = arith.constant 0 : index
    %106 = vector.load %arg5[%c1_72, %c0_73] : memref<7x128xf32, #tpu.memory_space<vmem>>, vector<1x128xf32>
    %c1_74 = arith.constant 1 : index
    %c0_75 = arith.constant 0 : index
    %107 = vector.load %arg6[%c1_74, %c0_75] : memref<7x128xf32, #tpu.memory_space<vmem>>, vector<1x128xf32>
    %c1_76 = arith.constant 1 : index
    %c0_77 = arith.constant 0 : index
    %108 = vector.load %arg7[%c1_76, %c0_77] : memref<7x128xf32, #tpu.memory_space<vmem>>, vector<1x128xf32>
    %cst_78 = arith.constant 9.99999974E-6 : f32
    %109 = vector.broadcast %cst_78 : f32 to vector<1x128xf32>
    %110 = arith.addf %105, %109 : vector<1x128xf32>
    %111 = math.rsqrt %110 : vector<1x128xf32>
    %112 = arith.mulf %106, %111 : vector<1x128xf32>
    %113 = arith.mulf %99, %112 : vector<1x128xf32>
    %114 = arith.subf %107, %113 : vector<1x128xf32>
    %115 = vector.broadcast %112 : vector<1x128xf32> to vector<128x128xf32>
    %116 = arith.mulf %92, %115 : vector<128x128xf32>
    %117 = vector.broadcast %114 : vector<1x128xf32> to vector<128x128xf32>
    %118 = arith.addf %116, %117 : vector<128x128xf32>
    %cst_79 = arith.constant 0.000000e+00 : f32
    %119 = vector.broadcast %cst_79 : f32 to vector<128x128xf32>
    %120 = arith.cmpf ogt, %118, %119 : vector<128x128xf32>
    %121 = vector.broadcast %108 : vector<1x128xf32> to vector<128x128xf32>
    %122 = arith.mulf %121, %118 : vector<128x128xf32>
    %123 = arith.select %120, %118, %122 : vector<128x128xi1>, vector<128x128xf32>
    %124 = arith.truncf %123 : vector<128x128xf32> to vector<128x128xbf16>
    %c0_80 = arith.constant 0 : index
    %c0_81 = arith.constant 0 : index
    %125 = vector.load %arg3[%c0_80, %c0_81] : memref<128x256xbf16, #tpu.memory_space<vmem>>, vector<64x128xbf16>
    %cst_82 = arith.constant dense<0.000000e+00> : vector<64x128xf32>
    %126 = tpu.matmul %125, %124, %cst_82 {dimension_numbers = #tpu.dot_dimension_numbers<[1], [0], [0], [1], [0, 0, 1, 1], [], []>} : vector<64x128xbf16>, vector<128x128xbf16>, vector<64x128xf32> -> vector<64x128xf32>
    %127 = arith.truncf %126 : vector<64x128xf32> to vector<64x128xbf16>
    %c0_83 = arith.constant 0 : index
    %c0_84 = arith.constant 0 : index
    %128 = vector.load %arg4[%c0_83, %c0_84] : memref<128x256xbf16, #tpu.memory_space<vmem>>, vector<64x128xbf16>
    %cst_85 = arith.constant dense<0.000000e+00> : vector<64x128xf32>
    %129 = tpu.matmul %128, %124, %cst_85 {dimension_numbers = #tpu.dot_dimension_numbers<[1], [0], [0], [1], [0, 0, 1, 1], [], []>} : vector<64x128xbf16>, vector<128x128xbf16>, vector<64x128xf32> -> vector<64x128xf32>
    %130 = arith.truncf %129 : vector<64x128xf32> to vector<64x128xbf16>
    %131 = vector.extract_strided_slice %127 {offsets = [0, 0], sizes = [32, 128], strides = [1, 1]} : vector<64x128xbf16> to vector<32x128xbf16>
    %132 = vector.extract_strided_slice %130 {offsets = [0, 0], sizes = [32, 128], strides = [1, 1]} : vector<64x128xbf16> to vector<32x128xbf16>
    %133 = tpu.concatenate %131, %132 in 1 : vector<32x128xbf16>, vector<32x128xbf16> -> vector<32x256xbf16>
    %c152 = arith.constant 152 : index
    %c0_86 = arith.constant 0 : index
    %134 = vector.load %arg11[%c152, %c0_86] : memref<376x256xbf16, #tpu.memory_space<vmem>>, vector<32x256xbf16>
    tpu.vector_store %arg11[%c152, %c0_86], %133 {strides = array<i32>} : memref<376x256xbf16, #tpu.memory_space<vmem>>, vector<32x256xbf16>,
    %135 = vector.extract_strided_slice %127 {offsets = [32, 0], sizes = [32, 128], strides = [1, 1]} : vector<64x128xbf16> to vector<32x128xbf16>
    %136 = vector.extract_strided_slice %130 {offsets = [32, 0], sizes = [32, 128], strides = [1, 1]} : vector<64x128xbf16> to vector<32x128xbf16>
    %137 = tpu.concatenate %135, %136 in 1 : vector<32x128xbf16>, vector<32x128xbf16> -> vector<32x256xbf16>
    %c192 = arith.constant 192 : index
    %c0_87 = arith.constant 0 : index
    %138 = vector.load %arg11[%c192, %c0_87] : memref<376x256xbf16, #tpu.memory_space<vmem>>, vector<32x256xbf16>
    tpu.vector_store %arg11[%c192, %c0_87], %137 {strides = array<i32>} : memref<376x256xbf16, #tpu.memory_space<vmem>>, vector<32x256xbf16>,
    %c149 = arith.constant 149 : index
    %c0_88 = arith.constant 0 : index
    %139 = vector.load %arg11[%c149, %c0_88] : memref<376x256xbf16, #tpu.memory_space<vmem>>, vector<32x256xbf16>
    %c189 = arith.constant 189 : index
    %c0_89 = arith.constant 0 : index
    %140 = vector.load %arg11[%c189, %c0_89] : memref<376x256xbf16, #tpu.memory_space<vmem>>, vector<32x256xbf16>
    %141 = tpu.concatenate %139, %140 in 0 : vector<32x256xbf16>, vector<32x256xbf16> -> vector<64x256xbf16>
    %c1_90 = arith.constant 1 : index
    %c0_91 = arith.constant 0 : index
    %c0_92 = arith.constant 0 : index
    %c0_93 = arith.constant 0 : index
    %142 = vector.load %arg2[%c1_90, %c0_91, %c0_92, %c0_93] : memref<6x6x256x128xbf16, #tpu.memory_space<vmem>>, vector<1x1x256x128xbf16>
    %143 = vector.shape_cast %142 : vector<1x1x256x128xbf16> to vector<256x128xbf16>
    %cst_94 = arith.constant dense<0.000000e+00> : vector<64x128xf32>
    %144 = tpu.matmul %141, %143, %cst_94 {dimension_numbers = #tpu.dot_dimension_numbers<[1], [0], [0], [1], [0, 0, 1, 1], [], []>} : vector<64x256xbf16>, vector<256x128xbf16>, vector<64x128xf32> -> vector<64x128xf32>
    %c150 = arith.constant 150 : index
    %c0_95 = arith.constant 0 : index
    %145 = vector.load %arg11[%c150, %c0_95] : memref<376x256xbf16, #tpu.memory_space<vmem>>, vector<32x256xbf16>
    %c190 = arith.constant 190 : index
    %c0_96 = arith.constant 0 : index
    %146 = vector.load %arg11[%c190, %c0_96] : memref<376x256xbf16, #tpu.memory_space<vmem>>, vector<32x256xbf16>
    %147 = tpu.concatenate %145, %146 in 0 : vector<32x256xbf16>, vector<32x256xbf16> -> vector<64x256xbf16>
    %c1_97 = arith.constant 1 : index
    %c1_98 = arith.constant 1 : index
    %c0_99 = arith.constant 0 : index
    %c0_100 = arith.constant 0 : index
    %148 = vector.load %arg2[%c1_97, %c1_98, %c0_99, %c0_100] : memref<6x6x256x128xbf16, #tpu.memory_space<vmem>>, vector<1x1x256x128xbf16>
    %149 = vector.shape_cast %148 : vector<1x1x256x128xbf16> to vector<256x128xbf16>
    %cst_101 = arith.constant dense<0.000000e+00> : vector<64x128xf32>
    %150 = tpu.matmul %147, %149, %cst_101 {dimension_numbers = #tpu.dot_dimension_numbers<[1], [0], [0], [1], [0, 0, 1, 1], [], []>} : vector<64x256xbf16>, vector<256x128xbf16>, vector<64x128xf32> -> vector<64x128xf32>
    %151 = arith.addf %144, %150 : vector<64x128xf32>
    %c151 = arith.constant 151 : index
    %c0_102 = arith.constant 0 : index
    %152 = vector.load %arg11[%c151, %c0_102] : memref<376x256xbf16, #tpu.memory_space<vmem>>, vector<32x256xbf16>
    %c191 = arith.constant 191 : index
    %c0_103 = arith.constant 0 : index
    %153 = vector.load %arg11[%c191, %c0_103] : memref<376x256xbf16, #tpu.memory_space<vmem>>, vector<32x256xbf16>
    %154 = tpu.concatenate %152, %153 in 0 : vector<32x256xbf16>, vector<32x256xbf16> -> vector<64x256xbf16>
    %c1_104 = arith.constant 1 : index
    %c2_105 = arith.constant 2 : index
    %c0_106 = arith.constant 0 : index
    %c0_107 = arith.constant 0 : index
    %155 = vector.load %arg2[%c1_104, %c2_105, %c0_106, %c0_107] : memref<6x6x256x128xbf16, #tpu.memory_space<vmem>>, vector<1x1x256x128xbf16>
    %156 = vector.shape_cast %155 : vector<1x1x256x128xbf16> to vector<256x128xbf16>
    %cst_108 = arith.constant dense<0.000000e+00> : vector<64x128xf32>
    %157 = tpu.matmul %154, %156, %cst_108 {dimension_numbers = #tpu.dot_dimension_numbers<[1], [0], [0], [1], [0, 0, 1, 1], [], []>} : vector<64x256xbf16>, vector<256x128xbf16>, vector<64x128xf32> -> vector<64x128xf32>
    %158 = arith.addf %151, %157 : vector<64x128xf32>
    %c152_109 = arith.constant 152 : index
    %c0_110 = arith.constant 0 : index
    %159 = vector.load %arg11[%c152_109, %c0_110] : memref<376x256xbf16, #tpu.memory_space<vmem>>, vector<32x256xbf16>
    %c192_111 = arith.constant 192 : index
    %c0_112 = arith.constant 0 : index
    %160 = vector.load %arg11[%c192_111, %c0_112] : memref<376x256xbf16, #tpu.memory_space<vmem>>, vector<32x256xbf16>
    %161 = tpu.concatenate %159, %160 in 0 : vector<32x256xbf16>, vector<32x256xbf16> -> vector<64x256xbf16>
    %c1_113 = arith.constant 1 : index
    %c3_114 = arith.constant 3 : index
    %c0_115 = arith.constant 0 : index
    %c0_116 = arith.constant 0 : index
    %162 = vector.load %arg2[%c1_113, %c3_114, %c0_115, %c0_116] : memref<6x6x256x128xbf16, #tpu.memory_space<vmem>>, vector<1x1x256x128xbf16>
    %163 = vector.shape_cast %162 : vector<1x1x256x128xbf16> to vector<256x128xbf16>
    %cst_117 = arith.constant dense<0.000000e+00> : vector<64x128xf32>
    %164 = tpu.matmul %161, %163, %cst_117 {dimension_numbers = #tpu.dot_dimension_numbers<[1], [0], [0], [1], [0, 0, 1, 1], [], []>} : vector<64x256xbf16>, vector<256x128xbf16>, vector<64x128xf32> -> vector<64x128xf32>
    %165 = arith.addf %158, %164 : vector<64x128xf32>
    %c153 = arith.constant 153 : index
    %c0_118 = arith.constant 0 : index
    %166 = vector.load %arg11[%c153, %c0_118] : memref<376x256xbf16, #tpu.memory_space<vmem>>, vector<32x256xbf16>
    %c193 = arith.constant 193 : index
    %c0_119 = arith.constant 0 : index
    %167 = vector.load %arg11[%c193, %c0_119] : memref<376x256xbf16, #tpu.memory_space<vmem>>, vector<32x256xbf16>
    %168 = tpu.concatenate %166, %167 in 0 : vector<32x256xbf16>, vector<32x256xbf16> -> vector<64x256xbf16>
    %c1_120 = arith.constant 1 : index
    %c4_121 = arith.constant 4 : index
    %c0_122 = arith.constant 0 : index
    %c0_123 = arith.constant 0 : index
    %169 = vector.load %arg2[%c1_120, %c4_121, %c0_122, %c0_123] : memref<6x6x256x128xbf16, #tpu.memory_space<vmem>>, vector<1x1x256x128xbf16>
    %170 = vector.shape_cast %169 : vector<1x1x256x128xbf16> to vector<256x128xbf16>
    %cst_124 = arith.constant dense<0.000000e+00> : vector<64x128xf32>
    %171 = tpu.matmul %168, %170, %cst_124 {dimension_numbers = #tpu.dot_dimension_numbers<[1], [0], [0], [1], [0, 0, 1, 1], [], []>} : vector<64x256xbf16>, vector<256x128xbf16>, vector<64x128xf32> -> vector<64x128xf32>
    %172 = arith.addf %165, %171 : vector<64x128xf32>
    %c154 = arith.constant 154 : index
    %c0_125 = arith.constant 0 : index
    %173 = vector.load %arg11[%c154, %c0_125] : memref<376x256xbf16, #tpu.memory_space<vmem>>, vector<32x256xbf16>
    %c194 = arith.constant 194 : index
    %c0_126 = arith.constant 0 : index
    %174 = vector.load %arg11[%c194, %c0_126] : memref<376x256xbf16, #tpu.memory_space<vmem>>, vector<32x256xbf16>
    %175 = tpu.concatenate %173, %174 in 0 : vector<32x256xbf16>, vector<32x256xbf16> -> vector<64x256xbf16>
    %c1_127 = arith.constant 1 : index
    %c5_128 = arith.constant 5 : index
    %c0_129 = arith.constant 0 : index
    %c0_130 = arith.constant 0 : index
    %176 = vector.load %arg2[%c1_127, %c5_128, %c0_129, %c0_130] : memref<6x6x256x128xbf16, #tpu.memory_space<vmem>>, vector<1x1x256x128xbf16>
    %177 = vector.shape_cast %176 : vector<1x1x256x128xbf16> to vector<256x128xbf16>
    %cst_131 = arith.constant dense<0.000000e+00> : vector<64x128xf32>
    %178 = tpu.matmul %175, %177, %cst_131 {dimension_numbers = #tpu.dot_dimension_numbers<[1], [0], [0], [1], [0, 0, 1, 1], [], []>} : vector<64x256xbf16>, vector<256x128xbf16>, vector<64x128xf32> -> vector<64x128xf32>
    %179 = arith.addf %172, %178 : vector<64x128xf32>
    %cst_132 = arith.constant dense<0.000000e+00> : vector<128xf32>
    %180 = vector.multi_reduction <add>, %179, %cst_132 [0] : vector<64x128xf32> to vector<128xf32>
    %181 = vector.shape_cast %180 : vector<128xf32> to vector<1x128xf32>
    %182 = arith.mulf %179, %179 : vector<64x128xf32>
    %cst_133 = arith.constant dense<0.000000e+00> : vector<128xf32>
    %183 = vector.multi_reduction <add>, %182, %cst_133 [0] : vector<64x128xf32> to vector<128xf32>
    %184 = vector.shape_cast %183 : vector<128xf32> to vector<1x128xf32>
    %cst_134 = arith.constant 1.562500e-02 : f32
    %185 = vector.broadcast %cst_134 : f32 to vector<1x128xf32>
    %186 = arith.mulf %181, %185 : vector<1x128xf32>
    %cst_135 = arith.constant 1.562500e-02 : f32
    %187 = vector.broadcast %cst_135 : f32 to vector<1x128xf32>
    %188 = arith.mulf %184, %187 : vector<1x128xf32>
    %189 = arith.mulf %186, %186 : vector<1x128xf32>
    %190 = arith.subf %188, %189 : vector<1x128xf32>
    %cst_136 = arith.constant 0.000000e+00 : f32
    %191 = vector.broadcast %cst_136 : f32 to vector<1x128xf32>
    %192 = arith.maximumf %190, %191 : vector<1x128xf32>
    %c2_137 = arith.constant 2 : index
    %c0_138 = arith.constant 0 : index
    %193 = vector.load %arg5[%c2_137, %c0_138] : memref<7x128xf32, #tpu.memory_space<vmem>>, vector<1x128xf32>
    %c2_139 = arith.constant 2 : index
    %c0_140 = arith.constant 0 : index
    %194 = vector.load %arg6[%c2_139, %c0_140] : memref<7x128xf32, #tpu.memory_space<vmem>>, vector<1x128xf32>
    %c2_141 = arith.constant 2 : index
    %c0_142 = arith.constant 0 : index
    %195 = vector.load %arg7[%c2_141, %c0_142] : memref<7x128xf32, #tpu.memory_space<vmem>>, vector<1x128xf32>
    %cst_143 = arith.constant 9.99999974E-6 : f32
    %196 = vector.broadcast %cst_143 : f32 to vector<1x128xf32>
    %197 = arith.addf %192, %196 : vector<1x128xf32>
    %198 = math.rsqrt %197 : vector<1x128xf32>
    %199 = arith.mulf %193, %198 : vector<1x128xf32>
    %200 = arith.mulf %186, %199 : vector<1x128xf32>
    %201 = arith.subf %194, %200 : vector<1x128xf32>
    %202 = vector.broadcast %199 : vector<1x128xf32> to vector<64x128xf32>
    %203 = arith.mulf %179, %202 : vector<64x128xf32>
    %204 = vector.broadcast %201 : vector<1x128xf32> to vector<64x128xf32>
    %205 = arith.addf %203, %204 : vector<64x128xf32>
    %cst_144 = arith.constant 0.000000e+00 : f32
    %206 = vector.broadcast %cst_144 : f32 to vector<64x128xf32>
    %207 = arith.cmpf ogt, %205, %206 : vector<64x128xf32>
    %208 = vector.broadcast %195 : vector<1x128xf32> to vector<64x128xf32>
    %209 = arith.mulf %208, %205 : vector<64x128xf32>
    %210 = arith.select %207, %205, %209 : vector<64x128xi1>, vector<64x128xf32>
    %211 = arith.truncf %210 : vector<64x128xf32> to vector<64x128xbf16>
    %c0_145 = arith.constant 0 : index
    %c0_146 = arith.constant 0 : index
    %212 = vector.load %arg3[%c0_145, %c0_146] : memref<128x256xbf16, #tpu.memory_space<vmem>>, vector<32x64xbf16>
    %cst_147 = arith.constant dense<0.000000e+00> : vector<32x128xf32>
    %213 = tpu.matmul %212, %211, %cst_147 {dimension_numbers = #tpu.dot_dimension_numbers<[1], [0], [0], [1], [0, 0, 1, 1], [], []>} : vector<32x64xbf16>, vector<64x128xbf16>, vector<32x128xf32> -> vector<32x128xf32>
    %214 = arith.truncf %213 : vector<32x128xf32> to vector<32x128xbf16>
    %c0_148 = arith.constant 0 : index
    %c0_149 = arith.constant 0 : index
    %215 = vector.load %arg4[%c0_148, %c0_149] : memref<128x256xbf16, #tpu.memory_space<vmem>>, vector<32x64xbf16>
    %cst_150 = arith.constant dense<0.000000e+00> : vector<32x128xf32>
    %216 = tpu.matmul %215, %211, %cst_150 {dimension_numbers = #tpu.dot_dimension_numbers<[1], [0], [0], [1], [0, 0, 1, 1], [], []>} : vector<32x64xbf16>, vector<64x128xbf16>, vector<32x128xf32> -> vector<32x128xf32>
    %217 = arith.truncf %216 : vector<32x128xf32> to vector<32x128xbf16>
    %218 = vector.extract_strided_slice %214 {offsets = [0, 0], sizes = [16, 128], strides = [1, 1]} : vector<32x128xbf16> to vector<16x128xbf16>
    %219 = vector.extract_strided_slice %217 {offsets = [0, 0], sizes = [16, 128], strides = [1, 1]} : vector<32x128xbf16> to vector<16x128xbf16>
    %220 = tpu.concatenate %218, %219 in 1 : vector<16x128xbf16>, vector<16x128xbf16> -> vector<16x256xbf16>
    %c232 = arith.constant 232 : index
    %c0_151 = arith.constant 0 : index
    %221 = vector.load %arg11[%c232, %c0_151] : memref<376x256xbf16, #tpu.memory_space<vmem>>, vector<16x256xbf16>
    tpu.vector_store %arg11[%c232, %c0_151], %220 {strides = array<i32>} : memref<376x256xbf16, #tpu.memory_space<vmem>>, vector<16x256xbf16>,
    %222 = vector.extract_strided_slice %214 {offsets = [16, 0], sizes = [16, 128], strides = [1, 1]} : vector<32x128xbf16> to vector<16x128xbf16>
    %223 = vector.extract_strided_slice %217 {offsets = [16, 0], sizes = [16, 128], strides = [1, 1]} : vector<32x128xbf16> to vector<16x128xbf16>
    %224 = tpu.concatenate %222, %223 in 1 : vector<16x128xbf16>, vector<16x128xbf16> -> vector<16x256xbf16>
    %c256 = arith.constant 256 : index
    %c0_152 = arith.constant 0 : index
    %225 = vector.load %arg11[%c256, %c0_152] : memref<376x256xbf16, #tpu.memory_space<vmem>>, vector<16x256xbf16>
    tpu.vector_store %arg11[%c256, %c0_152], %224 {strides = array<i32>} : memref<376x256xbf16, #tpu.memory_space<vmem>>, vector<16x256xbf16>,
    %c229 = arith.constant 229 : index
    %c0_153 = arith.constant 0 : index
    %226 = vector.load %arg11[%c229, %c0_153] : memref<376x256xbf16, #tpu.memory_space<vmem>>, vector<16x256xbf16>
    %c253 = arith.constant 253 : index
    %c0_154 = arith.constant 0 : index
    %227 = vector.load %arg11[%c253, %c0_154] : memref<376x256xbf16, #tpu.memory_space<vmem>>, vector<16x256xbf16>
    %228 = tpu.concatenate %226, %227 in 0 : vector<16x256xbf16>, vector<16x256xbf16> -> vector<32x256xbf16>
    %c2_155 = arith.constant 2 : index
    %c0_156 = arith.constant 0 : index
    %c0_157 = arith.constant 0 : index
    %c0_158 = arith.constant 0 : index
    %229 = vector.load %arg2[%c2_155, %c0_156, %c0_157, %c0_158] : memref<6x6x256x128xbf16, #tpu.memory_space<vmem>>, vector<1x1x256x128xbf16>
    %230 = vector.shape_cast %229 : vector<1x1x256x128xbf16> to vector<256x128xbf16>
    %cst_159 = arith.constant dense<0.000000e+00> : vector<32x128xf32>
    %231 = tpu.matmul %228, %230, %cst_159 {dimension_numbers = #tpu.dot_dimension_numbers<[1], [0], [0], [1], [0, 0, 1, 1], [], []>} : vector<32x256xbf16>, vector<256x128xbf16>, vector<32x128xf32> -> vector<32x128xf32>
    %c230 = arith.constant 230 : index
    %c0_160 = arith.constant 0 : index
    %232 = vector.load %arg11[%c230, %c0_160] : memref<376x256xbf16, #tpu.memory_space<vmem>>, vector<16x256xbf16>
    %c254 = arith.constant 254 : index
    %c0_161 = arith.constant 0 : index
    %233 = vector.load %arg11[%c254, %c0_161] : memref<376x256xbf16, #tpu.memory_space<vmem>>, vector<16x256xbf16>
    %234 = tpu.concatenate %232, %233 in 0 : vector<16x256xbf16>, vector<16x256xbf16> -> vector<32x256xbf16>
    %c2_162 = arith.constant 2 : index
    %c1_163 = arith.constant 1 : index
    %c0_164 = arith.constant 0 : index
    %c0_165 = arith.constant 0 : index
    %235 = vector.load %arg2[%c2_162, %c1_163, %c0_164, %c0_165] : memref<6x6x256x128xbf16, #tpu.memory_space<vmem>>, vector<1x1x256x128xbf16>
    %236 = vector.shape_cast %235 : vector<1x1x256x128xbf16> to vector<256x128xbf16>
    %cst_166 = arith.constant dense<0.000000e+00> : vector<32x128xf32>
    %237 = tpu.matmul %234, %236, %cst_166 {dimension_numbers = #tpu.dot_dimension_numbers<[1], [0], [0], [1], [0, 0, 1, 1], [], []>} : vector<32x256xbf16>, vector<256x128xbf16>, vector<32x128xf32> -> vector<32x128xf32>
    %238 = arith.addf %231, %237 : vector<32x128xf32>
    %c231 = arith.constant 231 : index
    %c0_167 = arith.constant 0 : index
    %239 = vector.load %arg11[%c231, %c0_167] : memref<376x256xbf16, #tpu.memory_space<vmem>>, vector<16x256xbf16>
    %c255 = arith.constant 255 : index
    %c0_168 = arith.constant 0 : index
    %240 = vector.load %arg11[%c255, %c0_168] : memref<376x256xbf16, #tpu.memory_space<vmem>>, vector<16x256xbf16>
    %241 = tpu.concatenate %239, %240 in 0 : vector<16x256xbf16>, vector<16x256xbf16> -> vector<32x256xbf16>
    %c2_169 = arith.constant 2 : index
    %c2_170 = arith.constant 2 : index
    %c0_171 = arith.constant 0 : index
    %c0_172 = arith.constant 0 : index
    %242 = vector.load %arg2[%c2_169, %c2_170, %c0_171, %c0_172] : memref<6x6x256x128xbf16, #tpu.memory_space<vmem>>, vector<1x1x256x128xbf16>
    %243 = vector.shape_cast %242 : vector<1x1x256x128xbf16> to vector<256x128xbf16>
    %cst_173 = arith.constant dense<0.000000e+00> : vector<32x128xf32>
    %244 = tpu.matmul %241, %243, %cst_173 {dimension_numbers = #tpu.dot_dimension_numbers<[1], [0], [0], [1], [0, 0, 1, 1], [], []>} : vector<32x256xbf16>, vector<256x128xbf16>, vector<32x128xf32> -> vector<32x128xf32>
    %245 = arith.addf %238, %244 : vector<32x128xf32>
    %c232_174 = arith.constant 232 : index
    %c0_175 = arith.constant 0 : index
    %246 = vector.load %arg11[%c232_174, %c0_175] : memref<376x256xbf16, #tpu.memory_space<vmem>>, vector<16x256xbf16>
    %c256_176 = arith.constant 256 : index
    %c0_177 = arith.constant 0 : index
    %247 = vector.load %arg11[%c256_176, %c0_177] : memref<376x256xbf16, #tpu.memory_space<vmem>>, vector<16x256xbf16>
    %248 = tpu.concatenate %246, %247 in 0 : vector<16x256xbf16>, vector<16x256xbf16> -> vector<32x256xbf16>
    %c2_178 = arith.constant 2 : index
    %c3_179 = arith.constant 3 : index
    %c0_180 = arith.constant 0 : index
    %c0_181 = arith.constant 0 : index
    %249 = vector.load %arg2[%c2_178, %c3_179, %c0_180, %c0_181] : memref<6x6x256x128xbf16, #tpu.memory_space<vmem>>, vector<1x1x256x128xbf16>
    %250 = vector.shape_cast %249 : vector<1x1x256x128xbf16> to vector<256x128xbf16>
    %cst_182 = arith.constant dense<0.000000e+00> : vector<32x128xf32>
    %251 = tpu.matmul %248, %250, %cst_182 {dimension_numbers = #tpu.dot_dimension_numbers<[1], [0], [0], [1], [0, 0, 1, 1], [], []>} : vector<32x256xbf16>, vector<256x128xbf16>, vector<32x128xf32> -> vector<32x128xf32>
    %252 = arith.addf %245, %251 : vector<32x128xf32>
    %c233 = arith.constant 233 : index
    %c0_183 = arith.constant 0 : index
    %253 = vector.load %arg11[%c233, %c0_183] : memref<376x256xbf16, #tpu.memory_space<vmem>>, vector<16x256xbf16>
    %c257 = arith.constant 257 : index
    %c0_184 = arith.constant 0 : index
    %254 = vector.load %arg11[%c257, %c0_184] : memref<376x256xbf16, #tpu.memory_space<vmem>>, vector<16x256xbf16>
    %255 = tpu.concatenate %253, %254 in 0 : vector<16x256xbf16>, vector<16x256xbf16> -> vector<32x256xbf16>
    %c2_185 = arith.constant 2 : index
    %c4_186 = arith.constant 4 : index
    %c0_187 = arith.constant 0 : index
    %c0_188 = arith.constant 0 : index
    %256 = vector.load %arg2[%c2_185, %c4_186, %c0_187, %c0_188] : memref<6x6x256x128xbf16, #tpu.memory_space<vmem>>, vector<1x1x256x128xbf16>
    %257 = vector.shape_cast %256 : vector<1x1x256x128xbf16> to vector<256x128xbf16>
    %cst_189 = arith.constant dense<0.000000e+00> : vector<32x128xf32>
    %258 = tpu.matmul %255, %257, %cst_189 {dimension_numbers = #tpu.dot_dimension_numbers<[1], [0], [0], [1], [0, 0, 1, 1], [], []>} : vector<32x256xbf16>, vector<256x128xbf16>, vector<32x128xf32> -> vector<32x128xf32>
    %259 = arith.addf %252, %258 : vector<32x128xf32>
    %c234 = arith.constant 234 : index
    %c0_190 = arith.constant 0 : index
    %260 = vector.load %arg11[%c234, %c0_190] : memref<376x256xbf16, #tpu.memory_space<vmem>>, vector<16x256xbf16>
    %c258 = arith.constant 258 : index
    %c0_191 = arith.constant 0 : index
    %261 = vector.load %arg11[%c258, %c0_191] : memref<376x256xbf16, #tpu.memory_space<vmem>>, vector<16x256xbf16>
    %262 = tpu.concatenate %260, %261 in 0 : vector<16x256xbf16>, vector<16x256xbf16> -> vector<32x256xbf16>
    %c2_192 = arith.constant 2 : index
    %c5_193 = arith.constant 5 : index
    %c0_194 = arith.constant 0 : index
    %c0_195 = arith.constant 0 : index
    %263 = vector.load %arg2[%c2_192, %c5_193, %c0_194, %c0_195] : memref<6x6x256x128xbf16, #tpu.memory_space<vmem>>, vector<1x1x256x128xbf16>
    %264 = vector.shape_cast %263 : vector<1x1x256x128xbf16> to vector<256x128xbf16>
    %cst_196 = arith.constant dense<0.000000e+00> : vector<32x128xf32>
    %265 = tpu.matmul %262, %264, %cst_196 {dimension_numbers = #tpu.dot_dimension_numbers<[1], [0], [0], [1], [0, 0, 1, 1], [], []>} : vector<32x256xbf16>, vector<256x128xbf16>, vector<32x128xf32> -> vector<32x128xf32>
    %266 = arith.addf %259, %265 : vector<32x128xf32>
    %cst_197 = arith.constant dense<0.000000e+00> : vector<128xf32>
    %267 = vector.multi_reduction <add>, %266, %cst_197 [0] : vector<32x128xf32> to vector<128xf32>
    %268 = vector.shape_cast %267 : vector<128xf32> to vector<1x128xf32>
    %269 = arith.mulf %266, %266 : vector<32x128xf32>
    %cst_198 = arith.constant dense<0.000000e+00> : vector<128xf32>
    %270 = vector.multi_reduction <add>, %269, %cst_198 [0] : vector<32x128xf32> to vector<128xf32>
    %271 = vector.shape_cast %270 : vector<128xf32> to vector<1x128xf32>
    %cst_199 = arith.constant 3.125000e-02 : f32
    %272 = vector.broadcast %cst_199 : f32 to vector<1x128xf32>
    %273 = arith.mulf %268, %272 : vector<1x128xf32>
    %cst_200 = arith.constant 3.125000e-02 : f32
    %274 = vector.broadcast %cst_200 : f32 to vector<1x128xf32>
    %275 = arith.mulf %271, %274 : vector<1x128xf32>
    %276 = arith.mulf %273, %273 : vector<1x128xf32>
    %277 = arith.subf %275, %276 : vector<1x128xf32>
    %cst_201 = arith.constant 0.000000e+00 : f32
    %278 = vector.broadcast %cst_201 : f32 to vector<1x128xf32>
    %279 = arith.maximumf %277, %278 : vector<1x128xf32>
    %c3_202 = arith.constant 3 : index
    %c0_203 = arith.constant 0 : index
    %280 = vector.load %arg5[%c3_202, %c0_203] : memref<7x128xf32, #tpu.memory_space<vmem>>, vector<1x128xf32>
    %c3_204 = arith.constant 3 : index
    %c0_205 = arith.constant 0 : index
    %281 = vector.load %arg6[%c3_204, %c0_205] : memref<7x128xf32, #tpu.memory_space<vmem>>, vector<1x128xf32>
    %c3_206 = arith.constant 3 : index
    %c0_207 = arith.constant 0 : index
    %282 = vector.load %arg7[%c3_206, %c0_207] : memref<7x128xf32, #tpu.memory_space<vmem>>, vector<1x128xf32>
    %cst_208 = arith.constant 9.99999974E-6 : f32
    %283 = vector.broadcast %cst_208 : f32 to vector<1x128xf32>
    %284 = arith.addf %279, %283 : vector<1x128xf32>
    %285 = math.rsqrt %284 : vector<1x128xf32>
    %286 = arith.mulf %280, %285 : vector<1x128xf32>
    %287 = arith.mulf %273, %286 : vector<1x128xf32>
    %288 = arith.subf %281, %287 : vector<1x128xf32>
    %289 = vector.broadcast %286 : vector<1x128xf32> to vector<32x128xf32>
    %290 = arith.mulf %266, %289 : vector<32x128xf32>
    %291 = vector.broadcast %288 : vector<1x128xf32> to vector<32x128xf32>
    %292 = arith.addf %290, %291 : vector<32x128xf32>
    %cst_209 = arith.constant 0.000000e+00 : f32
    %293 = vector.broadcast %cst_209 : f32 to vector<32x128xf32>
    %294 = arith.cmpf ogt, %292, %293 : vector<32x128xf32>
    %295 = vector.broadcast %282 : vector<1x128xf32> to vector<32x128xf32>
    %296 = arith.mulf %295, %292 : vector<32x128xf32>
    %297 = arith.select %294, %292, %296 : vector<32x128xi1>, vector<32x128xf32>
    %298 = arith.truncf %297 : vector<32x128xf32> to vector<32x128xbf16>
    %c0_210 = arith.constant 0 : index
    %c0_211 = arith.constant 0 : index
    %299 = vector.load %arg3[%c0_210, %c0_211] : memref<128x256xbf16, #tpu.memory_space<vmem>>, vector<16x32xbf16>
    %cst_212 = arith.constant dense<0.000000e+00> : vector<16x128xf32>
    %300 = tpu.matmul %299, %298, %cst_212 {dimension_numbers = #tpu.dot_dimension_numbers<[1], [0], [0], [1], [0, 0, 1, 1], [], []>} : vector<16x32xbf16>, vector<32x128xbf16>, vector<16x128xf32> -> vector<16x128xf32>
    %301 = arith.truncf %300 : vector<16x128xf32> to vector<16x128xbf16>
    %c0_213 = arith.constant 0 : index
    %c0_214 = arith.constant 0 : index
    %302 = vector.load %arg4[%c0_213, %c0_214] : memref<128x256xbf16, #tpu.memory_space<vmem>>, vector<16x32xbf16>
    %cst_215 = arith.constant dense<0.000000e+00> : vector<16x128xf32>
    %303 = tpu.matmul %302, %298, %cst_215 {dimension_numbers = #tpu.dot_dimension_numbers<[1], [0], [0], [1], [0, 0, 1, 1], [], []>} : vector<16x32xbf16>, vector<32x128xbf16>, vector<16x128xf32> -> vector<16x128xf32>
    %304 = arith.truncf %303 : vector<16x128xf32> to vector<16x128xbf16>
    %305 = vector.extract_strided_slice %301 {offsets = [0, 0], sizes = [8, 128], strides = [1, 1]} : vector<16x128xbf16> to vector<8x128xbf16>
    %306 = vector.extract_strided_slice %304 {offsets = [0, 0], sizes = [8, 128], strides = [1, 1]} : vector<16x128xbf16> to vector<8x128xbf16>
    %307 = tpu.concatenate %305, %306 in 1 : vector<8x128xbf16>, vector<8x128xbf16> -> vector<8x256xbf16>
    %c280 = arith.constant 280 : index
    %c0_216 = arith.constant 0 : index
    %308 = vector.load %arg11[%c280, %c0_216] : memref<376x256xbf16, #tpu.memory_space<vmem>>, vector<8x256xbf16>
    tpu.vector_store %arg11[%c280, %c0_216], %307 {strides = array<i32>} : memref<376x256xbf16, #tpu.memory_space<vmem>>, vector<8x256xbf16>,
    %309 = vector.extract_strided_slice %301 {offsets = [8, 0], sizes = [8, 128], strides = [1, 1]} : vector<16x128xbf16> to vector<8x128xbf16>
    %310 = vector.extract_strided_slice %304 {offsets = [8, 0], sizes = [8, 128], strides = [1, 1]} : vector<16x128xbf16> to vector<8x128xbf16>
    %311 = tpu.concatenate %309, %310 in 1 : vector<8x128xbf16>, vector<8x128xbf16> -> vector<8x256xbf16>
    %c296 = arith.constant 296 : index
    %c0_217 = arith.constant 0 : index
    %312 = vector.load %arg11[%c296, %c0_217] : memref<376x256xbf16, #tpu.memory_space<vmem>>, vector<8x256xbf16>
    tpu.vector_store %arg11[%c296, %c0_217], %311 {strides = array<i32>} : memref<376x256xbf16, #tpu.memory_space<vmem>>, vector<8x256xbf16>,
    %c277 = arith.constant 277 : index
    %c0_218 = arith.constant 0 : index
    %313 = vector.load %arg11[%c277, %c0_218] : memref<376x256xbf16, #tpu.memory_space<vmem>>, vector<8x256xbf16>
    %c293 = arith.constant 293 : index
    %c0_219 = arith.constant 0 : index
    %314 = vector.load %arg11[%c293, %c0_219] : memref<376x256xbf16, #tpu.memory_space<vmem>>, vector<8x256xbf16>
    %315 = tpu.concatenate %313, %314 in 0 : vector<8x256xbf16>, vector<8x256xbf16> -> vector<16x256xbf16>
    %c3_220 = arith.constant 3 : index
    %c0_221 = arith.constant 0 : index
    %c0_222 = arith.constant 0 : index
    %c0_223 = arith.constant 0 : index
    %316 = vector.load %arg2[%c3_220, %c0_221, %c0_222, %c0_223] : memref<6x6x256x128xbf16, #tpu.memory_space<vmem>>, vector<1x1x256x128xbf16>
    %317 = vector.shape_cast %316 : vector<1x1x256x128xbf16> to vector<256x128xbf16>
    %cst_224 = arith.constant dense<0.000000e+00> : vector<16x128xf32>
    %318 = tpu.matmul %315, %317, %cst_224 {dimension_numbers = #tpu.dot_dimension_numbers<[1], [0], [0], [1], [0, 0, 1, 1], [], []>} : vector<16x256xbf16>, vector<256x128xbf16>, vector<16x128xf32> -> vector<16x128xf32>
    %c278 = arith.constant 278 : index
    %c0_225 = arith.constant 0 : index
    %319 = vector.load %arg11[%c278, %c0_225] : memref<376x256xbf16, #tpu.memory_space<vmem>>, vector<8x256xbf16>
    %c294 = arith.constant 294 : index
    %c0_226 = arith.constant 0 : index
    %320 = vector.load %arg11[%c294, %c0_226] : memref<376x256xbf16, #tpu.memory_space<vmem>>, vector<8x256xbf16>
    %321 = tpu.concatenate %319, %320 in 0 : vector<8x256xbf16>, vector<8x256xbf16> -> vector<16x256xbf16>
    %c3_227 = arith.constant 3 : index
    %c1_228 = arith.constant 1 : index
    %c0_229 = arith.constant 0 : index
    %c0_230 = arith.constant 0 : index
    %322 = vector.load %arg2[%c3_227, %c1_228, %c0_229, %c0_230] : memref<6x6x256x128xbf16, #tpu.memory_space<vmem>>, vector<1x1x256x128xbf16>
    %323 = vector.shape_cast %322 : vector<1x1x256x128xbf16> to vector<256x128xbf16>
    %cst_231 = arith.constant dense<0.000000e+00> : vector<16x128xf32>
    %324 = tpu.matmul %321, %323, %cst_231 {dimension_numbers = #tpu.dot_dimension_numbers<[1], [0], [0], [1], [0, 0, 1, 1], [], []>} : vector<16x256xbf16>, vector<256x128xbf16>, vector<16x128xf32> -> vector<16x128xf32>
    %325 = arith.addf %318, %324 : vector<16x128xf32>
    %c279 = arith.constant 279 : index
    %c0_232 = arith.constant 0 : index
    %326 = vector.load %arg11[%c279, %c0_232] : memref<376x256xbf16, #tpu.memory_space<vmem>>, vector<8x256xbf16>
    %c295 = arith.constant 295 : index
    %c0_233 = arith.constant 0 : index
    %327 = vector.load %arg11[%c295, %c0_233] : memref<376x256xbf16, #tpu.memory_space<vmem>>, vector<8x256xbf16>
    %328 = tpu.concatenate %326, %327 in 0 : vector<8x256xbf16>, vector<8x256xbf16> -> vector<16x256xbf16>
    %c3_234 = arith.constant 3 : index
    %c2_235 = arith.constant 2 : index
    %c0_236 = arith.constant 0 : index
    %c0_237 = arith.constant 0 : index
    %329 = vector.load %arg2[%c3_234, %c2_235, %c0_236, %c0_237] : memref<6x6x256x128xbf16, #tpu.memory_space<vmem>>, vector<1x1x256x128xbf16>
    %330 = vector.shape_cast %329 : vector<1x1x256x128xbf16> to vector<256x128xbf16>
    %cst_238 = arith.constant dense<0.000000e+00> : vector<16x128xf32>
    %331 = tpu.matmul %328, %330, %cst_238 {dimension_numbers = #tpu.dot_dimension_numbers<[1], [0], [0], [1], [0, 0, 1, 1], [], []>} : vector<16x256xbf16>, vector<256x128xbf16>, vector<16x128xf32> -> vector<16x128xf32>
    %332 = arith.addf %325, %331 : vector<16x128xf32>
    %c280_239 = arith.constant 280 : index
    %c0_240 = arith.constant 0 : index
    %333 = vector.load %arg11[%c280_239, %c0_240] : memref<376x256xbf16, #tpu.memory_space<vmem>>, vector<8x256xbf16>
    %c296_241 = arith.constant 296 : index
    %c0_242 = arith.constant 0 : index
    %334 = vector.load %arg11[%c296_241, %c0_242] : memref<376x256xbf16, #tpu.memory_space<vmem>>, vector<8x256xbf16>
    %335 = tpu.concatenate %333, %334 in 0 : vector<8x256xbf16>, vector<8x256xbf16> -> vector<16x256xbf16>
    %c3_243 = arith.constant 3 : index
    %c3_244 = arith.constant 3 : index
    %c0_245 = arith.constant 0 : index
    %c0_246 = arith.constant 0 : index
    %336 = vector.load %arg2[%c3_243, %c3_244, %c0_245, %c0_246] : memref<6x6x256x128xbf16, #tpu.memory_space<vmem>>, vector<1x1x256x128xbf16>
    %337 = vector.shape_cast %336 : vector<1x1x256x128xbf16> to vector<256x128xbf16>
    %cst_247 = arith.constant dense<0.000000e+00> : vector<16x128xf32>
    %338 = tpu.matmul %335, %337, %cst_247 {dimension_numbers = #tpu.dot_dimension_numbers<[1], [0], [0], [1], [0, 0, 1, 1], [], []>} : vector<16x256xbf16>, vector<256x128xbf16>, vector<16x128xf32> -> vector<16x128xf32>
    %339 = arith.addf %332, %338 : vector<16x128xf32>
    %c281 = arith.constant 281 : index
    %c0_248 = arith.constant 0 : index
    %340 = vector.load %arg11[%c281, %c0_248] : memref<376x256xbf16, #tpu.memory_space<vmem>>, vector<8x256xbf16>
    %c297 = arith.constant 297 : index
    %c0_249 = arith.constant 0 : index
    %341 = vector.load %arg11[%c297, %c0_249] : memref<376x256xbf16, #tpu.memory_space<vmem>>, vector<8x256xbf16>
    %342 = tpu.concatenate %340, %341 in 0 : vector<8x256xbf16>, vector<8x256xbf16> -> vector<16x256xbf16>
    %c3_250 = arith.constant 3 : index
    %c4_251 = arith.constant 4 : index
    %c0_252 = arith.constant 0 : index
    %c0_253 = arith.constant 0 : index
    %343 = vector.load %arg2[%c3_250, %c4_251, %c0_252, %c0_253] : memref<6x6x256x128xbf16, #tpu.memory_space<vmem>>, vector<1x1x256x128xbf16>
    %344 = vector.shape_cast %343 : vector<1x1x256x128xbf16> to vector<256x128xbf16>
    %cst_254 = arith.constant dense<0.000000e+00> : vector<16x128xf32>
    %345 = tpu.matmul %342, %344, %cst_254 {dimension_numbers = #tpu.dot_dimension_numbers<[1], [0], [0], [1], [0, 0, 1, 1], [], []>} : vector<16x256xbf16>, vector<256x128xbf16>, vector<16x128xf32> -> vector<16x128xf32>
    %346 = arith.addf %339, %345 : vector<16x128xf32>
    %c282 = arith.constant 282 : index
    %c0_255 = arith.constant 0 : index
    %347 = vector.load %arg11[%c282, %c0_255] : memref<376x256xbf16, #tpu.memory_space<vmem>>, vector<8x256xbf16>
    %c298 = arith.constant 298 : index
    %c0_256 = arith.constant 0 : index
    %348 = vector.load %arg11[%c298, %c0_256] : memref<376x256xbf16, #tpu.memory_space<vmem>>, vector<8x256xbf16>
    %349 = tpu.concatenate %347, %348 in 0 : vector<8x256xbf16>, vector<8x256xbf16> -> vector<16x256xbf16>
    %c3_257 = arith.constant 3 : index
    %c5_258 = arith.constant 5 : index
    %c0_259 = arith.constant 0 : index
    %c0_260 = arith.constant 0 : index
    %350 = vector.load %arg2[%c3_257, %c5_258, %c0_259, %c0_260] : memref<6x6x256x128xbf16, #tpu.memory_space<vmem>>, vector<1x1x256x128xbf16>
    %351 = vector.shape_cast %350 : vector<1x1x256x128xbf16> to vector<256x128xbf16>
    %cst_261 = arith.constant dense<0.000000e+00> : vector<16x128xf32>
    %352 = tpu.matmul %349, %351, %cst_261 {dimension_numbers = #tpu.dot_dimension_numbers<[1], [0], [0], [1], [0, 0, 1, 1], [], []>} : vector<16x256xbf16>, vector<256x128xbf16>, vector<16x128xf32> -> vector<16x128xf32>
    %353 = arith.addf %346, %352 : vector<16x128xf32>
    %cst_262 = arith.constant dense<0.000000e+00> : vector<128xf32>
    %354 = vector.multi_reduction <add>, %353, %cst_262 [0] : vector<16x128xf32> to vector<128xf32>
    %355 = vector.shape_cast %354 : vector<128xf32> to vector<1x128xf32>
    %356 = arith.mulf %353, %353 : vector<16x128xf32>
    %cst_263 = arith.constant dense<0.000000e+00> : vector<128xf32>
    %357 = vector.multi_reduction <add>, %356, %cst_263 [0] : vector<16x128xf32> to vector<128xf32>
    %358 = vector.shape_cast %357 : vector<128xf32> to vector<1x128xf32>
    %cst_264 = arith.constant 6.250000e-02 : f32
    %359 = vector.broadcast %cst_264 : f32 to vector<1x128xf32>
    %360 = arith.mulf %355, %359 : vector<1x128xf32>
    %cst_265 = arith.constant 6.250000e-02 : f32
    %361 = vector.broadcast %cst_265 : f32 to vector<1x128xf32>
    %362 = arith.mulf %358, %361 : vector<1x128xf32>
    %363 = arith.mulf %360, %360 : vector<1x128xf32>
    %364 = arith.subf %362, %363 : vector<1x128xf32>
    %cst_266 = arith.constant 0.000000e+00 : f32
    %365 = vector.broadcast %cst_266 : f32 to vector<1x128xf32>
    %366 = arith.maximumf %364, %365 : vector<1x128xf32>
    %c4_267 = arith.constant 4 : index
    %c0_268 = arith.constant 0 : index
    %367 = vector.load %arg5[%c4_267, %c0_268] : memref<7x128xf32, #tpu.memory_space<vmem>>, vector<1x128xf32>
    %c4_269 = arith.constant 4 : index
    %c0_270 = arith.constant 0 : index
    %368 = vector.load %arg6[%c4_269, %c0_270] : memref<7x128xf32, #tpu.memory_space<vmem>>, vector<1x128xf32>
    %c4_271 = arith.constant 4 : index
    %c0_272 = arith.constant 0 : index
    %369 = vector.load %arg7[%c4_271, %c0_272] : memref<7x128xf32, #tpu.memory_space<vmem>>, vector<1x128xf32>
    %cst_273 = arith.constant 9.99999974E-6 : f32
    %370 = vector.broadcast %cst_273 : f32 to vector<1x128xf32>
    %371 = arith.addf %366, %370 : vector<1x128xf32>
    %372 = math.rsqrt %371 : vector<1x128xf32>
    %373 = arith.mulf %367, %372 : vector<1x128xf32>
    %374 = arith.mulf %360, %373 : vector<1x128xf32>
    %375 = arith.subf %368, %374 : vector<1x128xf32>
    %376 = vector.broadcast %373 : vector<1x128xf32> to vector<16x128xf32>
    %377 = arith.mulf %353, %376 : vector<16x128xf32>
    %378 = vector.broadcast %375 : vector<1x128xf32> to vector<16x128xf32>
    %379 = arith.addf %377, %378 : vector<16x128xf32>
    %cst_274 = arith.constant 0.000000e+00 : f32
    %380 = vector.broadcast %cst_274 : f32 to vector<16x128xf32>
    %381 = arith.cmpf ogt, %379, %380 : vector<16x128xf32>
    %382 = vector.broadcast %369 : vector<1x128xf32> to vector<16x128xf32>
    %383 = arith.mulf %382, %379 : vector<16x128xf32>
    %384 = arith.select %381, %379, %383 : vector<16x128xi1>, vector<16x128xf32>
    %385 = arith.truncf %384 : vector<16x128xf32> to vector<16x128xbf16>
    %c0_275 = arith.constant 0 : index
    %c0_276 = arith.constant 0 : index
    %386 = vector.load %arg3[%c0_275, %c0_276] : memref<128x256xbf16, #tpu.memory_space<vmem>>, vector<8x16xbf16>
    %cst_277 = arith.constant dense<0.000000e+00> : vector<8x128xf32>
    %387 = tpu.matmul %386, %385, %cst_277 {dimension_numbers = #tpu.dot_dimension_numbers<[1], [0], [0], [1], [0, 0, 1, 1], [], []>} : vector<8x16xbf16>, vector<16x128xbf16>, vector<8x128xf32> -> vector<8x128xf32>
    %388 = arith.truncf %387 : vector<8x128xf32> to vector<8x128xbf16>
    %c0_278 = arith.constant 0 : index
    %c0_279 = arith.constant 0 : index
    %389 = vector.load %arg4[%c0_278, %c0_279] : memref<128x256xbf16, #tpu.memory_space<vmem>>, vector<8x16xbf16>
    %cst_280 = arith.constant dense<0.000000e+00> : vector<8x128xf32>
    %390 = tpu.matmul %389, %385, %cst_280 {dimension_numbers = #tpu.dot_dimension_numbers<[1], [0], [0], [1], [0, 0, 1, 1], [], []>} : vector<8x16xbf16>, vector<16x128xbf16>, vector<8x128xf32> -> vector<8x128xf32>
    %391 = arith.truncf %390 : vector<8x128xf32> to vector<8x128xbf16>
    %392 = vector.extract_strided_slice %388 {offsets = [0, 0], sizes = [4, 128], strides = [1, 1]} : vector<8x128xbf16> to vector<4x128xbf16>
    %393 = vector.extract_strided_slice %391 {offsets = [0, 0], sizes = [4, 128], strides = [1, 1]} : vector<8x128xbf16> to vector<4x128xbf16>
    %394 = tpu.concatenate %392, %393 in 1 : vector<4x128xbf16>, vector<4x128xbf16> -> vector<4x256xbf16>
    %c312 = arith.constant 312 : index
    %c0_281 = arith.constant 0 : index
    %395 = vector.load %arg11[%c312, %c0_281] : memref<376x256xbf16, #tpu.memory_space<vmem>>, vector<4x256xbf16>
    tpu.vector_store %arg11[%c312, %c0_281], %394 {strides = array<i32>} : memref<376x256xbf16, #tpu.memory_space<vmem>>, vector<4x256xbf16>,
    %396 = vector.extract_strided_slice %388 {offsets = [4, 0], sizes = [4, 128], strides = [1, 1]} : vector<8x128xbf16> to vector<4x128xbf16>
    %397 = vector.extract_strided_slice %391 {offsets = [4, 0], sizes = [4, 128], strides = [1, 1]} : vector<8x128xbf16> to vector<4x128xbf16>
    %398 = tpu.concatenate %396, %397 in 1 : vector<4x128xbf16>, vector<4x128xbf16> -> vector<4x256xbf16>
    %c328 = arith.constant 328 : index
    %c0_282 = arith.constant 0 : index
    %399 = vector.load %arg11[%c328, %c0_282] : memref<376x256xbf16, #tpu.memory_space<vmem>>, vector<4x256xbf16>
    tpu.vector_store %arg11[%c328, %c0_282], %398 {strides = array<i32>} : memref<376x256xbf16, #tpu.memory_space<vmem>>, vector<4x256xbf16>,
    %c309 = arith.constant 309 : index
    %c0_283 = arith.constant 0 : index
    %400 = vector.load %arg11[%c309, %c0_283] : memref<376x256xbf16, #tpu.memory_space<vmem>>, vector<4x256xbf16>
    %c325 = arith.constant 325 : index
    %c0_284 = arith.constant 0 : index
    %401 = vector.load %arg11[%c325, %c0_284] : memref<376x256xbf16, #tpu.memory_space<vmem>>, vector<4x256xbf16>
    %402 = tpu.concatenate %400, %401 in 0 : vector<4x256xbf16>, vector<4x256xbf16> -> vector<8x256xbf16>
    %c4_285 = arith.constant 4 : index
    %c0_286 = arith.constant 0 : index
    %c0_287 = arith.constant 0 : index
    %c0_288 = arith.constant 0 : index
    %403 = vector.load %arg2[%c4_285, %c0_286, %c0_287, %c0_288] : memref<6x6x256x128xbf16, #tpu.memory_space<vmem>>, vector<1x1x256x128xbf16>
    %404 = vector.shape_cast %403 : vector<1x1x256x128xbf16> to vector<256x128xbf16>
    %cst_289 = arith.constant dense<0.000000e+00> : vector<8x128xf32>
    %405 = tpu.matmul %402, %404, %cst_289 {dimension_numbers = #tpu.dot_dimension_numbers<[1], [0], [0], [1], [0, 0, 1, 1], [], []>} : vector<8x256xbf16>, vector<256x128xbf16>, vector<8x128xf32> -> vector<8x128xf32>
    %c310 = arith.constant 310 : index
    %c0_290 = arith.constant 0 : index
    %406 = vector.load %arg11[%c310, %c0_290] : memref<376x256xbf16, #tpu.memory_space<vmem>>, vector<4x256xbf16>
    %c326 = arith.constant 326 : index
    %c0_291 = arith.constant 0 : index
    %407 = vector.load %arg11[%c326, %c0_291] : memref<376x256xbf16, #tpu.memory_space<vmem>>, vector<4x256xbf16>
    %408 = tpu.concatenate %406, %407 in 0 : vector<4x256xbf16>, vector<4x256xbf16> -> vector<8x256xbf16>
    %c4_292 = arith.constant 4 : index
    %c1_293 = arith.constant 1 : index
    %c0_294 = arith.constant 0 : index
    %c0_295 = arith.constant 0 : index
    %409 = vector.load %arg2[%c4_292, %c1_293, %c0_294, %c0_295] : memref<6x6x256x128xbf16, #tpu.memory_space<vmem>>, vector<1x1x256x128xbf16>
    %410 = vector.shape_cast %409 : vector<1x1x256x128xbf16> to vector<256x128xbf16>
    %cst_296 = arith.constant dense<0.000000e+00> : vector<8x128xf32>
    %411 = tpu.matmul %408, %410, %cst_296 {dimension_numbers = #tpu.dot_dimension_numbers<[1], [0], [0], [1], [0, 0, 1, 1], [], []>} : vector<8x256xbf16>, vector<256x128xbf16>, vector<8x128xf32> -> vector<8x128xf32>
    %412 = arith.addf %405, %411 : vector<8x128xf32>
    %c311 = arith.constant 311 : index
    %c0_297 = arith.constant 0 : index
    %413 = vector.load %arg11[%c311, %c0_297] : memref<376x256xbf16, #tpu.memory_space<vmem>>, vector<4x256xbf16>
    %c327 = arith.constant 327 : index
    %c0_298 = arith.constant 0 : index
    %414 = vector.load %arg11[%c327, %c0_298] : memref<376x256xbf16, #tpu.memory_space<vmem>>, vector<4x256xbf16>
    %415 = tpu.concatenate %413, %414 in 0 : vector<4x256xbf16>, vector<4x256xbf16> -> vector<8x256xbf16>
    %c4_299 = arith.constant 4 : index
    %c2_300 = arith.constant 2 : index
    %c0_301 = arith.constant 0 : index
    %c0_302 = arith.constant 0 : index
    %416 = vector.load %arg2[%c4_299, %c2_300, %c0_301, %c0_302] : memref<6x6x256x128xbf16, #tpu.memory_space<vmem>>, vector<1x1x256x128xbf16>
    %417 = vector.shape_cast %416 : vector<1x1x256x128xbf16> to vector<256x128xbf16>
    %cst_303 = arith.constant dense<0.000000e+00> : vector<8x128xf32>
    %418 = tpu.matmul %415, %417, %cst_303 {dimension_numbers = #tpu.dot_dimension_numbers<[1], [0], [0], [1], [0, 0, 1, 1], [], []>} : vector<8x256xbf16>, vector<256x128xbf16>, vector<8x128xf32> -> vector<8x128xf32>
    %419 = arith.addf %412, %418 : vector<8x128xf32>
    %c312_304 = arith.constant 312 : index
    %c0_305 = arith.constant 0 : index
    %420 = vector.load %arg11[%c312_304, %c0_305] : memref<376x256xbf16, #tpu.memory_space<vmem>>, vector<4x256xbf16>
    %c328_306 = arith.constant 328 : index
    %c0_307 = arith.constant 0 : index
    %421 = vector.load %arg11[%c328_306, %c0_307] : memref<376x256xbf16, #tpu.memory_space<vmem>>, vector<4x256xbf16>
    %422 = tpu.concatenate %420, %421 in 0 : vector<4x256xbf16>, vector<4x256xbf16> -> vector<8x256xbf16>
    %c4_308 = arith.constant 4 : index
    %c3_309 = arith.constant 3 : index
    %c0_310 = arith.constant 0 : index
    %c0_311 = arith.constant 0 : index
    %423 = vector.load %arg2[%c4_308, %c3_309, %c0_310, %c0_311] : memref<6x6x256x128xbf16, #tpu.memory_space<vmem>>, vector<1x1x256x128xbf16>
    %424 = vector.shape_cast %423 : vector<1x1x256x128xbf16> to vector<256x128xbf16>
    %cst_312 = arith.constant dense<0.000000e+00> : vector<8x128xf32>
    %425 = tpu.matmul %422, %424, %cst_312 {dimension_numbers = #tpu.dot_dimension_numbers<[1], [0], [0], [1], [0, 0, 1, 1], [], []>} : vector<8x256xbf16>, vector<256x128xbf16>, vector<8x128xf32> -> vector<8x128xf32>
    %426 = arith.addf %419, %425 : vector<8x128xf32>
    %c313 = arith.constant 313 : index
    %c0_313 = arith.constant 0 : index
    %427 = vector.load %arg11[%c313, %c0_313] : memref<376x256xbf16, #tpu.memory_space<vmem>>, vector<4x256xbf16>
    %c329 = arith.constant 329 : index
    %c0_314 = arith.constant 0 : index
    %428 = vector.load %arg11[%c329, %c0_314] : memref<376x256xbf16, #tpu.memory_space<vmem>>, vector<4x256xbf16>
    %429 = tpu.concatenate %427, %428 in 0 : vector<4x256xbf16>, vector<4x256xbf16> -> vector<8x256xbf16>
    %c4_315 = arith.constant 4 : index
    %c4_316 = arith.constant 4 : index
    %c0_317 = arith.constant 0 : index
    %c0_318 = arith.constant 0 : index
    %430 = vector.load %arg2[%c4_315, %c4_316, %c0_317, %c0_318] : memref<6x6x256x128xbf16, #tpu.memory_space<vmem>>, vector<1x1x256x128xbf16>
    %431 = vector.shape_cast %430 : vector<1x1x256x128xbf16> to vector<256x128xbf16>
    %cst_319 = arith.constant dense<0.000000e+00> : vector<8x128xf32>
    %432 = tpu.matmul %429, %431, %cst_319 {dimension_numbers = #tpu.dot_dimension_numbers<[1], [0], [0], [1], [0, 0, 1, 1], [], []>} : vector<8x256xbf16>, vector<256x128xbf16>, vector<8x128xf32> -> vector<8x128xf32>
    %433 = arith.addf %426, %432 : vector<8x128xf32>
    %c314 = arith.constant 314 : index
    %c0_320 = arith.constant 0 : index
    %434 = vector.load %arg11[%c314, %c0_320] : memref<376x256xbf16, #tpu.memory_space<vmem>>, vector<4x256xbf16>
    %c330 = arith.constant 330 : index
    %c0_321 = arith.constant 0 : index
    %435 = vector.load %arg11[%c330, %c0_321] : memref<376x256xbf16, #tpu.memory_space<vmem>>, vector<4x256xbf16>
    %436 = tpu.concatenate %434, %435 in 0 : vector<4x256xbf16>, vector<4x256xbf16> -> vector<8x256xbf16>
    %c4_322 = arith.constant 4 : index
    %c5_323 = arith.constant 5 : index
    %c0_324 = arith.constant 0 : index
    %c0_325 = arith.constant 0 : index
    %437 = vector.load %arg2[%c4_322, %c5_323, %c0_324, %c0_325] : memref<6x6x256x128xbf16, #tpu.memory_space<vmem>>, vector<1x1x256x128xbf16>
    %438 = vector.shape_cast %437 : vector<1x1x256x128xbf16> to vector<256x128xbf16>
    %cst_326 = arith.constant dense<0.000000e+00> : vector<8x128xf32>
    %439 = tpu.matmul %436, %438, %cst_326 {dimension_numbers = #tpu.dot_dimension_numbers<[1], [0], [0], [1], [0, 0, 1, 1], [], []>} : vector<8x256xbf16>, vector<256x128xbf16>, vector<8x128xf32> -> vector<8x128xf32>
    %440 = arith.addf %433, %439 : vector<8x128xf32>
    %cst_327 = arith.constant dense<0.000000e+00> : vector<128xf32>
    %441 = vector.multi_reduction <add>, %440, %cst_327 [0] : vector<8x128xf32> to vector<128xf32>
    %442 = vector.shape_cast %441 : vector<128xf32> to vector<1x128xf32>
    %443 = arith.mulf %440, %440 : vector<8x128xf32>
    %cst_328 = arith.constant dense<0.000000e+00> : vector<128xf32>
    %444 = vector.multi_reduction <add>, %443, %cst_328 [0] : vector<8x128xf32> to vector<128xf32>
    %445 = vector.shape_cast %444 : vector<128xf32> to vector<1x128xf32>
    %cst_329 = arith.constant 1.250000e-01 : f32
    %446 = vector.broadcast %cst_329 : f32 to vector<1x128xf32>
    %447 = arith.mulf %442, %446 : vector<1x128xf32>
    %cst_330 = arith.constant 1.250000e-01 : f32
    %448 = vector.broadcast %cst_330 : f32 to vector<1x128xf32>
    %449 = arith.mulf %445, %448 : vector<1x128xf32>
    %450 = arith.mulf %447, %447 : vector<1x128xf32>
    %451 = arith.subf %449, %450 : vector<1x128xf32>
    %cst_331 = arith.constant 0.000000e+00 : f32
    %452 = vector.broadcast %cst_331 : f32 to vector<1x128xf32>
    %453 = arith.maximumf %451, %452 : vector<1x128xf32>
    %c5_332 = arith.constant 5 : index
    %c0_333 = arith.constant 0 : index
    %454 = vector.load %arg5[%c5_332, %c0_333] : memref<7x128xf32, #tpu.memory_space<vmem>>, vector<1x128xf32>
    %c5_334 = arith.constant 5 : index
    %c0_335 = arith.constant 0 : index
    %455 = vector.load %arg6[%c5_334, %c0_335] : memref<7x128xf32, #tpu.memory_space<vmem>>, vector<1x128xf32>
    %c5_336 = arith.constant 5 : index
    %c0_337 = arith.constant 0 : index
    %456 = vector.load %arg7[%c5_336, %c0_337] : memref<7x128xf32, #tpu.memory_space<vmem>>, vector<1x128xf32>
    %cst_338 = arith.constant 9.99999974E-6 : f32
    %457 = vector.broadcast %cst_338 : f32 to vector<1x128xf32>
    %458 = arith.addf %453, %457 : vector<1x128xf32>
    %459 = math.rsqrt %458 : vector<1x128xf32>
    %460 = arith.mulf %454, %459 : vector<1x128xf32>
    %461 = arith.mulf %447, %460 : vector<1x128xf32>
    %462 = arith.subf %455, %461 : vector<1x128xf32>
    %463 = vector.broadcast %460 : vector<1x128xf32> to vector<8x128xf32>
    %464 = arith.mulf %440, %463 : vector<8x128xf32>
    %465 = vector.broadcast %462 : vector<1x128xf32> to vector<8x128xf32>
    %466 = arith.addf %464, %465 : vector<8x128xf32>
    %cst_339 = arith.constant 0.000000e+00 : f32
    %467 = vector.broadcast %cst_339 : f32 to vector<8x128xf32>
    %468 = arith.cmpf ogt, %466, %467 : vector<8x128xf32>
    %469 = vector.broadcast %456 : vector<1x128xf32> to vector<8x128xf32>
    %470 = arith.mulf %469, %466 : vector<8x128xf32>
    %471 = arith.select %468, %466, %470 : vector<8x128xi1>, vector<8x128xf32>
    %472 = arith.truncf %471 : vector<8x128xf32> to vector<8x128xbf16>
    %c0_340 = arith.constant 0 : index
    %c0_341 = arith.constant 0 : index
    %473 = vector.load %arg3[%c0_340, %c0_341] : memref<128x256xbf16, #tpu.memory_space<vmem>>, vector<4x8xbf16>
    %cst_342 = arith.constant dense<0.000000e+00> : vector<4x128xf32>
    %474 = tpu.matmul %473, %472, %cst_342 {dimension_numbers = #tpu.dot_dimension_numbers<[1], [0], [0], [1], [0, 0, 1, 1], [], []>} : vector<4x8xbf16>, vector<8x128xbf16>, vector<4x128xf32> -> vector<4x128xf32>
    %475 = arith.truncf %474 : vector<4x128xf32> to vector<4x128xbf16>
    %c0_343 = arith.constant 0 : index
    %c0_344 = arith.constant 0 : index
    %476 = vector.load %arg4[%c0_343, %c0_344] : memref<128x256xbf16, #tpu.memory_space<vmem>>, vector<4x8xbf16>
    %cst_345 = arith.constant dense<0.000000e+00> : vector<4x128xf32>
    %477 = tpu.matmul %476, %472, %cst_345 {dimension_numbers = #tpu.dot_dimension_numbers<[1], [0], [0], [1], [0, 0, 1, 1], [], []>} : vector<4x8xbf16>, vector<8x128xbf16>, vector<4x128xf32> -> vector<4x128xf32>
    %478 = arith.truncf %477 : vector<4x128xf32> to vector<4x128xbf16>
    %479 = vector.extract_strided_slice %475 {offsets = [0, 0], sizes = [2, 128], strides = [1, 1]} : vector<4x128xbf16> to vector<2x128xbf16>
    %480 = vector.extract_strided_slice %478 {offsets = [0, 0], sizes = [2, 128], strides = [1, 1]} : vector<4x128xbf16> to vector<2x128xbf16>
    %481 = tpu.concatenate %479, %480 in 1 : vector<2x128xbf16>, vector<2x128xbf16> -> vector<2x256xbf16>
    %c344 = arith.constant 344 : index
    %c0_346 = arith.constant 0 : index
    %482 = vector.load %arg11[%c344, %c0_346] : memref<376x256xbf16, #tpu.memory_space<vmem>>, vector<2x256xbf16>
    tpu.vector_store %arg11[%c344, %c0_346], %481 {strides = array<i32>} : memref<376x256xbf16, #tpu.memory_space<vmem>>, vector<2x256xbf16>,
    %483 = vector.extract_strided_slice %475 {offsets = [2, 0], sizes = [2, 128], strides = [1, 1]} : vector<4x128xbf16> to vector<2x128xbf16>
    %484 = vector.extract_strided_slice %478 {offsets = [2, 0], sizes = [2, 128], strides = [1, 1]} : vector<4x128xbf16> to vector<2x128xbf16>
    %485 = tpu.concatenate %483, %484 in 1 : vector<2x128xbf16>, vector<2x128xbf16> -> vector<2x256xbf16>
    %c360 = arith.constant 360 : index
    %c0_347 = arith.constant 0 : index
    %486 = vector.load %arg11[%c360, %c0_347] : memref<376x256xbf16, #tpu.memory_space<vmem>>, vector<2x256xbf16>
    tpu.vector_store %arg11[%c360, %c0_347], %485 {strides = array<i32>} : memref<376x256xbf16, #tpu.memory_space<vmem>>, vector<2x256xbf16>,
    %c341 = arith.constant 341 : index
    %c0_348 = arith.constant 0 : index
    %487 = vector.load %arg11[%c341, %c0_348] : memref<376x256xbf16, #tpu.memory_space<vmem>>, vector<2x256xbf16>
    %c357 = arith.constant 357 : index
    %c0_349 = arith.constant 0 : index
    %488 = vector.load %arg11[%c357, %c0_349] : memref<376x256xbf16, #tpu.memory_space<vmem>>, vector<2x256xbf16>
    %489 = tpu.concatenate %487, %488 in 0 : vector<2x256xbf16>, vector<2x256xbf16> -> vector<4x256xbf16>
    %c5_350 = arith.constant 5 : index
    %c0_351 = arith.constant 0 : index
    %c0_352 = arith.constant 0 : index
    %c0_353 = arith.constant 0 : index
    %490 = vector.load %arg2[%c5_350, %c0_351, %c0_352, %c0_353] : memref<6x6x256x128xbf16, #tpu.memory_space<vmem>>, vector<1x1x256x128xbf16>
    %491 = vector.shape_cast %490 : vector<1x1x256x128xbf16> to vector<256x128xbf16>
    %cst_354 = arith.constant dense<0.000000e+00> : vector<4x128xf32>
    %492 = tpu.matmul %489, %491, %cst_354 {dimension_numbers = #tpu.dot_dimension_numbers<[1], [0], [0], [1], [0, 0, 1, 1], [], []>} : vector<4x256xbf16>, vector<256x128xbf16>, vector<4x128xf32> -> vector<4x128xf32>
    %c342 = arith.constant 342 : index
    %c0_355 = arith.constant 0 : index
    %493 = vector.load %arg11[%c342, %c0_355] : memref<376x256xbf16, #tpu.memory_space<vmem>>, vector<2x256xbf16>
    %c358 = arith.constant 358 : index
    %c0_356 = arith.constant 0 : index
    %494 = vector.load %arg11[%c358, %c0_356] : memref<376x256xbf16, #tpu.memory_space<vmem>>, vector<2x256xbf16>
    %495 = tpu.concatenate %493, %494 in 0 : vector<2x256xbf16>, vector<2x256xbf16> -> vector<4x256xbf16>
    %c5_357 = arith.constant 5 : index
    %c1_358 = arith.constant 1 : index
    %c0_359 = arith.constant 0 : index
    %c0_360 = arith.constant 0 : index
    %496 = vector.load %arg2[%c5_357, %c1_358, %c0_359, %c0_360] : memref<6x6x256x128xbf16, #tpu.memory_space<vmem>>, vector<1x1x256x128xbf16>
    %497 = vector.shape_cast %496 : vector<1x1x256x128xbf16> to vector<256x128xbf16>
    %cst_361 = arith.constant dense<0.000000e+00> : vector<4x128xf32>
    %498 = tpu.matmul %495, %497, %cst_361 {dimension_numbers = #tpu.dot_dimension_numbers<[1], [0], [0], [1], [0, 0, 1, 1], [], []>} : vector<4x256xbf16>, vector<256x128xbf16>, vector<4x128xf32> -> vector<4x128xf32>
    %499 = arith.addf %492, %498 : vector<4x128xf32>
    %c343 = arith.constant 343 : index
    %c0_362 = arith.constant 0 : index
    %500 = vector.load %arg11[%c343, %c0_362] : memref<376x256xbf16, #tpu.memory_space<vmem>>, vector<2x256xbf16>
    %c359 = arith.constant 359 : index
    %c0_363 = arith.constant 0 : index
    %501 = vector.load %arg11[%c359, %c0_363] : memref<376x256xbf16, #tpu.memory_space<vmem>>, vector<2x256xbf16>
    %502 = tpu.concatenate %500, %501 in 0 : vector<2x256xbf16>, vector<2x256xbf16> -> vector<4x256xbf16>
    %c5_364 = arith.constant 5 : index
    %c2_365 = arith.constant 2 : index
    %c0_366 = arith.constant 0 : index
    %c0_367 = arith.constant 0 : index
    %503 = vector.load %arg2[%c5_364, %c2_365, %c0_366, %c0_367] : memref<6x6x256x128xbf16, #tpu.memory_space<vmem>>, vector<1x1x256x128xbf16>
    %504 = vector.shape_cast %503 : vector<1x1x256x128xbf16> to vector<256x128xbf16>
    %cst_368 = arith.constant dense<0.000000e+00> : vector<4x128xf32>
    %505 = tpu.matmul %502, %504, %cst_368 {dimension_numbers = #tpu.dot_dimension_numbers<[1], [0], [0], [1], [0, 0, 1, 1], [], []>} : vector<4x256xbf16>, vector<256x128xbf16>, vector<4x128xf32> -> vector<4x128xf32>
    %506 = arith.addf %499, %505 : vector<4x128xf32>
    %c344_369 = arith.constant 344 : index
    %c0_370 = arith.constant 0 : index
    %507 = vector.load %arg11[%c344_369, %c0_370] : memref<376x256xbf16, #tpu.memory_space<vmem>>, vector<2x256xbf16>
    %c360_371 = arith.constant 360 : index
    %c0_372 = arith.constant 0 : index
    %508 = vector.load %arg11[%c360_371, %c0_372] : memref<376x256xbf16, #tpu.memory_space<vmem>>, vector<2x256xbf16>
    %509 = tpu.concatenate %507, %508 in 0 : vector<2x256xbf16>, vector<2x256xbf16> -> vector<4x256xbf16>
    %c5_373 = arith.constant 5 : index
    %c3_374 = arith.constant 3 : index
    %c0_375 = arith.constant 0 : index
    %c0_376 = arith.constant 0 : index
    %510 = vector.load %arg2[%c5_373, %c3_374, %c0_375, %c0_376] : memref<6x6x256x128xbf16, #tpu.memory_space<vmem>>, vector<1x1x256x128xbf16>
    %511 = vector.shape_cast %510 : vector<1x1x256x128xbf16> to vector<256x128xbf16>
    %cst_377 = arith.constant dense<0.000000e+00> : vector<4x128xf32>
    %512 = tpu.matmul %509, %511, %cst_377 {dimension_numbers = #tpu.dot_dimension_numbers<[1], [0], [0], [1], [0, 0, 1, 1], [], []>} : vector<4x256xbf16>, vector<256x128xbf16>, vector<4x128xf32> -> vector<4x128xf32>
    %513 = arith.addf %506, %512 : vector<4x128xf32>
    %c345 = arith.constant 345 : index
    %c0_378 = arith.constant 0 : index
    %514 = vector.load %arg11[%c345, %c0_378] : memref<376x256xbf16, #tpu.memory_space<vmem>>, vector<2x256xbf16>
    %c361 = arith.constant 361 : index
    %c0_379 = arith.constant 0 : index
    %515 = vector.load %arg11[%c361, %c0_379] : memref<376x256xbf16, #tpu.memory_space<vmem>>, vector<2x256xbf16>
    %516 = tpu.concatenate %514, %515 in 0 : vector<2x256xbf16>, vector<2x256xbf16> -> vector<4x256xbf16>
    %c5_380 = arith.constant 5 : index
    %c4_381 = arith.constant 4 : index
    %c0_382 = arith.constant 0 : index
    %c0_383 = arith.constant 0 : index
    %517 = vector.load %arg2[%c5_380, %c4_381, %c0_382, %c0_383] : memref<6x6x256x128xbf16, #tpu.memory_space<vmem>>, vector<1x1x256x128xbf16>
    %518 = vector.shape_cast %517 : vector<1x1x256x128xbf16> to vector<256x128xbf16>
    %cst_384 = arith.constant dense<0.000000e+00> : vector<4x128xf32>
    %519 = tpu.matmul %516, %518, %cst_384 {dimension_numbers = #tpu.dot_dimension_numbers<[1], [0], [0], [1], [0, 0, 1, 1], [], []>} : vector<4x256xbf16>, vector<256x128xbf16>, vector<4x128xf32> -> vector<4x128xf32>
    %520 = arith.addf %513, %519 : vector<4x128xf32>
    %c346 = arith.constant 346 : index
    %c0_385 = arith.constant 0 : index
    %521 = vector.load %arg11[%c346, %c0_385] : memref<376x256xbf16, #tpu.memory_space<vmem>>, vector<2x256xbf16>
    %c362 = arith.constant 362 : index
    %c0_386 = arith.constant 0 : index
    %522 = vector.load %arg11[%c362, %c0_386] : memref<376x256xbf16, #tpu.memory_space<vmem>>, vector<2x256xbf16>
    %523 = tpu.concatenate %521, %522 in 0 : vector<2x256xbf16>, vector<2x256xbf16> -> vector<4x256xbf16>
    %c5_387 = arith.constant 5 : index
    %c5_388 = arith.constant 5 : index
    %c0_389 = arith.constant 0 : index
    %c0_390 = arith.constant 0 : index
    %524 = vector.load %arg2[%c5_387, %c5_388, %c0_389, %c0_390] : memref<6x6x256x128xbf16, #tpu.memory_space<vmem>>, vector<1x1x256x128xbf16>
    %525 = vector.shape_cast %524 : vector<1x1x256x128xbf16> to vector<256x128xbf16>
    %cst_391 = arith.constant dense<0.000000e+00> : vector<4x128xf32>
    %526 = tpu.matmul %523, %525, %cst_391 {dimension_numbers = #tpu.dot_dimension_numbers<[1], [0], [0], [1], [0, 0, 1, 1], [], []>} : vector<4x256xbf16>, vector<256x128xbf16>, vector<4x128xf32> -> vector<4x128xf32>
    %527 = arith.addf %520, %526 : vector<4x128xf32>
    %cst_392 = arith.constant dense<0.000000e+00> : vector<128xf32>
    %528 = vector.multi_reduction <add>, %527, %cst_392 [0] : vector<4x128xf32> to vector<128xf32>
    %529 = vector.shape_cast %528 : vector<128xf32> to vector<1x128xf32>
    %530 = arith.mulf %527, %527 : vector<4x128xf32>
    %cst_393 = arith.constant dense<0.000000e+00> : vector<128xf32>
    %531 = vector.multi_reduction <add>, %530, %cst_393 [0] : vector<4x128xf32> to vector<128xf32>
    %532 = vector.shape_cast %531 : vector<128xf32> to vector<1x128xf32>
    %cst_394 = arith.constant 2.500000e-01 : f32
    %533 = vector.broadcast %cst_394 : f32 to vector<1x128xf32>
    %534 = arith.mulf %529, %533 : vector<1x128xf32>
    %cst_395 = arith.constant 2.500000e-01 : f32
    %535 = vector.broadcast %cst_395 : f32 to vector<1x128xf32>
    %536 = arith.mulf %532, %535 : vector<1x128xf32>
    %537 = arith.mulf %534, %534 : vector<1x128xf32>
    %538 = arith.subf %536, %537 : vector<1x128xf32>
    %cst_396 = arith.constant 0.000000e+00 : f32
    %539 = vector.broadcast %cst_396 : f32 to vector<1x128xf32>
    %540 = arith.maximumf %538, %539 : vector<1x128xf32>
    %c6_397 = arith.constant 6 : index
    %c0_398 = arith.constant 0 : index
    %541 = vector.load %arg5[%c6_397, %c0_398] : memref<7x128xf32, #tpu.memory_space<vmem>>, vector<1x128xf32>
    %c6_399 = arith.constant 6 : index
    %c0_400 = arith.constant 0 : index
    %542 = vector.load %arg6[%c6_399, %c0_400] : memref<7x128xf32, #tpu.memory_space<vmem>>, vector<1x128xf32>
    %c6_401 = arith.constant 6 : index
    %c0_402 = arith.constant 0 : index
    %543 = vector.load %arg7[%c6_401, %c0_402] : memref<7x128xf32, #tpu.memory_space<vmem>>, vector<1x128xf32>
    %cst_403 = arith.constant 9.99999974E-6 : f32
    %544 = vector.broadcast %cst_403 : f32 to vector<1x128xf32>
    %545 = arith.addf %540, %544 : vector<1x128xf32>
    %546 = math.rsqrt %545 : vector<1x128xf32>
    %547 = arith.mulf %541, %546 : vector<1x128xf32>
    %548 = arith.mulf %534, %547 : vector<1x128xf32>
    %549 = arith.subf %542, %548 : vector<1x128xf32>
    %550 = vector.broadcast %547 : vector<1x128xf32> to vector<4x128xf32>
    %551 = arith.mulf %527, %550 : vector<4x128xf32>
    %552 = vector.broadcast %549 : vector<1x128xf32> to vector<4x128xf32>
    %553 = arith.addf %551, %552 : vector<4x128xf32>
    %cst_404 = arith.constant 0.000000e+00 : f32
    %554 = vector.broadcast %cst_404 : f32 to vector<4x128xf32>
    %555 = arith.cmpf ogt, %553, %554 : vector<4x128xf32>
    %556 = vector.broadcast %543 : vector<1x128xf32> to vector<4x128xf32>
    %557 = arith.mulf %556, %553 : vector<4x128xf32>
    %558 = arith.select %555, %553, %557 : vector<4x128xi1>, vector<4x128xf32>
    %c0_405 = arith.constant 0 : index
    %c0_406 = arith.constant 0 : index
    %559 = vector.load %arg8[%c0_405, %c0_406] : memref<2x128xf32, #tpu.memory_space<vmem>>, vector<2x128xf32>
    %c0_407 = arith.constant 0 : index
    %c0_408 = arith.constant 0 : index
    %560 = vector.load %arg9[%c0_407, %c0_408] : memref<1x1xf32, #tpu.memory_space<vmem>>, vector<1x1xf32>
    %561 = vector.extract_strided_slice %558 {offsets = [0, 0], sizes = [2, 128], strides = [1, 1]} : vector<4x128xf32> to vector<2x128xf32>
    %562 = arith.mulf %561, %559 : vector<2x128xf32>
    %563 = vector.shape_cast %562 : vector<2x128xf32> to vector<1x2x128xf32>
    %cst_409 = arith.constant dense<0.000000e+00> : vector<1xf32>
    %564 = vector.multi_reduction <add>, %563, %cst_409 [1, 2] : vector<1x2x128xf32> to vector<1xf32>
    %565 = vector.shape_cast %564 : vector<1xf32> to vector<1x1x1xf32>
    %566 = vector.extract %565[0, 0, 0] : f32 from vector<1x1x1xf32>
    %567 = vector.broadcast %566 : f32 to vector<1x1xf32>
    %568 = vector.extract_strided_slice %558 {offsets = [2, 0], sizes = [2, 128], strides = [1, 1]} : vector<4x128xf32> to vector<2x128xf32>
    %569 = arith.mulf %568, %559 : vector<2x128xf32>
    %570 = vector.shape_cast %569 : vector<2x128xf32> to vector<1x2x128xf32>
    %cst_410 = arith.constant dense<0.000000e+00> : vector<1xf32>
    %571 = vector.multi_reduction <add>, %570, %cst_410 [1, 2] : vector<1x2x128xf32> to vector<1xf32>
    %572 = vector.shape_cast %571 : vector<1xf32> to vector<1x1x1xf32>
    %573 = vector.extract %572[0, 0, 0] : f32 from vector<1x1x1xf32>
    %574 = vector.broadcast %573 : f32 to vector<1x1xf32>
    %575 = tpu.concatenate %567, %574 in 0 : vector<1x1xf32>, vector<1x1xf32> -> vector<2x1xf32>
    %576 = vector.broadcast %560 : vector<1x1xf32> to vector<2x1xf32>
    %577 = arith.addf %575, %576 : vector<2x1xf32>
    %c0_411 = arith.constant 0 : index
    %c0_412 = arith.constant 0 : index
    %578 = vector.load %arg10[%c0_411, %c0_412] : memref<2x1xf32, #tpu.memory_space<vmem>>, vector<2x1xf32>
    tpu.vector_store %arg10[%c0_411, %c0_412], %577 {strides = array<i32>} : memref<2x1xf32, #tpu.memory_space<vmem>>, vector<2x1xf32>,
    return
  }
}

</mosaic_0001>

<llo_original>
// kernel: time_discriminator_forward.1
$region0: #{time_discriminator_forward.1}
  #allocation0 [shape = 'u32[]', space=smem, size = 0x4, offset = 0x4, fixed_abs, tag = 'smem constant byte address 0x4 - core index']
  #allocation1 [shape = 'u32[144,128]{1,0:T(1,128)}', space=vmem, size = 0x12000, scoped, tag = 'internal scratch']
  #allocation2 [shape = 'bf16[376,256]{1,0:T(8,128)(2,1)}', space=vmem, size = 0x2f000, scoped, tag = 'scratch operand']
  #allocation3 [shape = 'f32[1,1]{1,0:T(1,128)S(1)}', space=vmem, size = 0x200, scoped, tag = 'scoped memory for time_discriminator_forward.1']
  %s0 = inlined_call_operand.vmem [shape: f32[256,16], index: 0, kind: input, shape index: {}]
  %s1 = inlined_call_operand.hbm [shape: bf16[16,128], index: 1, kind: input, shape index: {}]
  %s2 = inlined_call_operand.hbm [shape: bf16[6,6,256,128], index: 2, kind: input, shape index: {}]
  %s3 = inlined_call_operand.vmem [shape: bf16[128,256], index: 3, kind: input, shape index: {}]
  %s4 = inlined_call_operand.vmem [shape: bf16[128,256], index: 4, kind: input, shape index: {}]
  %s5 = inlined_call_operand.hbm [shape: f32[7,128], index: 5, kind: input, shape index: {}]
  %s6 = inlined_call_operand.hbm [shape: f32[7,128], index: 6, kind: input, shape index: {}]
  %s7 = inlined_call_operand.hbm [shape: f32[7,128], index: 7, kind: input, shape index: {}]
  %s8 = inlined_call_operand.hbm [shape: f32[2,128], index: 8, kind: input, shape index: {}]
  %s9 = inlined_call_operand.<no memory space> [shape: f32[1,1], index: 9, kind: input, shape index: {}]
  %s10 = inlined_call_operand.vmem [shape: f32[2,1], index: 10, kind: output, shape index: {}]
  %s11 = sld [smem:[#allocation0]]
  $region74: #{time_discriminator_forward.1} parent=0
    _
  %s13 = ssub.s32 1, %s11
  %s14 = scalar_select 0, %s13, %s11
  %v15 = vstv %s9
  %16 = vst [vmem:[#allocation3] sm:$0x1] %v15
  $region1: #{time_discriminator_forward.1} parent=0
    #allocation4 [shape = 'u8[4096]{0}', space=vmem, size = 0x1000, scoped, tag = 'input window, operand 1, single buffered']
    #allocation5 [shape = 's32[1]{0}', space=sflag, size = 0x4, scoped, tag = 'scoped memory for time_discriminator_forward.1']
    #allocation6 [shape = 'u8[2359296]{0}', space=vmem, size = 0x240000, scoped, tag = 'input window, operand 2, single buffered']
    #allocation7 [shape = 's32[1]{0}', space=sflag, size = 0x4, scoped, tag = 'scoped memory for time_discriminator_forward.1']
    #allocation8 [shape = 'u8[4096]{0}', space=vmem, size = 0x1000, scoped, tag = 'input window, operand 5, single buffered']
    #allocation9 [shape = 'u8[4096]{0}', space=vmem, size = 0x1000, scoped, tag = 'input window, operand 6, single buffered']
    #allocation10 [shape = 's32[1]{0}', space=sflag, size = 0x4, scoped, tag = 'scoped memory for time_discriminator_forward.1']
    #allocation11 [shape = 'u8[4096]{0}', space=vmem, size = 0x1000, scoped, tag = 'input window, operand 7, single buffered']
    #allocation12 [shape = 'u8[1024]{0}', space=vmem, size = 0x400, scoped, tag = 'input window, operand 8, single buffered']
    #allocation13 [shape = 's32[1]{0}', space=sflag, size = 0x4, scoped, tag = 'scoped memory for time_discriminator_forward.1']
    %17 = vsyncpa [#allocation5], 0
    %18 = vsyncpa [#allocation7], 0
    %19 = vsyncpa [#allocation10], 0
    %20 = vsyncpa [#allocation13], 0
    // Predicated region
    $region2: #{time_discriminator_forward.1} parent=1 // pred_check
      _
    $region3: #{time_discriminator_forward.1} parent=1 // pred_check_branch
      %22 = sbr.rel (0) target = $region5
    $region4: #{time_discriminator_forward.1} parent=1 // pred_region
      _
    $region5: #{time_discriminator_forward.1} parent=1 // pred_fallthru
      _
    // Predicated region
    $region6: #{time_discriminator_forward.1} parent=1 // pred_check
      _
    $region7: #{time_discriminator_forward.1} parent=1 // pred_check_branch
      %24 = sbr.rel (0) target = $region9
    $region8: #{time_discriminator_forward.1} parent=1 // pred_region
      %s26 = ssub.s32 128, 128
      %27 = vsyncadd [#allocation5], %s26
      %s28 = sshll.u32 [#allocation4], 4
      %s29 = int_to_ptr.vmem [resolvable:$true] %s28
      %34 = dma.hbm_to_vmem [thread:$0]  %s1, 128, %s29, [#allocation5], 64, 64, 4
    $region9: #{time_discriminator_forward.1} parent=1 // pred_fallthru
      _
    // Predicated region
    $region10: #{time_discriminator_forward.1} parent=1 // pred_check
      _
    $region11: #{time_discriminator_forward.1} parent=1 // pred_check_branch
      %36 = sbr.rel (0) target = $region13
    $region12: #{time_discriminator_forward.1} parent=1 // pred_region
      %s38 = ssub.s32 73728, 73728
      %39 = vsyncadd [#allocation7], %s38
      %s40 = sshll.u32 [#allocation6], 4
      %s41 = int_to_ptr.vmem [resolvable:$true] %s40
      %46 = dma.hbm_to_vmem [thread:$0]  %s2, 73728, %s41, [#allocation7], 64, 64, 4
    $region13: #{time_discriminator_forward.1} parent=1 // pred_fallthru
      _
    // Predicated region
    $region14: #{time_discriminator_forward.1} parent=1 // pred_check
      _
    $region15: #{time_discriminator_forward.1} parent=1 // pred_check_branch
      %48 = sbr.rel (0) target = $region17
    $region16: #{time_discriminator_forward.1} parent=1 // pred_region
      _
    $region17: #{time_discriminator_forward.1} parent=1 // pred_fallthru
      _
    // Predicated region
    $region18: #{time_discriminator_forward.1} parent=1 // pred_check
      _
    $region19: #{time_discriminator_forward.1} parent=1 // pred_check_branch
      %50 = sbr.rel (0) target = $region21
    $region20: #{time_discriminator_forward.1} parent=1 // pred_region
      _
    $region21: #{time_discriminator_forward.1} parent=1 // pred_fallthru
      _
    // Predicated region
    $region22: #{time_discriminator_forward.1} parent=1 // pred_check
      _
    $region23: #{time_discriminator_forward.1} parent=1 // pred_check_branch
      %52 = sbr.rel (0) target = $region25
    $region24: #{time_discriminator_forward.1} parent=1 // pred_region
      %s54 = ssub.s32 128, 128
      %55 = vsyncadd [#allocation7], %s54
      %s57 = sshll.u32 [#allocation8], 4
      %s58 = int_to_ptr.vmem [resolvable:$true] %s57
      %60 = dma.hbm_to_vmem [thread:$0]  %s5, 128, %s58, [#allocation7]
    $region25: #{time_discriminator_forward.1} parent=1 // pred_fallthru
      _
    // Predicated region
    $region26: #{time_discriminator_forward.1} parent=1 // pred_check
      _
    $region27: #{time_discriminator_forward.1} parent=1 // pred_check_branch
      %62 = sbr.rel (0) target = $region29
    $region28: #{time_discriminator_forward.1} parent=1 // pred_region
      %s64 = ssub.s32 128, 128
      %65 = vsyncadd [#allocation10], %s64
      %s67 = sshll.u32 [#allocation9], 4
      %s68 = int_to_ptr.vmem [resolvable:$true] %s67
      %70 = dma.hbm_to_vmem [thread:$0]  %s6, 128, %s68, [#allocation10]
    $region29: #{time_discriminator_forward.1} parent=1 // pred_fallthru
      _
    // Predicated region
    $region30: #{time_discriminator_forward.1} parent=1 // pred_check
      _
    $region31: #{time_discriminator_forward.1} parent=1 // pred_check_branch
      %72 = sbr.rel (0) target = $region33
    $region32: #{time_discriminator_forward.1} parent=1 // pred_region
      %s74 = ssub.s32 128, 128
      %75 = vsyncadd [#allocation10], %s74
      %s77 = sshll.u32 [#allocation11], 4
      %s78 = int_to_ptr.vmem [resolvable:$true] %s77
      %80 = dma.hbm_to_vmem [thread:$0]  %s7, 128, %s78, [#allocation10]
    $region33: #{time_discriminator_forward.1} parent=1 // pred_fallthru
      _
    // Predicated region
    $region34: #{time_discriminator_forward.1} parent=1 // pred_check
      _
    $region35: #{time_discriminator_forward.1} parent=1 // pred_check_branch
      %82 = sbr.rel (0) target = $region37
    $region36: #{time_discriminator_forward.1} parent=1 // pred_region
      %s84 = ssub.s32 32, 32
      %85 = vsyncadd [#allocation13], %s84
      %s87 = sshll.u32 [#allocation12], 4
      %s88 = int_to_ptr.vmem [resolvable:$true] %s87
      %90 = dma.hbm_to_vmem [thread:$0]  %s8, 32, %s88, [#allocation13]
    $region37: #{time_discriminator_forward.1} parent=1 // pred_fallthru
      _
    // Predicated region
    $region38: #{time_discriminator_forward.1} parent=1 // pred_check
      _
    $region39: #{time_discriminator_forward.1} parent=1 // pred_check_branch
      %92 = sbr.rel (0) target = $region41
    $region40: #{time_discriminator_forward.1} parent=1 // pred_region
      _
    $region41: #{time_discriminator_forward.1} parent=1 // pred_fallthru
      _
    // Predicated region
    $region42: #{time_discriminator_forward.1} parent=1 // pred_check
      _
    $region43: #{time_discriminator_forward.1} parent=1 // pred_check_branch
      %94 = sbr.rel (0) target = $region45
    $region44: #{time_discriminator_forward.1} parent=1 // pred_region
      %95 = dma.done [#allocation5], 128
    $region45: #{time_discriminator_forward.1} parent=1 // pred_fallthru
      _
    // Predicated region
    $region46: #{time_discriminator_forward.1} parent=1 // pred_check
      _
    $region47: #{time_discriminator_forward.1} parent=1 // pred_check_branch
      %97 = sbr.rel (0) target = $region49
    $region48: #{time_discriminator_forward.1} parent=1 // pred_region
      %98 = dma.done [#allocation7], 73728
    $region49: #{time_discriminator_forward.1} parent=1 // pred_fallthru
      _
    // Predicated region
    $region50: #{time_discriminator_forward.1} parent=1 // pred_check
      _
    $region51: #{time_discriminator_forward.1} parent=1 // pred_check_branch
      %100 = sbr.rel (0) target = $region53
    $region52: #{time_discriminator_forward.1} parent=1 // pred_region
      %101 = dma.done [#allocation7], 128
    $region53: #{time_discriminator_forward.1} parent=1 // pred_fallthru
      _
    // Predicated region
    $region54: #{time_discriminator_forward.1} parent=1 // pred_check
      _
    $region55: #{time_discriminator_forward.1} parent=1 // pred_check_branch
      %103 = sbr.rel (0) target = $region57
    $region56: #{time_discriminator_forward.1} parent=1 // pred_region
      %104 = dma.done [#allocation10], 128
    $region57: #{time_discriminator_forward.1} parent=1 // pred_fallthru
      _
    // Predicated region
    $region58: #{time_discriminator_forward.1} parent=1 // pred_check
      _
    $region59: #{time_discriminator_forward.1} parent=1 // pred_check_branch
      %106 = sbr.rel (0) target = $region61
    $region60: #{time_discriminator_forward.1} parent=1 // pred_region
      %107 = dma.done [#allocation10], 128
    $region61: #{time_discriminator_forward.1} parent=1 // pred_fallthru
      _
    // Predicated region
    $region62: #{time_discriminator_forward.1} parent=1 // pred_check
      _
    $region63: #{time_discriminator_forward.1} parent=1 // pred_check_branch
      %109 = sbr.rel (0) target = $region65
    $region64: #{time_discriminator_forward.1} parent=1 // pred_region
      %110 = dma.done [#allocation13], 32
    $region65: #{time_discriminator_forward.1} parent=1 // pred_fallthru
      _
    %112 = vst [vmem:[#allocation2] sm:$0xff] 0
    %113 = vst [vmem:[#allocation2 + $0x8] sm:$0xff] 0
    %114 = vst [vmem:[#allocation2 + $0x10] sm:$0xff] 0
    %115 = vst [vmem:[#allocation2 + $0x18] sm:$0xff] 0
    %116 = vst [vmem:[#allocation2 + $0x20] sm:$0xff] 0
    %117 = vst [vmem:[#allocation2 + $0x28] sm:$0xff] 0
    %118 = vst [vmem:[#allocation2 + $0x30] sm:$0xff] 0
    %119 = vst [vmem:[#allocation2 + $0x38] sm:$0xff] 0
    %120 = vst [vmem:[#allocation2 + $0x40] sm:$0xff] 0
    %121 = vst [vmem:[#allocation2 + $0x48] sm:$0xff] 0
    %122 = vst [vmem:[#allocation2 + $0x50] sm:$0xff] 0
    %123 = vst [vmem:[#allocation2 + $0x58] sm:$0xff] 0
    %124 = vst [vmem:[#allocation2 + $0x60] sm:$0xff] 0
    %125 = vst [vmem:[#allocation2 + $0x68] sm:$0xff] 0
    %126 = vst [vmem:[#allocation2 + $0x70] sm:$0xff] 0
    %127 = vst [vmem:[#allocation2 + $0x78] sm:$0xff] 0
    %128 = vst [vmem:[#allocation2 + $0x80] sm:$0xff] 0
    %129 = vst [vmem:[#allocation2 + $0x88] sm:$0xff] 0
    %130 = vst [vmem:[#allocation2 + $0x90] sm:$0xff] 0
    %131 = vst [vmem:[#allocation2 + $0x98] sm:$0xff] 0
    %132 = vst [vmem:[#allocation2 + $0xa0] sm:$0xff] 0
    %133 = vst [vmem:[#allocation2 + $0xa8] sm:$0xff] 0
    %134 = vst [vmem:[#allocation2 + $0xb0] sm:$0xff] 0
    %135 = vst [vmem:[#allocation2 + $0xb8] sm:$0xff] 0
    %136 = vst [vmem:[#allocation2 + $0xc0] sm:$0xff] 0
    %137 = vst [vmem:[#allocation2 + $0xc8] sm:$0xff] 0
    %138 = vst [vmem:[#allocation2 + $0xd0] sm:$0xff] 0
    %139 = vst [vmem:[#allocation2 + $0xd8] sm:$0xff] 0
    %140 = vst [vmem:[#allocation2 + $0xe0] sm:$0xff] 0
    %141 = vst [vmem:[#allocation2 + $0xe8] sm:$0xff] 0
    %142 = vst [vmem:[#allocation2 + $0xf0] sm:$0xff] 0
    %143 = vst [vmem:[#allocation2 + $0xf8] sm:$0xff] 0
    %144 = vst [vmem:[#allocation2 + $0x100] sm:$0xff] 0
    %145 = vst [vmem:[#allocation2 + $0x108] sm:$0xff] 0
    %146 = vst [vmem:[#allocation2 + $0x110] sm:$0xff] 0
    %147 = vst [vmem:[#allocation2 + $0x118] sm:$0xff] 0
    %148 = vst [vmem:[#allocation2 + $0x120] sm:$0xff] 0
    %149 = vst [vmem:[#allocation2 + $0x128] sm:$0xff] 0
    %150 = vst [vmem:[#allocation2 + $0x130] sm:$0xff] 0
    %151 = vst [vmem:[#allocation2 + $0x138] sm:$0xff] 0
    %152 = vst [vmem:[#allocation2 + $0x140] sm:$0xff] 0
    %153 = vst [vmem:[#allocation2 + $0x148] sm:$0xff] 0
    %154 = vst [vmem:[#allocation2 + $0x150] sm:$0xff] 0
    %155 = vst [vmem:[#allocation2 + $0x158] sm:$0xff] 0
    %156 = vst [vmem:[#allocation2 + $0x160] sm:$0xff] 0
    %157 = vst [vmem:[#allocation2 + $0x168] sm:$0xff] 0
    %158 = vst [vmem:[#allocation2 + $0x170] sm:$0xff] 0
    %v159 = vld [vmem:[%s0] sm:$0xff]
    %v160 = vld [vmem:[%s0 + $0x8] sm:$0xff]
    %v161 = vld [vmem:[%s0 + $0x10] sm:$0xff]
    %v162 = vld [vmem:[%s0 + $0x18] sm:$0xff]
    %v163 = vld [vmem:[%s0 + $0x20] sm:$0xff]
    %v164 = vld [vmem:[%s0 + $0x28] sm:$0xff]
    %v165 = vld [vmem:[%s0 + $0x30] sm:$0xff]
    %v166 = vld [vmem:[%s0 + $0x38] sm:$0xff]
    %v167 = vld [vmem:[%s0 + $0x40] sm:$0xff]
    %v168 = vld [vmem:[%s0 + $0x48] sm:$0xff]
    %v169 = vld [vmem:[%s0 + $0x50] sm:$0xff]
    %v170 = vld [vmem:[%s0 + $0x58] sm:$0xff]
    %v171 = vld [vmem:[%s0 + $0x60] sm:$0xff]
    %v172 = vld [vmem:[%s0 + $0x68] sm:$0xff]
    %v173 = vld [vmem:[%s0 + $0x70] sm:$0xff]
    %v174 = vld [vmem:[%s0 + $0x78] sm:$0xff]
    %v175 = vld [vmem:[%s0 + $0x80] sm:$0xff]
    %v176 = vld [vmem:[%s0 + $0x88] sm:$0xff]
    %v177 = vld [vmem:[%s0 + $0x90] sm:$0xff]
    %v178 = vld [vmem:[%s0 + $0x98] sm:$0xff]
    %v179 = vld [vmem:[%s0 + $0xa0] sm:$0xff]
    %v180 = vld [vmem:[%s0 + $0xa8] sm:$0xff]
    %v181 = vld [vmem:[%s0 + $0xb0] sm:$0xff]
    %v182 = vld [vmem:[%s0 + $0xb8] sm:$0xff]
    %v183 = vld [vmem:[%s0 + $0xc0] sm:$0xff]
    %v184 = vld [vmem:[%s0 + $0xc8] sm:$0xff]
    %v185 = vld [vmem:[%s0 + $0xd0] sm:$0xff]
    %v186 = vld [vmem:[%s0 + $0xd8] sm:$0xff]
    %v187 = vld [vmem:[%s0 + $0xe0] sm:$0xff]
    %v188 = vld [vmem:[%s0 + $0xe8] sm:$0xff]
    %v189 = vld [vmem:[%s0 + $0xf0] sm:$0xff]
    %v190 = vld [vmem:[%s0 + $0xf8] sm:$0xff]
    %v191 = vpack.c.bf16 %v160, %v159
    %v192 = vpack.c.bf16 %v162, %v161
    %v193 = vpack.c.bf16 %v164, %v163
    %v194 = vpack.c.bf16 %v166, %v165
    %v195 = vpack.c.bf16 %v168, %v167
    %v196 = vpack.c.bf16 %v170, %v169
    %v197 = vpack.c.bf16 %v172, %v171
    %v198 = vpack.c.bf16 %v174, %v173
    %v199 = vpack.c.bf16 %v176, %v175
    %v200 = vpack.c.bf16 %v178, %v177
    %v201 = vpack.c.bf16 %v180, %v179
    %v202 = vpack.c.bf16 %v182, %v181
    %v203 = vpack.c.bf16 %v184, %v183
    %v204 = vpack.c.bf16 %v186, %v185
    %v205 = vpack.c.bf16 %v188, %v187
    %v206 = vpack.c.bf16 %v190, %v189
    %v207 = vld [vmem:[#allocation4] sm:$0xf]
    %v208 = vld [vmem:[#allocation4 + $0x4] sm:$0xf]
    %v211 = vunpack.c.l.b16 %v207
    %v212 = vunpack.c.l.b16 %v208
    %v213 = vpack.c.b16 %v212, %v211
    %vm215 = vcmask 130048
    %v217 = vsel %vm215, %v191, 0
    %v220 = vsel %vm215, %v192, 0
    %v223 = vsel %vm215, %v193, 0
    %v226 = vsel %vm215, %v194, 0
    %v229 = vsel %vm215, %v195, 0
    %v232 = vsel %vm215, %v196, 0
    %v235 = vsel %vm215, %v197, 0
    %v238 = vsel %vm215, %v198, 0
    %v241 = vsel %vm215, %v199, 0
    %v244 = vsel %vm215, %v200, 0
    %v247 = vsel %vm215, %v201, 0
    %v250 = vsel %vm215, %v202, 0
    %v253 = vsel %vm215, %v203, 0
    %v256 = vsel %vm215, %v204, 0
    %v259 = vsel %vm215, %v205, 0
    %v262 = vsel %vm215, %v206, 0
    %264 = vmatprep.subr.bf16.mxu0 0
    %265 = vmatpush1.bf16.msra.mxu0 0
    %266 = vmatprep.subr.bf16.mxu0 0
    %267 = vmatpush1.bf16.msra.mxu0 0
    %268 = vmatprep.subr.bf16.mxu0 0
    %269 = vmatpush1.bf16.msra.mxu0 0
    %270 = vmatprep.subr.bf16.mxu0 0
    %271 = vmatpush1.bf16.msra.mxu0 0
    %272 = vmatprep.subr.bf16.mxu0 0
    %273 = vmatpush1.bf16.msra.mxu0 0
    %274 = vmatprep.subr.bf16.mxu0 0
    %275 = vmatpush1.bf16.msra.mxu0 0
    %276 = vmatprep.subr.bf16.mxu0 0
    %277 = vmatpush1.bf16.msra.mxu0 0
    %278 = vmatprep.subr.bf16.mxu0 0
    %279 = vmatpush1.bf16.msra.mxu0 %v213
    %280 = vmatprep.subr.bf16.mxu0 0
    %281 = vmatpush2.bf16.msra.mxu0 0
    %282 = vmatprep.subr.bf16.mxu0 0
    %283 = vmatpush2.bf16.msra.mxu0 0
    %284 = vmatprep.subr.bf16.mxu0 0
    %285 = vmatpush2.bf16.msra.mxu0 0
    %286 = vmatprep.subr.bf16.mxu0 0
    %287 = vmatpush2.bf16.msra.mxu0 0
    %288 = vmatprep.subr.bf16.mxu0 0
    %289 = vmatpush2.bf16.msra.mxu0 0
    %290 = vmatprep.subr.bf16.mxu0 0
    %291 = vmatpush2.bf16.msra.mxu0 0
    %292 = vmatprep.subr.bf16.mxu0 0
    %293 = vmatpush2.bf16.msra.mxu0 0
    %294 = vmatprep.subr.bf16.mxu0 0
    %295 = vmatpush2.bf16.msra.mxu0 0
    %296 = vmatprep.mubr.bf16.mxu0 0
    %297 = vmatmul.mubr.bf16.gmra.mxu0 %v217
    %v298 = vpop.f32.mrf.mxu0
    %v299 = vadd.f32 0.0, %v298
    %v300 = vpop.f32.mrf.mxu0
    %v301 = vpop.f32.mrf.mxu0
    %v302 = vadd.f32 0.0, %v301
    %v303 = vpop.f32.mrf.mxu0
    %304 = vmatprep.mubr.bf16.mxu0 0
    %305 = vmatmul.mubr.bf16.gmra.mxu0 %v220
    %v306 = vpop.f32.mrf.mxu0
    %v307 = vadd.f32 0.0, %v306
    %v308 = vpop.f32.mrf.mxu0
    %v309 = vpop.f32.mrf.mxu0
    %v310 = vadd.f32 0.0, %v309
    %v311 = vpop.f32.mrf.mxu0
    %312 = vmatprep.mubr.bf16.mxu0 0
    %313 = vmatmul.mubr.bf16.gmra.mxu0 %v223
    %v314 = vpop.f32.mrf.mxu0
    %v315 = vadd.f32 0.0, %v314
    %v316 = vpop.f32.mrf.mxu0
    %v317 = vpop.f32.mrf.mxu0
    %v318 = vadd.f32 0.0, %v317
    %v319 = vpop.f32.mrf.mxu0
    %320 = vmatprep.mubr.bf16.mxu0 0
    %321 = vmatmul.mubr.bf16.gmra.mxu0 %v226
    %v322 = vpop.f32.mrf.mxu0
    %v323 = vadd.f32 0.0, %v322
    %v324 = vpop.f32.mrf.mxu0
    %v325 = vpop.f32.mrf.mxu0
    %v326 = vadd.f32 0.0, %v325
    %v327 = vpop.f32.mrf.mxu0
    %328 = vmatprep.mubr.bf16.mxu0 0
    %329 = vmatmul.mubr.bf16.gmra.mxu0 %v229
    %v330 = vpop.f32.mrf.mxu0
    %v331 = vadd.f32 0.0, %v330
    %v332 = vpop.f32.mrf.mxu0
    %v333 = vpop.f32.mrf.mxu0
    %v334 = vadd.f32 0.0, %v333
    %v335 = vpop.f32.mrf.mxu0
    %336 = vmatprep.mubr.bf16.mxu0 0
    %337 = vmatmul.mubr.bf16.gmra.mxu0 %v232
    %v338 = vpop.f32.mrf.mxu0
    %v339 = vadd.f32 0.0, %v338
    %v340 = vpop.f32.mrf.mxu0
    %v341 = vpop.f32.mrf.mxu0
    %v342 = vadd.f32 0.0, %v341
    %v343 = vpop.f32.mrf.mxu0
    %344 = vmatprep.mubr.bf16.mxu0 0
    %345 = vmatmul.mubr.bf16.gmra.mxu0 %v235
    %v346 = vpop.f32.mrf.mxu0
    %v347 = vadd.f32 0.0, %v346
    %v348 = vpop.f32.mrf.mxu0
    %v349 = vpop.f32.mrf.mxu0
    %v350 = vadd.f32 0.0, %v349
    %v351 = vpop.f32.mrf.mxu0
    %352 = vmatprep.mubr.bf16.mxu0 0
    %353 = vmatmul.mubr.bf16.gmra.mxu0 %v238
    %v354 = vpop.f32.mrf.mxu0
    %v355 = vadd.f32 0.0, %v354
    %v356 = vpop.f32.mrf.mxu0
    %v357 = vpop.f32.mrf.mxu0
    %v358 = vadd.f32 0.0, %v357
    %v359 = vpop.f32.mrf.mxu0
    %360 = vmatprep.mubr.bf16.mxu0 0
    %361 = vmatmul.mubr.bf16.gmra.mxu0 %v241
    %v362 = vpop.f32.mrf.mxu0
    %v363 = vadd.f32 0.0, %v362
    %v364 = vpop.f32.mrf.mxu0
    %v365 = vpop.f32.mrf.mxu0
    %v366 = vadd.f32 0.0, %v365
    %v367 = vpop.f32.mrf.mxu0
    %368 = vmatprep.mubr.bf16.mxu0 0
    %369 = vmatmul.mubr.bf16.gmra.mxu0 %v244
    %v370 = vpop.f32.mrf.mxu0
    %v371 = vadd.f32 0.0, %v370
    %v372 = vpop.f32.mrf.mxu0
    %v373 = vpop.f32.mrf.mxu0
    %v374 = vadd.f32 0.0, %v373
    %v375 = vpop.f32.mrf.mxu0
    %376 = vmatprep.mubr.bf16.mxu0 0
    %377 = vmatmul.mubr.bf16.gmra.mxu0 %v247
    %v378 = vpop.f32.mrf.mxu0
    %v379 = vadd.f32 0.0, %v378
    %v380 = vpop.f32.mrf.mxu0
    %v381 = vpop.f32.mrf.mxu0
    %v382 = vadd.f32 0.0, %v381
    %v383 = vpop.f32.mrf.mxu0
    %384 = vmatprep.mubr.bf16.mxu0 0
    %385 = vmatmul.mubr.bf16.gmra.mxu0 %v250
    %v386 = vpop.f32.mrf.mxu0
    %v387 = vadd.f32 0.0, %v386
    %v388 = vpop.f32.mrf.mxu0
    %v389 = vpop.f32.mrf.mxu0
    %v390 = vadd.f32 0.0, %v389
    %v391 = vpop.f32.mrf.mxu0
    %392 = vmatprep.mubr.bf16.mxu0 0
    %393 = vmatmul.mubr.bf16.gmra.mxu0 %v253
    %v394 = vpop.f32.mrf.mxu0
    %v395 = vadd.f32 0.0, %v394
    %v396 = vpop.f32.mrf.mxu0
    %v397 = vpop.f32.mrf.mxu0
    %v398 = vadd.f32 0.0, %v397
    %v399 = vpop.f32.mrf.mxu0
    %400 = vmatprep.mubr.bf16.mxu0 0
    %401 = vmatmul.mubr.bf16.gmra.mxu0 %v256
    %v402 = vpop.f32.mrf.mxu0
    %v403 = vadd.f32 0.0, %v402
    %v404 = vpop.f32.mrf.mxu0
    %v405 = vpop.f32.mrf.mxu0
    %v406 = vadd.f32 0.0, %v405
    %v407 = vpop.f32.mrf.mxu0
    %408 = vmatprep.mubr.bf16.mxu0 0
    %409 = vmatmul.mubr.bf16.gmra.mxu0 %v259
    %v410 = vpop.f32.mrf.mxu0
    %v411 = vadd.f32 0.0, %v410
    %v412 = vpop.f32.mrf.mxu0
    %v413 = vpop.f32.mrf.mxu0
    %v414 = vadd.f32 0.0, %v413
    %v415 = vpop.f32.mrf.mxu0
    %416 = vmatprep.mubr.bf16.mxu0 0
    %417 = vmatmul.mubr.bf16.gmra.mxu0 %v262
    %v418 = vpop.f32.mrf.mxu0
    %v419 = vadd.f32 0.0, %v418
    %v420 = vpop.f32.mrf.mxu0
    %v421 = vpop.f32.mrf.mxu0
    %v422 = vadd.f32 0.0, %v421
    %v423 = vpop.f32.mrf.mxu0
    %424 = vdwg.mxu0
    %v425 = vadd.f32 %v299, %v302
    %v426 = vadd.f32 %v425, %v307
    %v427 = vadd.f32 %v426, %v310
    %v428 = vadd.f32 %v427, %v315
    %v429 = vadd.f32 %v428, %v318
    %v430 = vadd.f32 %v429, %v323
    %v431 = vadd.f32 %v430, %v326
    %v432 = vadd.f32 %v431, %v331
    %v433 = vadd.f32 %v432, %v334
    %v434 = vadd.f32 %v433, %v339
    %v435 = vadd.f32 %v434, %v342
    %v436 = vadd.f32 %v435, %v347
    %v437 = vadd.f32 %v436, %v350
    %v438 = vadd.f32 %v437, %v355
    %v439 = vadd.f32 %v438, %v358
    %v440 = vadd.f32 %v439, %v363
    %v441 = vadd.f32 %v440, %v366
    %v442 = vadd.f32 %v441, %v371
    %v443 = vadd.f32 %v442, %v374
    %v444 = vadd.f32 %v443, %v379
    %v445 = vadd.f32 %v444, %v382
    %v446 = vadd.f32 %v445, %v387
    %v447 = vadd.f32 %v446, %v390
    %v448 = vadd.f32 %v447, %v395
    %v449 = vadd.f32 %v448, %v398
    %v450 = vadd.f32 %v449, %v403
    %v451 = vadd.f32 %v450, %v406
    %v452 = vadd.f32 %v451, %v411
    %v453 = vadd.f32 %v452, %v414
    %v454 = vadd.f32 %v453, %v419
    %v455 = vadd.f32 %v454, %v422
    %v456 = vrot.slane %v455, 4
    %v457 = vadd.f32 %v455, %v456
    %v458 = vrot.slane %v457, 2
    %v459 = vadd.f32 %v457, %v458
    %v460 = vrot.slane %v459, 1
    %v461 = vadd.f32 %v459, %v460
    %v462 = vmul.f32 %v299, %v299
    %v463 = vmul.f32 %v302, %v302
    %v464 = vmul.f32 %v307, %v307
    %v465 = vmul.f32 %v310, %v310
    %v466 = vmul.f32 %v315, %v315
    %v467 = vmul.f32 %v318, %v318
    %v468 = vmul.f32 %v323, %v323
    %v469 = vmul.f32 %v326, %v326
    %v470 = vmul.f32 %v331, %v331
    %v471 = vmul.f32 %v334, %v334
    %v472 = vmul.f32 %v339, %v339
    %v473 = vmul.f32 %v342, %v342
    %v474 = vmul.f32 %v347, %v347
    %v475 = vmul.f32 %v350, %v350
    %v476 = vmul.f32 %v355, %v355
    %v477 = vmul.f32 %v358, %v358
    %v478 = vmul.f32 %v363, %v363
    %v479 = vmul.f32 %v366, %v366
    %v480 = vmul.f32 %v371, %v371
    %v481 = vmul.f32 %v374, %v374
    %v482 = vmul.f32 %v379, %v379
    %v483 = vmul.f32 %v382, %v382
    %v484 = vmul.f32 %v387, %v387
    %v485 = vmul.f32 %v390, %v390
    %v486 = vmul.f32 %v395, %v395
    %v487 = vmul.f32 %v398, %v398
    %v488 = vmul.f32 %v403, %v403
    %v489 = vmul.f32 %v406, %v406
    %v490 = vmul.f32 %v411, %v411
    %v491 = vmul.f32 %v414, %v414
    %v492 = vmul.f32 %v419, %v419
    %v493 = vmul.f32 %v422, %v422
    %v494 = vadd.f32 %v462, %v463
    %v495 = vadd.f32 %v494, %v464
    %v496 = vadd.f32 %v495, %v465
    %v497 = vadd.f32 %v496, %v466
    %v498 = vadd.f32 %v497, %v467
    %v499 = vadd.f32 %v498, %v468
    %v500 = vadd.f32 %v499, %v469
    %v501 = vadd.f32 %v500, %v470
    %v502 = vadd.f32 %v501, %v471
    %v503 = vadd.f32 %v502, %v472
    %v504 = vadd.f32 %v503, %v473
    %v505 = vadd.f32 %v504, %v474
    %v506 = vadd.f32 %v505, %v475
    %v507 = vadd.f32 %v506, %v476
    %v508 = vadd.f32 %v507, %v477
    %v509 = vadd.f32 %v508, %v478
    %v510 = vadd.f32 %v509, %v479
    %v511 = vadd.f32 %v510, %v480
    %v512 = vadd.f32 %v511, %v481
    %v513 = vadd.f32 %v512, %v482
    %v514 = vadd.f32 %v513, %v483
    %v515 = vadd.f32 %v514, %v484
    %v516 = vadd.f32 %v515, %v485
    %v517 = vadd.f32 %v516, %v486
    %v518 = vadd.f32 %v517, %v487
    %v519 = vadd.f32 %v518, %v488
    %v520 = vadd.f32 %v519, %v489
    %v521 = vadd.f32 %v520, %v490
    %v522 = vadd.f32 %v521, %v491
    %v523 = vadd.f32 %v522, %v492
    %v524 = vadd.f32 %v523, %v493
    %v525 = vrot.slane %v524, 4
    %v526 = vadd.f32 %v524, %v525
    %v527 = vrot.slane %v526, 2
    %v528 = vadd.f32 %v526, %v527
    %v529 = vrot.slane %v528, 1
    %v530 = vadd.f32 %v528, %v529
    %v531 = vmul.f32 %v461, 0.00390625
    %v532 = vmul.f32 %v530, 0.00390625
    %v533 = vmul.f32 %v531, %v531
    %v534 = vsub.f32 %v532, %v533
    %v535 = vmax.f32 %v534, 0.0
    %v536 = vld [vmem:[#allocation8] sm:$0x1]
    %v537 = vld [vmem:[#allocation9] sm:$0x1]
    %v538 = vld [vmem:[#allocation11] sm:$0x1]
    %v539 = vadd.f32 %v535, 1e-05
    %v540 = vrsqrt.pop %v539
    %v541 = vmul.f32 %v536, %v540
    %v542 = vmul.f32 %v531, %v541
    %v543 = vsub.f32 %v537, %v542
    %v544 = vlaneseq
    %v545 = vshrl.u32 %v544, 7
    %v546 = vsub.s32 0, %v545
    %v547 = vrot.slane %v541, %v546
    %v548 = vmul.f32 %v299, %v547
    %v549 = vmul.f32 %v302, %v547
    %v550 = vmul.f32 %v307, %v547
    %v551 = vmul.f32 %v310, %v547
    %v552 = vmul.f32 %v315, %v547
    %v553 = vmul.f32 %v318, %v547
    %v554 = vmul.f32 %v323, %v547
    %v555 = vmul.f32 %v326, %v547
    %v556 = vmul.f32 %v331, %v547
    %v557 = vmul.f32 %v334, %v547
    %v558 = vmul.f32 %v339, %v547
    %v559 = vmul.f32 %v342, %v547
    %v560 = vmul.f32 %v347, %v547
    %v561 = vmul.f32 %v350, %v547
    %v562 = vmul.f32 %v355, %v547
    %v563 = vmul.f32 %v358, %v547
    %v564 = vmul.f32 %v363, %v547
    %v565 = vmul.f32 %v366, %v547
    %v566 = vmul.f32 %v371, %v547
    %v567 = vmul.f32 %v374, %v547
    %v568 = vmul.f32 %v379, %v547
    %v569 = vmul.f32 %v382, %v547
    %v570 = vmul.f32 %v387, %v547
    %v571 = vmul.f32 %v390, %v547
    %v572 = vmul.f32 %v395, %v547
    %v573 = vmul.f32 %v398, %v547
    %v574 = vmul.f32 %v403, %v547
    %v575 = vmul.f32 %v406, %v547
    %v576 = vmul.f32 %v411, %v547
    %v577 = vmul.f32 %v414, %v547
    %v578 = vmul.f32 %v419, %v547
    %v579 = vmul.f32 %v422, %v547
    %v580 = vlaneseq
    %v581 = vshrl.u32 %v580, 7
    %v582 = vsub.s32 0, %v581
    %v583 = vrot.slane %v543, %v582
    %v584 = vadd.f32 %v548, %v583
    %v585 = vadd.f32 %v549, %v583
    %v586 = vadd.f32 %v550, %v583
    %v587 = vadd.f32 %v551, %v583
    %v588 = vadd.f32 %v552, %v583
    %v589 = vadd.f32 %v553, %v583
    %v590 = vadd.f32 %v554, %v583
    %v591 = vadd.f32 %v555, %v583
    %v592 = vadd.f32 %v556, %v583
    %v593 = vadd.f32 %v557, %v583
    %v594 = vadd.f32 %v558, %v583
    %v595 = vadd.f32 %v559, %v583
    %v596 = vadd.f32 %v560, %v583
    %v597 = vadd.f32 %v561, %v583
    %v598 = vadd.f32 %v562, %v583
    %v599 = vadd.f32 %v563, %v583
    %v600 = vadd.f32 %v564, %v583
    %v601 = vadd.f32 %v565, %v583
    %v602 = vadd.f32 %v566, %v583
    %v603 = vadd.f32 %v567, %v583
    %v604 = vadd.f32 %v568, %v583
    %v605 = vadd.f32 %v569, %v583
    %v606 = vadd.f32 %v570, %v583
    %v607 = vadd.f32 %v571, %v583
    %v608 = vadd.f32 %v572, %v583
    %v609 = vadd.f32 %v573, %v583
    %v610 = vadd.f32 %v574, %v583
    %v611 = vadd.f32 %v575, %v583
    %v612 = vadd.f32 %v576, %v583
    %v613 = vadd.f32 %v577, %v583
    %v614 = vadd.f32 %v578, %v583
    %v615 = vadd.f32 %v579, %v583
    %vm616 = vcmp.gt.f32.partialorder %v584, 0.0
    %vm617 = vcmp.gt.f32.partialorder %v585, 0.0
    %vm618 = vcmp.gt.f32.partialorder %v586, 0.0
    %vm619 = vcmp.gt.f32.partialorder %v587, 0.0
    %vm620 = vcmp.gt.f32.partialorder %v588, 0.0
    %vm621 = vcmp.gt.f32.partialorder %v589, 0.0
    %vm622 = vcmp.gt.f32.partialorder %v590, 0.0
    %vm623 = vcmp.gt.f32.partialorder %v591, 0.0
    %vm624 = vcmp.gt.f32.partialorder %v592, 0.0
    %vm625 = vcmp.gt.f32.partialorder %v593, 0.0
    %vm626 = vcmp.gt.f32.partialorder %v594, 0.0
    %vm627 = vcmp.gt.f32.partialorder %v595, 0.0
    %vm628 = vcmp.gt.f32.partialorder %v596, 0.0
    %vm629 = vcmp.gt.f32.partialorder %v597, 0.0
    %vm630 = vcmp.gt.f32.partialorder %v598, 0.0
    %vm631 = vcmp.gt.f32.partialorder %v599, 0.0
    %vm632 = vcmp.gt.f32.partialorder %v600, 0.0
    %vm633 = vcmp.gt.f32.partialorder %v601, 0.0
    %vm634 = vcmp.gt.f32.partialorder %v602, 0.0
    %vm635 = vcmp.gt.f32.partialorder %v603, 0.0
    %vm636 = vcmp.gt.f32.partialorder %v604, 0.0
    %vm637 = vcmp.gt.f32.partialorder %v605, 0.0
    %vm638 = vcmp.gt.f32.partialorder %v606, 0.0
    %vm639 = vcmp.gt.f32.partialorder %v607, 0.0
    %vm640 = vcmp.gt.f32.partialorder %v608, 0.0
    %vm641 = vcmp.gt.f32.partialorder %v609, 0.0
    %vm642 = vcmp.gt.f32.partialorder %v610, 0.0
    %vm643 = vcmp.gt.f32.partialorder %v611, 0.0
    %vm644 = vcmp.gt.f32.partialorder %v612, 0.0
    %vm645 = vcmp.gt.f32.partialorder %v613, 0.0
    %vm646 = vcmp.gt.f32.partialorder %v614, 0.0
    %vm647 = vcmp.gt.f32.partialorder %v615, 0.0
    %v648 = vlaneseq
    %v649 = vshrl.u32 %v648, 7
    %v650 = vsub.s32 0, %v649
    %v651 = vrot.slane %v538, %v650
    %v652 = vmul.f32 %v651, %v584
    %v653 = vmul.f32 %v651, %v585
    %v654 = vmul.f32 %v651, %v586
    %v655 = vmul.f32 %v651, %v587
    %v656 = vmul.f32 %v651, %v588
    %v657 = vmul.f32 %v651, %v589
    %v658 = vmul.f32 %v651, %v590
    %v659 = vmul.f32 %v651, %v591
    %v660 = vmul.f32 %v651, %v592
    %v661 = vmul.f32 %v651, %v593
    %v662 = vmul.f32 %v651, %v594
    %v663 = vmul.f32 %v651, %v595
    %v664 = vmul.f32 %v651, %v596
    %v665 = vmul.f32 %v651, %v597
    %v666 = vmul.f32 %v651, %v598
    %v667 = vmul.f32 %v651, %v599
    %v668 = vmul.f32 %v651, %v600
    %v669 = vmul.f32 %v651, %v601
    %v670 = vmul.f32 %v651, %v602
    %v671 = vmul.f32 %v651, %v603
    %v672 = vmul.f32 %v651, %v604
    %v673 = vmul.f32 %v651, %v605
    %v674 = vmul.f32 %v651, %v606
    %v675 = vmul.f32 %v651, %v607
    %v676 = vmul.f32 %v651, %v608
    %v677 = vmul.f32 %v651, %v609
    %v678 = vmul.f32 %v651, %v610
    %v679 = vmul.f32 %v651, %v611
    %v680 = vmul.f32 %v651, %v612
    %v681 = vmul.f32 %v651, %v613
    %v682 = vmul.f32 %v651, %v614
    %v683 = vmul.f32 %v651, %v615
    %v684 = vsel %vm616, %v584, %v652
    %v685 = vsel %vm617, %v585, %v653
    %v686 = vsel %vm618, %v586, %v654
    %v687 = vsel %vm619, %v587, %v655
    %v688 = vsel %vm620, %v588, %v656
    %v689 = vsel %vm621, %v589, %v657
    %v690 = vsel %vm622, %v590, %v658
    %v691 = vsel %vm623, %v591, %v659
    %v692 = vsel %vm624, %v592, %v660
    %v693 = vsel %vm625, %v593, %v661
    %v694 = vsel %vm626, %v594, %v662
    %v695 = vsel %vm627, %v595, %v663
    %v696 = vsel %vm628, %v596, %v664
    %v697 = vsel %vm629, %v597, %v665
    %v698 = vsel %vm630, %v598, %v666
    %v699 = vsel %vm631, %v599, %v667
    %v700 = vsel %vm632, %v600, %v668
    %v701 = vsel %vm633, %v601, %v669
    %v702 = vsel %vm634, %v602, %v670
    %v703 = vsel %vm635, %v603, %v671
    %v704 = vsel %vm636, %v604, %v672
    %v705 = vsel %vm637, %v605, %v673
    %v706 = vsel %vm638, %v606, %v674
    %v707 = vsel %vm639, %v607, %v675
    %v708 = vsel %vm640, %v608, %v676
    %v709 = vsel %vm641, %v609, %v677
    %v710 = vsel %vm642, %v610, %v678
    %v711 = vsel %vm643, %v611, %v679
    %v712 = vsel %vm644, %v612, %v680
    %v713 = vsel %vm645, %v613, %v681
    %v714 = vsel %vm646, %v614, %v682
    %v715 = vsel %vm647, %v615, %v683
    %v716 = vpack.c.bf16 %v685, %v684
    %v717 = vpack.c.bf16 %v687, %v686
    %v718 = vpack.c.bf16 %v689, %v688
    %v719 = vpack.c.bf16 %v691, %v690
    %v720 = vpack.c.bf16 %v693, %v692
    %v721 = vpack.c.bf16 %v695, %v694
    %v722 = vpack.c.bf16 %v697, %v696
    %v723 = vpack.c.bf16 %v699, %v698
    %v724 = vpack.c.bf16 %v701, %v700
    %v725 = vpack.c.bf16 %v703, %v702
    %v726 = vpack.c.bf16 %v705, %v704
    %v727 = vpack.c.bf16 %v707, %v706
    %v728 = vpack.c.bf16 %v709, %v708
    %v729 = vpack.c.bf16 %v711, %v710
    %v730 = vpack.c.bf16 %v713, %v712
    %v731 = vpack.c.bf16 %v715, %v714
    %v732 = vld [vmem:[%s3] sm:$0xff]
    %v733 = vld [vmem:[%s3 + $0x8] sm:$0xff]
    %v734 = vld [vmem:[%s3 + $0x10] sm:$0xff]
    %v735 = vld [vmem:[%s3 + $0x18] sm:$0xff]
    %v736 = vld [vmem:[%s3 + $0x20] sm:$0xff]
    %v737 = vld [vmem:[%s3 + $0x28] sm:$0xff]
    %v738 = vld [vmem:[%s3 + $0x30] sm:$0xff]
    %v739 = vld [vmem:[%s3 + $0x38] sm:$0xff]
    %v740 = vld [vmem:[%s3 + $0x40] sm:$0xff]
    %v741 = vld [vmem:[%s3 + $0x48] sm:$0xff]
    %v742 = vld [vmem:[%s3 + $0x50] sm:$0xff]
    %v743 = vld [vmem:[%s3 + $0x58] sm:$0xff]
    %v744 = vld [vmem:[%s3 + $0x60] sm:$0xff]
    %v745 = vld [vmem:[%s3 + $0x68] sm:$0xff]
    %v746 = vld [vmem:[%s3 + $0x70] sm:$0xff]
    %v747 = vld [vmem:[%s3 + $0x78] sm:$0xff]
    %v764 = vunpack.c.l.b16 %v732
    %v765 = vunpack.c.h.b16 %v732
    %v766 = vunpack.c.l.b16 %v733
    %v767 = vunpack.c.h.b16 %v733
    %v768 = vunpack.c.l.b16 %v734
    %v769 = vunpack.c.h.b16 %v734
    %v770 = vunpack.c.l.b16 %v735
    %v771 = vunpack.c.h.b16 %v735
    %v772 = vunpack.c.l.b16 %v736
    %v773 = vunpack.c.h.b16 %v736
    %v774 = vunpack.c.l.b16 %v737
    %v775 = vunpack.c.h.b16 %v737
    %v776 = vunpack.c.l.b16 %v738
    %v777 = vunpack.c.h.b16 %v738
    %v778 = vunpack.c.l.b16 %v739
    %v779 = vunpack.c.h.b16 %v739
    %v780 = vunpack.c.l.b16 %v740
    %v781 = vunpack.c.h.b16 %v740
    %v782 = vunpack.c.l.b16 %v741
    %v783 = vunpack.c.h.b16 %v741
    %v784 = vunpack.c.l.b16 %v742
    %v785 = vunpack.c.h.b16 %v742
    %v786 = vunpack.c.l.b16 %v743
    %v787 = vunpack.c.h.b16 %v743
    %v788 = vunpack.c.l.b16 %v744
    %v789 = vunpack.c.h.b16 %v744
    %v790 = vunpack.c.l.b16 %v745
    %v791 = vunpack.c.h.b16 %v745
    %v792 = vunpack.c.l.b16 %v746
    %v793 = vunpack.c.h.b16 %v746
    %v794 = vunpack.c.l.b16 %v747
    %v795 = vunpack.c.h.b16 %v747
    %v796 = vpack.c.b16 %v766, %v764
    %v797 = vpack.c.b16 %v767, %v765
    %v798 = vpack.c.b16 %v770, %v768
    %v799 = vpack.c.b16 %v771, %v769
    %v800 = vpack.c.b16 %v774, %v772
    %v801 = vpack.c.b16 %v775, %v773
    %v802 = vpack.c.b16 %v778, %v776
    %v803 = vpack.c.b16 %v779, %v777
    %v804 = vpack.c.b16 %v782, %v780
    %v805 = vpack.c.b16 %v783, %v781
    %v806 = vpack.c.b16 %v786, %v784
    %v807 = vpack.c.b16 %v787, %v785
    %v808 = vpack.c.b16 %v790, %v788
    %v809 = vpack.c.b16 %v791, %v789
    %v810 = vpack.c.b16 %v794, %v792
    %v811 = vpack.c.b16 %v795, %v793
    %828 = vmatprep.subr.bf16.mxu0 0
    %829 = vmatpush1.bf16.msra.mxu0 %v723
    %830 = vmatprep.subr.bf16.mxu0 0
    %831 = vmatpush1.bf16.msra.mxu0 %v722
    %832 = vmatprep.subr.bf16.mxu0 0
    %833 = vmatpush1.bf16.msra.mxu0 %v721
    %834 = vmatprep.subr.bf16.mxu0 0
    %835 = vmatpush1.bf16.msra.mxu0 %v720
    %836 = vmatprep.subr.bf16.mxu0 0
    %837 = vmatpush1.bf16.msra.mxu0 %v719
    %838 = vmatprep.subr.bf16.mxu0 0
    %839 = vmatpush1.bf16.msra.mxu0 %v718
    %840 = vmatprep.subr.bf16.mxu0 0
    %841 = vmatpush1.bf16.msra.mxu0 %v717
    %842 = vmatprep.subr.bf16.mxu0 0
    %843 = vmatpush1.bf16.msra.mxu0 %v716
    %844 = vmatprep.subr.bf16.mxu0 0
    %845 = vmatpush2.bf16.msra.mxu0 %v731
    %846 = vmatprep.subr.bf16.mxu0 0
    %847 = vmatpush2.bf16.msra.mxu0 %v730
    %848 = vmatprep.subr.bf16.mxu0 0
    %849 = vmatpush2.bf16.msra.mxu0 %v729
    %850 = vmatprep.subr.bf16.mxu0 0
    %851 = vmatpush2.bf16.msra.mxu0 %v728
    %852 = vmatprep.subr.bf16.mxu0 0
    %853 = vmatpush2.bf16.msra.mxu0 %v727
    %854 = vmatprep.subr.bf16.mxu0 0
    %855 = vmatpush2.bf16.msra.mxu0 %v726
    %856 = vmatprep.subr.bf16.mxu0 0
    %857 = vmatpush2.bf16.msra.mxu0 %v725
    %858 = vmatprep.subr.bf16.mxu0 0
    %859 = vmatpush2.bf16.msra.mxu0 %v724
    %860 = vmatprep.mubr.bf16.mxu0 %v797
    %861 = vmatmul.mubr.bf16.gmra.mxu0 %v796
    %v862 = vpop.f32.mrf.mxu0
    %v863 = vadd.f32 0.0, %v862
    %v864 = vpop.f32.mrf.mxu0
    %v865 = vpop.f32.mrf.mxu0
    %v866 = vadd.f32 0.0, %v865
    %v867 = vpop.f32.mrf.mxu0
    %868 = vmatprep.mubr.bf16.mxu0 %v799
    %869 = vmatmul.mubr.bf16.gmra.mxu0 %v798
    %v870 = vpop.f32.mrf.mxu0
    %v871 = vadd.f32 0.0, %v870
    %v872 = vpop.f32.mrf.mxu0
    %v873 = vpop.f32.mrf.mxu0
    %v874 = vadd.f32 0.0, %v873
    %v875 = vpop.f32.mrf.mxu0
    %876 = vmatprep.mubr.bf16.mxu0 %v801
    %877 = vmatmul.mubr.bf16.gmra.mxu0 %v800
    %v878 = vpop.f32.mrf.mxu0
    %v879 = vadd.f32 0.0, %v878
    %v880 = vpop.f32.mrf.mxu0
    %v881 = vpop.f32.mrf.mxu0
    %v882 = vadd.f32 0.0, %v881
    %v883 = vpop.f32.mrf.mxu0
    %884 = vmatprep.mubr.bf16.mxu0 %v803
    %885 = vmatmul.mubr.bf16.gmra.mxu0 %v802
    %v886 = vpop.f32.mrf.mxu0
    %v887 = vadd.f32 0.0, %v886
    %v888 = vpop.f32.mrf.mxu0
    %v889 = vpop.f32.mrf.mxu0
    %v890 = vadd.f32 0.0, %v889
    %v891 = vpop.f32.mrf.mxu0
    %892 = vmatprep.mubr.bf16.mxu0 %v805
    %893 = vmatmul.mubr.bf16.gmra.mxu0 %v804
    %v894 = vpop.f32.mrf.mxu0
    %v895 = vadd.f32 0.0, %v894
    %v896 = vpop.f32.mrf.mxu0
    %v897 = vpop.f32.mrf.mxu0
    %v898 = vadd.f32 0.0, %v897
    %v899 = vpop.f32.mrf.mxu0
    %900 = vmatprep.mubr.bf16.mxu0 %v807
    %901 = vmatmul.mubr.bf16.gmra.mxu0 %v806
    %v902 = vpop.f32.mrf.mxu0
    %v903 = vadd.f32 0.0, %v902
    %v904 = vpop.f32.mrf.mxu0
    %v905 = vpop.f32.mrf.mxu0
    %v906 = vadd.f32 0.0, %v905
    %v907 = vpop.f32.mrf.mxu0
    %908 = vmatprep.mubr.bf16.mxu0 %v809
    %909 = vmatmul.mubr.bf16.gmra.mxu0 %v808
    %v910 = vpop.f32.mrf.mxu0
    %v911 = vadd.f32 0.0, %v910
    %v912 = vpop.f32.mrf.mxu0
    %v913 = vpop.f32.mrf.mxu0
    %v914 = vadd.f32 0.0, %v913
    %v915 = vpop.f32.mrf.mxu0
    %916 = vmatprep.mubr.bf16.mxu0 %v811
    %917 = vmatmul.mubr.bf16.gmra.mxu0 %v810
    %v918 = vpop.f32.mrf.mxu0
    %v919 = vadd.f32 0.0, %v918
    %v920 = vpop.f32.mrf.mxu0
    %v921 = vpop.f32.mrf.mxu0
    %v922 = vadd.f32 0.0, %v921
    %v923 = vpop.f32.mrf.mxu0
    %924 = vdwg.mxu0
    %v925 = vpack.c.bf16 %v866, %v863
    %v926 = vpack.c.bf16 %v874, %v871
    %v927 = vpack.c.bf16 %v882, %v879
    %v928 = vpack.c.bf16 %v890, %v887
    %v929 = vpack.c.bf16 %v898, %v895
    %v930 = vpack.c.bf16 %v906, %v903
    %v931 = vpack.c.bf16 %v914, %v911
    %v932 = vpack.c.bf16 %v922, %v919
    %v933 = vld [vmem:[%s4] sm:$0xff]
    %v934 = vld [vmem:[%s4 + $0x8] sm:$0xff]
    %v935 = vld [vmem:[%s4 + $0x10] sm:$0xff]
    %v936 = vld [vmem:[%s4 + $0x18] sm:$0xff]
    %v937 = vld [vmem:[%s4 + $0x20] sm:$0xff]
    %v938 = vld [vmem:[%s4 + $0x28] sm:$0xff]
    %v939 = vld [vmem:[%s4 + $0x30] sm:$0xff]
    %v940 = vld [vmem:[%s4 + $0x38] sm:$0xff]
    %v941 = vld [vmem:[%s4 + $0x40] sm:$0xff]
    %v942 = vld [vmem:[%s4 + $0x48] sm:$0xff]
    %v943 = vld [vmem:[%s4 + $0x50] sm:$0xff]
    %v944 = vld [vmem:[%s4 + $0x58] sm:$0xff]
    %v945 = vld [vmem:[%s4 + $0x60] sm:$0xff]
    %v946 = vld [vmem:[%s4 + $0x68] sm:$0xff]
    %v947 = vld [vmem:[%s4 + $0x70] sm:$0xff]
    %v948 = vld [vmem:[%s4 + $0x78] sm:$0xff]
    %v965 = vunpack.c.l.b16 %v933
    %v966 = vunpack.c.h.b16 %v933
    %v967 = vunpack.c.l.b16 %v934
    %v968 = vunpack.c.h.b16 %v934
    %v969 = vunpack.c.l.b16 %v935
    %v970 = vunpack.c.h.b16 %v935
    %v971 = vunpack.c.l.b16 %v936
    %v972 = vunpack.c.h.b16 %v936
    %v973 = vunpack.c.l.b16 %v937
    %v974 = vunpack.c.h.b16 %v937
    %v975 = vunpack.c.l.b16 %v938
    %v976 = vunpack.c.h.b16 %v938
    %v977 = vunpack.c.l.b16 %v939
    %v978 = vunpack.c.h.b16 %v939
    %v979 = vunpack.c.l.b16 %v940
    %v980 = vunpack.c.h.b16 %v940
    %v981 = vunpack.c.l.b16 %v941
    %v982 = vunpack.c.h.b16 %v941
    %v983 = vunpack.c.l.b16 %v942
    %v984 = vunpack.c.h.b16 %v942
    %v985 = vunpack.c.l.b16 %v943
    %v986 = vunpack.c.h.b16 %v943
    %v987 = vunpack.c.l.b16 %v944
    %v988 = vunpack.c.h.b16 %v944
    %v989 = vunpack.c.l.b16 %v945
    %v990 = vunpack.c.h.b16 %v945
    %v991 = vunpack.c.l.b16 %v946
    %v992 = vunpack.c.h.b16 %v946
    %v993 = vunpack.c.l.b16 %v947
    %v994 = vunpack.c.h.b16 %v947
    %v995 = vunpack.c.l.b16 %v948
    %v996 = vunpack.c.h.b16 %v948
    %v997 = vpack.c.b16 %v967, %v965
    %v998 = vpack.c.b16 %v968, %v966
    %v999 = vpack.c.b16 %v971, %v969
    %v1000 = vpack.c.b16 %v972, %v970
    %v1001 = vpack.c.b16 %v975, %v973
    %v1002 = vpack.c.b16 %v976, %v974
    %v1003 = vpack.c.b16 %v979, %v977
    %v1004 = vpack.c.b16 %v980, %v978
    %v1005 = vpack.c.b16 %v983, %v981
    %v1006 = vpack.c.b16 %v984, %v982
    %v1007 = vpack.c.b16 %v987, %v985
    %v1008 = vpack.c.b16 %v988, %v986
    %v1009 = vpack.c.b16 %v991, %v989
    %v1010 = vpack.c.b16 %v992, %v990
    %v1011 = vpack.c.b16 %v995, %v993
    %v1012 = vpack.c.b16 %v996, %v994
    %1029 = vmatprep.subr.bf16.mxu0 0
    %1030 = vmatpush1.bf16.msra.mxu0 %v723
    %1031 = vmatprep.subr.bf16.mxu0 0
    %1032 = vmatpush1.bf16.msra.mxu0 %v722
    %1033 = vmatprep.subr.bf16.mxu0 0
    %1034 = vmatpush1.bf16.msra.mxu0 %v721
    %1035 = vmatprep.subr.bf16.mxu0 0
    %1036 = vmatpush1.bf16.msra.mxu0 %v720
    %1037 = vmatprep.subr.bf16.mxu0 0
    %1038 = vmatpush1.bf16.msra.mxu0 %v719
    %1039 = vmatprep.subr.bf16.mxu0 0
    %1040 = vmatpush1.bf16.msra.mxu0 %v718
    %1041 = vmatprep.subr.bf16.mxu0 0
    %1042 = vmatpush1.bf16.msra.mxu0 %v717
    %1043 = vmatprep.subr.bf16.mxu0 0
    %1044 = vmatpush1.bf16.msra.mxu0 %v716
    %1045 = vmatprep.subr.bf16.mxu0 0
    %1046 = vmatpush2.bf16.msra.mxu0 %v731
    %1047 = vmatprep.subr.bf16.mxu0 0
    %1048 = vmatpush2.bf16.msra.mxu0 %v730
    %1049 = vmatprep.subr.bf16.mxu0 0
    %1050 = vmatpush2.bf16.msra.mxu0 %v729
    %1051 = vmatprep.subr.bf16.mxu0 0
    %1052 = vmatpush2.bf16.msra.mxu0 %v728
    %1053 = vmatprep.subr.bf16.mxu0 0
    %1054 = vmatpush2.bf16.msra.mxu0 %v727
    %1055 = vmatprep.subr.bf16.mxu0 0
    %1056 = vmatpush2.bf16.msra.mxu0 %v726
    %1057 = vmatprep.subr.bf16.mxu0 0
    %1058 = vmatpush2.bf16.msra.mxu0 %v725
    %1059 = vmatprep.subr.bf16.mxu0 0
    %1060 = vmatpush2.bf16.msra.mxu0 %v724
    %1061 = vmatprep.mubr.bf16.mxu0 %v998
    %1062 = vmatmul.mubr.bf16.gmra.mxu0 %v997
    %v1063 = vpop.f32.mrf.mxu0
    %v1064 = vadd.f32 0.0, %v1063
    %v1065 = vpop.f32.mrf.mxu0
    %v1066 = vpop.f32.mrf.mxu0
    %v1067 = vadd.f32 0.0, %v1066
    %v1068 = vpop.f32.mrf.mxu0
    %1069 = vmatprep.mubr.bf16.mxu0 %v1000
    %1070 = vmatmul.mubr.bf16.gmra.mxu0 %v999
    %v1071 = vpop.f32.mrf.mxu0
    %v1072 = vadd.f32 0.0, %v1071
    %v1073 = vpop.f32.mrf.mxu0
    %v1074 = vpop.f32.mrf.mxu0
    %v1075 = vadd.f32 0.0, %v1074
    %v1076 = vpop.f32.mrf.mxu0
    %1077 = vmatprep.mubr.bf16.mxu0 %v1002
    %1078 = vmatmul.mubr.bf16.gmra.mxu0 %v1001
    %v1079 = vpop.f32.mrf.mxu0
    %v1080 = vadd.f32 0.0, %v1079
    %v1081 = vpop.f32.mrf.mxu0
    %v1082 = vpop.f32.mrf.mxu0
    %v1083 = vadd.f32 0.0, %v1082
    %v1084 = vpop.f32.mrf.mxu0
    %1085 = vmatprep.mubr.bf16.mxu0 %v1004
    %1086 = vmatmul.mubr.bf16.gmra.mxu0 %v1003
    %v1087 = vpop.f32.mrf.mxu0
    %v1088 = vadd.f32 0.0, %v1087
    %v1089 = vpop.f32.mrf.mxu0
    %v1090 = vpop.f32.mrf.mxu0
    %v1091 = vadd.f32 0.0, %v1090
    %v1092 = vpop.f32.mrf.mxu0
    %1093 = vmatprep.mubr.bf16.mxu0 %v1006
    %1094 = vmatmul.mubr.bf16.gmra.mxu0 %v1005
    %v1095 = vpop.f32.mrf.mxu0
    %v1096 = vadd.f32 0.0, %v1095
    %v1097 = vpop.f32.mrf.mxu0
    %v1098 = vpop.f32.mrf.mxu0
    %v1099 = vadd.f32 0.0, %v1098
    %v1100 = vpop.f32.mrf.mxu0
    %1101 = vmatprep.mubr.bf16.mxu0 %v1008
    %1102 = vmatmul.mubr.bf16.gmra.mxu0 %v1007
    %v1103 = vpop.f32.mrf.mxu0
    %v1104 = vadd.f32 0.0, %v1103
    %v1105 = vpop.f32.mrf.mxu0
    %v1106 = vpop.f32.mrf.mxu0
    %v1107 = vadd.f32 0.0, %v1106
    %v1108 = vpop.f32.mrf.mxu0
    %1109 = vmatprep.mubr.bf16.mxu0 %v1010
    %1110 = vmatmul.mubr.bf16.gmra.mxu0 %v1009
    %v1111 = vpop.f32.mrf.mxu0
    %v1112 = vadd.f32 0.0, %v1111
    %v1113 = vpop.f32.mrf.mxu0
    %v1114 = vpop.f32.mrf.mxu0
    %v1115 = vadd.f32 0.0, %v1114
    %v1116 = vpop.f32.mrf.mxu0
    %1117 = vmatprep.mubr.bf16.mxu0 %v1012
    %1118 = vmatmul.mubr.bf16.gmra.mxu0 %v1011
    %v1119 = vpop.f32.mrf.mxu0
    %v1120 = vadd.f32 0.0, %v1119
    %v1121 = vpop.f32.mrf.mxu0
    %v1122 = vpop.f32.mrf.mxu0
    %v1123 = vadd.f32 0.0, %v1122
    %v1124 = vpop.f32.mrf.mxu0
    %1125 = vdwg.mxu0
    %v1126 = vpack.c.bf16 %v1067, %v1064
    %v1127 = vpack.c.bf16 %v1075, %v1072
    %v1128 = vpack.c.bf16 %v1083, %v1080
    %v1129 = vpack.c.bf16 %v1091, %v1088
    %v1130 = vpack.c.bf16 %v1099, %v1096
    %v1131 = vpack.c.bf16 %v1107, %v1104
    %v1132 = vpack.c.bf16 %v1115, %v1112
    %v1133 = vpack.c.bf16 %v1123, %v1120
    %v1142 = vunpack.c.l.b16 %v925
    %v1143 = vunpack.c.l.b16 %v1126
    %v1144 = vunpack.c.h.b16 %v925
    %v1145 = vunpack.c.h.b16 %v1126
    %v1146 = vunpack.c.l.b16 %v926
    %v1147 = vunpack.c.l.b16 %v1127
    %v1148 = vunpack.c.h.b16 %v926
    %v1149 = vunpack.c.h.b16 %v1127
    %v1150 = vunpack.c.l.b16 %v927
    %v1151 = vunpack.c.l.b16 %v1128
    %v1152 = vunpack.c.h.b16 %v927
    %v1153 = vunpack.c.h.b16 %v1128
    %v1154 = vunpack.c.l.b16 %v928
    %v1155 = vunpack.c.l.b16 %v1129
    %v1156 = vunpack.c.h.b16 %v928
    %v1157 = vunpack.c.h.b16 %v1129
    %v1158 = vpack.c.b16 %v1143, %v1142
    %v1159 = vpack.c.b16 %v1145, %v1144
    %v1160 = vpack.c.b16 %v1147, %v1146
    %v1161 = vpack.c.b16 %v1149, %v1148
    %v1162 = vpack.c.b16 %v1151, %v1150
    %v1163 = vpack.c.b16 %v1153, %v1152
    %v1164 = vpack.c.b16 %v1155, %v1154
    %v1165 = vpack.c.b16 %v1157, %v1156
    %1174 = vst [vmem:[#allocation2 + $0x8] sm:$0xff] %v1158
    %1175 = vst [vmem:[#allocation2 + $0x10] sm:$0xff] %v1159
    %1176 = vst [vmem:[#allocation2 + $0x18] sm:$0xff] %v1160
    %1177 = vst [vmem:[#allocation2 + $0x20] sm:$0xff] %v1161
    %1178 = vst [vmem:[#allocation2 + $0x28] sm:$0xff] %v1162
    %1179 = vst [vmem:[#allocation2 + $0x30] sm:$0xff] %v1163
    %1180 = vst [vmem:[#allocation2 + $0x38] sm:$0xff] %v1164
    %1181 = vst [vmem:[#allocation2 + $0x40] sm:$0xff] %v1165
    %v1190 = vunpack.c.l.b16 %v929
    %v1191 = vunpack.c.l.b16 %v1130
    %v1192 = vunpack.c.h.b16 %v929
    %v1193 = vunpack.c.h.b16 %v1130
    %v1194 = vunpack.c.l.b16 %v930
    %v1195 = vunpack.c.l.b16 %v1131
    %v1196 = vunpack.c.h.b16 %v930
    %v1197 = vunpack.c.h.b16 %v1131
    %v1198 = vunpack.c.l.b16 %v931
    %v1199 = vunpack.c.l.b16 %v1132
    %v1200 = vunpack.c.h.b16 %v931
    %v1201 = vunpack.c.h.b16 %v1132
    %v1202 = vunpack.c.l.b16 %v932
    %v1203 = vunpack.c.l.b16 %v1133
    %v1204 = vunpack.c.h.b16 %v932
    %v1205 = vunpack.c.h.b16 %v1133
    %v1206 = vpack.c.b16 %v1191, %v1190
    %v1207 = vpack.c.b16 %v1193, %v1192
    %v1208 = vpack.c.b16 %v1195, %v1194
    %v1209 = vpack.c.b16 %v1197, %v1196
    %v1210 = vpack.c.b16 %v1199, %v1198
    %v1211 = vpack.c.b16 %v1201, %v1200
    %v1212 = vpack.c.b16 %v1203, %v1202
    %v1213 = vpack.c.b16 %v1205, %v1204
    %1222 = vst [vmem:[#allocation2 + $0x50] sm:$0xff] %v1206
    %1223 = vst [vmem:[#allocation2 + $0x58] sm:$0xff] %v1207
    %1224 = vst [vmem:[#allocation2 + $0x60] sm:$0xff] %v1208
    %1225 = vst [vmem:[#allocation2 + $0x68] sm:$0xff] %v1209
    %1226 = vst [vmem:[#allocation2 + $0x70] sm:$0xff] %v1210
    %1227 = vst [vmem:[#allocation2 + $0x78] sm:$0xff] %v1211
    %1228 = vst [vmem:[#allocation2 + $0x80] sm:$0xff] %v1212
    %1229 = vst [vmem:[#allocation2 + $0x88] sm:$0xff] %v1213
    %v1230 = vld [vmem:[#allocation2] sm:$0xcc]
    %v1231 = vld [vmem:[#allocation2 + $0x8] sm:$0xff]
    %v1232 = vld [vmem:[#allocation2 + $0x10] sm:$0xff]
    %v1233 = vld [vmem:[#allocation2 + $0x18] sm:$0xff]
    %v1234 = vld [vmem:[#allocation2 + $0x20] sm:$0xff]
    %v1235 = vld [vmem:[#allocation2 + $0x28] sm:$0xff]
    %v1236 = vld [vmem:[#allocation2 + $0x30] sm:$0xff]
    %v1237 = vld [vmem:[#allocation2 + $0x38] sm:$0xff]
    %v1238 = vld [vmem:[#allocation2 + $0x40] sm:$0x77]
    %v1239 = vld [vmem:[#allocation2 + $0x48] sm:$0xcc]
    %v1240 = vld [vmem:[#allocation2 + $0x50] sm:$0xff]
    %v1241 = vld [vmem:[#allocation2 + $0x58] sm:$0xff]
    %v1242 = vld [vmem:[#allocation2 + $0x60] sm:$0xff]
    %v1243 = vld [vmem:[#allocation2 + $0x68] sm:$0xff]
    %v1244 = vld [vmem:[#allocation2 + $0x70] sm:$0xff]
    %v1245 = vld [vmem:[#allocation2 + $0x78] sm:$0xff]
    %v1246 = vld [vmem:[#allocation2 + $0x80] sm:$0xff]
    %v1247 = vld [vmem:[#allocation2 + $0x88] sm:$0x77]
    %v1257 = vunpack.c.l.b16 %v1230
    %v1258 = vunpack.c.h.b16 %v1230
    %v1259 = vunpack.c.l.b16 %v1231
    %v1260 = vunpack.c.h.b16 %v1231
    %v1261 = vunpack.c.l.b16 %v1232
    %v1262 = vunpack.c.h.b16 %v1232
    %v1263 = vunpack.c.l.b16 %v1233
    %v1264 = vunpack.c.h.b16 %v1233
    %v1265 = vunpack.c.l.b16 %v1234
    %v1266 = vunpack.c.h.b16 %v1234
    %v1267 = vunpack.c.l.b16 %v1235
    %v1268 = vunpack.c.h.b16 %v1235
    %v1269 = vunpack.c.l.b16 %v1236
    %v1270 = vunpack.c.h.b16 %v1236
    %v1271 = vunpack.c.l.b16 %v1237
    %v1272 = vunpack.c.h.b16 %v1237
    %v1273 = vunpack.c.l.b16 %v1238
    %v1274 = vunpack.c.h.b16 %v1238
    %v1275 = vpack.c.b16 %v1259, %v1257
    %v1276 = vpack.c.b16 %v1260, %v1258
    %v1277 = vpack.c.b16 %v1263, %v1261
    %v1278 = vpack.c.b16 %v1264, %v1262
    %v1279 = vpack.c.b16 %v1267, %v1265
    %v1280 = vpack.c.b16 %v1268, %v1266
    %v1281 = vpack.c.b16 %v1271, %v1269
    %v1282 = vpack.c.b16 %v1272, %v1270
    %v1283 = vpack.c.b16 %v1273, %v1273
    %v1284 = vpack.c.b16 %v1274, %v1274
    %vm1285 = vsmask.f32 5376
    %v1287 = vshrl.u32 %v1275, 16
    %v1289 = vrot.slane %v1287, 2
    %v1290 = vshll.u32 %v1275, 16
    %v1292 = vrot.slane %v1290, 3
    %v1293 = vor.u32 %v1289, %v1292
    %v1295 = vshrl.u32 %v1277, 16
    %v1297 = vrot.slane %v1295, 2
    %v1298 = vshll.u32 %v1277, 16
    %v1300 = vrot.slane %v1298, 3
    %v1301 = vor.u32 %v1297, %v1300
    %v1302 = vsel %vm1285, %v1293, %v1301
    %v1304 = vshrl.u32 %v1276, 16
    %v1306 = vrot.slane %v1304, 2
    %v1307 = vshll.u32 %v1276, 16
    %v1309 = vrot.slane %v1307, 3
    %v1310 = vor.u32 %v1306, %v1309
    %v1312 = vshrl.u32 %v1278, 16
    %v1314 = vrot.slane %v1312, 2
    %v1315 = vshll.u32 %v1278, 16
    %v1317 = vrot.slane %v1315, 3
    %v1318 = vor.u32 %v1314, %v1317
    %v1319 = vsel %vm1285, %v1310, %v1318
    %v1321 = vshrl.u32 %v1279, 16
    %v1323 = vrot.slane %v1321, 2
    %v1324 = vshll.u32 %v1279, 16
    %v1326 = vrot.slane %v1324, 3
    %v1327 = vor.u32 %v1323, %v1326
    %v1328 = vsel %vm1285, %v1301, %v1327
    %v1330 = vshrl.u32 %v1280, 16
    %v1332 = vrot.slane %v1330, 2
    %v1333 = vshll.u32 %v1280, 16
    %v1335 = vrot.slane %v1333, 3
    %v1336 = vor.u32 %v1332, %v1335
    %v1337 = vsel %vm1285, %v1318, %v1336
    %v1339 = vshrl.u32 %v1281, 16
    %v1341 = vrot.slane %v1339, 2
    %v1342 = vshll.u32 %v1281, 16
    %v1344 = vrot.slane %v1342, 3
    %v1345 = vor.u32 %v1341, %v1344
    %v1346 = vsel %vm1285, %v1327, %v1345
    %v1348 = vshrl.u32 %v1282, 16
    %v1350 = vrot.slane %v1348, 2
    %v1351 = vshll.u32 %v1282, 16
    %v1353 = vrot.slane %v1351, 3
    %v1354 = vor.u32 %v1350, %v1353
    %v1355 = vsel %vm1285, %v1336, %v1354
    %v1357 = vshrl.u32 %v1283, 16
    %v1359 = vrot.slane %v1357, 2
    %v1360 = vshll.u32 %v1283, 16
    %v1362 = vrot.slane %v1360, 3
    %v1363 = vor.u32 %v1359, %v1362
    %v1364 = vsel %vm1285, %v1345, %v1363
    %v1366 = vshrl.u32 %v1284, 16
    %v1368 = vrot.slane %v1366, 2
    %v1369 = vshll.u32 %v1284, 16
    %v1371 = vrot.slane %v1369, 3
    %v1372 = vor.u32 %v1368, %v1371
    %v1373 = vsel %vm1285, %v1354, %v1372
    %v1391 = vunpack.c.l.b16 %v1239
    %v1392 = vunpack.c.h.b16 %v1239
    %v1393 = vunpack.c.l.b16 %v1240
    %v1394 = vunpack.c.h.b16 %v1240
    %v1395 = vunpack.c.l.b16 %v1241
    %v1396 = vunpack.c.h.b16 %v1241
    %v1397 = vunpack.c.l.b16 %v1242
    %v1398 = vunpack.c.h.b16 %v1242
    %v1399 = vunpack.c.l.b16 %v1243
    %v1400 = vunpack.c.h.b16 %v1243
    %v1401 = vunpack.c.l.b16 %v1244
    %v1402 = vunpack.c.h.b16 %v1244
    %v1403 = vunpack.c.l.b16 %v1245
    %v1404 = vunpack.c.h.b16 %v1245
    %v1405 = vunpack.c.l.b16 %v1246
    %v1406 = vunpack.c.h.b16 %v1246
    %v1407 = vunpack.c.l.b16 %v1247
    %v1408 = vunpack.c.h.b16 %v1247
    %v1409 = vpack.c.b16 %v1393, %v1391
    %v1410 = vpack.c.b16 %v1394, %v1392
    %v1411 = vpack.c.b16 %v1397, %v1395
    %v1412 = vpack.c.b16 %v1398, %v1396
    %v1413 = vpack.c.b16 %v1401, %v1399
    %v1414 = vpack.c.b16 %v1402, %v1400
    %v1415 = vpack.c.b16 %v1405, %v1403
    %v1416 = vpack.c.b16 %v1406, %v1404
    %v1417 = vpack.c.b16 %v1407, %v1407
    %v1418 = vpack.c.b16 %v1408, %v1408
    %v1420 = vshrl.u32 %v1409, 16
    %v1422 = vrot.slane %v1420, 2
    %v1423 = vshll.u32 %v1409, 16
    %v1425 = vrot.slane %v1423, 3
    %v1426 = vor.u32 %v1422, %v1425
    %v1428 = vshrl.u32 %v1411, 16
    %v1430 = vrot.slane %v1428, 2
    %v1431 = vshll.u32 %v1411, 16
    %v1433 = vrot.slane %v1431, 3
    %v1434 = vor.u32 %v1430, %v1433
    %v1435 = vsel %vm1285, %v1426, %v1434
    %v1437 = vshrl.u32 %v1410, 16
    %v1439 = vrot.slane %v1437, 2
    %v1440 = vshll.u32 %v1410, 16
    %v1442 = vrot.slane %v1440, 3
    %v1443 = vor.u32 %v1439, %v1442
    %v1445 = vshrl.u32 %v1412, 16
    %v1447 = vrot.slane %v1445, 2
    %v1448 = vshll.u32 %v1412, 16
    %v1450 = vrot.slane %v1448, 3
    %v1451 = vor.u32 %v1447, %v1450
    %v1452 = vsel %vm1285, %v1443, %v1451
    %v1454 = vshrl.u32 %v1413, 16
    %v1456 = vrot.slane %v1454, 2
    %v1457 = vshll.u32 %v1413, 16
    %v1459 = vrot.slane %v1457, 3
    %v1460 = vor.u32 %v1456, %v1459
    %v1461 = vsel %vm1285, %v1434, %v1460
    %v1463 = vshrl.u32 %v1414, 16
    %v1465 = vrot.slane %v1463, 2
    %v1466 = vshll.u32 %v1414, 16
    %v1468 = vrot.slane %v1466, 3
    %v1469 = vor.u32 %v1465, %v1468
    %v1470 = vsel %vm1285, %v1451, %v1469
    %v1472 = vshrl.u32 %v1415, 16
    %v1474 = vrot.slane %v1472, 2
    %v1475 = vshll.u32 %v1415, 16
    %v1477 = vrot.slane %v1475, 3
    %v1478 = vor.u32 %v1474, %v1477
    %v1479 = vsel %vm1285, %v1460, %v1478
    %v1481 = vshrl.u32 %v1416, 16
    %v1483 = vrot.slane %v1481, 2
    %v1484 = vshll.u32 %v1416, 16
    %v1486 = vrot.slane %v1484, 3
    %v1487 = vor.u32 %v1483, %v1486
    %v1488 = vsel %vm1285, %v1469, %v1487
    %v1490 = vshrl.u32 %v1417, 16
    %v1492 = vrot.slane %v1490, 2
    %v1493 = vshll.u32 %v1417, 16
    %v1495 = vrot.slane %v1493, 3
    %v1496 = vor.u32 %v1492, %v1495
    %v1497 = vsel %vm1285, %v1478, %v1496
    %v1499 = vshrl.u32 %v1418, 16
    %v1501 = vrot.slane %v1499, 2
    %v1502 = vshll.u32 %v1418, 16
    %v1504 = vrot.slane %v1502, 3
    %v1505 = vor.u32 %v1501, %v1504
    %v1506 = vsel %vm1285, %v1487, %v1505
    %v1515 = vld [vmem:[#allocation6] sm:$0xf]
    %v1516 = vld [vmem:[#allocation6 + $0x4] sm:$0xf]
    %v1517 = vld [vmem:[#allocation6 + $0x8] sm:$0xf]
    %v1518 = vld [vmem:[#allocation6 + $0xc] sm:$0xf]
    %v1519 = vld [vmem:[#allocation6 + $0x10] sm:$0xf]
    %v1520 = vld [vmem:[#allocation6 + $0x14] sm:$0xf]
    %v1521 = vld [vmem:[#allocation6 + $0x18] sm:$0xf]
    %v1522 = vld [vmem:[#allocation6 + $0x1c] sm:$0xf]
    %v1523 = vld [vmem:[#allocation6 + $0x20] sm:$0xf]
    %v1524 = vld [vmem:[#allocation6 + $0x24] sm:$0xf]
    %v1525 = vld [vmem:[#allocation6 + $0x28] sm:$0xf]
    %v1526 = vld [vmem:[#allocation6 + $0x2c] sm:$0xf]
    %v1527 = vld [vmem:[#allocation6 + $0x30] sm:$0xf]
    %v1528 = vld [vmem:[#allocation6 + $0x34] sm:$0xf]
    %v1529 = vld [vmem:[#allocation6 + $0x38] sm:$0xf]
    %v1530 = vld [vmem:[#allocation6 + $0x3c] sm:$0xf]
    %v1531 = vld [vmem:[#allocation6 + $0x40] sm:$0xf]
    %v1532 = vld [vmem:[#allocation6 + $0x44] sm:$0xf]
    %v1533 = vld [vmem:[#allocation6 + $0x48] sm:$0xf]
    %v1534 = vld [vmem:[#allocation6 + $0x4c] sm:$0xf]
    %v1535 = vld [vmem:[#allocation6 + $0x50] sm:$0xf]
    %v1536 = vld [vmem:[#allocation6 + $0x54] sm:$0xf]
    %v1537 = vld [vmem:[#allocation6 + $0x58] sm:$0xf]
    %v1538 = vld [vmem:[#allocation6 + $0x5c] sm:$0xf]
    %v1539 = vld [vmem:[#allocation6 + $0x60] sm:$0xf]
    %v1540 = vld [vmem:[#allocation6 + $0x64] sm:$0xf]
    %v1541 = vld [vmem:[#allocation6 + $0x68] sm:$0xf]
    %v1542 = vld [vmem:[#allocation6 + $0x6c] sm:$0xf]
    %v1543 = vld [vmem:[#allocation6 + $0x70] sm:$0xf]
    %v1544 = vld [vmem:[#allocation6 + $0x74] sm:$0xf]
    %v1545 = vld [vmem:[#allocation6 + $0x78] sm:$0xf]
    %v1546 = vld [vmem:[#allocation6 + $0x7c] sm:$0xf]
    %v1547 = vld [vmem:[#allocation2] sm:$0x88]
    %v1548 = vld [vmem:[#allocation2 + $0x48] sm:$0x88]
    %v1550 = vunpack.c.l.b16 %v1547
    %v1551 = vunpack.c.h.b16 %v1547
    %v1552 = vpack.c.b16 %v1259, %v1550
    %v1553 = vpack.c.b16 %v1260, %v1551
    %vm1554 = vcmask 1044480
    %v1555 = vrot.slane %v1552, 3
    %v1556 = vrot.slane %v1277, 3
    %v1557 = vsel %vm1554, %v1555, %v1556
    %v1558 = vrot.slane %v1553, 3
    %v1559 = vrot.slane %v1278, 3
    %v1560 = vsel %vm1554, %v1558, %v1559
    %v1561 = vrot.slane %v1279, 3
    %v1562 = vsel %vm1554, %v1556, %v1561
    %v1563 = vrot.slane %v1280, 3
    %v1564 = vsel %vm1554, %v1559, %v1563
    %v1565 = vrot.slane %v1281, 3
    %v1566 = vsel %vm1554, %v1561, %v1565
    %v1567 = vrot.slane %v1282, 3
    %v1568 = vsel %vm1554, %v1563, %v1567
    %v1569 = vrot.slane %v1283, 3
    %v1570 = vsel %vm1554, %v1565, %v1569
    %v1571 = vrot.slane %v1284, 3
    %v1572 = vsel %vm1554, %v1567, %v1571
    %v1582 = vunpack.c.l.b16 %v1548
    %v1583 = vunpack.c.h.b16 %v1548
    %v1584 = vpack.c.b16 %v1393, %v1582
    %v1585 = vpack.c.b16 %v1394, %v1583
    %v1586 = vrot.slane %v1584, 3
    %v1587 = vrot.slane %v1411, 3
    %v1588 = vsel %vm1554, %v1586, %v1587
    %v1589 = vrot.slane %v1585, 3
    %v1590 = vrot.slane %v1412, 3
    %v1591 = vsel %vm1554, %v1589, %v1590
    %v1592 = vrot.slane %v1413, 3
    %v1593 = vsel %vm1554, %v1587, %v1592
    %v1594 = vrot.slane %v1414, 3
    %v1595 = vsel %vm1554, %v1590, %v1594
    %v1596 = vrot.slane %v1415, 3
    %v1597 = vsel %vm1554, %v1592, %v1596
    %v1598 = vrot.slane %v1416, 3
    %v1599 = vsel %vm1554, %v1594, %v1598
    %v1600 = vrot.slane %v1417, 3
    %v1601 = vsel %vm1554, %v1596, %v1600
    %v1602 = vrot.slane %v1418, 3
    %v1603 = vsel %vm1554, %v1598, %v1602
    %s1612 = scalar_lea.vmem [#allocation6], 128
    %v1613 = vld [vmem:[%s1612] sm:$0xf]
    %v1614 = vld [vmem:[%s1612 + $0x4] sm:$0xf]
    %v1615 = vld [vmem:[%s1612 + $0x8] sm:$0xf]
    %v1616 = vld [vmem:[%s1612 + $0xc] sm:$0xf]
    %v1617 = vld [vmem:[%s1612 + $0x10] sm:$0xf]
    %v1618 = vld [vmem:[%s1612 + $0x14] sm:$0xf]
    %v1619 = vld [vmem:[%s1612 + $0x18] sm:$0xf]
    %v1620 = vld [vmem:[%s1612 + $0x1c] sm:$0xf]
    %v1621 = vld [vmem:[%s1612 + $0x20] sm:$0xf]
    %v1622 = vld [vmem:[%s1612 + $0x24] sm:$0xf]
    %v1623 = vld [vmem:[%s1612 + $0x28] sm:$0xf]
    %v1624 = vld [vmem:[%s1612 + $0x2c] sm:$0xf]
    %v1625 = vld [vmem:[%s1612 + $0x30] sm:$0xf]
    %v1626 = vld [vmem:[%s1612 + $0x34] sm:$0xf]
    %v1627 = vld [vmem:[%s1612 + $0x38] sm:$0xf]
    %v1628 = vld [vmem:[%s1612 + $0x3c] sm:$0xf]
    %v1629 = vld [vmem:[%s1612 + $0x40] sm:$0xf]
    %v1630 = vld [vmem:[%s1612 + $0x44] sm:$0xf]
    %v1631 = vld [vmem:[%s1612 + $0x48] sm:$0xf]
    %v1632 = vld [vmem:[%s1612 + $0x4c] sm:$0xf]
    %v1633 = vld [vmem:[%s1612 + $0x50] sm:$0xf]
    %v1634 = vld [vmem:[%s1612 + $0x54] sm:$0xf]
    %v1635 = vld [vmem:[%s1612 + $0x58] sm:$0xf]
    %v1636 = vld [vmem:[%s1612 + $0x5c] sm:$0xf]
    %v1637 = vld [vmem:[%s1612 + $0x60] sm:$0xf]
    %v1638 = vld [vmem:[%s1612 + $0x64] sm:$0xf]
    %v1639 = vld [vmem:[%s1612 + $0x68] sm:$0xf]
    %v1640 = vld [vmem:[%s1612 + $0x6c] sm:$0xf]
    %v1641 = vld [vmem:[%s1612 + $0x70] sm:$0xf]
    %v1642 = vld [vmem:[%s1612 + $0x74] sm:$0xf]
    %v1643 = vld [vmem:[%s1612 + $0x78] sm:$0xf]
    %v1644 = vld [vmem:[%s1612 + $0x7c] sm:$0xf]
    %v1677 = vunpack.c.l.b16 %v1613
    %v1678 = vunpack.c.l.b16 %v1614
    %v1679 = vunpack.c.l.b16 %v1615
    %v1680 = vunpack.c.l.b16 %v1616
    %v1681 = vunpack.c.l.b16 %v1617
    %v1682 = vunpack.c.l.b16 %v1618
    %v1683 = vunpack.c.l.b16 %v1619
    %v1684 = vunpack.c.l.b16 %v1620
    %v1685 = vunpack.c.l.b16 %v1621
    %v1686 = vunpack.c.l.b16 %v1622
    %v1687 = vunpack.c.l.b16 %v1623
    %v1688 = vunpack.c.l.b16 %v1624
    %v1689 = vunpack.c.l.b16 %v1625
    %v1690 = vunpack.c.l.b16 %v1626
    %v1691 = vunpack.c.l.b16 %v1627
    %v1692 = vunpack.c.l.b16 %v1628
    %v1693 = vunpack.c.l.b16 %v1629
    %v1694 = vunpack.c.l.b16 %v1630
    %v1695 = vunpack.c.l.b16 %v1631
    %v1696 = vunpack.c.l.b16 %v1632
    %v1697 = vunpack.c.l.b16 %v1633
    %v1698 = vunpack.c.l.b16 %v1634
    %v1699 = vunpack.c.l.b16 %v1635
    %v1700 = vunpack.c.l.b16 %v1636
    %v1701 = vunpack.c.l.b16 %v1637
    %v1702 = vunpack.c.l.b16 %v1638
    %v1703 = vunpack.c.l.b16 %v1639
    %v1704 = vunpack.c.l.b16 %v1640
    %v1705 = vunpack.c.l.b16 %v1641
    %v1706 = vunpack.c.l.b16 %v1642
    %v1707 = vunpack.c.l.b16 %v1643
    %v1708 = vunpack.c.l.b16 %v1644
    %v1709 = vpack.c.b16 %v1678, %v1677
    %v1710 = vpack.c.b16 %v1680, %v1679
    %v1711 = vpack.c.b16 %v1682, %v1681
    %v1712 = vpack.c.b16 %v1684, %v1683
    %v1713 = vpack.c.b16 %v1686, %v1685
    %v1714 = vpack.c.b16 %v1688, %v1687
    %v1715 = vpack.c.b16 %v1690, %v1689
    %v1716 = vpack.c.b16 %v1692, %v1691
    %v1717 = vpack.c.b16 %v1694, %v1693
    %v1718 = vpack.c.b16 %v1696, %v1695
    %v1719 = vpack.c.b16 %v1698, %v1697
    %v1720 = vpack.c.b16 %v1700, %v1699
    %v1721 = vpack.c.b16 %v1702, %v1701
    %v1722 = vpack.c.b16 %v1704, %v1703
    %v1723 = vpack.c.b16 %v1706, %v1705
    %v1724 = vpack.c.b16 %v1708, %v1707
    %1741 = vmatprep.subr.bf16.mxu0 0
    %1742 = vmatpush1.bf16.msra.mxu0 %v1716
    %1743 = vmatprep.subr.bf16.mxu0 0
    %1744 = vmatpush1.bf16.msra.mxu0 %v1715
    %1745 = vmatprep.subr.bf16.mxu0 0
    %1746 = vmatpush1.bf16.msra.mxu0 %v1714
    %1747 = vmatprep.subr.bf16.mxu0 0
    %1748 = vmatpush1.bf16.msra.mxu0 %v1713
    %1749 = vmatprep.subr.bf16.mxu0 0
    %1750 = vmatpush1.bf16.msra.mxu0 %v1712
    %1751 = vmatprep.subr.bf16.mxu0 0
    %1752 = vmatpush1.bf16.msra.mxu0 %v1711
    %1753 = vmatprep.subr.bf16.mxu0 0
    %1754 = vmatpush1.bf16.msra.mxu0 %v1710
    %1755 = vmatprep.subr.bf16.mxu0 0
    %1756 = vmatpush1.bf16.msra.mxu0 %v1709
    %1757 = vmatprep.subr.bf16.mxu0 0
    %1758 = vmatpush2.bf16.msra.mxu0 %v1724
    %1759 = vmatprep.subr.bf16.mxu0 0
    %1760 = vmatpush2.bf16.msra.mxu0 %v1723
    %1761 = vmatprep.subr.bf16.mxu0 0
    %1762 = vmatpush2.bf16.msra.mxu0 %v1722
    %1763 = vmatprep.subr.bf16.mxu0 0
    %1764 = vmatpush2.bf16.msra.mxu0 %v1721
    %1765 = vmatprep.subr.bf16.mxu0 0
    %1766 = vmatpush2.bf16.msra.mxu0 %v1720
    %1767 = vmatprep.subr.bf16.mxu0 0
    %1768 = vmatpush2.bf16.msra.mxu0 %v1719
    %1769 = vmatprep.subr.bf16.mxu0 0
    %1770 = vmatpush2.bf16.msra.mxu0 %v1718
    %1771 = vmatprep.subr.bf16.mxu0 0
    %1772 = vmatpush2.bf16.msra.mxu0 %v1717
    %1773 = vmatprep.mubr.bf16.mxu0 %v1560
    %1774 = vmatmul.mubr.bf16.gmra.mxu0 %v1557
    %v1775 = vpop.f32.mrf.mxu0
    %v1776 = vadd.f32 0.0, %v1775
    %v1777 = vpop.f32.mrf.mxu0
    %v1778 = vpop.f32.mrf.mxu0
    %v1779 = vadd.f32 0.0, %v1778
    %v1780 = vpop.f32.mrf.mxu0
    %1781 = vmatprep.mubr.bf16.mxu0 %v1564
    %1782 = vmatmul.mubr.bf16.gmra.mxu0 %v1562
    %v1783 = vpop.f32.mrf.mxu0
    %v1784 = vadd.f32 0.0, %v1783
    %v1785 = vpop.f32.mrf.mxu0
    %v1786 = vpop.f32.mrf.mxu0
    %v1787 = vadd.f32 0.0, %v1786
    %v1788 = vpop.f32.mrf.mxu0
    %1789 = vmatprep.mubr.bf16.mxu0 %v1568
    %1790 = vmatmul.mubr.bf16.gmra.mxu0 %v1566
    %v1791 = vpop.f32.mrf.mxu0
    %v1792 = vadd.f32 0.0, %v1791
    %v1793 = vpop.f32.mrf.mxu0
    %v1794 = vpop.f32.mrf.mxu0
    %v1795 = vadd.f32 0.0, %v1794
    %v1796 = vpop.f32.mrf.mxu0
    %1797 = vmatprep.mubr.bf16.mxu0 %v1572
    %1798 = vmatmul.mubr.bf16.gmra.mxu0 %v1570
    %v1799 = vpop.f32.mrf.mxu0
    %v1800 = vadd.f32 0.0, %v1799
    %v1801 = vpop.f32.mrf.mxu0
    %v1802 = vpop.f32.mrf.mxu0
    %v1803 = vadd.f32 0.0, %v1802
    %v1804 = vpop.f32.mrf.mxu0
    %1805 = vmatprep.mubr.bf16.mxu0 %v1591
    %1806 = vmatmul.mubr.bf16.gmra.mxu0 %v1588
    %v1807 = vpop.f32.mrf.mxu0
    %v1808 = vadd.f32 0.0, %v1807
    %v1809 = vpop.f32.mrf.mxu0
    %v1810 = vpop.f32.mrf.mxu0
    %v1811 = vadd.f32 0.0, %v1810
    %v1812 = vpop.f32.mrf.mxu0
    %1813 = vmatprep.mubr.bf16.mxu0 %v1595
    %1814 = vmatmul.mubr.bf16.gmra.mxu0 %v1593
    %v1815 = vpop.f32.mrf.mxu0
    %v1816 = vadd.f32 0.0, %v1815
    %v1817 = vpop.f32.mrf.mxu0
    %v1818 = vpop.f32.mrf.mxu0
    %v1819 = vadd.f32 0.0, %v1818
    %v1820 = vpop.f32.mrf.mxu0
    %1821 = vmatprep.mubr.bf16.mxu0 %v1599
    %1822 = vmatmul.mubr.bf16.gmra.mxu0 %v1597
    %v1823 = vpop.f32.mrf.mxu0
    %v1824 = vadd.f32 0.0, %v1823
    %v1825 = vpop.f32.mrf.mxu0
    %v1826 = vpop.f32.mrf.mxu0
    %v1827 = vadd.f32 0.0, %v1826
    %v1828 = vpop.f32.mrf.mxu0
    %1829 = vmatprep.mubr.bf16.mxu0 %v1603
    %1830 = vmatmul.mubr.bf16.gmra.mxu0 %v1601
    %v1831 = vpop.f32.mrf.mxu0
    %v1832 = vadd.f32 0.0, %v1831
    %v1833 = vpop.f32.mrf.mxu0
    %v1834 = vpop.f32.mrf.mxu0
    %v1835 = vadd.f32 0.0, %v1834
    %v1836 = vpop.f32.mrf.mxu0
    %1837 = vdwg.mxu0
    %v1870 = vunpack.c.l.b16 %v1515
    %v1871 = vunpack.c.l.b16 %v1516
    %v1872 = vunpack.c.l.b16 %v1517
    %v1873 = vunpack.c.l.b16 %v1518
    %v1874 = vunpack.c.l.b16 %v1519
    %v1875 = vunpack.c.l.b16 %v1520
    %v1876 = vunpack.c.l.b16 %v1521
    %v1877 = vunpack.c.l.b16 %v1522
    %v1878 = vunpack.c.l.b16 %v1523
    %v1879 = vunpack.c.l.b16 %v1524
    %v1880 = vunpack.c.l.b16 %v1525
    %v1881 = vunpack.c.l.b16 %v1526
    %v1882 = vunpack.c.l.b16 %v1527
    %v1883 = vunpack.c.l.b16 %v1528
    %v1884 = vunpack.c.l.b16 %v1529
    %v1885 = vunpack.c.l.b16 %v1530
    %v1886 = vunpack.c.l.b16 %v1531
    %v1887 = vunpack.c.l.b16 %v1532
    %v1888 = vunpack.c.l.b16 %v1533
    %v1889 = vunpack.c.l.b16 %v1534
    %v1890 = vunpack.c.l.b16 %v1535
    %v1891 = vunpack.c.l.b16 %v1536
    %v1892 = vunpack.c.l.b16 %v1537
    %v1893 = vunpack.c.l.b16 %v1538
    %v1894 = vunpack.c.l.b16 %v1539
    %v1895 = vunpack.c.l.b16 %v1540
    %v1896 = vunpack.c.l.b16 %v1541
    %v1897 = vunpack.c.l.b16 %v1542
    %v1898 = vunpack.c.l.b16 %v1543
    %v1899 = vunpack.c.l.b16 %v1544
    %v1900 = vunpack.c.l.b16 %v1545
    %v1901 = vunpack.c.l.b16 %v1546
    %v1902 = vpack.c.b16 %v1871, %v1870
    %v1903 = vpack.c.b16 %v1873, %v1872
    %v1904 = vpack.c.b16 %v1875, %v1874
    %v1905 = vpack.c.b16 %v1877, %v1876
    %v1906 = vpack.c.b16 %v1879, %v1878
    %v1907 = vpack.c.b16 %v1881, %v1880
    %v1908 = vpack.c.b16 %v1883, %v1882
    %v1909 = vpack.c.b16 %v1885, %v1884
    %v1910 = vpack.c.b16 %v1887, %v1886
    %v1911 = vpack.c.b16 %v1889, %v1888
    %v1912 = vpack.c.b16 %v1891, %v1890
    %v1913 = vpack.c.b16 %v1893, %v1892
    %v1914 = vpack.c.b16 %v1895, %v1894
    %v1915 = vpack.c.b16 %v1897, %v1896
    %v1916 = vpack.c.b16 %v1899, %v1898
    %v1917 = vpack.c.b16 %v1901, %v1900
    %1934 = vmatprep.subr.bf16.mxu0 0
    %1935 = vmatpush1.bf16.msra.mxu0 %v1909
    %1936 = vmatprep.subr.bf16.mxu0 0
    %1937 = vmatpush1.bf16.msra.mxu0 %v1908
    %1938 = vmatprep.subr.bf16.mxu0 0
    %1939 = vmatpush1.bf16.msra.mxu0 %v1907
    %1940 = vmatprep.subr.bf16.mxu0 0
    %1941 = vmatpush1.bf16.msra.mxu0 %v1906
    %1942 = vmatprep.subr.bf16.mxu0 0
    %1943 = vmatpush1.bf16.msra.mxu0 %v1905
    %1944 = vmatprep.subr.bf16.mxu0 0
    %1945 = vmatpush1.bf16.msra.mxu0 %v1904
    %1946 = vmatprep.subr.bf16.mxu0 0
    %1947 = vmatpush1.bf16.msra.mxu0 %v1903
    %1948 = vmatprep.subr.bf16.mxu0 0
    %1949 = vmatpush1.bf16.msra.mxu0 %v1902
    %1950 = vmatprep.subr.bf16.mxu0 0
    %1951 = vmatpush2.bf16.msra.mxu0 %v1917
    %1952 = vmatprep.subr.bf16.mxu0 0
    %1953 = vmatpush2.bf16.msra.mxu0 %v1916
    %1954 = vmatprep.subr.bf16.mxu0 0
    %1955 = vmatpush2.bf16.msra.mxu0 %v1915
    %1956 = vmatprep.subr.bf16.mxu0 0
    %1957 = vmatpush2.bf16.msra.mxu0 %v1914
    %1958 = vmatprep.subr.bf16.mxu0 0
    %1959 = vmatpush2.bf16.msra.mxu0 %v1913
    %1960 = vmatprep.subr.bf16.mxu0 0
    %1961 = vmatpush2.bf16.msra.mxu0 %v1912
    %1962 = vmatprep.subr.bf16.mxu0 0
    %1963 = vmatpush2.bf16.msra.mxu0 %v1911
    %1964 = vmatprep.subr.bf16.mxu0 0
    %1965 = vmatpush2.bf16.msra.mxu0 %v1910
    %1966 = vmatprep.mubr.bf16.mxu0 %v1319
    %1967 = vmatmul.mubr.bf16.gmra.mxu0 %v1302
    %v1968 = vpop.f32.mrf.mxu0
    %v1969 = vadd.f32 %v1776, %v1968
    %v1970 = vpop.f32.mrf.mxu0
    %v1971 = vpop.f32.mrf.mxu0
    %v1972 = vadd.f32 %v1779, %v1971
    %v1973 = vpop.f32.mrf.mxu0
    %1974 = vmatprep.mubr.bf16.mxu0 %v1337
    %1975 = vmatmul.mubr.bf16.gmra.mxu0 %v1328
    %v1976 = vpop.f32.mrf.mxu0
    %v1977 = vadd.f32 %v1784, %v1976
    %v1978 = vpop.f32.mrf.mxu0
    %v1979 = vpop.f32.mrf.mxu0
    %v1980 = vadd.f32 %v1787, %v1979
    %v1981 = vpop.f32.mrf.mxu0
    %1982 = vmatprep.mubr.bf16.mxu0 %v1355
    %1983 = vmatmul.mubr.bf16.gmra.mxu0 %v1346
    %v1984 = vpop.f32.mrf.mxu0
    %v1985 = vadd.f32 %v1792, %v1984
    %v1986 = vpop.f32.mrf.mxu0
    %v1987 = vpop.f32.mrf.mxu0
    %v1988 = vadd.f32 %v1795, %v1987
    %v1989 = vpop.f32.mrf.mxu0
    %1990 = vmatprep.mubr.bf16.mxu0 %v1373
    %1991 = vmatmul.mubr.bf16.gmra.mxu0 %v1364
    %v1992 = vpop.f32.mrf.mxu0
    %v1993 = vadd.f32 %v1800, %v1992
    %v1994 = vpop.f32.mrf.mxu0
    %v1995 = vpop.f32.mrf.mxu0
    %v1996 = vadd.f32 %v1803, %v1995
    %v1997 = vpop.f32.mrf.mxu0
    %1998 = vmatprep.mubr.bf16.mxu0 %v1452
    %1999 = vmatmul.mubr.bf16.gmra.mxu0 %v1435
    %v2000 = vpop.f32.mrf.mxu0
    %v2001 = vadd.f32 %v1808, %v2000
    %v2002 = vpop.f32.mrf.mxu0
    %v2003 = vpop.f32.mrf.mxu0
    %v2004 = vadd.f32 %v1811, %v2003
    %v2005 = vpop.f32.mrf.mxu0
    %2006 = vmatprep.mubr.bf16.mxu0 %v1470
    %2007 = vmatmul.mubr.bf16.gmra.mxu0 %v1461
    %v2008 = vpop.f32.mrf.mxu0
    %v2009 = vadd.f32 %v1816, %v2008
    %v2010 = vpop.f32.mrf.mxu0
    %v2011 = vpop.f32.mrf.mxu0
    %v2012 = vadd.f32 %v1819, %v2011
    %v2013 = vpop.f32.mrf.mxu0
    %2014 = vmatprep.mubr.bf16.mxu0 %v1488
    %2015 = vmatmul.mubr.bf16.gmra.mxu0 %v1479
    %v2016 = vpop.f32.mrf.mxu0
    %v2017 = vadd.f32 %v1824, %v2016
    %v2018 = vpop.f32.mrf.mxu0
    %v2019 = vpop.f32.mrf.mxu0
    %v2020 = vadd.f32 %v1827, %v2019
    %v2021 = vpop.f32.mrf.mxu0
    %2022 = vmatprep.mubr.bf16.mxu0 %v1506
    %2023 = vmatmul.mubr.bf16.gmra.mxu0 %v1497
    %v2024 = vpop.f32.mrf.mxu0
    %v2025 = vadd.f32 %v1832, %v2024
    %v2026 = vpop.f32.mrf.mxu0
    %v2027 = vpop.f32.mrf.mxu0
    %v2028 = vadd.f32 %v1835, %v2027
    %v2029 = vpop.f32.mrf.mxu0
    %2030 = vdwg.mxu0
    %v2031 = vld [vmem:[#allocation2 + $0x40] sm:$0xff]
    %v2032 = vld [vmem:[#allocation2 + $0x88] sm:$0xff]
    %v2034 = vunpack.c.l.b16 %v2031
    %v2035 = vunpack.c.h.b16 %v2031
    %v2036 = vpack.c.b16 %v2034, %v2034
    %v2037 = vpack.c.b16 %v2035, %v2035
    %vm2038 = vsmask.f32 4352
    %v2040 = vshrl.u32 %v1552, 16
    %v2042 = vrot.slane %v2040, 3
    %v2043 = vshll.u32 %v1552, 16
    %v2045 = vrot.slane %v2043, 4
    %v2046 = vor.u32 %v2042, %v2045
    %v2047 = vrot.slane %v1295, 3
    %v2048 = vrot.slane %v1298, 4
    %v2049 = vor.u32 %v2047, %v2048
    %v2050 = vsel %vm2038, %v2046, %v2049
    %v2052 = vshrl.u32 %v1553, 16
    %v2054 = vrot.slane %v2052, 3
    %v2055 = vshll.u32 %v1553, 16
    %v2057 = vrot.slane %v2055, 4
    %v2058 = vor.u32 %v2054, %v2057
    %v2059 = vrot.slane %v1312, 3
    %v2060 = vrot.slane %v1315, 4
    %v2061 = vor.u32 %v2059, %v2060
    %v2062 = vsel %vm2038, %v2058, %v2061
    %v2063 = vrot.slane %v1321, 3
    %v2064 = vrot.slane %v1324, 4
    %v2065 = vor.u32 %v2063, %v2064
    %v2066 = vsel %vm2038, %v2049, %v2065
    %v2067 = vrot.slane %v1330, 3
    %v2068 = vrot.slane %v1333, 4
    %v2069 = vor.u32 %v2067, %v2068
    %v2070 = vsel %vm2038, %v2061, %v2069
    %v2071 = vrot.slane %v1339, 3
    %v2072 = vrot.slane %v1342, 4
    %v2073 = vor.u32 %v2071, %v2072
    %v2074 = vsel %vm2038, %v2065, %v2073
    %v2075 = vrot.slane %v1348, 3
    %v2076 = vrot.slane %v1351, 4
    %v2077 = vor.u32 %v2075, %v2076
    %v2078 = vsel %vm2038, %v2069, %v2077
    %v2080 = vshrl.u32 %v2036, 16
    %v2082 = vrot.slane %v2080, 3
    %v2083 = vshll.u32 %v2036, 16
    %v2085 = vrot.slane %v2083, 4
    %v2086 = vor.u32 %v2082, %v2085
    %v2087 = vsel %vm2038, %v2073, %v2086
    %v2089 = vshrl.u32 %v2037, 16
    %v2091 = vrot.slane %v2089, 3
    %v2092 = vshll.u32 %v2037, 16
    %v2094 = vrot.slane %v2092, 4
    %v2095 = vor.u32 %v2091, %v2094
    %v2096 = vsel %vm2038, %v2077, %v2095
    %v2106 = vunpack.c.l.b16 %v2032
    %v2107 = vunpack.c.h.b16 %v2032
    %v2108 = vpack.c.b16 %v2106, %v2106
    %v2109 = vpack.c.b16 %v2107, %v2107
    %v2111 = vshrl.u32 %v1584, 16
    %v2113 = vrot.slane %v2111, 3
    %v2114 = vshll.u32 %v1584, 16
    %v2116 = vrot.slane %v2114, 4
    %v2117 = vor.u32 %v2113, %v2116
    %v2118 = vrot.slane %v1428, 3
    %v2119 = vrot.slane %v1431, 4
    %v2120 = vor.u32 %v2118, %v2119
    %v2121 = vsel %vm2038, %v2117, %v2120
    %v2123 = vshrl.u32 %v1585, 16
    %v2125 = vrot.slane %v2123, 3
    %v2126 = vshll.u32 %v1585, 16
    %v2128 = vrot.slane %v2126, 4
    %v2129 = vor.u32 %v2125, %v2128
    %v2130 = vrot.slane %v1445, 3
    %v2131 = vrot.slane %v1448, 4
    %v2132 = vor.u32 %v2130, %v2131
    %v2133 = vsel %vm2038, %v2129, %v2132
    %v2134 = vrot.slane %v1454, 3
    %v2135 = vrot.slane %v1457, 4
    %v2136 = vor.u32 %v2134, %v2135
    %v2137 = vsel %vm2038, %v2120, %v2136
    %v2138 = vrot.slane %v1463, 3
    %v2139 = vrot.slane %v1466, 4
    %v2140 = vor.u32 %v2138, %v2139
    %v2141 = vsel %vm2038, %v2132, %v2140
    %v2142 = vrot.slane %v1472, 3
    %v2143 = vrot.slane %v1475, 4
    %v2144 = vor.u32 %v2142, %v2143
    %v2145 = vsel %vm2038, %v2136, %v2144
    %v2146 = vrot.slane %v1481, 3
    %v2147 = vrot.slane %v1484, 4
    %v2148 = vor.u32 %v2146, %v2147
    %v2149 = vsel %vm2038, %v2140, %v2148
    %v2151 = vshrl.u32 %v2108, 16
    %v2153 = vrot.slane %v2151, 3
    %v2154 = vshll.u32 %v2108, 16
    %v2156 = vrot.slane %v2154, 4
    %v2157 = vor.u32 %v2153, %v2156
    %v2158 = vsel %vm2038, %v2144, %v2157
    %v2160 = vshrl.u32 %v2109, 16
    %v2162 = vrot.slane %v2160, 3
    %v2163 = vshll.u32 %v2109, 16
    %v2165 = vrot.slane %v2163, 4
    %v2166 = vor.u32 %v2162, %v2165
    %v2167 = vsel %vm2038, %v2148, %v2166
    %s2176 = scalar_lea.vmem [#allocation6], 256
    %v2177 = vld [vmem:[%s2176] sm:$0xf]
    %v2178 = vld [vmem:[%s2176 + $0x4] sm:$0xf]
    %v2179 = vld [vmem:[%s2176 + $0x8] sm:$0xf]
    %v2180 = vld [vmem:[%s2176 + $0xc] sm:$0xf]
    %v2181 = vld [vmem:[%s2176 + $0x10] sm:$0xf]
    %v2182 = vld [vmem:[%s2176 + $0x14] sm:$0xf]
    %v2183 = vld [vmem:[%s2176 + $0x18] sm:$0xf]
    %v2184 = vld [vmem:[%s2176 + $0x1c] sm:$0xf]
    %v2185 = vld [vmem:[%s2176 + $0x20] sm:$0xf]
    %v2186 = vld [vmem:[%s2176 + $0x24] sm:$0xf]
    %v2187 = vld [vmem:[%s2176 + $0x28] sm:$0xf]
    %v2188 = vld [vmem:[%s2176 + $0x2c] sm:$0xf]
    %v2189 = vld [vmem:[%s2176 + $0x30] sm:$0xf]
    %v2190 = vld [vmem:[%s2176 + $0x34] sm:$0xf]
    %v2191 = vld [vmem:[%s2176 + $0x38] sm:$0xf]
    %v2192 = vld [vmem:[%s2176 + $0x3c] sm:$0xf]
    %v2193 = vld [vmem:[%s2176 + $0x40] sm:$0xf]
    %v2194 = vld [vmem:[%s2176 + $0x44] sm:$0xf]
    %v2195 = vld [vmem:[%s2176 + $0x48] sm:$0xf]
    %v2196 = vld [vmem:[%s2176 + $0x4c] sm:$0xf]
    %v2197 = vld [vmem:[%s2176 + $0x50] sm:$0xf]
    %v2198 = vld [vmem:[%s2176 + $0x54] sm:$0xf]
    %v2199 = vld [vmem:[%s2176 + $0x58] sm:$0xf]
    %v2200 = vld [vmem:[%s2176 + $0x5c] sm:$0xf]
    %v2201 = vld [vmem:[%s2176 + $0x60] sm:$0xf]
    %v2202 = vld [vmem:[%s2176 + $0x64] sm:$0xf]
    %v2203 = vld [vmem:[%s2176 + $0x68] sm:$0xf]
    %v2204 = vld [vmem:[%s2176 + $0x6c] sm:$0xf]
    %v2205 = vld [vmem:[%s2176 + $0x70] sm:$0xf]
    %v2206 = vld [vmem:[%s2176 + $0x74] sm:$0xf]
    %v2207 = vld [vmem:[%s2176 + $0x78] sm:$0xf]
    %v2208 = vld [vmem:[%s2176 + $0x7c] sm:$0xf]
    %v2241 = vunpack.c.l.b16 %v2177
    %v2242 = vunpack.c.l.b16 %v2178
    %v2243 = vunpack.c.l.b16 %v2179
    %v2244 = vunpack.c.l.b16 %v2180
    %v2245 = vunpack.c.l.b16 %v2181
    %v2246 = vunpack.c.l.b16 %v2182
    %v2247 = vunpack.c.l.b16 %v2183
    %v2248 = vunpack.c.l.b16 %v2184
    %v2249 = vunpack.c.l.b16 %v2185
    %v2250 = vunpack.c.l.b16 %v2186
    %v2251 = vunpack.c.l.b16 %v2187
    %v2252 = vunpack.c.l.b16 %v2188
    %v2253 = vunpack.c.l.b16 %v2189
    %v2254 = vunpack.c.l.b16 %v2190
    %v2255 = vunpack.c.l.b16 %v2191
    %v2256 = vunpack.c.l.b16 %v2192
    %v2257 = vunpack.c.l.b16 %v2193
    %v2258 = vunpack.c.l.b16 %v2194
    %v2259 = vunpack.c.l.b16 %v2195
    %v2260 = vunpack.c.l.b16 %v2196
    %v2261 = vunpack.c.l.b16 %v2197
    %v2262 = vunpack.c.l.b16 %v2198
    %v2263 = vunpack.c.l.b16 %v2199
    %v2264 = vunpack.c.l.b16 %v2200
    %v2265 = vunpack.c.l.b16 %v2201
    %v2266 = vunpack.c.l.b16 %v2202
    %v2267 = vunpack.c.l.b16 %v2203
    %v2268 = vunpack.c.l.b16 %v2204
    %v2269 = vunpack.c.l.b16 %v2205
    %v2270 = vunpack.c.l.b16 %v2206
    %v2271 = vunpack.c.l.b16 %v2207
    %v2272 = vunpack.c.l.b16 %v2208
    %v2273 = vpack.c.b16 %v2242, %v2241
    %v2274 = vpack.c.b16 %v2244, %v2243
    %v2275 = vpack.c.b16 %v2246, %v2245
    %v2276 = vpack.c.b16 %v2248, %v2247
    %v2277 = vpack.c.b16 %v2250, %v2249
    %v2278 = vpack.c.b16 %v2252, %v2251
    %v2279 = vpack.c.b16 %v2254, %v2253
    %v2280 = vpack.c.b16 %v2256, %v2255
    %v2281 = vpack.c.b16 %v2258, %v2257
    %v2282 = vpack.c.b16 %v2260, %v2259
    %v2283 = vpack.c.b16 %v2262, %v2261
    %v2284 = vpack.c.b16 %v2264, %v2263
    %v2285 = vpack.c.b16 %v2266, %v2265
    %v2286 = vpack.c.b16 %v2268, %v2267
    %v2287 = vpack.c.b16 %v2270, %v2269
    %v2288 = vpack.c.b16 %v2272, %v2271
    %2305 = vmatprep.subr.bf16.mxu0 0
    %2306 = vmatpush1.bf16.msra.mxu0 %v2280
    %2307 = vmatprep.subr.bf16.mxu0 0
    %2308 = vmatpush1.bf16.msra.mxu0 %v2279
    %2309 = vmatprep.subr.bf16.mxu0 0
    %2310 = vmatpush1.bf16.msra.mxu0 %v2278
    %2311 = vmatprep.subr.bf16.mxu0 0
    %2312 = vmatpush1.bf16.msra.mxu0 %v2277
    %2313 = vmatprep.subr.bf16.mxu0 0
    %2314 = vmatpush1.bf16.msra.mxu0 %v2276
    %2315 = vmatprep.subr.bf16.mxu0 0
    %2316 = vmatpush1.bf16.msra.mxu0 %v2275
    %2317 = vmatprep.subr.bf16.mxu0 0
    %2318 = vmatpush1.bf16.msra.mxu0 %v2274
    %2319 = vmatprep.subr.bf16.mxu0 0
    %2320 = vmatpush1.bf16.msra.mxu0 %v2273
    %2321 = vmatprep.subr.bf16.mxu0 0
    %2322 = vmatpush2.bf16.msra.mxu0 %v2288
    %2323 = vmatprep.subr.bf16.mxu0 0
    %2324 = vmatpush2.bf16.msra.mxu0 %v2287
    %2325 = vmatprep.subr.bf16.mxu0 0
    %2326 = vmatpush2.bf16.msra.mxu0 %v2286
    %2327 = vmatprep.subr.bf16.mxu0 0
    %2328 = vmatpush2.bf16.msra.mxu0 %v2285
    %2329 = vmatprep.subr.bf16.mxu0 0
    %2330 = vmatpush2.bf16.msra.mxu0 %v2284
    %2331 = vmatprep.subr.bf16.mxu0 0
    %2332 = vmatpush2.bf16.msra.mxu0 %v2283
    %2333 = vmatprep.subr.bf16.mxu0 0
    %2334 = vmatpush2.bf16.msra.mxu0 %v2282
    %2335 = vmatprep.subr.bf16.mxu0 0
    %2336 = vmatpush2.bf16.msra.mxu0 %v2281
    %2337 = vmatprep.mubr.bf16.mxu0 %v2062
    %2338 = vmatmul.mubr.bf16.gmra.mxu0 %v2050
    %v2339 = vpop.f32.mrf.mxu0
    %v2340 = vadd.f32 0.0, %v2339
    %v2341 = vpop.f32.mrf.mxu0
    %v2342 = vpop.f32.mrf.mxu0
    %v2343 = vadd.f32 0.0, %v2342
    %v2344 = vpop.f32.mrf.mxu0
    %2345 = vmatprep.mubr.bf16.mxu0 %v2070
    %2346 = vmatmul.mubr.bf16.gmra.mxu0 %v2066
    %v2347 = vpop.f32.mrf.mxu0
    %v2348 = vadd.f32 0.0, %v2347
    %v2349 = vpop.f32.mrf.mxu0
    %v2350 = vpop.f32.mrf.mxu0
    %v2351 = vadd.f32 0.0, %v2350
    %v2352 = vpop.f32.mrf.mxu0
    %2353 = vmatprep.mubr.bf16.mxu0 %v2078
    %2354 = vmatmul.mubr.bf16.gmra.mxu0 %v2074
    %v2355 = vpop.f32.mrf.mxu0
    %v2356 = vadd.f32 0.0, %v2355
    %v2357 = vpop.f32.mrf.mxu0
    %v2358 = vpop.f32.mrf.mxu0
    %v2359 = vadd.f32 0.0, %v2358
    %v2360 = vpop.f32.mrf.mxu0
    %2361 = vmatprep.mubr.bf16.mxu0 %v2096
    %2362 = vmatmul.mubr.bf16.gmra.mxu0 %v2087
    %v2363 = vpop.f32.mrf.mxu0
    %v2364 = vadd.f32 0.0, %v2363
    %v2365 = vpop.f32.mrf.mxu0
    %v2366 = vpop.f32.mrf.mxu0
    %v2367 = vadd.f32 0.0, %v2366
    %v2368 = vpop.f32.mrf.mxu0
    %2369 = vmatprep.mubr.bf16.mxu0 %v2133
    %2370 = vmatmul.mubr.bf16.gmra.mxu0 %v2121
    %v2371 = vpop.f32.mrf.mxu0
    %v2372 = vadd.f32 0.0, %v2371
    %v2373 = vpop.f32.mrf.mxu0
    %v2374 = vpop.f32.mrf.mxu0
    %v2375 = vadd.f32 0.0, %v2374
    %v2376 = vpop.f32.mrf.mxu0
    %2377 = vmatprep.mubr.bf16.mxu0 %v2141
    %2378 = vmatmul.mubr.bf16.gmra.mxu0 %v2137
    %v2379 = vpop.f32.mrf.mxu0
    %v2380 = vadd.f32 0.0, %v2379
    %v2381 = vpop.f32.mrf.mxu0
    %v2382 = vpop.f32.mrf.mxu0
    %v2383 = vadd.f32 0.0, %v2382
    %v2384 = vpop.f32.mrf.mxu0
    %2385 = vmatprep.mubr.bf16.mxu0 %v2149
    %2386 = vmatmul.mubr.bf16.gmra.mxu0 %v2145
    %v2387 = vpop.f32.mrf.mxu0
    %v2388 = vadd.f32 0.0, %v2387
    %v2389 = vpop.f32.mrf.mxu0
    %v2390 = vpop.f32.mrf.mxu0
    %v2391 = vadd.f32 0.0, %v2390
    %v2392 = vpop.f32.mrf.mxu0
    %2393 = vmatprep.mubr.bf16.mxu0 %v2167
    %2394 = vmatmul.mubr.bf16.gmra.mxu0 %v2158
    %v2395 = vpop.f32.mrf.mxu0
    %v2396 = vadd.f32 0.0, %v2395
    %v2397 = vpop.f32.mrf.mxu0
    %v2398 = vpop.f32.mrf.mxu0
    %v2399 = vadd.f32 0.0, %v2398
    %v2400 = vpop.f32.mrf.mxu0
    %2401 = vdwg.mxu0
    %v2402 = vadd.f32 %v1969, %v2340
    %v2403 = vadd.f32 %v1972, %v2343
    %v2404 = vadd.f32 %v1977, %v2348
    %v2405 = vadd.f32 %v1980, %v2351
    %v2406 = vadd.f32 %v1985, %v2356
    %v2407 = vadd.f32 %v1988, %v2359
    %v2408 = vadd.f32 %v1993, %v2364
    %v2409 = vadd.f32 %v1996, %v2367
    %v2410 = vadd.f32 %v2001, %v2372
    %v2411 = vadd.f32 %v2004, %v2375
    %v2412 = vadd.f32 %v2009, %v2380
    %v2413 = vadd.f32 %v2012, %v2383
    %v2414 = vadd.f32 %v2017, %v2388
    %v2415 = vadd.f32 %v2020, %v2391
    %v2416 = vadd.f32 %v2025, %v2396
    %v2417 = vadd.f32 %v2028, %v2399
    %v2418 = vpack.c.b16 %v1261, %v1259
    %v2419 = vpack.c.b16 %v1262, %v1260
    %v2420 = vpack.c.b16 %v1265, %v1263
    %v2421 = vpack.c.b16 %v1266, %v1264
    %v2422 = vpack.c.b16 %v1269, %v1267
    %v2423 = vpack.c.b16 %v1270, %v1268
    %v2424 = vpack.c.b16 %v2034, %v1271
    %v2425 = vpack.c.b16 %v2035, %v1272
    %v2434 = vpack.c.b16 %v1395, %v1393
    %v2435 = vpack.c.b16 %v1396, %v1394
    %v2436 = vpack.c.b16 %v1399, %v1397
    %v2437 = vpack.c.b16 %v1400, %v1398
    %v2438 = vpack.c.b16 %v1403, %v1401
    %v2439 = vpack.c.b16 %v1404, %v1402
    %v2440 = vpack.c.b16 %v2106, %v1405
    %v2441 = vpack.c.b16 %v2107, %v1406
    %s2450 = scalar_lea.vmem [#allocation6], 384
    %v2451 = vld [vmem:[%s2450] sm:$0xf]
    %v2452 = vld [vmem:[%s2450 + $0x4] sm:$0xf]
    %v2453 = vld [vmem:[%s2450 + $0x8] sm:$0xf]
    %v2454 = vld [vmem:[%s2450 + $0xc] sm:$0xf]
    %v2455 = vld [vmem:[%s2450 + $0x10] sm:$0xf]
    %v2456 = vld [vmem:[%s2450 + $0x14] sm:$0xf]
    %v2457 = vld [vmem:[%s2450 + $0x18] sm:$0xf]
    %v2458 = vld [vmem:[%s2450 + $0x1c] sm:$0xf]
    %v2459 = vld [vmem:[%s2450 + $0x20] sm:$0xf]
    %v2460 = vld [vmem:[%s2450 + $0x24] sm:$0xf]
    %v2461 = vld [vmem:[%s2450 + $0x28] sm:$0xf]
    %v2462 = vld [vmem:[%s2450 + $0x2c] sm:$0xf]
    %v2463 = vld [vmem:[%s2450 + $0x30] sm:$0xf]
    %v2464 = vld [vmem:[%s2450 + $0x34] sm:$0xf]
    %v2465 = vld [vmem:[%s2450 + $0x38] sm:$0xf]
    %v2466 = vld [vmem:[%s2450 + $0x3c] sm:$0xf]
    %v2467 = vld [vmem:[%s2450 + $0x40] sm:$0xf]
    %v2468 = vld [vmem:[%s2450 + $0x44] sm:$0xf]
    %v2469 = vld [vmem:[%s2450 + $0x48] sm:$0xf]
    %v2470 = vld [vmem:[%s2450 + $0x4c] sm:$0xf]
    %v2471 = vld [vmem:[%s2450 + $0x50] sm:$0xf]
    %v2472 = vld [vmem:[%s2450 + $0x54] sm:$0xf]
    %v2473 = vld [vmem:[%s2450 + $0x58] sm:$0xf]
    %v2474 = vld [vmem:[%s2450 + $0x5c] sm:$0xf]
    %v2475 = vld [vmem:[%s2450 + $0x60] sm:$0xf]
    %v2476 = vld [vmem:[%s2450 + $0x64] sm:$0xf]
    %v2477 = vld [vmem:[%s2450 + $0x68] sm:$0xf]
    %v2478 = vld [vmem:[%s2450 + $0x6c] sm:$0xf]
    %v2479 = vld [vmem:[%s2450 + $0x70] sm:$0xf]
    %v2480 = vld [vmem:[%s2450 + $0x74] sm:$0xf]
    %v2481 = vld [vmem:[%s2450 + $0x78] sm:$0xf]
    %v2482 = vld [vmem:[%s2450 + $0x7c] sm:$0xf]
    %v2515 = vunpack.c.l.b16 %v2451
    %v2516 = vunpack.c.l.b16 %v2452
    %v2517 = vunpack.c.l.b16 %v2453
    %v2518 = vunpack.c.l.b16 %v2454
    %v2519 = vunpack.c.l.b16 %v2455
    %v2520 = vunpack.c.l.b16 %v2456
    %v2521 = vunpack.c.l.b16 %v2457
    %v2522 = vunpack.c.l.b16 %v2458
    %v2523 = vunpack.c.l.b16 %v2459
    %v2524 = vunpack.c.l.b16 %v2460
    %v2525 = vunpack.c.l.b16 %v2461
    %v2526 = vunpack.c.l.b16 %v2462
    %v2527 = vunpack.c.l.b16 %v2463
    %v2528 = vunpack.c.l.b16 %v2464
    %v2529 = vunpack.c.l.b16 %v2465
    %v2530 = vunpack.c.l.b16 %v2466
    %v2531 = vunpack.c.l.b16 %v2467
    %v2532 = vunpack.c.l.b16 %v2468
    %v2533 = vunpack.c.l.b16 %v2469
    %v2534 = vunpack.c.l.b16 %v2470
    %v2535 = vunpack.c.l.b16 %v2471
    %v2536 = vunpack.c.l.b16 %v2472
    %v2537 = vunpack.c.l.b16 %v2473
    %v2538 = vunpack.c.l.b16 %v2474
    %v2539 = vunpack.c.l.b16 %v2475
    %v2540 = vunpack.c.l.b16 %v2476
    %v2541 = vunpack.c.l.b16 %v2477
    %v2542 = vunpack.c.l.b16 %v2478
    %v2543 = vunpack.c.l.b16 %v2479
    %v2544 = vunpack.c.l.b16 %v2480
    %v2545 = vunpack.c.l.b16 %v2481
    %v2546 = vunpack.c.l.b16 %v2482
    %v2547 = vpack.c.b16 %v2516, %v2515
    %v2548 = vpack.c.b16 %v2518, %v2517
    %v2549 = vpack.c.b16 %v2520, %v2519
    %v2550 = vpack.c.b16 %v2522, %v2521
    %v2551 = vpack.c.b16 %v2524, %v2523
    %v2552 = vpack.c.b16 %v2526, %v2525
    %v2553 = vpack.c.b16 %v2528, %v2527
    %v2554 = vpack.c.b16 %v2530, %v2529
    %v2555 = vpack.c.b16 %v2532, %v2531
    %v2556 = vpack.c.b16 %v2534, %v2533
    %v2557 = vpack.c.b16 %v2536, %v2535
    %v2558 = vpack.c.b16 %v2538, %v2537
    %v2559 = vpack.c.b16 %v2540, %v2539
    %v2560 = vpack.c.b16 %v2542, %v2541
    %v2561 = vpack.c.b16 %v2544, %v2543
    %v2562 = vpack.c.b16 %v2546, %v2545
    %2579 = vmatprep.subr.bf16.mxu0 0
    %2580 = vmatpush1.bf16.msra.mxu0 %v2554
    %2581 = vmatprep.subr.bf16.mxu0 0
    %2582 = vmatpush1.bf16.msra.mxu0 %v2553
    %2583 = vmatprep.subr.bf16.mxu0 0
    %2584 = vmatpush1.bf16.msra.mxu0 %v2552
    %2585 = vmatprep.subr.bf16.mxu0 0
    %2586 = vmatpush1.bf16.msra.mxu0 %v2551
    %2587 = vmatprep.subr.bf16.mxu0 0
    %2588 = vmatpush1.bf16.msra.mxu0 %v2550
    %2589 = vmatprep.subr.bf16.mxu0 0
    %2590 = vmatpush1.bf16.msra.mxu0 %v2549
    %2591 = vmatprep.subr.bf16.mxu0 0
    %2592 = vmatpush1.bf16.msra.mxu0 %v2548
    %2593 = vmatprep.subr.bf16.mxu0 0
    %2594 = vmatpush1.bf16.msra.mxu0 %v2547
    %2595 = vmatprep.subr.bf16.mxu0 0
    %2596 = vmatpush2.bf16.msra.mxu0 %v2562
    %2597 = vmatprep.subr.bf16.mxu0 0
    %2598 = vmatpush2.bf16.msra.mxu0 %v2561
    %2599 = vmatprep.subr.bf16.mxu0 0
    %2600 = vmatpush2.bf16.msra.mxu0 %v2560
    %2601 = vmatprep.subr.bf16.mxu0 0
    %2602 = vmatpush2.bf16.msra.mxu0 %v2559
    %2603 = vmatprep.subr.bf16.mxu0 0
    %2604 = vmatpush2.bf16.msra.mxu0 %v2558
    %2605 = vmatprep.subr.bf16.mxu0 0
    %2606 = vmatpush2.bf16.msra.mxu0 %v2557
    %2607 = vmatprep.subr.bf16.mxu0 0
    %2608 = vmatpush2.bf16.msra.mxu0 %v2556
    %2609 = vmatprep.subr.bf16.mxu0 0
    %2610 = vmatpush2.bf16.msra.mxu0 %v2555
    %2611 = vmatprep.mubr.bf16.mxu0 %v2419
    %2612 = vmatmul.mubr.bf16.gmra.mxu0 %v2418
    %v2613 = vpop.f32.mrf.mxu0
    %v2614 = vadd.f32 0.0, %v2613
    %v2615 = vpop.f32.mrf.mxu0
    %v2616 = vpop.f32.mrf.mxu0
    %v2617 = vadd.f32 0.0, %v2616
    %v2618 = vpop.f32.mrf.mxu0
    %2619 = vmatprep.mubr.bf16.mxu0 %v2421
    %2620 = vmatmul.mubr.bf16.gmra.mxu0 %v2420
    %v2621 = vpop.f32.mrf.mxu0
    %v2622 = vadd.f32 0.0, %v2621
    %v2623 = vpop.f32.mrf.mxu0
    %v2624 = vpop.f32.mrf.mxu0
    %v2625 = vadd.f32 0.0, %v2624
    %v2626 = vpop.f32.mrf.mxu0
    %2627 = vmatprep.mubr.bf16.mxu0 %v2423
    %2628 = vmatmul.mubr.bf16.gmra.mxu0 %v2422
    %v2629 = vpop.f32.mrf.mxu0
    %v2630 = vadd.f32 0.0, %v2629
    %v2631 = vpop.f32.mrf.mxu0
    %v2632 = vpop.f32.mrf.mxu0
    %v2633 = vadd.f32 0.0, %v2632
    %v2634 = vpop.f32.mrf.mxu0
    %2635 = vmatprep.mubr.bf16.mxu0 %v2425
    %2636 = vmatmul.mubr.bf16.gmra.mxu0 %v2424
    %v2637 = vpop.f32.mrf.mxu0
    %v2638 = vadd.f32 0.0, %v2637
    %v2639 = vpop.f32.mrf.mxu0
    %v2640 = vpop.f32.mrf.mxu0
    %v2641 = vadd.f32 0.0, %v2640
    %v2642 = vpop.f32.mrf.mxu0
    %2643 = vmatprep.mubr.bf16.mxu0 %v2435
    %2644 = vmatmul.mubr.bf16.gmra.mxu0 %v2434
    %v2645 = vpop.f32.mrf.mxu0
    %v2646 = vadd.f32 0.0, %v2645
    %v2647 = vpop.f32.mrf.mxu0
    %v2648 = vpop.f32.mrf.mxu0
    %v2649 = vadd.f32 0.0, %v2648
    %v2650 = vpop.f32.mrf.mxu0
    %2651 = vmatprep.mubr.bf16.mxu0 %v2437
    %2652 = vmatmul.mubr.bf16.gmra.mxu0 %v2436
    %v2653 = vpop.f32.mrf.mxu0
    %v2654 = vadd.f32 0.0, %v2653
    %v2655 = vpop.f32.mrf.mxu0
    %v2656 = vpop.f32.mrf.mxu0
    %v2657 = vadd.f32 0.0, %v2656
    %v2658 = vpop.f32.mrf.mxu0
    %2659 = vmatprep.mubr.bf16.mxu0 %v2439
    %2660 = vmatmul.mubr.bf16.gmra.mxu0 %v2438
    %v2661 = vpop.f32.mrf.mxu0
    %v2662 = vadd.f32 0.0, %v2661
    %v2663 = vpop.f32.mrf.mxu0
    %v2664 = vpop.f32.mrf.mxu0
    %v2665 = vadd.f32 0.0, %v2664
    %v2666 = vpop.f32.mrf.mxu0
    %2667 = vmatprep.mubr.bf16.mxu0 %v2441
    %2668 = vmatmul.mubr.bf16.gmra.mxu0 %v2440
    %v2669 = vpop.f32.mrf.mxu0
    %v2670 = vadd.f32 0.0, %v2669
    %v2671 = vpop.f32.mrf.mxu0
    %v2672 = vpop.f32.mrf.mxu0
    %v2673 = vadd.f32 0.0, %v2672
    %v2674 = vpop.f32.mrf.mxu0
    %2675 = vdwg.mxu0
    %v2676 = vadd.f32 %v2402, %v2614
    %v2677 = vadd.f32 %v2403, %v2617
    %v2678 = vadd.f32 %v2404, %v2622
    %v2679 = vadd.f32 %v2405, %v2625
    %v2680 = vadd.f32 %v2406, %v2630
    %v2681 = vadd.f32 %v2407, %v2633
    %v2682 = vadd.f32 %v2408, %v2638
    %v2683 = vadd.f32 %v2409, %v2641
    %v2684 = vadd.f32 %v2410, %v2646
    %v2685 = vadd.f32 %v2411, %v2649
    %v2686 = vadd.f32 %v2412, %v2654
    %v2687 = vadd.f32 %v2413, %v2657
    %v2688 = vadd.f32 %v2414, %v2662
    %v2689 = vadd.f32 %v2415, %v2665
    %v2690 = vadd.f32 %v2416, %v2670
    %v2691 = vadd.f32 %v2417, %v2673
    %v2692 = vld [vmem:[#allocation2 + $0x8] sm:$0xff]
    %v2693 = vld [vmem:[#allocation2 + $0x10] sm:$0xff]
    %v2694 = vld [vmem:[#allocation2 + $0x18] sm:$0xff]
    %v2695 = vld [vmem:[#allocation2 + $0x20] sm:$0xff]
    %v2696 = vld [vmem:[#allocation2 + $0x28] sm:$0xff]
    %v2697 = vld [vmem:[#allocation2 + $0x30] sm:$0xff]
    %v2698 = vld [vmem:[#allocation2 + $0x38] sm:$0xff]
    %v2699 = vld [vmem:[#allocation2 + $0x40] sm:$0xff]
    %v2700 = vld [vmem:[#allocation2 + $0x48] sm:$0x11]
    %v2701 = vld [vmem:[#allocation2 + $0x50] sm:$0xff]
    %v2702 = vld [vmem:[#allocation2 + $0x58] sm:$0xff]
    %v2703 = vld [vmem:[#allocation2 + $0x60] sm:$0xff]
    %v2704 = vld [vmem:[#allocation2 + $0x68] sm:$0xff]
    %v2705 = vld [vmem:[#allocation2 + $0x70] sm:$0xff]
    %v2706 = vld [vmem:[#allocation2 + $0x78] sm:$0xff]
    %v2707 = vld [vmem:[#allocation2 + $0x80] sm:$0xff]
    %v2708 = vld [vmem:[#allocation2 + $0x88] sm:$0xff]
    %v2709 = vld [vmem:[#allocation2 + $0x90] sm:$0x11]
    %v2719 = vunpack.c.l.b16 %v2692
    %v2720 = vunpack.c.h.b16 %v2692
    %v2721 = vunpack.c.l.b16 %v2693
    %v2722 = vunpack.c.h.b16 %v2693
    %v2723 = vunpack.c.l.b16 %v2694
    %v2724 = vunpack.c.h.b16 %v2694
    %v2725 = vunpack.c.l.b16 %v2695
    %v2726 = vunpack.c.h.b16 %v2695
    %v2727 = vunpack.c.l.b16 %v2696
    %v2728 = vunpack.c.h.b16 %v2696
    %v2729 = vunpack.c.l.b16 %v2697
    %v2730 = vunpack.c.h.b16 %v2697
    %v2731 = vunpack.c.l.b16 %v2698
    %v2732 = vunpack.c.h.b16 %v2698
    %v2733 = vunpack.c.l.b16 %v2699
    %v2734 = vunpack.c.h.b16 %v2699
    %v2735 = vunpack.c.l.b16 %v2700
    %v2736 = vunpack.c.h.b16 %v2700
    %v2737 = vpack.c.b16 %v2721, %v2719
    %v2738 = vpack.c.b16 %v2722, %v2720
    %v2739 = vpack.c.b16 %v2725, %v2723
    %v2740 = vpack.c.b16 %v2726, %v2724
    %v2741 = vpack.c.b16 %v2729, %v2727
    %v2742 = vpack.c.b16 %v2730, %v2728
    %v2743 = vpack.c.b16 %v2733, %v2731
    %v2744 = vpack.c.b16 %v2734, %v2732
    %v2745 = vpack.c.b16 %v2735, %v2735
    %v2746 = vpack.c.b16 %v2736, %v2736
    %vm2747 = vsmask.f32 7424
    %v2749 = vshrl.u32 %v2737, 16
    %v2751 = vshll.u32 %v2737, 16
    %v2753 = vrot.slane %v2751, 1
    %v2754 = vor.u32 %v2749, %v2753
    %v2756 = vshll.u32 %v2739, 16
    %v2758 = vrot.slane %v2756, 1
    %v2759 = vsel %vm2747, %v2754, %v2758
    %v2761 = vshrl.u32 %v2738, 16
    %v2763 = vshll.u32 %v2738, 16
    %v2765 = vrot.slane %v2763, 1
    %v2766 = vor.u32 %v2761, %v2765
    %v2768 = vshll.u32 %v2740, 16
    %v2770 = vrot.slane %v2768, 1
    %v2771 = vsel %vm2747, %v2766, %v2770
    %v2772 = vshrl.u32 %v2739, 16
    %v2774 = vor.u32 %v2772, %v2758
    %v2776 = vshll.u32 %v2741, 16
    %v2778 = vrot.slane %v2776, 1
    %v2779 = vsel %vm2747, %v2774, %v2778
    %v2780 = vshrl.u32 %v2740, 16
    %v2782 = vor.u32 %v2780, %v2770
    %v2784 = vshll.u32 %v2742, 16
    %v2786 = vrot.slane %v2784, 1
    %v2787 = vsel %vm2747, %v2782, %v2786
    %v2788 = vshrl.u32 %v2741, 16
    %v2790 = vor.u32 %v2788, %v2778
    %v2792 = vshll.u32 %v2743, 16
    %v2794 = vrot.slane %v2792, 1
    %v2795 = vsel %vm2747, %v2790, %v2794
    %v2796 = vshrl.u32 %v2742, 16
    %v2798 = vor.u32 %v2796, %v2786
    %v2800 = vshll.u32 %v2744, 16
    %v2802 = vrot.slane %v2800, 1
    %v2803 = vsel %vm2747, %v2798, %v2802
    %v2804 = vshrl.u32 %v2743, 16
    %v2806 = vor.u32 %v2804, %v2794
    %v2808 = vshll.u32 %v2745, 16
    %v2810 = vrot.slane %v2808, 1
    %v2811 = vsel %vm2747, %v2806, %v2810
    %v2812 = vshrl.u32 %v2744, 16
    %v2814 = vor.u32 %v2812, %v2802
    %v2816 = vshll.u32 %v2746, 16
    %v2818 = vrot.slane %v2816, 1
    %v2819 = vsel %vm2747, %v2814, %v2818
    %v2837 = vunpack.c.l.b16 %v2701
    %v2838 = vunpack.c.h.b16 %v2701
    %v2839 = vunpack.c.l.b16 %v2702
    %v2840 = vunpack.c.h.b16 %v2702
    %v2841 = vunpack.c.l.b16 %v2703
    %v2842 = vunpack.c.h.b16 %v2703
    %v2843 = vunpack.c.l.b16 %v2704
    %v2844 = vunpack.c.h.b16 %v2704
    %v2845 = vunpack.c.l.b16 %v2705
    %v2846 = vunpack.c.h.b16 %v2705
    %v2847 = vunpack.c.l.b16 %v2706
    %v2848 = vunpack.c.h.b16 %v2706
    %v2849 = vunpack.c.l.b16 %v2707
    %v2850 = vunpack.c.h.b16 %v2707
    %v2851 = vunpack.c.l.b16 %v2708
    %v2852 = vunpack.c.h.b16 %v2708
    %v2853 = vunpack.c.l.b16 %v2709
    %v2854 = vunpack.c.h.b16 %v2709
    %v2855 = vpack.c.b16 %v2839, %v2837
    %v2856 = vpack.c.b16 %v2840, %v2838
    %v2857 = vpack.c.b16 %v2843, %v2841
    %v2858 = vpack.c.b16 %v2844, %v2842
    %v2859 = vpack.c.b16 %v2847, %v2845
    %v2860 = vpack.c.b16 %v2848, %v2846
    %v2861 = vpack.c.b16 %v2851, %v2849
    %v2862 = vpack.c.b16 %v2852, %v2850
    %v2863 = vpack.c.b16 %v2853, %v2853
    %v2864 = vpack.c.b16 %v2854, %v2854
    %v2866 = vshrl.u32 %v2855, 16
    %v2868 = vshll.u32 %v2855, 16
    %v2870 = vrot.slane %v2868, 1
    %v2871 = vor.u32 %v2866, %v2870
    %v2873 = vshll.u32 %v2857, 16
    %v2875 = vrot.slane %v2873, 1
    %v2876 = vsel %vm2747, %v2871, %v2875
    %v2878 = vshrl.u32 %v2856, 16
    %v2880 = vshll.u32 %v2856, 16
    %v2882 = vrot.slane %v2880, 1
    %v2883 = vor.u32 %v2878, %v2882
    %v2885 = vshll.u32 %v2858, 16
    %v2887 = vrot.slane %v2885, 1
    %v2888 = vsel %vm2747, %v2883, %v2887
    %v2889 = vshrl.u32 %v2857, 16
    %v2891 = vor.u32 %v2889, %v2875
    %v2893 = vshll.u32 %v2859, 16
    %v2895 = vrot.slane %v2893, 1
    %v2896 = vsel %vm2747, %v2891, %v2895
    %v2897 = vshrl.u32 %v2858, 16
    %v2899 = vor.u32 %v2897, %v2887
    %v2901 = vshll.u32 %v2860, 16
    %v2903 = vrot.slane %v2901, 1
    %v2904 = vsel %vm2747, %v2899, %v2903
    %v2905 = vshrl.u32 %v2859, 16
    %v2907 = vor.u32 %v2905, %v2895
    %v2909 = vshll.u32 %v2861, 16
    %v2911 = vrot.slane %v2909, 1
    %v2912 = vsel %vm2747, %v2907, %v2911
    %v2913 = vshrl.u32 %v2860, 16
    %v2915 = vor.u32 %v2913, %v2903
    %v2917 = vshll.u32 %v2862, 16
    %v2919 = vrot.slane %v2917, 1
    %v2920 = vsel %vm2747, %v2915, %v2919
    %v2921 = vshrl.u32 %v2861, 16
    %v2923 = vor.u32 %v2921, %v2911
    %v2925 = vshll.u32 %v2863, 16
    %v2927 = vrot.slane %v2925, 1
    %v2928 = vsel %vm2747, %v2923, %v2927
    %v2929 = vshrl.u32 %v2862, 16
    %v2931 = vor.u32 %v2929, %v2919
    %v2933 = vshll.u32 %v2864, 16
    %v2935 = vrot.slane %v2933, 1
    %v2936 = vsel %vm2747, %v2931, %v2935
    %s2945 = scalar_lea.vmem [#allocation6], 512
    %v2946 = vld [vmem:[%s2945] sm:$0xf]
    %v2947 = vld [vmem:[%s2945 + $0x4] sm:$0xf]
    %v2948 = vld [vmem:[%s2945 + $0x8] sm:$0xf]
    %v2949 = vld [vmem:[%s2945 + $0xc] sm:$0xf]
    %v2950 = vld [vmem:[%s2945 + $0x10] sm:$0xf]
    %v2951 = vld [vmem:[%s2945 + $0x14] sm:$0xf]
    %v2952 = vld [vmem:[%s2945 + $0x18] sm:$0xf]
    %v2953 = vld [vmem:[%s2945 + $0x1c] sm:$0xf]
    %v2954 = vld [vmem:[%s2945 + $0x20] sm:$0xf]
    %v2955 = vld [vmem:[%s2945 + $0x24] sm:$0xf]
    %v2956 = vld [vmem:[%s2945 + $0x28] sm:$0xf]
    %v2957 = vld [vmem:[%s2945 + $0x2c] sm:$0xf]
    %v2958 = vld [vmem:[%s2945 + $0x30] sm:$0xf]
    %v2959 = vld [vmem:[%s2945 + $0x34] sm:$0xf]
    %v2960 = vld [vmem:[%s2945 + $0x38] sm:$0xf]
    %v2961 = vld [vmem:[%s2945 + $0x3c] sm:$0xf]
    %v2962 = vld [vmem:[%s2945 + $0x40] sm:$0xf]
    %v2963 = vld [vmem:[%s2945 + $0x44] sm:$0xf]
    %v2964 = vld [vmem:[%s2945 + $0x48] sm:$0xf]
    %v2965 = vld [vmem:[%s2945 + $0x4c] sm:$0xf]
    %v2966 = vld [vmem:[%s2945 + $0x50] sm:$0xf]
    %v2967 = vld [vmem:[%s2945 + $0x54] sm:$0xf]
    %v2968 = vld [vmem:[%s2945 + $0x58] sm:$0xf]
    %v2969 = vld [vmem:[%s2945 + $0x5c] sm:$0xf]
    %v2970 = vld [vmem:[%s2945 + $0x60] sm:$0xf]
    %v2971 = vld [vmem:[%s2945 + $0x64] sm:$0xf]
    %v2972 = vld [vmem:[%s2945 + $0x68] sm:$0xf]
    %v2973 = vld [vmem:[%s2945 + $0x6c] sm:$0xf]
    %v2974 = vld [vmem:[%s2945 + $0x70] sm:$0xf]
    %v2975 = vld [vmem:[%s2945 + $0x74] sm:$0xf]
    %v2976 = vld [vmem:[%s2945 + $0x78] sm:$0xf]
    %v2977 = vld [vmem:[%s2945 + $0x7c] sm:$0xf]
    %v3010 = vunpack.c.l.b16 %v2946
    %v3011 = vunpack.c.l.b16 %v2947
    %v3012 = vunpack.c.l.b16 %v2948
    %v3013 = vunpack.c.l.b16 %v2949
    %v3014 = vunpack.c.l.b16 %v2950
    %v3015 = vunpack.c.l.b16 %v2951
    %v3016 = vunpack.c.l.b16 %v2952
    %v3017 = vunpack.c.l.b16 %v2953
    %v3018 = vunpack.c.l.b16 %v2954
    %v3019 = vunpack.c.l.b16 %v2955
    %v3020 = vunpack.c.l.b16 %v2956
    %v3021 = vunpack.c.l.b16 %v2957
    %v3022 = vunpack.c.l.b16 %v2958
    %v3023 = vunpack.c.l.b16 %v2959
    %v3024 = vunpack.c.l.b16 %v2960
    %v3025 = vunpack.c.l.b16 %v2961
    %v3026 = vunpack.c.l.b16 %v2962
    %v3027 = vunpack.c.l.b16 %v2963
    %v3028 = vunpack.c.l.b16 %v2964
    %v3029 = vunpack.c.l.b16 %v2965
    %v3030 = vunpack.c.l.b16 %v2966
    %v3031 = vunpack.c.l.b16 %v2967
    %v3032 = vunpack.c.l.b16 %v2968
    %v3033 = vunpack.c.l.b16 %v2969
    %v3034 = vunpack.c.l.b16 %v2970
    %v3035 = vunpack.c.l.b16 %v2971
    %v3036 = vunpack.c.l.b16 %v2972
    %v3037 = vunpack.c.l.b16 %v2973
    %v3038 = vunpack.c.l.b16 %v2974
    %v3039 = vunpack.c.l.b16 %v2975
    %v3040 = vunpack.c.l.b16 %v2976
    %v3041 = vunpack.c.l.b16 %v2977
    %v3042 = vpack.c.b16 %v3011, %v3010
    %v3043 = vpack.c.b16 %v3013, %v3012
    %v3044 = vpack.c.b16 %v3015, %v3014
    %v3045 = vpack.c.b16 %v3017, %v3016
    %v3046 = vpack.c.b16 %v3019, %v3018
    %v3047 = vpack.c.b16 %v3021, %v3020
    %v3048 = vpack.c.b16 %v3023, %v3022
    %v3049 = vpack.c.b16 %v3025, %v3024
    %v3050 = vpack.c.b16 %v3027, %v3026
    %v3051 = vpack.c.b16 %v3029, %v3028
    %v3052 = vpack.c.b16 %v3031, %v3030
    %v3053 = vpack.c.b16 %v3033, %v3032
    %v3054 = vpack.c.b16 %v3035, %v3034
    %v3055 = vpack.c.b16 %v3037, %v3036
    %v3056 = vpack.c.b16 %v3039, %v3038
    %v3057 = vpack.c.b16 %v3041, %v3040
    %3074 = vmatprep.subr.bf16.mxu0 0
    %3075 = vmatpush1.bf16.msra.mxu0 %v3049
    %3076 = vmatprep.subr.bf16.mxu0 0
    %3077 = vmatpush1.bf16.msra.mxu0 %v3048
    %3078 = vmatprep.subr.bf16.mxu0 0
    %3079 = vmatpush1.bf16.msra.mxu0 %v3047
    %3080 = vmatprep.subr.bf16.mxu0 0
    %3081 = vmatpush1.bf16.msra.mxu0 %v3046
    %3082 = vmatprep.subr.bf16.mxu0 0
    %3083 = vmatpush1.bf16.msra.mxu0 %v3045
    %3084 = vmatprep.subr.bf16.mxu0 0
    %3085 = vmatpush1.bf16.msra.mxu0 %v3044
    %3086 = vmatprep.subr.bf16.mxu0 0
    %3087 = vmatpush1.bf16.msra.mxu0 %v3043
    %3088 = vmatprep.subr.bf16.mxu0 0
    %3089 = vmatpush1.bf16.msra.mxu0 %v3042
    %3090 = vmatprep.subr.bf16.mxu0 0
    %3091 = vmatpush2.bf16.msra.mxu0 %v3057
    %3092 = vmatprep.subr.bf16.mxu0 0
    %3093 = vmatpush2.bf16.msra.mxu0 %v3056
    %3094 = vmatprep.subr.bf16.mxu0 0
    %3095 = vmatpush2.bf16.msra.mxu0 %v3055
    %3096 = vmatprep.subr.bf16.mxu0 0
    %3097 = vmatpush2.bf16.msra.mxu0 %v3054
    %3098 = vmatprep.subr.bf16.mxu0 0
    %3099 = vmatpush2.bf16.msra.mxu0 %v3053
    %3100 = vmatprep.subr.bf16.mxu0 0
    %3101 = vmatpush2.bf16.msra.mxu0 %v3052
    %3102 = vmatprep.subr.bf16.mxu0 0
    %3103 = vmatpush2.bf16.msra.mxu0 %v3051
    %3104 = vmatprep.subr.bf16.mxu0 0
    %3105 = vmatpush2.bf16.msra.mxu0 %v3050
    %3106 = vmatprep.mubr.bf16.mxu0 %v2771
    %3107 = vmatmul.mubr.bf16.gmra.mxu0 %v2759
    %v3108 = vpop.f32.mrf.mxu0
    %v3109 = vadd.f32 0.0, %v3108
    %v3110 = vpop.f32.mrf.mxu0
    %v3111 = vpop.f32.mrf.mxu0
    %v3112 = vadd.f32 0.0, %v3111
    %v3113 = vpop.f32.mrf.mxu0
    %3114 = vmatprep.mubr.bf16.mxu0 %v2787
    %3115 = vmatmul.mubr.bf16.gmra.mxu0 %v2779
    %v3116 = vpop.f32.mrf.mxu0
    %v3117 = vadd.f32 0.0, %v3116
    %v3118 = vpop.f32.mrf.mxu0
    %v3119 = vpop.f32.mrf.mxu0
    %v3120 = vadd.f32 0.0, %v3119
    %v3121 = vpop.f32.mrf.mxu0
    %3122 = vmatprep.mubr.bf16.mxu0 %v2803
    %3123 = vmatmul.mubr.bf16.gmra.mxu0 %v2795
    %v3124 = vpop.f32.mrf.mxu0
    %v3125 = vadd.f32 0.0, %v3124
    %v3126 = vpop.f32.mrf.mxu0
    %v3127 = vpop.f32.mrf.mxu0
    %v3128 = vadd.f32 0.0, %v3127
    %v3129 = vpop.f32.mrf.mxu0
    %3130 = vmatprep.mubr.bf16.mxu0 %v2819
    %3131 = vmatmul.mubr.bf16.gmra.mxu0 %v2811
    %v3132 = vpop.f32.mrf.mxu0
    %v3133 = vadd.f32 0.0, %v3132
    %v3134 = vpop.f32.mrf.mxu0
    %v3135 = vpop.f32.mrf.mxu0
    %v3136 = vadd.f32 0.0, %v3135
    %v3137 = vpop.f32.mrf.mxu0
    %3138 = vmatprep.mubr.bf16.mxu0 %v2888
    %3139 = vmatmul.mubr.bf16.gmra.mxu0 %v2876
    %v3140 = vpop.f32.mrf.mxu0
    %v3141 = vadd.f32 0.0, %v3140
    %v3142 = vpop.f32.mrf.mxu0
    %v3143 = vpop.f32.mrf.mxu0
    %v3144 = vadd.f32 0.0, %v3143
    %v3145 = vpop.f32.mrf.mxu0
    %3146 = vmatprep.mubr.bf16.mxu0 %v2904
    %3147 = vmatmul.mubr.bf16.gmra.mxu0 %v2896
    %v3148 = vpop.f32.mrf.mxu0
    %v3149 = vadd.f32 0.0, %v3148
    %v3150 = vpop.f32.mrf.mxu0
    %v3151 = vpop.f32.mrf.mxu0
    %v3152 = vadd.f32 0.0, %v3151
    %v3153 = vpop.f32.mrf.mxu0
    %3154 = vmatprep.mubr.bf16.mxu0 %v2920
    %3155 = vmatmul.mubr.bf16.gmra.mxu0 %v2912
    %v3156 = vpop.f32.mrf.mxu0
    %v3157 = vadd.f32 0.0, %v3156
    %v3158 = vpop.f32.mrf.mxu0
    %v3159 = vpop.f32.mrf.mxu0
    %v3160 = vadd.f32 0.0, %v3159
    %v3161 = vpop.f32.mrf.mxu0
    %3162 = vmatprep.mubr.bf16.mxu0 %v2936
    %3163 = vmatmul.mubr.bf16.gmra.mxu0 %v2928
    %v3164 = vpop.f32.mrf.mxu0
    %v3165 = vadd.f32 0.0, %v3164
    %v3166 = vpop.f32.mrf.mxu0
    %v3167 = vpop.f32.mrf.mxu0
    %v3168 = vadd.f32 0.0, %v3167
    %v3169 = vpop.f32.mrf.mxu0
    %3170 = vdwg.mxu0
    %v3171 = vadd.f32 %v2676, %v3109
    %v3172 = vadd.f32 %v2677, %v3112
    %v3173 = vadd.f32 %v2678, %v3117
    %v3174 = vadd.f32 %v2679, %v3120
    %v3175 = vadd.f32 %v2680, %v3125
    %v3176 = vadd.f32 %v2681, %v3128
    %v3177 = vadd.f32 %v2682, %v3133
    %v3178 = vadd.f32 %v2683, %v3136
    %v3179 = vadd.f32 %v2684, %v3141
    %v3180 = vadd.f32 %v2685, %v3144
    %v3181 = vadd.f32 %v2686, %v3149
    %v3182 = vadd.f32 %v2687, %v3152
    %v3183 = vadd.f32 %v2688, %v3157
    %v3184 = vadd.f32 %v2689, %v3160
    %v3185 = vadd.f32 %v2690, %v3165
    %v3186 = vadd.f32 %v2691, %v3168
    %v3187 = vld [vmem:[#allocation2 + $0x8] sm:$0xee]
    %v3188 = vld [vmem:[#allocation2 + $0x50] sm:$0xee]
    %v3190 = vunpack.c.l.b16 %v3187
    %v3191 = vunpack.c.h.b16 %v3187
    %v3192 = vpack.c.b16 %v2721, %v3190
    %v3193 = vpack.c.b16 %v2722, %v3191
    %vm3194 = vcmask 1046528
    %v3195 = vrot.slane %v3192, 1
    %v3196 = vrot.slane %v2739, 1
    %v3197 = vsel %vm3194, %v3195, %v3196
    %v3198 = vrot.slane %v3193, 1
    %v3199 = vrot.slane %v2740, 1
    %v3200 = vsel %vm3194, %v3198, %v3199
    %v3201 = vrot.slane %v2741, 1
    %v3202 = vsel %vm3194, %v3196, %v3201
    %v3203 = vrot.slane %v2742, 1
    %v3204 = vsel %vm3194, %v3199, %v3203
    %v3205 = vrot.slane %v2743, 1
    %v3206 = vsel %vm3194, %v3201, %v3205
    %v3207 = vrot.slane %v2744, 1
    %v3208 = vsel %vm3194, %v3203, %v3207
    %v3209 = vrot.slane %v2745, 1
    %v3210 = vsel %vm3194, %v3205, %v3209
    %v3211 = vrot.slane %v2746, 1
    %v3212 = vsel %vm3194, %v3207, %v3211
    %v3222 = vunpack.c.l.b16 %v3188
    %v3223 = vunpack.c.h.b16 %v3188
    %v3224 = vpack.c.b16 %v2839, %v3222
    %v3225 = vpack.c.b16 %v2840, %v3223
    %v3226 = vrot.slane %v3224, 1
    %v3227 = vrot.slane %v2857, 1
    %v3228 = vsel %vm3194, %v3226, %v3227
    %v3229 = vrot.slane %v3225, 1
    %v3230 = vrot.slane %v2858, 1
    %v3231 = vsel %vm3194, %v3229, %v3230
    %v3232 = vrot.slane %v2859, 1
    %v3233 = vsel %vm3194, %v3227, %v3232
    %v3234 = vrot.slane %v2860, 1
    %v3235 = vsel %vm3194, %v3230, %v3234
    %v3236 = vrot.slane %v2861, 1
    %v3237 = vsel %vm3194, %v3232, %v3236
    %v3238 = vrot.slane %v2862, 1
    %v3239 = vsel %vm3194, %v3234, %v3238
    %v3240 = vrot.slane %v2863, 1
    %v3241 = vsel %vm3194, %v3236, %v3240
    %v3242 = vrot.slane %v2864, 1
    %v3243 = vsel %vm3194, %v3238, %v3242
    %s3252 = scalar_lea.vmem [#allocation6], 640
    %v3253 = vld [vmem:[%s3252] sm:$0xf]
    %v3254 = vld [vmem:[%s3252 + $0x4] sm:$0xf]
    %v3255 = vld [vmem:[%s3252 + $0x8] sm:$0xf]
    %v3256 = vld [vmem:[%s3252 + $0xc] sm:$0xf]
    %v3257 = vld [vmem:[%s3252 + $0x10] sm:$0xf]
    %v3258 = vld [vmem:[%s3252 + $0x14] sm:$0xf]
    %v3259 = vld [vmem:[%s3252 + $0x18] sm:$0xf]
    %v3260 = vld [vmem:[%s3252 + $0x1c] sm:$0xf]
    %v3261 = vld [vmem:[%s3252 + $0x20] sm:$0xf]
    %v3262 = vld [vmem:[%s3252 + $0x24] sm:$0xf]
    %v3263 = vld [vmem:[%s3252 + $0x28] sm:$0xf]
    %v3264 = vld [vmem:[%s3252 + $0x2c] sm:$0xf]
    %v3265 = vld [vmem:[%s3252 + $0x30] sm:$0xf]
    %v3266 = vld [vmem:[%s3252 + $0x34] sm:$0xf]
    %v3267 = vld [vmem:[%s3252 + $0x38] sm:$0xf]
    %v3268 = vld [vmem:[%s3252 + $0x3c] sm:$0xf]
    %v3269 = vld [vmem:[%s3252 + $0x40] sm:$0xf]
    %v3270 = vld [vmem:[%s3252 + $0x44] sm:$0xf]
    %v3271 = vld [vmem:[%s3252 + $0x48] sm:$0xf]
    %v3272 = vld [vmem:[%s3252 + $0x4c] sm:$0xf]
    %v3273 = vld [vmem:[%s3252 + $0x50] sm:$0xf]
    %v3274 = vld [vmem:[%s3252 + $0x54] sm:$0xf]
    %v3275 = vld [vmem:[%s3252 + $0x58] sm:$0xf]
    %v3276 = vld [vmem:[%s3252 + $0x5c] sm:$0xf]
    %v3277 = vld [vmem:[%s3252 + $0x60] sm:$0xf]
    %v3278 = vld [vmem:[%s3252 + $0x64] sm:$0xf]
    %v3279 = vld [vmem:[%s3252 + $0x68] sm:$0xf]
    %v3280 = vld [vmem:[%s3252 + $0x6c] sm:$0xf]
    %v3281 = vld [vmem:[%s3252 + $0x70] sm:$0xf]
    %v3282 = vld [vmem:[%s3252 + $0x74] sm:$0xf]
    %v3283 = vld [vmem:[%s3252 + $0x78] sm:$0xf]
    %v3284 = vld [vmem:[%s3252 + $0x7c] sm:$0xf]
    %v3317 = vunpack.c.l.b16 %v3253
    %v3318 = vunpack.c.l.b16 %v3254
    %v3319 = vunpack.c.l.b16 %v3255
    %v3320 = vunpack.c.l.b16 %v3256
    %v3321 = vunpack.c.l.b16 %v3257
    %v3322 = vunpack.c.l.b16 %v3258
    %v3323 = vunpack.c.l.b16 %v3259
    %v3324 = vunpack.c.l.b16 %v3260
    %v3325 = vunpack.c.l.b16 %v3261
    %v3326 = vunpack.c.l.b16 %v3262
    %v3327 = vunpack.c.l.b16 %v3263
    %v3328 = vunpack.c.l.b16 %v3264
    %v3329 = vunpack.c.l.b16 %v3265
    %v3330 = vunpack.c.l.b16 %v3266
    %v3331 = vunpack.c.l.b16 %v3267
    %v3332 = vunpack.c.l.b16 %v3268
    %v3333 = vunpack.c.l.b16 %v3269
    %v3334 = vunpack.c.l.b16 %v3270
    %v3335 = vunpack.c.l.b16 %v3271
    %v3336 = vunpack.c.l.b16 %v3272
    %v3337 = vunpack.c.l.b16 %v3273
    %v3338 = vunpack.c.l.b16 %v3274
    %v3339 = vunpack.c.l.b16 %v3275
    %v3340 = vunpack.c.l.b16 %v3276
    %v3341 = vunpack.c.l.b16 %v3277
    %v3342 = vunpack.c.l.b16 %v3278
    %v3343 = vunpack.c.l.b16 %v3279
    %v3344 = vunpack.c.l.b16 %v3280
    %v3345 = vunpack.c.l.b16 %v3281
    %v3346 = vunpack.c.l.b16 %v3282
    %v3347 = vunpack.c.l.b16 %v3283
    %v3348 = vunpack.c.l.b16 %v3284
    %v3349 = vpack.c.b16 %v3318, %v3317
    %v3350 = vpack.c.b16 %v3320, %v3319
    %v3351 = vpack.c.b16 %v3322, %v3321
    %v3352 = vpack.c.b16 %v3324, %v3323
    %v3353 = vpack.c.b16 %v3326, %v3325
    %v3354 = vpack.c.b16 %v3328, %v3327
    %v3355 = vpack.c.b16 %v3330, %v3329
    %v3356 = vpack.c.b16 %v3332, %v3331
    %v3357 = vpack.c.b16 %v3334, %v3333
    %v3358 = vpack.c.b16 %v3336, %v3335
    %v3359 = vpack.c.b16 %v3338, %v3337
    %v3360 = vpack.c.b16 %v3340, %v3339
    %v3361 = vpack.c.b16 %v3342, %v3341
    %v3362 = vpack.c.b16 %v3344, %v3343
    %v3363 = vpack.c.b16 %v3346, %v3345
    %v3364 = vpack.c.b16 %v3348, %v3347
    %3381 = vmatprep.subr.bf16.mxu0 0
    %3382 = vmatpush1.bf16.msra.mxu0 %v3356
    %3383 = vmatprep.subr.bf16.mxu0 0
    %3384 = vmatpush1.bf16.msra.mxu0 %v3355
    %3385 = vmatprep.subr.bf16.mxu0 0
    %3386 = vmatpush1.bf16.msra.mxu0 %v3354
    %3387 = vmatprep.subr.bf16.mxu0 0
    %3388 = vmatpush1.bf16.msra.mxu0 %v3353
    %3389 = vmatprep.subr.bf16.mxu0 0
    %3390 = vmatpush1.bf16.msra.mxu0 %v3352
    %3391 = vmatprep.subr.bf16.mxu0 0
    %3392 = vmatpush1.bf16.msra.mxu0 %v3351
    %3393 = vmatprep.subr.bf16.mxu0 0
    %3394 = vmatpush1.bf16.msra.mxu0 %v3350
    %3395 = vmatprep.subr.bf16.mxu0 0
    %3396 = vmatpush1.bf16.msra.mxu0 %v3349
    %3397 = vmatprep.subr.bf16.mxu0 0
    %3398 = vmatpush2.bf16.msra.mxu0 %v3364
    %3399 = vmatprep.subr.bf16.mxu0 0
    %3400 = vmatpush2.bf16.msra.mxu0 %v3363
    %3401 = vmatprep.subr.bf16.mxu0 0
    %3402 = vmatpush2.bf16.msra.mxu0 %v3362
    %3403 = vmatprep.subr.bf16.mxu0 0
    %3404 = vmatpush2.bf16.msra.mxu0 %v3361
    %3405 = vmatprep.subr.bf16.mxu0 0
    %3406 = vmatpush2.bf16.msra.mxu0 %v3360
    %3407 = vmatprep.subr.bf16.mxu0 0
    %3408 = vmatpush2.bf16.msra.mxu0 %v3359
    %3409 = vmatprep.subr.bf16.mxu0 0
    %3410 = vmatpush2.bf16.msra.mxu0 %v3358
    %3411 = vmatprep.subr.bf16.mxu0 0
    %3412 = vmatpush2.bf16.msra.mxu0 %v3357
    %3413 = vmatprep.mubr.bf16.mxu0 %v3200
    %3414 = vmatmul.mubr.bf16.gmra.mxu0 %v3197
    %v3415 = vpop.f32.mrf.mxu0
    %v3416 = vadd.f32 0.0, %v3415
    %v3417 = vpop.f32.mrf.mxu0
    %v3418 = vpop.f32.mrf.mxu0
    %v3419 = vadd.f32 0.0, %v3418
    %v3420 = vpop.f32.mrf.mxu0
    %3421 = vmatprep.mubr.bf16.mxu0 %v3204
    %3422 = vmatmul.mubr.bf16.gmra.mxu0 %v3202
    %v3423 = vpop.f32.mrf.mxu0
    %v3424 = vadd.f32 0.0, %v3423
    %v3425 = vpop.f32.mrf.mxu0
    %v3426 = vpop.f32.mrf.mxu0
    %v3427 = vadd.f32 0.0, %v3426
    %v3428 = vpop.f32.mrf.mxu0
    %3429 = vmatprep.mubr.bf16.mxu0 %v3208
    %3430 = vmatmul.mubr.bf16.gmra.mxu0 %v3206
    %v3431 = vpop.f32.mrf.mxu0
    %v3432 = vadd.f32 0.0, %v3431
    %v3433 = vpop.f32.mrf.mxu0
    %v3434 = vpop.f32.mrf.mxu0
    %v3435 = vadd.f32 0.0, %v3434
    %v3436 = vpop.f32.mrf.mxu0
    %3437 = vmatprep.mubr.bf16.mxu0 %v3212
    %3438 = vmatmul.mubr.bf16.gmra.mxu0 %v3210
    %v3439 = vpop.f32.mrf.mxu0
    %v3440 = vadd.f32 0.0, %v3439
    %v3441 = vpop.f32.mrf.mxu0
    %v3442 = vpop.f32.mrf.mxu0
    %v3443 = vadd.f32 0.0, %v3442
    %v3444 = vpop.f32.mrf.mxu0
    %3445 = vmatprep.mubr.bf16.mxu0 %v3231
    %3446 = vmatmul.mubr.bf16.gmra.mxu0 %v3228
    %v3447 = vpop.f32.mrf.mxu0
    %v3448 = vadd.f32 0.0, %v3447
    %v3449 = vpop.f32.mrf.mxu0
    %v3450 = vpop.f32.mrf.mxu0
    %v3451 = vadd.f32 0.0, %v3450
    %v3452 = vpop.f32.mrf.mxu0
    %3453 = vmatprep.mubr.bf16.mxu0 %v3235
    %3454 = vmatmul.mubr.bf16.gmra.mxu0 %v3233
    %v3455 = vpop.f32.mrf.mxu0
    %v3456 = vadd.f32 0.0, %v3455
    %v3457 = vpop.f32.mrf.mxu0
    %v3458 = vpop.f32.mrf.mxu0
    %v3459 = vadd.f32 0.0, %v3458
    %v3460 = vpop.f32.mrf.mxu0
    %3461 = vmatprep.mubr.bf16.mxu0 %v3239
    %3462 = vmatmul.mubr.bf16.gmra.mxu0 %v3237
    %v3463 = vpop.f32.mrf.mxu0
    %v3464 = vadd.f32 0.0, %v3463
    %v3465 = vpop.f32.mrf.mxu0
    %v3466 = vpop.f32.mrf.mxu0
    %v3467 = vadd.f32 0.0, %v3466
    %v3468 = vpop.f32.mrf.mxu0
    %3469 = vmatprep.mubr.bf16.mxu0 %v3243
    %3470 = vmatmul.mubr.bf16.gmra.mxu0 %v3241
    %v3471 = vpop.f32.mrf.mxu0
    %v3472 = vadd.f32 0.0, %v3471
    %v3473 = vpop.f32.mrf.mxu0
    %v3474 = vpop.f32.mrf.mxu0
    %v3475 = vadd.f32 0.0, %v3474
    %v3476 = vpop.f32.mrf.mxu0
    %3477 = vdwg.mxu0
    %v3478 = vadd.f32 %v3171, %v3416
    %v3479 = vadd.f32 %v3172, %v3419
    %v3480 = vadd.f32 %v3173, %v3424
    %v3481 = vadd.f32 %v3174, %v3427
    %v3482 = vadd.f32 %v3175, %v3432
    %v3483 = vadd.f32 %v3176, %v3435
    %v3484 = vadd.f32 %v3177, %v3440
    %v3485 = vadd.f32 %v3178, %v3443
    %v3486 = vadd.f32 %v3179, %v3448
    %v3487 = vadd.f32 %v3180, %v3451
    %v3488 = vadd.f32 %v3181, %v3456
    %v3489 = vadd.f32 %v3182, %v3459
    %v3490 = vadd.f32 %v3183, %v3464
    %v3491 = vadd.f32 %v3184, %v3467
    %v3492 = vadd.f32 %v3185, %v3472
    %v3493 = vadd.f32 %v3186, %v3475
    %v3494 = vadd.f32 %v3478, %v3479
    %v3495 = vadd.f32 %v3494, %v3480
    %v3496 = vadd.f32 %v3495, %v3481
    %v3497 = vadd.f32 %v3496, %v3482
    %v3498 = vadd.f32 %v3497, %v3483
    %v3499 = vadd.f32 %v3498, %v3484
    %v3500 = vadd.f32 %v3499, %v3485
    %v3501 = vadd.f32 %v3500, %v3486
    %v3502 = vadd.f32 %v3501, %v3487
    %v3503 = vadd.f32 %v3502, %v3488
    %v3504 = vadd.f32 %v3503, %v3489
    %v3505 = vadd.f32 %v3504, %v3490
    %v3506 = vadd.f32 %v3505, %v3491
    %v3507 = vadd.f32 %v3506, %v3492
    %v3508 = vadd.f32 %v3507, %v3493
    %v3509 = vrot.slane %v3508, 4
    %v3510 = vadd.f32 %v3508, %v3509
    %v3511 = vrot.slane %v3510, 2
    %v3512 = vadd.f32 %v3510, %v3511
    %v3513 = vrot.slane %v3512, 1
    %v3514 = vadd.f32 %v3512, %v3513
    %v3515 = vmul.f32 %v3478, %v3478
    %v3516 = vmul.f32 %v3479, %v3479
    %v3517 = vmul.f32 %v3480, %v3480
    %v3518 = vmul.f32 %v3481, %v3481
    %v3519 = vmul.f32 %v3482, %v3482
    %v3520 = vmul.f32 %v3483, %v3483
    %v3521 = vmul.f32 %v3484, %v3484
    %v3522 = vmul.f32 %v3485, %v3485
    %v3523 = vmul.f32 %v3486, %v3486
    %v3524 = vmul.f32 %v3487, %v3487
    %v3525 = vmul.f32 %v3488, %v3488
    %v3526 = vmul.f32 %v3489, %v3489
    %v3527 = vmul.f32 %v3490, %v3490
    %v3528 = vmul.f32 %v3491, %v3491
    %v3529 = vmul.f32 %v3492, %v3492
    %v3530 = vmul.f32 %v3493, %v3493
    %v3531 = vadd.f32 %v3515, %v3516
    %v3532 = vadd.f32 %v3531, %v3517
    %v3533 = vadd.f32 %v3532, %v3518
    %v3534 = vadd.f32 %v3533, %v3519
    %v3535 = vadd.f32 %v3534, %v3520
    %v3536 = vadd.f32 %v3535, %v3521
    %v3537 = vadd.f32 %v3536, %v3522
    %v3538 = vadd.f32 %v3537, %v3523
    %v3539 = vadd.f32 %v3538, %v3524
    %v3540 = vadd.f32 %v3539, %v3525
    %v3541 = vadd.f32 %v3540, %v3526
    %v3542 = vadd.f32 %v3541, %v3527
    %v3543 = vadd.f32 %v3542, %v3528
    %v3544 = vadd.f32 %v3543, %v3529
    %v3545 = vadd.f32 %v3544, %v3530
    %v3546 = vrot.slane %v3545, 4
    %v3547 = vadd.f32 %v3545, %v3546
    %v3548 = vrot.slane %v3547, 2
    %v3549 = vadd.f32 %v3547, %v3548
    %v3550 = vrot.slane %v3549, 1
    %v3551 = vadd.f32 %v3549, %v3550
    %v3552 = vmul.f32 %v3514, 0.0078125
    %v3553 = vmul.f32 %v3551, 0.0078125
    %v3554 = vmul.f32 %v3552, %v3552
    %v3555 = vsub.f32 %v3553, %v3554
    %v3556 = vmax.f32 %v3555, 0.0
    %v3557 = vld [vmem:[#allocation8 + $0x1] sm:$0x1]
    %v3558 = vld [vmem:[#allocation9 + $0x1] sm:$0x1]
    %v3559 = vld [vmem:[#allocation11 + $0x1] sm:$0x1]
    %v3560 = vadd.f32 %v3556, 1e-05
    %v3561 = vrsqrt.pop %v3560
    %v3562 = vmul.f32 %v3557, %v3561
    %v3563 = vmul.f32 %v3552, %v3562
    %v3564 = vsub.f32 %v3558, %v3563
    %v3565 = vlaneseq
    %v3566 = vshrl.u32 %v3565, 7
    %v3567 = vsub.s32 0, %v3566
    %v3568 = vrot.slane %v3562, %v3567
    %v3569 = vmul.f32 %v3478, %v3568
    %v3570 = vmul.f32 %v3479, %v3568
    %v3571 = vmul.f32 %v3480, %v3568
    %v3572 = vmul.f32 %v3481, %v3568
    %v3573 = vmul.f32 %v3482, %v3568
    %v3574 = vmul.f32 %v3483, %v3568
    %v3575 = vmul.f32 %v3484, %v3568
    %v3576 = vmul.f32 %v3485, %v3568
    %v3577 = vmul.f32 %v3486, %v3568
    %v3578 = vmul.f32 %v3487, %v3568
    %v3579 = vmul.f32 %v3488, %v3568
    %v3580 = vmul.f32 %v3489, %v3568
    %v3581 = vmul.f32 %v3490, %v3568
    %v3582 = vmul.f32 %v3491, %v3568
    %v3583 = vmul.f32 %v3492, %v3568
    %v3584 = vmul.f32 %v3493, %v3568
    %v3585 = vlaneseq
    %v3586 = vshrl.u32 %v3585, 7
    %v3587 = vsub.s32 0, %v3586
    %v3588 = vrot.slane %v3564, %v3587
    %v3589 = vadd.f32 %v3569, %v3588
    %v3590 = vadd.f32 %v3570, %v3588
    %v3591 = vadd.f32 %v3571, %v3588
    %v3592 = vadd.f32 %v3572, %v3588
    %v3593 = vadd.f32 %v3573, %v3588
    %v3594 = vadd.f32 %v3574, %v3588
    %v3595 = vadd.f32 %v3575, %v3588
    %v3596 = vadd.f32 %v3576, %v3588
    %v3597 = vadd.f32 %v3577, %v3588
    %v3598 = vadd.f32 %v3578, %v3588
    %v3599 = vadd.f32 %v3579, %v3588
    %v3600 = vadd.f32 %v3580, %v3588
    %v3601 = vadd.f32 %v3581, %v3588
    %v3602 = vadd.f32 %v3582, %v3588
    %v3603 = vadd.f32 %v3583, %v3588
    %v3604 = vadd.f32 %v3584, %v3588
    %vm3605 = vcmp.gt.f32.partialorder %v3589, 0.0
    %vm3606 = vcmp.gt.f32.partialorder %v3590, 0.0
    %vm3607 = vcmp.gt.f32.partialorder %v3591, 0.0
    %vm3608 = vcmp.gt.f32.partialorder %v3592, 0.0
    %vm3609 = vcmp.gt.f32.partialorder %v3593, 0.0
    %vm3610 = vcmp.gt.f32.partialorder %v3594, 0.0
    %vm3611 = vcmp.gt.f32.partialorder %v3595, 0.0
    %vm3612 = vcmp.gt.f32.partialorder %v3596, 0.0
    %vm3613 = vcmp.gt.f32.partialorder %v3597, 0.0
    %vm3614 = vcmp.gt.f32.partialorder %v3598, 0.0
    %vm3615 = vcmp.gt.f32.partialorder %v3599, 0.0
    %vm3616 = vcmp.gt.f32.partialorder %v3600, 0.0
    %vm3617 = vcmp.gt.f32.partialorder %v3601, 0.0
    %vm3618 = vcmp.gt.f32.partialorder %v3602, 0.0
    %vm3619 = vcmp.gt.f32.partialorder %v3603, 0.0
    %vm3620 = vcmp.gt.f32.partialorder %v3604, 0.0
    %v3621 = vlaneseq
    %v3622 = vshrl.u32 %v3621, 7
    %v3623 = vsub.s32 0, %v3622
    %v3624 = vrot.slane %v3559, %v3623
    %v3625 = vmul.f32 %v3624, %v3589
    %v3626 = vmul.f32 %v3624, %v3590
    %v3627 = vmul.f32 %v3624, %v3591
    %v3628 = vmul.f32 %v3624, %v3592
    %v3629 = vmul.f32 %v3624, %v3593
    %v3630 = vmul.f32 %v3624, %v3594
    %v3631 = vmul.f32 %v3624, %v3595
    %v3632 = vmul.f32 %v3624, %v3596
    %v3633 = vmul.f32 %v3624, %v3597
    %v3634 = vmul.f32 %v3624, %v3598
    %v3635 = vmul.f32 %v3624, %v3599
    %v3636 = vmul.f32 %v3624, %v3600
    %v3637 = vmul.f32 %v3624, %v3601
    %v3638 = vmul.f32 %v3624, %v3602
    %v3639 = vmul.f32 %v3624, %v3603
    %v3640 = vmul.f32 %v3624, %v3604
    %v3641 = vsel %vm3605, %v3589, %v3625
    %v3642 = vsel %vm3606, %v3590, %v3626
    %v3643 = vsel %vm3607, %v3591, %v3627
    %v3644 = vsel %vm3608, %v3592, %v3628
    %v3645 = vsel %vm3609, %v3593, %v3629
    %v3646 = vsel %vm3610, %v3594, %v3630
    %v3647 = vsel %vm3611, %v3595, %v3631
    %v3648 = vsel %vm3612, %v3596, %v3632
    %v3649 = vsel %vm3613, %v3597, %v3633
    %v3650 = vsel %vm3614, %v3598, %v3634
    %v3651 = vsel %vm3615, %v3599, %v3635
    %v3652 = vsel %vm3616, %v3600, %v3636
    %v3653 = vsel %vm3617, %v3601, %v3637
    %v3654 = vsel %vm3618, %v3602, %v3638
    %v3655 = vsel %vm3619, %v3603, %v3639
    %v3656 = vsel %vm3620, %v3604, %v3640
    %v3657 = vpack.c.bf16 %v3642, %v3641
    %v3658 = vpack.c.bf16 %v3644, %v3643
    %v3659 = vpack.c.bf16 %v3646, %v3645
    %v3660 = vpack.c.bf16 %v3648, %v3647
    %v3661 = vpack.c.bf16 %v3650, %v3649
    %v3662 = vpack.c.bf16 %v3652, %v3651
    %v3663 = vpack.c.bf16 %v3654, %v3653
    %v3664 = vpack.c.bf16 %v3656, %v3655
    %v3665 = vld [vmem:[%s3] sm:$0xf]
    %v3666 = vld [vmem:[%s3 + $0x8] sm:$0xf]
    %v3667 = vld [vmem:[%s3 + $0x10] sm:$0xf]
    %v3668 = vld [vmem:[%s3 + $0x18] sm:$0xf]
    %v3669 = vld [vmem:[%s3 + $0x20] sm:$0xf]
    %v3670 = vld [vmem:[%s3 + $0x28] sm:$0xf]
    %v3671 = vld [vmem:[%s3 + $0x30] sm:$0xf]
    %v3672 = vld [vmem:[%s3 + $0x38] sm:$0xf]
    %v3681 = vunpack.c.l.b16 %v3665
    %v3682 = vunpack.c.l.b16 %v3666
    %v3683 = vunpack.c.l.b16 %v3667
    %v3684 = vunpack.c.l.b16 %v3668
    %v3685 = vunpack.c.l.b16 %v3669
    %v3686 = vunpack.c.l.b16 %v3670
    %v3687 = vunpack.c.l.b16 %v3671
    %v3688 = vunpack.c.l.b16 %v3672
    %v3689 = vpack.c.b16 %v3682, %v3681
    %v3690 = vpack.c.b16 %v3684, %v3683
    %v3691 = vpack.c.b16 %v3686, %v3685
    %v3692 = vpack.c.b16 %v3688, %v3687
    %3697 = vmatprep.subr.bf16.mxu0 0
    %3698 = vmatpush1.bf16.msra.mxu0 %v3664
    %3699 = vmatprep.subr.bf16.mxu0 0
    %3700 = vmatpush1.bf16.msra.mxu0 %v3663
    %3701 = vmatprep.subr.bf16.mxu0 0
    %3702 = vmatpush1.bf16.msra.mxu0 %v3662
    %3703 = vmatprep.subr.bf16.mxu0 0
    %3704 = vmatpush1.bf16.msra.mxu0 %v3661
    %3705 = vmatprep.subr.bf16.mxu0 0
    %3706 = vmatpush1.bf16.msra.mxu0 %v3660
    %3707 = vmatprep.subr.bf16.mxu0 0
    %3708 = vmatpush1.bf16.msra.mxu0 %v3659
    %3709 = vmatprep.subr.bf16.mxu0 0
    %3710 = vmatpush1.bf16.msra.mxu0 %v3658
    %3711 = vmatprep.subr.bf16.mxu0 0
    %3712 = vmatpush1.bf16.msra.mxu0 %v3657
    %3713 = vmatprep.subr.bf16.mxu0 0
    %3714 = vmatpush2.bf16.msra.mxu0 0
    %3715 = vmatprep.subr.bf16.mxu0 0
    %3716 = vmatpush2.bf16.msra.mxu0 0
    %3717 = vmatprep.subr.bf16.mxu0 0
    %3718 = vmatpush2.bf16.msra.mxu0 0
    %3719 = vmatprep.subr.bf16.mxu0 0
    %3720 = vmatpush2.bf16.msra.mxu0 0
    %3721 = vmatprep.subr.bf16.mxu0 0
    %3722 = vmatpush2.bf16.msra.mxu0 0
    %3723 = vmatprep.subr.bf16.mxu0 0
    %3724 = vmatpush2.bf16.msra.mxu0 0
    %3725 = vmatprep.subr.bf16.mxu0 0
    %3726 = vmatpush2.bf16.msra.mxu0 0
    %3727 = vmatprep.subr.bf16.mxu0 0
    %3728 = vmatpush2.bf16.msra.mxu0 0
    %3729 = vmatprep.mubr.bf16.mxu0 0
    %3730 = vmatmul.mubr.bf16.gmra.mxu0 %v3689
    %v3731 = vpop.f32.mrf.mxu0
    %v3732 = vadd.f32 0.0, %v3731
    %v3733 = vpop.f32.mrf.mxu0
    %v3734 = vpop.f32.mrf.mxu0
    %v3735 = vadd.f32 0.0, %v3734
    %v3736 = vpop.f32.mrf.mxu0
    %3737 = vmatprep.mubr.bf16.mxu0 0
    %3738 = vmatmul.mubr.bf16.gmra.mxu0 %v3690
    %v3739 = vpop.f32.mrf.mxu0
    %v3740 = vadd.f32 0.0, %v3739
    %v3741 = vpop.f32.mrf.mxu0
    %v3742 = vpop.f32.mrf.mxu0
    %v3743 = vadd.f32 0.0, %v3742
    %v3744 = vpop.f32.mrf.mxu0
    %3745 = vmatprep.mubr.bf16.mxu0 0
    %3746 = vmatmul.mubr.bf16.gmra.mxu0 %v3691
    %v3747 = vpop.f32.mrf.mxu0
    %v3748 = vadd.f32 0.0, %v3747
    %v3749 = vpop.f32.mrf.mxu0
    %v3750 = vpop.f32.mrf.mxu0
    %v3751 = vadd.f32 0.0, %v3750
    %v3752 = vpop.f32.mrf.mxu0
    %3753 = vmatprep.mubr.bf16.mxu0 0
    %3754 = vmatmul.mubr.bf16.gmra.mxu0 %v3692
    %v3755 = vpop.f32.mrf.mxu0
    %v3756 = vadd.f32 0.0, %v3755
    %v3757 = vpop.f32.mrf.mxu0
    %v3758 = vpop.f32.mrf.mxu0
    %v3759 = vadd.f32 0.0, %v3758
    %v3760 = vpop.f32.mrf.mxu0
    %3761 = vdwg.mxu0
    %v3762 = vpack.c.bf16 %v3735, %v3732
    %v3763 = vpack.c.bf16 %v3743, %v3740
    %v3764 = vpack.c.bf16 %v3751, %v3748
    %v3765 = vpack.c.bf16 %v3759, %v3756
    %v3766 = vld [vmem:[%s4] sm:$0xf]
    %v3767 = vld [vmem:[%s4 + $0x8] sm:$0xf]
    %v3768 = vld [vmem:[%s4 + $0x10] sm:$0xf]
    %v3769 = vld [vmem:[%s4 + $0x18] sm:$0xf]
    %v3770 = vld [vmem:[%s4 + $0x20] sm:$0xf]
    %v3771 = vld [vmem:[%s4 + $0x28] sm:$0xf]
    %v3772 = vld [vmem:[%s4 + $0x30] sm:$0xf]
    %v3773 = vld [vmem:[%s4 + $0x38] sm:$0xf]
    %v3782 = vunpack.c.l.b16 %v3766
    %v3783 = vunpack.c.l.b16 %v3767
    %v3784 = vunpack.c.l.b16 %v3768
    %v3785 = vunpack.c.l.b16 %v3769
    %v3786 = vunpack.c.l.b16 %v3770
    %v3787 = vunpack.c.l.b16 %v3771
    %v3788 = vunpack.c.l.b16 %v3772
    %v3789 = vunpack.c.l.b16 %v3773
    %v3790 = vpack.c.b16 %v3783, %v3782
    %v3791 = vpack.c.b16 %v3785, %v3784
    %v3792 = vpack.c.b16 %v3787, %v3786
    %v3793 = vpack.c.b16 %v3789, %v3788
    %3798 = vmatprep.subr.bf16.mxu0 0
    %3799 = vmatpush1.bf16.msra.mxu0 %v3664
    %3800 = vmatprep.subr.bf16.mxu0 0
    %3801 = vmatpush1.bf16.msra.mxu0 %v3663
    %3802 = vmatprep.subr.bf16.mxu0 0
    %3803 = vmatpush1.bf16.msra.mxu0 %v3662
    %3804 = vmatprep.subr.bf16.mxu0 0
    %3805 = vmatpush1.bf16.msra.mxu0 %v3661
    %3806 = vmatprep.subr.bf16.mxu0 0
    %3807 = vmatpush1.bf16.msra.mxu0 %v3660
    %3808 = vmatprep.subr.bf16.mxu0 0
    %3809 = vmatpush1.bf16.msra.mxu0 %v3659
    %3810 = vmatprep.subr.bf16.mxu0 0
    %3811 = vmatpush1.bf16.msra.mxu0 %v3658
    %3812 = vmatprep.subr.bf16.mxu0 0
    %3813 = vmatpush1.bf16.msra.mxu0 %v3657
    %3814 = vmatprep.subr.bf16.mxu0 0
    %3815 = vmatpush2.bf16.msra.mxu0 0
    %3816 = vmatprep.subr.bf16.mxu0 0
    %3817 = vmatpush2.bf16.msra.mxu0 0
    %3818 = vmatprep.subr.bf16.mxu0 0
    %3819 = vmatpush2.bf16.msra.mxu0 0
    %3820 = vmatprep.subr.bf16.mxu0 0
    %3821 = vmatpush2.bf16.msra.mxu0 0
    %3822 = vmatprep.subr.bf16.mxu0 0
    %3823 = vmatpush2.bf16.msra.mxu0 0
    %3824 = vmatprep.subr.bf16.mxu0 0
    %3825 = vmatpush2.bf16.msra.mxu0 0
    %3826 = vmatprep.subr.bf16.mxu0 0
    %3827 = vmatpush2.bf16.msra.mxu0 0
    %3828 = vmatprep.subr.bf16.mxu0 0
    %3829 = vmatpush2.bf16.msra.mxu0 0
    %3830 = vmatprep.mubr.bf16.mxu0 0
    %3831 = vmatmul.mubr.bf16.gmra.mxu0 %v3790
    %v3832 = vpop.f32.mrf.mxu0
    %v3833 = vadd.f32 0.0, %v3832
    %v3834 = vpop.f32.mrf.mxu0
    %v3835 = vpop.f32.mrf.mxu0
    %v3836 = vadd.f32 0.0, %v3835
    %v3837 = vpop.f32.mrf.mxu0
    %3838 = vmatprep.mubr.bf16.mxu0 0
    %3839 = vmatmul.mubr.bf16.gmra.mxu0 %v3791
    %v3840 = vpop.f32.mrf.mxu0
    %v3841 = vadd.f32 0.0, %v3840
    %v3842 = vpop.f32.mrf.mxu0
    %v3843 = vpop.f32.mrf.mxu0
    %v3844 = vadd.f32 0.0, %v3843
    %v3845 = vpop.f32.mrf.mxu0
    %3846 = vmatprep.mubr.bf16.mxu0 0
    %3847 = vmatmul.mubr.bf16.gmra.mxu0 %v3792
    %v3848 = vpop.f32.mrf.mxu0
    %v3849 = vadd.f32 0.0, %v3848
    %v3850 = vpop.f32.mrf.mxu0
    %v3851 = vpop.f32.mrf.mxu0
    %v3852 = vadd.f32 0.0, %v3851
    %v3853 = vpop.f32.mrf.mxu0
    %3854 = vmatprep.mubr.bf16.mxu0 0
    %3855 = vmatmul.mubr.bf16.gmra.mxu0 %v3793
    %v3856 = vpop.f32.mrf.mxu0
    %v3857 = vadd.f32 0.0, %v3856
    %v3858 = vpop.f32.mrf.mxu0
    %v3859 = vpop.f32.mrf.mxu0
    %v3860 = vadd.f32 0.0, %v3859
    %v3861 = vpop.f32.mrf.mxu0
    %3862 = vdwg.mxu0
    %v3863 = vpack.c.bf16 %v3836, %v3833
    %v3864 = vpack.c.bf16 %v3844, %v3841
    %v3865 = vpack.c.bf16 %v3852, %v3849
    %v3866 = vpack.c.bf16 %v3860, %v3857
    %v3871 = vunpack.c.l.b16 %v3762
    %v3872 = vunpack.c.l.b16 %v3863
    %v3873 = vunpack.c.h.b16 %v3762
    %v3874 = vunpack.c.h.b16 %v3863
    %v3875 = vunpack.c.l.b16 %v3763
    %v3876 = vunpack.c.l.b16 %v3864
    %v3877 = vunpack.c.h.b16 %v3763
    %v3878 = vunpack.c.h.b16 %v3864
    %v3879 = vpack.c.b16 %v3872, %v3871
    %v3880 = vpack.c.b16 %v3874, %v3873
    %v3881 = vpack.c.b16 %v3876, %v3875
    %v3882 = vpack.c.b16 %v3878, %v3877
    %3887 = vst [vmem:[#allocation2 + $0x98] sm:$0xff] %v3879
    %3888 = vst [vmem:[#allocation2 + $0xa0] sm:$0xff] %v3880
    %3889 = vst [vmem:[#allocation2 + $0xa8] sm:$0xff] %v3881
    %3890 = vst [vmem:[#allocation2 + $0xb0] sm:$0xff] %v3882
    %v3895 = vunpack.c.l.b16 %v3764
    %v3896 = vunpack.c.l.b16 %v3865
    %v3897 = vunpack.c.h.b16 %v3764
    %v3898 = vunpack.c.h.b16 %v3865
    %v3899 = vunpack.c.l.b16 %v3765
    %v3900 = vunpack.c.l.b16 %v3866
    %v3901 = vunpack.c.h.b16 %v3765
    %v3902 = vunpack.c.h.b16 %v3866
    %v3903 = vpack.c.b16 %v3896, %v3895
    %v3904 = vpack.c.b16 %v3898, %v3897
    %v3905 = vpack.c.b16 %v3900, %v3899
    %v3906 = vpack.c.b16 %v3902, %v3901
    %3911 = vst [vmem:[#allocation2 + $0xc0] sm:$0xff] %v3903
    %3912 = vst [vmem:[#allocation2 + $0xc8] sm:$0xff] %v3904
    %3913 = vst [vmem:[#allocation2 + $0xd0] sm:$0xff] %v3905
    %3914 = vst [vmem:[#allocation2 + $0xd8] sm:$0xff] %v3906
    %v3915 = vld [vmem:[#allocation2 + $0x90] sm:$0xcc]
    %v3916 = vld [vmem:[#allocation2 + $0x98] sm:$0xff]
    %v3917 = vld [vmem:[#allocation2 + $0xa0] sm:$0xff]
    %v3918 = vld [vmem:[#allocation2 + $0xa8] sm:$0xff]
    %v3919 = vld [vmem:[#allocation2 + $0xb0] sm:$0x77]
    %v3920 = vld [vmem:[#allocation2 + $0xb8] sm:$0xcc]
    %v3921 = vld [vmem:[#allocation2 + $0xc0] sm:$0xff]
    %v3922 = vld [vmem:[#allocation2 + $0xc8] sm:$0xff]
    %v3923 = vld [vmem:[#allocation2 + $0xd0] sm:$0xff]
    %v3924 = vld [vmem:[#allocation2 + $0xd8] sm:$0x77]
    %v3930 = vunpack.c.l.b16 %v3915
    %v3931 = vunpack.c.h.b16 %v3915
    %v3932 = vunpack.c.l.b16 %v3916
    %v3933 = vunpack.c.h.b16 %v3916
    %v3934 = vunpack.c.l.b16 %v3917
    %v3935 = vunpack.c.h.b16 %v3917
    %v3936 = vunpack.c.l.b16 %v3918
    %v3937 = vunpack.c.h.b16 %v3918
    %v3938 = vunpack.c.l.b16 %v3919
    %v3939 = vunpack.c.h.b16 %v3919
    %v3940 = vpack.c.b16 %v3932, %v3930
    %v3941 = vpack.c.b16 %v3933, %v3931
    %v3942 = vpack.c.b16 %v3936, %v3934
    %v3943 = vpack.c.b16 %v3937, %v3935
    %v3944 = vpack.c.b16 %v3938, %v3938
    %v3945 = vpack.c.b16 %v3939, %v3939
    %v3947 = vshrl.u32 %v3940, 16
    %v3949 = vrot.slane %v3947, 2
    %v3950 = vshll.u32 %v3940, 16
    %v3952 = vrot.slane %v3950, 3
    %v3953 = vor.u32 %v3949, %v3952
    %v3955 = vshrl.u32 %v3942, 16
    %v3957 = vrot.slane %v3955, 2
    %v3958 = vshll.u32 %v3942, 16
    %v3960 = vrot.slane %v3958, 3
    %v3961 = vor.u32 %v3957, %v3960
    %v3962 = vsel %vm1285, %v3953, %v3961
    %v3964 = vshrl.u32 %v3941, 16
    %v3966 = vrot.slane %v3964, 2
    %v3967 = vshll.u32 %v3941, 16
    %v3969 = vrot.slane %v3967, 3
    %v3970 = vor.u32 %v3966, %v3969
    %v3972 = vshrl.u32 %v3943, 16
    %v3974 = vrot.slane %v3972, 2
    %v3975 = vshll.u32 %v3943, 16
    %v3977 = vrot.slane %v3975, 3
    %v3978 = vor.u32 %v3974, %v3977
    %v3979 = vsel %vm1285, %v3970, %v3978
    %v3981 = vshrl.u32 %v3944, 16
    %v3983 = vrot.slane %v3981, 2
    %v3984 = vshll.u32 %v3944, 16
    %v3986 = vrot.slane %v3984, 3
    %v3987 = vor.u32 %v3983, %v3986
    %v3988 = vsel %vm1285, %v3961, %v3987
    %v3990 = vshrl.u32 %v3945, 16
    %v3992 = vrot.slane %v3990, 2
    %v3993 = vshll.u32 %v3945, 16
    %v3995 = vrot.slane %v3993, 3
    %v3996 = vor.u32 %v3992, %v3995
    %v3997 = vsel %vm1285, %v3978, %v3996
    %v4007 = vunpack.c.l.b16 %v3920
    %v4008 = vunpack.c.h.b16 %v3920
    %v4009 = vunpack.c.l.b16 %v3921
    %v4010 = vunpack.c.h.b16 %v3921
    %v4011 = vunpack.c.l.b16 %v3922
    %v4012 = vunpack.c.h.b16 %v3922
    %v4013 = vunpack.c.l.b16 %v3923
    %v4014 = vunpack.c.h.b16 %v3923
    %v4015 = vunpack.c.l.b16 %v3924
    %v4016 = vunpack.c.h.b16 %v3924
    %v4017 = vpack.c.b16 %v4009, %v4007
    %v4018 = vpack.c.b16 %v4010, %v4008
    %v4019 = vpack.c.b16 %v4013, %v4011
    %v4020 = vpack.c.b16 %v4014, %v4012
    %v4021 = vpack.c.b16 %v4015, %v4015
    %v4022 = vpack.c.b16 %v4016, %v4016
    %v4024 = vshrl.u32 %v4017, 16
    %v4026 = vrot.slane %v4024, 2
    %v4027 = vshll.u32 %v4017, 16
    %v4029 = vrot.slane %v4027, 3
    %v4030 = vor.u32 %v4026, %v4029
    %v4032 = vshrl.u32 %v4019, 16
    %v4034 = vrot.slane %v4032, 2
    %v4035 = vshll.u32 %v4019, 16
    %v4037 = vrot.slane %v4035, 3
    %v4038 = vor.u32 %v4034, %v4037
    %v4039 = vsel %vm1285, %v4030, %v4038
    %v4041 = vshrl.u32 %v4018, 16
    %v4043 = vrot.slane %v4041, 2
    %v4044 = vshll.u32 %v4018, 16
    %v4046 = vrot.slane %v4044, 3
    %v4047 = vor.u32 %v4043, %v4046
    %v4049 = vshrl.u32 %v4020, 16
    %v4051 = vrot.slane %v4049, 2
    %v4052 = vshll.u32 %v4020, 16
    %v4054 = vrot.slane %v4052, 3
    %v4055 = vor.u32 %v4051, %v4054
    %v4056 = vsel %vm1285, %v4047, %v4055
    %v4058 = vshrl.u32 %v4021, 16
    %v4060 = vrot.slane %v4058, 2
    %v4061 = vshll.u32 %v4021, 16
    %v4063 = vrot.slane %v4061, 3
    %v4064 = vor.u32 %v4060, %v4063
    %v4065 = vsel %vm1285, %v4038, %v4064
    %v4067 = vshrl.u32 %v4022, 16
    %v4069 = vrot.slane %v4067, 2
    %v4070 = vshll.u32 %v4022, 16
    %v4072 = vrot.slane %v4070, 3
    %v4073 = vor.u32 %v4069, %v4072
    %v4074 = vsel %vm1285, %v4055, %v4073
    %s4079 = scalar_lea.vmem [#allocation6], 768
    %v4080 = vld [vmem:[%s4079] sm:$0xf]
    %v4081 = vld [vmem:[%s4079 + $0x4] sm:$0xf]
    %v4082 = vld [vmem:[%s4079 + $0x8] sm:$0xf]
    %v4083 = vld [vmem:[%s4079 + $0xc] sm:$0xf]
    %v4084 = vld [vmem:[%s4079 + $0x10] sm:$0xf]
    %v4085 = vld [vmem:[%s4079 + $0x14] sm:$0xf]
    %v4086 = vld [vmem:[%s4079 + $0x18] sm:$0xf]
    %v4087 = vld [vmem:[%s4079 + $0x1c] sm:$0xf]
    %v4088 = vld [vmem:[%s4079 + $0x20] sm:$0xf]
    %v4089 = vld [vmem:[%s4079 + $0x24] sm:$0xf]
    %v4090 = vld [vmem:[%s4079 + $0x28] sm:$0xf]
    %v4091 = vld [vmem:[%s4079 + $0x2c] sm:$0xf]
    %v4092 = vld [vmem:[%s4079 + $0x30] sm:$0xf]
    %v4093 = vld [vmem:[%s4079 + $0x34] sm:$0xf]
    %v4094 = vld [vmem:[%s4079 + $0x38] sm:$0xf]
    %v4095 = vld [vmem:[%s4079 + $0x3c] sm:$0xf]
    %v4096 = vld [vmem:[%s4079 + $0x40] sm:$0xf]
    %v4097 = vld [vmem:[%s4079 + $0x44] sm:$0xf]
    %v4098 = vld [vmem:[%s4079 + $0x48] sm:$0xf]
    %v4099 = vld [vmem:[%s4079 + $0x4c] sm:$0xf]
    %v4100 = vld [vmem:[%s4079 + $0x50] sm:$0xf]
    %v4101 = vld [vmem:[%s4079 + $0x54] sm:$0xf]
    %v4102 = vld [vmem:[%s4079 + $0x58] sm:$0xf]
    %v4103 = vld [vmem:[%s4079 + $0x5c] sm:$0xf]
    %v4104 = vld [vmem:[%s4079 + $0x60] sm:$0xf]
    %v4105 = vld [vmem:[%s4079 + $0x64] sm:$0xf]
    %v4106 = vld [vmem:[%s4079 + $0x68] sm:$0xf]
    %v4107 = vld [vmem:[%s4079 + $0x6c] sm:$0xf]
    %v4108 = vld [vmem:[%s4079 + $0x70] sm:$0xf]
    %v4109 = vld [vmem:[%s4079 + $0x74] sm:$0xf]
    %v4110 = vld [vmem:[%s4079 + $0x78] sm:$0xf]
    %v4111 = vld [vmem:[%s4079 + $0x7c] sm:$0xf]
    %v4112 = vld [vmem:[#allocation2 + $0x90] sm:$0x88]
    %v4113 = vld [vmem:[#allocation2 + $0xb8] sm:$0x88]
    %v4115 = vunpack.c.l.b16 %v4112
    %v4116 = vunpack.c.h.b16 %v4112
    %v4117 = vpack.c.b16 %v3932, %v4115
    %v4118 = vpack.c.b16 %v3933, %v4116
    %v4119 = vrot.slane %v4117, 3
    %v4120 = vrot.slane %v3942, 3
    %v4121 = vsel %vm1554, %v4119, %v4120
    %v4122 = vrot.slane %v4118, 3
    %v4123 = vrot.slane %v3943, 3
    %v4124 = vsel %vm1554, %v4122, %v4123
    %v4125 = vrot.slane %v3944, 3
    %v4126 = vsel %vm1554, %v4120, %v4125
    %v4127 = vrot.slane %v3945, 3
    %v4128 = vsel %vm1554, %v4123, %v4127
    %v4134 = vunpack.c.l.b16 %v4113
    %v4135 = vunpack.c.h.b16 %v4113
    %v4136 = vpack.c.b16 %v4009, %v4134
    %v4137 = vpack.c.b16 %v4010, %v4135
    %v4138 = vrot.slane %v4136, 3
    %v4139 = vrot.slane %v4019, 3
    %v4140 = vsel %vm1554, %v4138, %v4139
    %v4141 = vrot.slane %v4137, 3
    %v4142 = vrot.slane %v4020, 3
    %v4143 = vsel %vm1554, %v4141, %v4142
    %v4144 = vrot.slane %v4021, 3
    %v4145 = vsel %vm1554, %v4139, %v4144
    %v4146 = vrot.slane %v4022, 3
    %v4147 = vsel %vm1554, %v4142, %v4146
    %s4152 = scalar_lea.vmem [#allocation6], 896
    %v4153 = vld [vmem:[%s4152] sm:$0xf]
    %v4154 = vld [vmem:[%s4152 + $0x4] sm:$0xf]
    %v4155 = vld [vmem:[%s4152 + $0x8] sm:$0xf]
    %v4156 = vld [vmem:[%s4152 + $0xc] sm:$0xf]
    %v4157 = vld [vmem:[%s4152 + $0x10] sm:$0xf]
    %v4158 = vld [vmem:[%s4152 + $0x14] sm:$0xf]
    %v4159 = vld [vmem:[%s4152 + $0x18] sm:$0xf]
    %v4160 = vld [vmem:[%s4152 + $0x1c] sm:$0xf]
    %v4161 = vld [vmem:[%s4152 + $0x20] sm:$0xf]
    %v4162 = vld [vmem:[%s4152 + $0x24] sm:$0xf]
    %v4163 = vld [vmem:[%s4152 + $0x28] sm:$0xf]
    %v4164 = vld [vmem:[%s4152 + $0x2c] sm:$0xf]
    %v4165 = vld [vmem:[%s4152 + $0x30] sm:$0xf]
    %v4166 = vld [vmem:[%s4152 + $0x34] sm:$0xf]
    %v4167 = vld [vmem:[%s4152 + $0x38] sm:$0xf]
    %v4168 = vld [vmem:[%s4152 + $0x3c] sm:$0xf]
    %v4169 = vld [vmem:[%s4152 + $0x40] sm:$0xf]
    %v4170 = vld [vmem:[%s4152 + $0x44] sm:$0xf]
    %v4171 = vld [vmem:[%s4152 + $0x48] sm:$0xf]
    %v4172 = vld [vmem:[%s4152 + $0x4c] sm:$0xf]
    %v4173 = vld [vmem:[%s4152 + $0x50] sm:$0xf]
    %v4174 = vld [vmem:[%s4152 + $0x54] sm:$0xf]
    %v4175 = vld [vmem:[%s4152 + $0x58] sm:$0xf]
    %v4176 = vld [vmem:[%s4152 + $0x5c] sm:$0xf]
    %v4177 = vld [vmem:[%s4152 + $0x60] sm:$0xf]
    %v4178 = vld [vmem:[%s4152 + $0x64] sm:$0xf]
    %v4179 = vld [vmem:[%s4152 + $0x68] sm:$0xf]
    %v4180 = vld [vmem:[%s4152 + $0x6c] sm:$0xf]
    %v4181 = vld [vmem:[%s4152 + $0x70] sm:$0xf]
    %v4182 = vld [vmem:[%s4152 + $0x74] sm:$0xf]
    %v4183 = vld [vmem:[%s4152 + $0x78] sm:$0xf]
    %v4184 = vld [vmem:[%s4152 + $0x7c] sm:$0xf]
    %v4217 = vunpack.c.l.b16 %v4153
    %v4218 = vunpack.c.l.b16 %v4154
    %v4219 = vunpack.c.l.b16 %v4155
    %v4220 = vunpack.c.l.b16 %v4156
    %v4221 = vunpack.c.l.b16 %v4157
    %v4222 = vunpack.c.l.b16 %v4158
    %v4223 = vunpack.c.l.b16 %v4159
    %v4224 = vunpack.c.l.b16 %v4160
    %v4225 = vunpack.c.l.b16 %v4161
    %v4226 = vunpack.c.l.b16 %v4162
    %v4227 = vunpack.c.l.b16 %v4163
    %v4228 = vunpack.c.l.b16 %v4164
    %v4229 = vunpack.c.l.b16 %v4165
    %v4230 = vunpack.c.l.b16 %v4166
    %v4231 = vunpack.c.l.b16 %v4167
    %v4232 = vunpack.c.l.b16 %v4168
    %v4233 = vunpack.c.l.b16 %v4169
    %v4234 = vunpack.c.l.b16 %v4170
    %v4235 = vunpack.c.l.b16 %v4171
    %v4236 = vunpack.c.l.b16 %v4172
    %v4237 = vunpack.c.l.b16 %v4173
    %v4238 = vunpack.c.l.b16 %v4174
    %v4239 = vunpack.c.l.b16 %v4175
    %v4240 = vunpack.c.l.b16 %v4176
    %v4241 = vunpack.c.l.b16 %v4177
    %v4242 = vunpack.c.l.b16 %v4178
    %v4243 = vunpack.c.l.b16 %v4179
    %v4244 = vunpack.c.l.b16 %v4180
    %v4245 = vunpack.c.l.b16 %v4181
    %v4246 = vunpack.c.l.b16 %v4182
    %v4247 = vunpack.c.l.b16 %v4183
    %v4248 = vunpack.c.l.b16 %v4184
    %v4249 = vpack.c.b16 %v4218, %v4217
    %v4250 = vpack.c.b16 %v4220, %v4219
    %v4251 = vpack.c.b16 %v4222, %v4221
    %v4252 = vpack.c.b16 %v4224, %v4223
    %v4253 = vpack.c.b16 %v4226, %v4225
    %v4254 = vpack.c.b16 %v4228, %v4227
    %v4255 = vpack.c.b16 %v4230, %v4229
    %v4256 = vpack.c.b16 %v4232, %v4231
    %v4257 = vpack.c.b16 %v4234, %v4233
    %v4258 = vpack.c.b16 %v4236, %v4235
    %v4259 = vpack.c.b16 %v4238, %v4237
    %v4260 = vpack.c.b16 %v4240, %v4239
    %v4261 = vpack.c.b16 %v4242, %v4241
    %v4262 = vpack.c.b16 %v4244, %v4243
    %v4263 = vpack.c.b16 %v4246, %v4245
    %v4264 = vpack.c.b16 %v4248, %v4247
    %4281 = vmatprep.subr.bf16.mxu0 0
    %4282 = vmatpush1.bf16.msra.mxu0 %v4256
    %4283 = vmatprep.subr.bf16.mxu0 0
    %4284 = vmatpush1.bf16.msra.mxu0 %v4255
    %4285 = vmatprep.subr.bf16.mxu0 0
    %4286 = vmatpush1.bf16.msra.mxu0 %v4254
    %4287 = vmatprep.subr.bf16.mxu0 0
    %4288 = vmatpush1.bf16.msra.mxu0 %v4253
    %4289 = vmatprep.subr.bf16.mxu0 0
    %4290 = vmatpush1.bf16.msra.mxu0 %v4252
    %4291 = vmatprep.subr.bf16.mxu0 0
    %4292 = vmatpush1.bf16.msra.mxu0 %v4251
    %4293 = vmatprep.subr.bf16.mxu0 0
    %4294 = vmatpush1.bf16.msra.mxu0 %v4250
    %4295 = vmatprep.subr.bf16.mxu0 0
    %4296 = vmatpush1.bf16.msra.mxu0 %v4249
    %4297 = vmatprep.subr.bf16.mxu0 0
    %4298 = vmatpush2.bf16.msra.mxu0 %v4264
    %4299 = vmatprep.subr.bf16.mxu0 0
    %4300 = vmatpush2.bf16.msra.mxu0 %v4263
    %4301 = vmatprep.subr.bf16.mxu0 0
    %4302 = vmatpush2.bf16.msra.mxu0 %v4262
    %4303 = vmatprep.subr.bf16.mxu0 0
    %4304 = vmatpush2.bf16.msra.mxu0 %v4261
    %4305 = vmatprep.subr.bf16.mxu0 0
    %4306 = vmatpush2.bf16.msra.mxu0 %v4260
    %4307 = vmatprep.subr.bf16.mxu0 0
    %4308 = vmatpush2.bf16.msra.mxu0 %v4259
    %4309 = vmatprep.subr.bf16.mxu0 0
    %4310 = vmatpush2.bf16.msra.mxu0 %v4258
    %4311 = vmatprep.subr.bf16.mxu0 0
    %4312 = vmatpush2.bf16.msra.mxu0 %v4257
    %4313 = vmatprep.mubr.bf16.mxu0 %v4124
    %4314 = vmatmul.mubr.bf16.gmra.mxu0 %v4121
    %v4315 = vpop.f32.mrf.mxu0
    %v4316 = vadd.f32 0.0, %v4315
    %v4317 = vpop.f32.mrf.mxu0
    %v4318 = vpop.f32.mrf.mxu0
    %v4319 = vadd.f32 0.0, %v4318
    %v4320 = vpop.f32.mrf.mxu0
    %4321 = vmatprep.mubr.bf16.mxu0 %v4128
    %4322 = vmatmul.mubr.bf16.gmra.mxu0 %v4126
    %v4323 = vpop.f32.mrf.mxu0
    %v4324 = vadd.f32 0.0, %v4323
    %v4325 = vpop.f32.mrf.mxu0
    %v4326 = vpop.f32.mrf.mxu0
    %v4327 = vadd.f32 0.0, %v4326
    %v4328 = vpop.f32.mrf.mxu0
    %4329 = vmatprep.mubr.bf16.mxu0 %v4143
    %4330 = vmatmul.mubr.bf16.gmra.mxu0 %v4140
    %v4331 = vpop.f32.mrf.mxu0
    %v4332 = vadd.f32 0.0, %v4331
    %v4333 = vpop.f32.mrf.mxu0
    %v4334 = vpop.f32.mrf.mxu0
    %v4335 = vadd.f32 0.0, %v4334
    %v4336 = vpop.f32.mrf.mxu0
    %4337 = vmatprep.mubr.bf16.mxu0 %v4147
    %4338 = vmatmul.mubr.bf16.gmra.mxu0 %v4145
    %v4339 = vpop.f32.mrf.mxu0
    %v4340 = vadd.f32 0.0, %v4339
    %v4341 = vpop.f32.mrf.mxu0
    %v4342 = vpop.f32.mrf.mxu0
    %v4343 = vadd.f32 0.0, %v4342
    %v4344 = vpop.f32.mrf.mxu0
    %4345 = vdwg.mxu0
    %v4378 = vunpack.c.l.b16 %v4080
    %v4379 = vunpack.c.l.b16 %v4081
    %v4380 = vunpack.c.l.b16 %v4082
    %v4381 = vunpack.c.l.b16 %v4083
    %v4382 = vunpack.c.l.b16 %v4084
    %v4383 = vunpack.c.l.b16 %v4085
    %v4384 = vunpack.c.l.b16 %v4086
    %v4385 = vunpack.c.l.b16 %v4087
    %v4386 = vunpack.c.l.b16 %v4088
    %v4387 = vunpack.c.l.b16 %v4089
    %v4388 = vunpack.c.l.b16 %v4090
    %v4389 = vunpack.c.l.b16 %v4091
    %v4390 = vunpack.c.l.b16 %v4092
    %v4391 = vunpack.c.l.b16 %v4093
    %v4392 = vunpack.c.l.b16 %v4094
    %v4393 = vunpack.c.l.b16 %v4095
    %v4394 = vunpack.c.l.b16 %v4096
    %v4395 = vunpack.c.l.b16 %v4097
    %v4396 = vunpack.c.l.b16 %v4098
    %v4397 = vunpack.c.l.b16 %v4099
    %v4398 = vunpack.c.l.b16 %v4100
    %v4399 = vunpack.c.l.b16 %v4101
    %v4400 = vunpack.c.l.b16 %v4102
    %v4401 = vunpack.c.l.b16 %v4103
    %v4402 = vunpack.c.l.b16 %v4104
    %v4403 = vunpack.c.l.b16 %v4105
    %v4404 = vunpack.c.l.b16 %v4106
    %v4405 = vunpack.c.l.b16 %v4107
    %v4406 = vunpack.c.l.b16 %v4108
    %v4407 = vunpack.c.l.b16 %v4109
    %v4408 = vunpack.c.l.b16 %v4110
    %v4409 = vunpack.c.l.b16 %v4111
    %v4410 = vpack.c.b16 %v4379, %v4378
    %v4411 = vpack.c.b16 %v4381, %v4380
    %v4412 = vpack.c.b16 %v4383, %v4382
    %v4413 = vpack.c.b16 %v4385, %v4384
    %v4414 = vpack.c.b16 %v4387, %v4386
    %v4415 = vpack.c.b16 %v4389, %v4388
    %v4416 = vpack.c.b16 %v4391, %v4390
    %v4417 = vpack.c.b16 %v4393, %v4392
    %v4418 = vpack.c.b16 %v4395, %v4394
    %v4419 = vpack.c.b16 %v4397, %v4396
    %v4420 = vpack.c.b16 %v4399, %v4398
    %v4421 = vpack.c.b16 %v4401, %v4400
    %v4422 = vpack.c.b16 %v4403, %v4402
    %v4423 = vpack.c.b16 %v4405, %v4404
    %v4424 = vpack.c.b16 %v4407, %v4406
    %v4425 = vpack.c.b16 %v4409, %v4408
    %4442 = vmatprep.subr.bf16.mxu0 0
    %4443 = vmatpush1.bf16.msra.mxu0 %v4417
    %4444 = vmatprep.subr.bf16.mxu0 0
    %4445 = vmatpush1.bf16.msra.mxu0 %v4416
    %4446 = vmatprep.subr.bf16.mxu0 0
    %4447 = vmatpush1.bf16.msra.mxu0 %v4415
    %4448 = vmatprep.subr.bf16.mxu0 0
    %4449 = vmatpush1.bf16.msra.mxu0 %v4414
    %4450 = vmatprep.subr.bf16.mxu0 0
    %4451 = vmatpush1.bf16.msra.mxu0 %v4413
    %4452 = vmatprep.subr.bf16.mxu0 0
    %4453 = vmatpush1.bf16.msra.mxu0 %v4412
    %4454 = vmatprep.subr.bf16.mxu0 0
    %4455 = vmatpush1.bf16.msra.mxu0 %v4411
    %4456 = vmatprep.subr.bf16.mxu0 0
    %4457 = vmatpush1.bf16.msra.mxu0 %v4410
    %4458 = vmatprep.subr.bf16.mxu0 0
    %4459 = vmatpush2.bf16.msra.mxu0 %v4425
    %4460 = vmatprep.subr.bf16.mxu0 0
    %4461 = vmatpush2.bf16.msra.mxu0 %v4424
    %4462 = vmatprep.subr.bf16.mxu0 0
    %4463 = vmatpush2.bf16.msra.mxu0 %v4423
    %4464 = vmatprep.subr.bf16.mxu0 0
    %4465 = vmatpush2.bf16.msra.mxu0 %v4422
    %4466 = vmatprep.subr.bf16.mxu0 0
    %4467 = vmatpush2.bf16.msra.mxu0 %v4421
    %4468 = vmatprep.subr.bf16.mxu0 0
    %4469 = vmatpush2.bf16.msra.mxu0 %v4420
    %4470 = vmatprep.subr.bf16.mxu0 0
    %4471 = vmatpush2.bf16.msra.mxu0 %v4419
    %4472 = vmatprep.subr.bf16.mxu0 0
    %4473 = vmatpush2.bf16.msra.mxu0 %v4418
    %4474 = vmatprep.mubr.bf16.mxu0 %v3979
    %4475 = vmatmul.mubr.bf16.gmra.mxu0 %v3962
    %v4476 = vpop.f32.mrf.mxu0
    %v4477 = vadd.f32 %v4316, %v4476
    %v4478 = vpop.f32.mrf.mxu0
    %v4479 = vpop.f32.mrf.mxu0
    %v4480 = vadd.f32 %v4319, %v4479
    %v4481 = vpop.f32.mrf.mxu0
    %4482 = vmatprep.mubr.bf16.mxu0 %v3997
    %4483 = vmatmul.mubr.bf16.gmra.mxu0 %v3988
    %v4484 = vpop.f32.mrf.mxu0
    %v4485 = vadd.f32 %v4324, %v4484
    %v4486 = vpop.f32.mrf.mxu0
    %v4487 = vpop.f32.mrf.mxu0
    %v4488 = vadd.f32 %v4327, %v4487
    %v4489 = vpop.f32.mrf.mxu0
    %4490 = vmatprep.mubr.bf16.mxu0 %v4056
    %4491 = vmatmul.mubr.bf16.gmra.mxu0 %v4039
    %v4492 = vpop.f32.mrf.mxu0
    %v4493 = vadd.f32 %v4332, %v4492
    %v4494 = vpop.f32.mrf.mxu0
    %v4495 = vpop.f32.mrf.mxu0
    %v4496 = vadd.f32 %v4335, %v4495
    %v4497 = vpop.f32.mrf.mxu0
    %4498 = vmatprep.mubr.bf16.mxu0 %v4074
    %4499 = vmatmul.mubr.bf16.gmra.mxu0 %v4065
    %v4500 = vpop.f32.mrf.mxu0
    %v4501 = vadd.f32 %v4340, %v4500
    %v4502 = vpop.f32.mrf.mxu0
    %v4503 = vpop.f32.mrf.mxu0
    %v4504 = vadd.f32 %v4343, %v4503
    %v4505 = vpop.f32.mrf.mxu0
    %4506 = vdwg.mxu0
    %v4507 = vld [vmem:[#allocation2 + $0xb0] sm:$0xff]
    %v4508 = vld [vmem:[#allocation2 + $0xd8] sm:$0xff]
    %v4510 = vunpack.c.l.b16 %v4507
    %v4511 = vunpack.c.h.b16 %v4507
    %v4512 = vpack.c.b16 %v4510, %v4510
    %v4513 = vpack.c.b16 %v4511, %v4511
    %v4515 = vshrl.u32 %v4117, 16
    %v4517 = vrot.slane %v4515, 3
    %v4518 = vshll.u32 %v4117, 16
    %v4520 = vrot.slane %v4518, 4
    %v4521 = vor.u32 %v4517, %v4520
    %v4522 = vrot.slane %v3955, 3
    %v4523 = vrot.slane %v3958, 4
    %v4524 = vor.u32 %v4522, %v4523
    %v4525 = vsel %vm2038, %v4521, %v4524
    %v4527 = vshrl.u32 %v4118, 16
    %v4529 = vrot.slane %v4527, 3
    %v4530 = vshll.u32 %v4118, 16
    %v4532 = vrot.slane %v4530, 4
    %v4533 = vor.u32 %v4529, %v4532
    %v4534 = vrot.slane %v3972, 3
    %v4535 = vrot.slane %v3975, 4
    %v4536 = vor.u32 %v4534, %v4535
    %v4537 = vsel %vm2038, %v4533, %v4536
    %v4539 = vshrl.u32 %v4512, 16
    %v4541 = vrot.slane %v4539, 3
    %v4542 = vshll.u32 %v4512, 16
    %v4544 = vrot.slane %v4542, 4
    %v4545 = vor.u32 %v4541, %v4544
    %v4546 = vsel %vm2038, %v4524, %v4545
    %v4548 = vshrl.u32 %v4513, 16
    %v4550 = vrot.slane %v4548, 3
    %v4551 = vshll.u32 %v4513, 16
    %v4553 = vrot.slane %v4551, 4
    %v4554 = vor.u32 %v4550, %v4553
    %v4555 = vsel %vm2038, %v4536, %v4554
    %v4561 = vunpack.c.l.b16 %v4508
    %v4562 = vunpack.c.h.b16 %v4508
    %v4563 = vpack.c.b16 %v4561, %v4561
    %v4564 = vpack.c.b16 %v4562, %v4562
    %v4566 = vshrl.u32 %v4136, 16
    %v4568 = vrot.slane %v4566, 3
    %v4569 = vshll.u32 %v4136, 16
    %v4571 = vrot.slane %v4569, 4
    %v4572 = vor.u32 %v4568, %v4571
    %v4573 = vrot.slane %v4032, 3
    %v4574 = vrot.slane %v4035, 4
    %v4575 = vor.u32 %v4573, %v4574
    %v4576 = vsel %vm2038, %v4572, %v4575
    %v4578 = vshrl.u32 %v4137, 16
    %v4580 = vrot.slane %v4578, 3
    %v4581 = vshll.u32 %v4137, 16
    %v4583 = vrot.slane %v4581, 4
    %v4584 = vor.u32 %v4580, %v4583
    %v4585 = vrot.slane %v4049, 3
    %v4586 = vrot.slane %v4052, 4
    %v4587 = vor.u32 %v4585, %v4586
    %v4588 = vsel %vm2038, %v4584, %v4587
    %v4590 = vshrl.u32 %v4563, 16
    %v4592 = vrot.slane %v4590, 3
    %v4593 = vshll.u32 %v4563, 16
    %v4595 = vrot.slane %v4593, 4
    %v4596 = vor.u32 %v4592, %v4595
    %v4597 = vsel %vm2038, %v4575, %v4596
    %v4599 = vshrl.u32 %v4564, 16
    %v4601 = vrot.slane %v4599, 3
    %v4602 = vshll.u32 %v4564, 16
    %v4604 = vrot.slane %v4602, 4
    %v4605 = vor.u32 %v4601, %v4604
    %v4606 = vsel %vm2038, %v4587, %v4605
    %s4611 = scalar_lea.vmem [#allocation6], 1024
    %v4612 = vld [vmem:[%s4611] sm:$0xf]
    %v4613 = vld [vmem:[%s4611 + $0x4] sm:$0xf]
    %v4614 = vld [vmem:[%s4611 + $0x8] sm:$0xf]
    %v4615 = vld [vmem:[%s4611 + $0xc] sm:$0xf]
    %v4616 = vld [vmem:[%s4611 + $0x10] sm:$0xf]
    %v4617 = vld [vmem:[%s4611 + $0x14] sm:$0xf]
    %v4618 = vld [vmem:[%s4611 + $0x18] sm:$0xf]
    %v4619 = vld [vmem:[%s4611 + $0x1c] sm:$0xf]
    %v4620 = vld [vmem:[%s4611 + $0x20] sm:$0xf]
    %v4621 = vld [vmem:[%s4611 + $0x24] sm:$0xf]
    %v4622 = vld [vmem:[%s4611 + $0x28] sm:$0xf]
    %v4623 = vld [vmem:[%s4611 + $0x2c] sm:$0xf]
    %v4624 = vld [vmem:[%s4611 + $0x30] sm:$0xf]
    %v4625 = vld [vmem:[%s4611 + $0x34] sm:$0xf]
    %v4626 = vld [vmem:[%s4611 + $0x38] sm:$0xf]
    %v4627 = vld [vmem:[%s4611 + $0x3c] sm:$0xf]
    %v4628 = vld [vmem:[%s4611 + $0x40] sm:$0xf]
    %v4629 = vld [vmem:[%s4611 + $0x44] sm:$0xf]
    %v4630 = vld [vmem:[%s4611 + $0x48] sm:$0xf]
    %v4631 = vld [vmem:[%s4611 + $0x4c] sm:$0xf]
    %v4632 = vld [vmem:[%s4611 + $0x50] sm:$0xf]
    %v4633 = vld [vmem:[%s4611 + $0x54] sm:$0xf]
    %v4634 = vld [vmem:[%s4611 + $0x58] sm:$0xf]
    %v4635 = vld [vmem:[%s4611 + $0x5c] sm:$0xf]
    %v4636 = vld [vmem:[%s4611 + $0x60] sm:$0xf]
    %v4637 = vld [vmem:[%s4611 + $0x64] sm:$0xf]
    %v4638 = vld [vmem:[%s4611 + $0x68] sm:$0xf]
    %v4639 = vld [vmem:[%s4611 + $0x6c] sm:$0xf]
    %v4640 = vld [vmem:[%s4611 + $0x70] sm:$0xf]
    %v4641 = vld [vmem:[%s4611 + $0x74] sm:$0xf]
    %v4642 = vld [vmem:[%s4611 + $0x78] sm:$0xf]
    %v4643 = vld [vmem:[%s4611 + $0x7c] sm:$0xf]
    %v4676 = vunpack.c.l.b16 %v4612
    %v4677 = vunpack.c.l.b16 %v4613
    %v4678 = vunpack.c.l.b16 %v4614
    %v4679 = vunpack.c.l.b16 %v4615
    %v4680 = vunpack.c.l.b16 %v4616
    %v4681 = vunpack.c.l.b16 %v4617
    %v4682 = vunpack.c.l.b16 %v4618
    %v4683 = vunpack.c.l.b16 %v4619
    %v4684 = vunpack.c.l.b16 %v4620
    %v4685 = vunpack.c.l.b16 %v4621
    %v4686 = vunpack.c.l.b16 %v4622
    %v4687 = vunpack.c.l.b16 %v4623
    %v4688 = vunpack.c.l.b16 %v4624
    %v4689 = vunpack.c.l.b16 %v4625
    %v4690 = vunpack.c.l.b16 %v4626
    %v4691 = vunpack.c.l.b16 %v4627
    %v4692 = vunpack.c.l.b16 %v4628
    %v4693 = vunpack.c.l.b16 %v4629
    %v4694 = vunpack.c.l.b16 %v4630
    %v4695 = vunpack.c.l.b16 %v4631
    %v4696 = vunpack.c.l.b16 %v4632
    %v4697 = vunpack.c.l.b16 %v4633
    %v4698 = vunpack.c.l.b16 %v4634
    %v4699 = vunpack.c.l.b16 %v4635
    %v4700 = vunpack.c.l.b16 %v4636
    %v4701 = vunpack.c.l.b16 %v4637
    %v4702 = vunpack.c.l.b16 %v4638
    %v4703 = vunpack.c.l.b16 %v4639
    %v4704 = vunpack.c.l.b16 %v4640
    %v4705 = vunpack.c.l.b16 %v4641
    %v4706 = vunpack.c.l.b16 %v4642
    %v4707 = vunpack.c.l.b16 %v4643
    %v4708 = vpack.c.b16 %v4677, %v4676
    %v4709 = vpack.c.b16 %v4679, %v4678
    %v4710 = vpack.c.b16 %v4681, %v4680
    %v4711 = vpack.c.b16 %v4683, %v4682
    %v4712 = vpack.c.b16 %v4685, %v4684
    %v4713 = vpack.c.b16 %v4687, %v4686
    %v4714 = vpack.c.b16 %v4689, %v4688
    %v4715 = vpack.c.b16 %v4691, %v4690
    %v4716 = vpack.c.b16 %v4693, %v4692
    %v4717 = vpack.c.b16 %v4695, %v4694
    %v4718 = vpack.c.b16 %v4697, %v4696
    %v4719 = vpack.c.b16 %v4699, %v4698
    %v4720 = vpack.c.b16 %v4701, %v4700
    %v4721 = vpack.c.b16 %v4703, %v4702
    %v4722 = vpack.c.b16 %v4705, %v4704
    %v4723 = vpack.c.b16 %v4707, %v4706
    %4740 = vmatprep.subr.bf16.mxu0 0
    %4741 = vmatpush1.bf16.msra.mxu0 %v4715
    %4742 = vmatprep.subr.bf16.mxu0 0
    %4743 = vmatpush1.bf16.msra.mxu0 %v4714
    %4744 = vmatprep.subr.bf16.mxu0 0
    %4745 = vmatpush1.bf16.msra.mxu0 %v4713
    %4746 = vmatprep.subr.bf16.mxu0 0
    %4747 = vmatpush1.bf16.msra.mxu0 %v4712
    %4748 = vmatprep.subr.bf16.mxu0 0
    %4749 = vmatpush1.bf16.msra.mxu0 %v4711
    %4750 = vmatprep.subr.bf16.mxu0 0
    %4751 = vmatpush1.bf16.msra.mxu0 %v4710
    %4752 = vmatprep.subr.bf16.mxu0 0
    %4753 = vmatpush1.bf16.msra.mxu0 %v4709
    %4754 = vmatprep.subr.bf16.mxu0 0
    %4755 = vmatpush1.bf16.msra.mxu0 %v4708
    %4756 = vmatprep.subr.bf16.mxu0 0
    %4757 = vmatpush2.bf16.msra.mxu0 %v4723
    %4758 = vmatprep.subr.bf16.mxu0 0
    %4759 = vmatpush2.bf16.msra.mxu0 %v4722
    %4760 = vmatprep.subr.bf16.mxu0 0
    %4761 = vmatpush2.bf16.msra.mxu0 %v4721
    %4762 = vmatprep.subr.bf16.mxu0 0
    %4763 = vmatpush2.bf16.msra.mxu0 %v4720
    %4764 = vmatprep.subr.bf16.mxu0 0
    %4765 = vmatpush2.bf16.msra.mxu0 %v4719
    %4766 = vmatprep.subr.bf16.mxu0 0
    %4767 = vmatpush2.bf16.msra.mxu0 %v4718
    %4768 = vmatprep.subr.bf16.mxu0 0
    %4769 = vmatpush2.bf16.msra.mxu0 %v4717
    %4770 = vmatprep.subr.bf16.mxu0 0
    %4771 = vmatpush2.bf16.msra.mxu0 %v4716
    %4772 = vmatprep.mubr.bf16.mxu0 %v4537
    %4773 = vmatmul.mubr.bf16.gmra.mxu0 %v4525
    %v4774 = vpop.f32.mrf.mxu0
    %v4775 = vadd.f32 0.0, %v4774
    %v4776 = vpop.f32.mrf.mxu0
    %v4777 = vpop.f32.mrf.mxu0
    %v4778 = vadd.f32 0.0, %v4777
    %v4779 = vpop.f32.mrf.mxu0
    %4780 = vmatprep.mubr.bf16.mxu0 %v4555
    %4781 = vmatmul.mubr.bf16.gmra.mxu0 %v4546
    %v4782 = vpop.f32.mrf.mxu0
    %v4783 = vadd.f32 0.0, %v4782
    %v4784 = vpop.f32.mrf.mxu0
    %v4785 = vpop.f32.mrf.mxu0
    %v4786 = vadd.f32 0.0, %v4785
    %v4787 = vpop.f32.mrf.mxu0
    %4788 = vmatprep.mubr.bf16.mxu0 %v4588
    %4789 = vmatmul.mubr.bf16.gmra.mxu0 %v4576
    %v4790 = vpop.f32.mrf.mxu0
    %v4791 = vadd.f32 0.0, %v4790
    %v4792 = vpop.f32.mrf.mxu0
    %v4793 = vpop.f32.mrf.mxu0
    %v4794 = vadd.f32 0.0, %v4793
    %v4795 = vpop.f32.mrf.mxu0
    %4796 = vmatprep.mubr.bf16.mxu0 %v4606
    %4797 = vmatmul.mubr.bf16.gmra.mxu0 %v4597
    %v4798 = vpop.f32.mrf.mxu0
    %v4799 = vadd.f32 0.0, %v4798
    %v4800 = vpop.f32.mrf.mxu0
    %v4801 = vpop.f32.mrf.mxu0
    %v4802 = vadd.f32 0.0, %v4801
    %v4803 = vpop.f32.mrf.mxu0
    %4804 = vdwg.mxu0
    %v4805 = vadd.f32 %v4477, %v4775
    %v4806 = vadd.f32 %v4480, %v4778
    %v4807 = vadd.f32 %v4485, %v4783
    %v4808 = vadd.f32 %v4488, %v4786
    %v4809 = vadd.f32 %v4493, %v4791
    %v4810 = vadd.f32 %v4496, %v4794
    %v4811 = vadd.f32 %v4501, %v4799
    %v4812 = vadd.f32 %v4504, %v4802
    %v4813 = vpack.c.b16 %v3934, %v3932
    %v4814 = vpack.c.b16 %v3935, %v3933
    %v4815 = vpack.c.b16 %v4510, %v3936
    %v4816 = vpack.c.b16 %v4511, %v3937
    %v4821 = vpack.c.b16 %v4011, %v4009
    %v4822 = vpack.c.b16 %v4012, %v4010
    %v4823 = vpack.c.b16 %v4561, %v4013
    %v4824 = vpack.c.b16 %v4562, %v4014
    %s4829 = scalar_lea.vmem [#allocation6], 1152
    %v4830 = vld [vmem:[%s4829] sm:$0xf]
    %v4831 = vld [vmem:[%s4829 + $0x4] sm:$0xf]
    %v4832 = vld [vmem:[%s4829 + $0x8] sm:$0xf]
    %v4833 = vld [vmem:[%s4829 + $0xc] sm:$0xf]
    %v4834 = vld [vmem:[%s4829 + $0x10] sm:$0xf]
    %v4835 = vld [vmem:[%s4829 + $0x14] sm:$0xf]
    %v4836 = vld [vmem:[%s4829 + $0x18] sm:$0xf]
    %v4837 = vld [vmem:[%s4829 + $0x1c] sm:$0xf]
    %v4838 = vld [vmem:[%s4829 + $0x20] sm:$0xf]
    %v4839 = vld [vmem:[%s4829 + $0x24] sm:$0xf]
    %v4840 = vld [vmem:[%s4829 + $0x28] sm:$0xf]
    %v4841 = vld [vmem:[%s4829 + $0x2c] sm:$0xf]
    %v4842 = vld [vmem:[%s4829 + $0x30] sm:$0xf]
    %v4843 = vld [vmem:[%s4829 + $0x34] sm:$0xf]
    %v4844 = vld [vmem:[%s4829 + $0x38] sm:$0xf]
    %v4845 = vld [vmem:[%s4829 + $0x3c] sm:$0xf]
    %v4846 = vld [vmem:[%s4829 + $0x40] sm:$0xf]
    %v4847 = vld [vmem:[%s4829 + $0x44] sm:$0xf]
    %v4848 = vld [vmem:[%s4829 + $0x48] sm:$0xf]
    %v4849 = vld [vmem:[%s4829 + $0x4c] sm:$0xf]
    %v4850 = vld [vmem:[%s4829 + $0x50] sm:$0xf]
    %v4851 = vld [vmem:[%s4829 + $0x54] sm:$0xf]
    %v4852 = vld [vmem:[%s4829 + $0x58] sm:$0xf]
    %v4853 = vld [vmem:[%s4829 + $0x5c] sm:$0xf]
    %v4854 = vld [vmem:[%s4829 + $0x60] sm:$0xf]
    %v4855 = vld [vmem:[%s4829 + $0x64] sm:$0xf]
    %v4856 = vld [vmem:[%s4829 + $0x68] sm:$0xf]
    %v4857 = vld [vmem:[%s4829 + $0x6c] sm:$0xf]
    %v4858 = vld [vmem:[%s4829 + $0x70] sm:$0xf]
    %v4859 = vld [vmem:[%s4829 + $0x74] sm:$0xf]
    %v4860 = vld [vmem:[%s4829 + $0x78] sm:$0xf]
    %v4861 = vld [vmem:[%s4829 + $0x7c] sm:$0xf]
    %v4894 = vunpack.c.l.b16 %v4830
    %v4895 = vunpack.c.l.b16 %v4831
    %v4896 = vunpack.c.l.b16 %v4832
    %v4897 = vunpack.c.l.b16 %v4833
    %v4898 = vunpack.c.l.b16 %v4834
    %v4899 = vunpack.c.l.b16 %v4835
    %v4900 = vunpack.c.l.b16 %v4836
    %v4901 = vunpack.c.l.b16 %v4837
    %v4902 = vunpack.c.l.b16 %v4838
    %v4903 = vunpack.c.l.b16 %v4839
    %v4904 = vunpack.c.l.b16 %v4840
    %v4905 = vunpack.c.l.b16 %v4841
    %v4906 = vunpack.c.l.b16 %v4842
    %v4907 = vunpack.c.l.b16 %v4843
    %v4908 = vunpack.c.l.b16 %v4844
    %v4909 = vunpack.c.l.b16 %v4845
    %v4910 = vunpack.c.l.b16 %v4846
    %v4911 = vunpack.c.l.b16 %v4847
    %v4912 = vunpack.c.l.b16 %v4848
    %v4913 = vunpack.c.l.b16 %v4849
    %v4914 = vunpack.c.l.b16 %v4850
    %v4915 = vunpack.c.l.b16 %v4851
    %v4916 = vunpack.c.l.b16 %v4852
    %v4917 = vunpack.c.l.b16 %v4853
    %v4918 = vunpack.c.l.b16 %v4854
    %v4919 = vunpack.c.l.b16 %v4855
    %v4920 = vunpack.c.l.b16 %v4856
    %v4921 = vunpack.c.l.b16 %v4857
    %v4922 = vunpack.c.l.b16 %v4858
    %v4923 = vunpack.c.l.b16 %v4859
    %v4924 = vunpack.c.l.b16 %v4860
    %v4925 = vunpack.c.l.b16 %v4861
    %v4926 = vpack.c.b16 %v4895, %v4894
    %v4927 = vpack.c.b16 %v4897, %v4896
    %v4928 = vpack.c.b16 %v4899, %v4898
    %v4929 = vpack.c.b16 %v4901, %v4900
    %v4930 = vpack.c.b16 %v4903, %v4902
    %v4931 = vpack.c.b16 %v4905, %v4904
    %v4932 = vpack.c.b16 %v4907, %v4906
    %v4933 = vpack.c.b16 %v4909, %v4908
    %v4934 = vpack.c.b16 %v4911, %v4910
    %v4935 = vpack.c.b16 %v4913, %v4912
    %v4936 = vpack.c.b16 %v4915, %v4914
    %v4937 = vpack.c.b16 %v4917, %v4916
    %v4938 = vpack.c.b16 %v4919, %v4918
    %v4939 = vpack.c.b16 %v4921, %v4920
    %v4940 = vpack.c.b16 %v4923, %v4922
    %v4941 = vpack.c.b16 %v4925, %v4924
    %4958 = vmatprep.subr.bf16.mxu0 0
    %4959 = vmatpush1.bf16.msra.mxu0 %v4933
    %4960 = vmatprep.subr.bf16.mxu0 0
    %4961 = vmatpush1.bf16.msra.mxu0 %v4932
    %4962 = vmatprep.subr.bf16.mxu0 0
    %4963 = vmatpush1.bf16.msra.mxu0 %v4931
    %4964 = vmatprep.subr.bf16.mxu0 0
    %4965 = vmatpush1.bf16.msra.mxu0 %v4930
    %4966 = vmatprep.subr.bf16.mxu0 0
    %4967 = vmatpush1.bf16.msra.mxu0 %v4929
    %4968 = vmatprep.subr.bf16.mxu0 0
    %4969 = vmatpush1.bf16.msra.mxu0 %v4928
    %4970 = vmatprep.subr.bf16.mxu0 0
    %4971 = vmatpush1.bf16.msra.mxu0 %v4927
    %4972 = vmatprep.subr.bf16.mxu0 0
    %4973 = vmatpush1.bf16.msra.mxu0 %v4926
    %4974 = vmatprep.subr.bf16.mxu0 0
    %4975 = vmatpush2.bf16.msra.mxu0 %v4941
    %4976 = vmatprep.subr.bf16.mxu0 0
    %4977 = vmatpush2.bf16.msra.mxu0 %v4940
    %4978 = vmatprep.subr.bf16.mxu0 0
    %4979 = vmatpush2.bf16.msra.mxu0 %v4939
    %4980 = vmatprep.subr.bf16.mxu0 0
    %4981 = vmatpush2.bf16.msra.mxu0 %v4938
    %4982 = vmatprep.subr.bf16.mxu0 0
    %4983 = vmatpush2.bf16.msra.mxu0 %v4937
    %4984 = vmatprep.subr.bf16.mxu0 0
    %4985 = vmatpush2.bf16.msra.mxu0 %v4936
    %4986 = vmatprep.subr.bf16.mxu0 0
    %4987 = vmatpush2.bf16.msra.mxu0 %v4935
    %4988 = vmatprep.subr.bf16.mxu0 0
    %4989 = vmatpush2.bf16.msra.mxu0 %v4934
    %4990 = vmatprep.mubr.bf16.mxu0 %v4814
    %4991 = vmatmul.mubr.bf16.gmra.mxu0 %v4813
    %v4992 = vpop.f32.mrf.mxu0
    %v4993 = vadd.f32 0.0, %v4992
    %v4994 = vpop.f32.mrf.mxu0
    %v4995 = vpop.f32.mrf.mxu0
    %v4996 = vadd.f32 0.0, %v4995
    %v4997 = vpop.f32.mrf.mxu0
    %4998 = vmatprep.mubr.bf16.mxu0 %v4816
    %4999 = vmatmul.mubr.bf16.gmra.mxu0 %v4815
    %v5000 = vpop.f32.mrf.mxu0
    %v5001 = vadd.f32 0.0, %v5000
    %v5002 = vpop.f32.mrf.mxu0
    %v5003 = vpop.f32.mrf.mxu0
    %v5004 = vadd.f32 0.0, %v5003
    %v5005 = vpop.f32.mrf.mxu0
    %5006 = vmatprep.mubr.bf16.mxu0 %v4822
    %5007 = vmatmul.mubr.bf16.gmra.mxu0 %v4821
    %v5008 = vpop.f32.mrf.mxu0
    %v5009 = vadd.f32 0.0, %v5008
    %v5010 = vpop.f32.mrf.mxu0
    %v5011 = vpop.f32.mrf.mxu0
    %v5012 = vadd.f32 0.0, %v5011
    %v5013 = vpop.f32.mrf.mxu0
    %5014 = vmatprep.mubr.bf16.mxu0 %v4824
    %5015 = vmatmul.mubr.bf16.gmra.mxu0 %v4823
    %v5016 = vpop.f32.mrf.mxu0
    %v5017 = vadd.f32 0.0, %v5016
    %v5018 = vpop.f32.mrf.mxu0
    %v5019 = vpop.f32.mrf.mxu0
    %v5020 = vadd.f32 0.0, %v5019
    %v5021 = vpop.f32.mrf.mxu0
    %5022 = vdwg.mxu0
    %v5023 = vadd.f32 %v4805, %v4993
    %v5024 = vadd.f32 %v4806, %v4996
    %v5025 = vadd.f32 %v4807, %v5001
    %v5026 = vadd.f32 %v4808, %v5004
    %v5027 = vadd.f32 %v4809, %v5009
    %v5028 = vadd.f32 %v4810, %v5012
    %v5029 = vadd.f32 %v4811, %v5017
    %v5030 = vadd.f32 %v4812, %v5020
    %v5031 = vld [vmem:[#allocation2 + $0x98] sm:$0xff]
    %v5032 = vld [vmem:[#allocation2 + $0xa0] sm:$0xff]
    %v5033 = vld [vmem:[#allocation2 + $0xa8] sm:$0xff]
    %v5034 = vld [vmem:[#allocation2 + $0xb0] sm:$0xff]
    %v5035 = vld [vmem:[#allocation2 + $0xb8] sm:$0x11]
    %v5036 = vld [vmem:[#allocation2 + $0xc0] sm:$0xff]
    %v5037 = vld [vmem:[#allocation2 + $0xc8] sm:$0xff]
    %v5038 = vld [vmem:[#allocation2 + $0xd0] sm:$0xff]
    %v5039 = vld [vmem:[#allocation2 + $0xd8] sm:$0xff]
    %v5040 = vld [vmem:[#allocation2 + $0xe0] sm:$0x11]
    %v5046 = vunpack.c.l.b16 %v5031
    %v5047 = vunpack.c.h.b16 %v5031
    %v5048 = vunpack.c.l.b16 %v5032
    %v5049 = vunpack.c.h.b16 %v5032
    %v5050 = vunpack.c.l.b16 %v5033
    %v5051 = vunpack.c.h.b16 %v5033
    %v5052 = vunpack.c.l.b16 %v5034
    %v5053 = vunpack.c.h.b16 %v5034
    %v5054 = vunpack.c.l.b16 %v5035
    %v5055 = vunpack.c.h.b16 %v5035
    %v5056 = vpack.c.b16 %v5048, %v5046
    %v5057 = vpack.c.b16 %v5049, %v5047
    %v5058 = vpack.c.b16 %v5052, %v5050
    %v5059 = vpack.c.b16 %v5053, %v5051
    %v5060 = vpack.c.b16 %v5054, %v5054
    %v5061 = vpack.c.b16 %v5055, %v5055
    %v5063 = vshrl.u32 %v5056, 16
    %v5065 = vshll.u32 %v5056, 16
    %v5067 = vrot.slane %v5065, 1
    %v5068 = vor.u32 %v5063, %v5067
    %v5070 = vshll.u32 %v5058, 16
    %v5072 = vrot.slane %v5070, 1
    %v5073 = vsel %vm2747, %v5068, %v5072
    %v5075 = vshrl.u32 %v5057, 16
    %v5077 = vshll.u32 %v5057, 16
    %v5079 = vrot.slane %v5077, 1
    %v5080 = vor.u32 %v5075, %v5079
    %v5082 = vshll.u32 %v5059, 16
    %v5084 = vrot.slane %v5082, 1
    %v5085 = vsel %vm2747, %v5080, %v5084
    %v5086 = vshrl.u32 %v5058, 16
    %v5088 = vor.u32 %v5086, %v5072
    %v5090 = vshll.u32 %v5060, 16
    %v5092 = vrot.slane %v5090, 1
    %v5093 = vsel %vm2747, %v5088, %v5092
    %v5094 = vshrl.u32 %v5059, 16
    %v5096 = vor.u32 %v5094, %v5084
    %v5098 = vshll.u32 %v5061, 16
    %v5100 = vrot.slane %v5098, 1
    %v5101 = vsel %vm2747, %v5096, %v5100
    %v5111 = vunpack.c.l.b16 %v5036
    %v5112 = vunpack.c.h.b16 %v5036
    %v5113 = vunpack.c.l.b16 %v5037
    %v5114 = vunpack.c.h.b16 %v5037
    %v5115 = vunpack.c.l.b16 %v5038
    %v5116 = vunpack.c.h.b16 %v5038
    %v5117 = vunpack.c.l.b16 %v5039
    %v5118 = vunpack.c.h.b16 %v5039
    %v5119 = vunpack.c.l.b16 %v5040
    %v5120 = vunpack.c.h.b16 %v5040
    %v5121 = vpack.c.b16 %v5113, %v5111
    %v5122 = vpack.c.b16 %v5114, %v5112
    %v5123 = vpack.c.b16 %v5117, %v5115
    %v5124 = vpack.c.b16 %v5118, %v5116
    %v5125 = vpack.c.b16 %v5119, %v5119
    %v5126 = vpack.c.b16 %v5120, %v5120
    %v5128 = vshrl.u32 %v5121, 16
    %v5130 = vshll.u32 %v5121, 16
    %v5132 = vrot.slane %v5130, 1
    %v5133 = vor.u32 %v5128, %v5132
    %v5135 = vshll.u32 %v5123, 16
    %v5137 = vrot.slane %v5135, 1
    %v5138 = vsel %vm2747, %v5133, %v5137
    %v5140 = vshrl.u32 %v5122, 16
    %v5142 = vshll.u32 %v5122, 16
    %v5144 = vrot.slane %v5142, 1
    %v5145 = vor.u32 %v5140, %v5144
    %v5147 = vshll.u32 %v5124, 16
    %v5149 = vrot.slane %v5147, 1
    %v5150 = vsel %vm2747, %v5145, %v5149
    %v5151 = vshrl.u32 %v5123, 16
    %v5153 = vor.u32 %v5151, %v5137
    %v5155 = vshll.u32 %v5125, 16
    %v5157 = vrot.slane %v5155, 1
    %v5158 = vsel %vm2747, %v5153, %v5157
    %v5159 = vshrl.u32 %v5124, 16
    %v5161 = vor.u32 %v5159, %v5149
    %v5163 = vshll.u32 %v5126, 16
    %v5165 = vrot.slane %v5163, 1
    %v5166 = vsel %vm2747, %v5161, %v5165
    %s5171 = scalar_lea.vmem [#allocation6], 1280
    %v5172 = vld [vmem:[%s5171] sm:$0xf]
    %v5173 = vld [vmem:[%s5171 + $0x4] sm:$0xf]
    %v5174 = vld [vmem:[%s5171 + $0x8] sm:$0xf]
    %v5175 = vld [vmem:[%s5171 + $0xc] sm:$0xf]
    %v5176 = vld [vmem:[%s5171 + $0x10] sm:$0xf]
    %v5177 = vld [vmem:[%s5171 + $0x14] sm:$0xf]
    %v5178 = vld [vmem:[%s5171 + $0x18] sm:$0xf]
    %v5179 = vld [vmem:[%s5171 + $0x1c] sm:$0xf]
    %v5180 = vld [vmem:[%s5171 + $0x20] sm:$0xf]
    %v5181 = vld [vmem:[%s5171 + $0x24] sm:$0xf]
    %v5182 = vld [vmem:[%s5171 + $0x28] sm:$0xf]
    %v5183 = vld [vmem:[%s5171 + $0x2c] sm:$0xf]
    %v5184 = vld [vmem:[%s5171 + $0x30] sm:$0xf]
    %v5185 = vld [vmem:[%s5171 + $0x34] sm:$0xf]
    %v5186 = vld [vmem:[%s5171 + $0x38] sm:$0xf]
    %v5187 = vld [vmem:[%s5171 + $0x3c] sm:$0xf]
    %v5188 = vld [vmem:[%s5171 + $0x40] sm:$0xf]
    %v5189 = vld [vmem:[%s5171 + $0x44] sm:$0xf]
    %v5190 = vld [vmem:[%s5171 + $0x48] sm:$0xf]
    %v5191 = vld [vmem:[%s5171 + $0x4c] sm:$0xf]
    %v5192 = vld [vmem:[%s5171 + $0x50] sm:$0xf]
    %v5193 = vld [vmem:[%s5171 + $0x54] sm:$0xf]
    %v5194 = vld [vmem:[%s5171 + $0x58] sm:$0xf]
    %v5195 = vld [vmem:[%s5171 + $0x5c] sm:$0xf]
    %v5196 = vld [vmem:[%s5171 + $0x60] sm:$0xf]
    %v5197 = vld [vmem:[%s5171 + $0x64] sm:$0xf]
    %v5198 = vld [vmem:[%s5171 + $0x68] sm:$0xf]
    %v5199 = vld [vmem:[%s5171 + $0x6c] sm:$0xf]
    %v5200 = vld [vmem:[%s5171 + $0x70] sm:$0xf]
    %v5201 = vld [vmem:[%s5171 + $0x74] sm:$0xf]
    %v5202 = vld [vmem:[%s5171 + $0x78] sm:$0xf]
    %v5203 = vld [vmem:[%s5171 + $0x7c] sm:$0xf]
    %v5236 = vunpack.c.l.b16 %v5172
    %v5237 = vunpack.c.l.b16 %v5173
    %v5238 = vunpack.c.l.b16 %v5174
    %v5239 = vunpack.c.l.b16 %v5175
    %v5240 = vunpack.c.l.b16 %v5176
    %v5241 = vunpack.c.l.b16 %v5177
    %v5242 = vunpack.c.l.b16 %v5178
    %v5243 = vunpack.c.l.b16 %v5179
    %v5244 = vunpack.c.l.b16 %v5180
    %v5245 = vunpack.c.l.b16 %v5181
    %v5246 = vunpack.c.l.b16 %v5182
    %v5247 = vunpack.c.l.b16 %v5183
    %v5248 = vunpack.c.l.b16 %v5184
    %v5249 = vunpack.c.l.b16 %v5185
    %v5250 = vunpack.c.l.b16 %v5186
    %v5251 = vunpack.c.l.b16 %v5187
    %v5252 = vunpack.c.l.b16 %v5188
    %v5253 = vunpack.c.l.b16 %v5189
    %v5254 = vunpack.c.l.b16 %v5190
    %v5255 = vunpack.c.l.b16 %v5191
    %v5256 = vunpack.c.l.b16 %v5192
    %v5257 = vunpack.c.l.b16 %v5193
    %v5258 = vunpack.c.l.b16 %v5194
    %v5259 = vunpack.c.l.b16 %v5195
    %v5260 = vunpack.c.l.b16 %v5196
    %v5261 = vunpack.c.l.b16 %v5197
    %v5262 = vunpack.c.l.b16 %v5198
    %v5263 = vunpack.c.l.b16 %v5199
    %v5264 = vunpack.c.l.b16 %v5200
    %v5265 = vunpack.c.l.b16 %v5201
    %v5266 = vunpack.c.l.b16 %v5202
    %v5267 = vunpack.c.l.b16 %v5203
    %v5268 = vpack.c.b16 %v5237, %v5236
    %v5269 = vpack.c.b16 %v5239, %v5238
    %v5270 = vpack.c.b16 %v5241, %v5240
    %v5271 = vpack.c.b16 %v5243, %v5242
    %v5272 = vpack.c.b16 %v5245, %v5244
    %v5273 = vpack.c.b16 %v5247, %v5246
    %v5274 = vpack.c.b16 %v5249, %v5248
    %v5275 = vpack.c.b16 %v5251, %v5250
    %v5276 = vpack.c.b16 %v5253, %v5252
    %v5277 = vpack.c.b16 %v5255, %v5254
    %v5278 = vpack.c.b16 %v5257, %v5256
    %v5279 = vpack.c.b16 %v5259, %v5258
    %v5280 = vpack.c.b16 %v5261, %v5260
    %v5281 = vpack.c.b16 %v5263, %v5262
    %v5282 = vpack.c.b16 %v5265, %v5264
    %v5283 = vpack.c.b16 %v5267, %v5266
    %5300 = vmatprep.subr.bf16.mxu0 0
    %5301 = vmatpush1.bf16.msra.mxu0 %v5275
    %5302 = vmatprep.subr.bf16.mxu0 0
    %5303 = vmatpush1.bf16.msra.mxu0 %v5274
    %5304 = vmatprep.subr.bf16.mxu0 0
    %5305 = vmatpush1.bf16.msra.mxu0 %v5273
    %5306 = vmatprep.subr.bf16.mxu0 0
    %5307 = vmatpush1.bf16.msra.mxu0 %v5272
    %5308 = vmatprep.subr.bf16.mxu0 0
    %5309 = vmatpush1.bf16.msra.mxu0 %v5271
    %5310 = vmatprep.subr.bf16.mxu0 0
    %5311 = vmatpush1.bf16.msra.mxu0 %v5270
    %5312 = vmatprep.subr.bf16.mxu0 0
    %5313 = vmatpush1.bf16.msra.mxu0 %v5269
    %5314 = vmatprep.subr.bf16.mxu0 0
    %5315 = vmatpush1.bf16.msra.mxu0 %v5268
    %5316 = vmatprep.subr.bf16.mxu0 0
    %5317 = vmatpush2.bf16.msra.mxu0 %v5283
    %5318 = vmatprep.subr.bf16.mxu0 0
    %5319 = vmatpush2.bf16.msra.mxu0 %v5282
    %5320 = vmatprep.subr.bf16.mxu0 0
    %5321 = vmatpush2.bf16.msra.mxu0 %v5281
    %5322 = vmatprep.subr.bf16.mxu0 0
    %5323 = vmatpush2.bf16.msra.mxu0 %v5280
    %5324 = vmatprep.subr.bf16.mxu0 0
    %5325 = vmatpush2.bf16.msra.mxu0 %v5279
    %5326 = vmatprep.subr.bf16.mxu0 0
    %5327 = vmatpush2.bf16.msra.mxu0 %v5278
    %5328 = vmatprep.subr.bf16.mxu0 0
    %5329 = vmatpush2.bf16.msra.mxu0 %v5277
    %5330 = vmatprep.subr.bf16.mxu0 0
    %5331 = vmatpush2.bf16.msra.mxu0 %v5276
    %5332 = vmatprep.mubr.bf16.mxu0 %v5085
    %5333 = vmatmul.mubr.bf16.gmra.mxu0 %v5073
    %v5334 = vpop.f32.mrf.mxu0
    %v5335 = vadd.f32 0.0, %v5334
    %v5336 = vpop.f32.mrf.mxu0
    %v5337 = vpop.f32.mrf.mxu0
    %v5338 = vadd.f32 0.0, %v5337
    %v5339 = vpop.f32.mrf.mxu0
    %5340 = vmatprep.mubr.bf16.mxu0 %v5101
    %5341 = vmatmul.mubr.bf16.gmra.mxu0 %v5093
    %v5342 = vpop.f32.mrf.mxu0
    %v5343 = vadd.f32 0.0, %v5342
    %v5344 = vpop.f32.mrf.mxu0
    %v5345 = vpop.f32.mrf.mxu0
    %v5346 = vadd.f32 0.0, %v5345
    %v5347 = vpop.f32.mrf.mxu0
    %5348 = vmatprep.mubr.bf16.mxu0 %v5150
    %5349 = vmatmul.mubr.bf16.gmra.mxu0 %v5138
    %v5350 = vpop.f32.mrf.mxu0
    %v5351 = vadd.f32 0.0, %v5350
    %v5352 = vpop.f32.mrf.mxu0
    %v5353 = vpop.f32.mrf.mxu0
    %v5354 = vadd.f32 0.0, %v5353
    %v5355 = vpop.f32.mrf.mxu0
    %5356 = vmatprep.mubr.bf16.mxu0 %v5166
    %5357 = vmatmul.mubr.bf16.gmra.mxu0 %v5158
    %v5358 = vpop.f32.mrf.mxu0
    %v5359 = vadd.f32 0.0, %v5358
    %v5360 = vpop.f32.mrf.mxu0
    %v5361 = vpop.f32.mrf.mxu0
    %v5362 = vadd.f32 0.0, %v5361
    %v5363 = vpop.f32.mrf.mxu0
    %5364 = vdwg.mxu0
    %v5365 = vadd.f32 %v5023, %v5335
    %v5366 = vadd.f32 %v5024, %v5338
    %v5367 = vadd.f32 %v5025, %v5343
    %v5368 = vadd.f32 %v5026, %v5346
    %v5369 = vadd.f32 %v5027, %v5351
    %v5370 = vadd.f32 %v5028, %v5354
    %v5371 = vadd.f32 %v5029, %v5359
    %v5372 = vadd.f32 %v5030, %v5362
    %v5373 = vld [vmem:[#allocation2 + $0x98] sm:$0xee]
    %v5374 = vld [vmem:[#allocation2 + $0xc0] sm:$0xee]
    %v5376 = vunpack.c.l.b16 %v5373
    %v5377 = vunpack.c.h.b16 %v5373
    %v5378 = vpack.c.b16 %v5048, %v5376
    %v5379 = vpack.c.b16 %v5049, %v5377
    %v5380 = vrot.slane %v5378, 1
    %v5381 = vrot.slane %v5058, 1
    %v5382 = vsel %vm3194, %v5380, %v5381
    %v5383 = vrot.slane %v5379, 1
    %v5384 = vrot.slane %v5059, 1
    %v5385 = vsel %vm3194, %v5383, %v5384
    %v5386 = vrot.slane %v5060, 1
    %v5387 = vsel %vm3194, %v5381, %v5386
    %v5388 = vrot.slane %v5061, 1
    %v5389 = vsel %vm3194, %v5384, %v5388
    %v5395 = vunpack.c.l.b16 %v5374
    %v5396 = vunpack.c.h.b16 %v5374
    %v5397 = vpack.c.b16 %v5113, %v5395
    %v5398 = vpack.c.b16 %v5114, %v5396
    %v5399 = vrot.slane %v5397, 1
    %v5400 = vrot.slane %v5123, 1
    %v5401 = vsel %vm3194, %v5399, %v5400
    %v5402 = vrot.slane %v5398, 1
    %v5403 = vrot.slane %v5124, 1
    %v5404 = vsel %vm3194, %v5402, %v5403
    %v5405 = vrot.slane %v5125, 1
    %v5406 = vsel %vm3194, %v5400, %v5405
    %v5407 = vrot.slane %v5126, 1
    %v5408 = vsel %vm3194, %v5403, %v5407
    %s5413 = scalar_lea.vmem [#allocation6], 1408
    %v5414 = vld [vmem:[%s5413] sm:$0xf]
    %v5415 = vld [vmem:[%s5413 + $0x4] sm:$0xf]
    %v5416 = vld [vmem:[%s5413 + $0x8] sm:$0xf]
    %v5417 = vld [vmem:[%s5413 + $0xc] sm:$0xf]
    %v5418 = vld [vmem:[%s5413 + $0x10] sm:$0xf]
    %v5419 = vld [vmem:[%s5413 + $0x14] sm:$0xf]
    %v5420 = vld [vmem:[%s5413 + $0x18] sm:$0xf]
    %v5421 = vld [vmem:[%s5413 + $0x1c] sm:$0xf]
    %v5422 = vld [vmem:[%s5413 + $0x20] sm:$0xf]
    %v5423 = vld [vmem:[%s5413 + $0x24] sm:$0xf]
    %v5424 = vld [vmem:[%s5413 + $0x28] sm:$0xf]
    %v5425 = vld [vmem:[%s5413 + $0x2c] sm:$0xf]
    %v5426 = vld [vmem:[%s5413 + $0x30] sm:$0xf]
    %v5427 = vld [vmem:[%s5413 + $0x34] sm:$0xf]
    %v5428 = vld [vmem:[%s5413 + $0x38] sm:$0xf]
    %v5429 = vld [vmem:[%s5413 + $0x3c] sm:$0xf]
    %v5430 = vld [vmem:[%s5413 + $0x40] sm:$0xf]
    %v5431 = vld [vmem:[%s5413 + $0x44] sm:$0xf]
    %v5432 = vld [vmem:[%s5413 + $0x48] sm:$0xf]
    %v5433 = vld [vmem:[%s5413 + $0x4c] sm:$0xf]
    %v5434 = vld [vmem:[%s5413 + $0x50] sm:$0xf]
    %v5435 = vld [vmem:[%s5413 + $0x54] sm:$0xf]
    %v5436 = vld [vmem:[%s5413 + $0x58] sm:$0xf]
    %v5437 = vld [vmem:[%s5413 + $0x5c] sm:$0xf]
    %v5438 = vld [vmem:[%s5413 + $0x60] sm:$0xf]
    %v5439 = vld [vmem:[%s5413 + $0x64] sm:$0xf]
    %v5440 = vld [vmem:[%s5413 + $0x68] sm:$0xf]
    %v5441 = vld [vmem:[%s5413 + $0x6c] sm:$0xf]
    %v5442 = vld [vmem:[%s5413 + $0x70] sm:$0xf]
    %v5443 = vld [vmem:[%s5413 + $0x74] sm:$0xf]
    %v5444 = vld [vmem:[%s5413 + $0x78] sm:$0xf]
    %v5445 = vld [vmem:[%s5413 + $0x7c] sm:$0xf]
    %v5478 = vunpack.c.l.b16 %v5414
    %v5479 = vunpack.c.l.b16 %v5415
    %v5480 = vunpack.c.l.b16 %v5416
    %v5481 = vunpack.c.l.b16 %v5417
    %v5482 = vunpack.c.l.b16 %v5418
    %v5483 = vunpack.c.l.b16 %v5419
    %v5484 = vunpack.c.l.b16 %v5420
    %v5485 = vunpack.c.l.b16 %v5421
    %v5486 = vunpack.c.l.b16 %v5422
    %v5487 = vunpack.c.l.b16 %v5423
    %v5488 = vunpack.c.l.b16 %v5424
    %v5489 = vunpack.c.l.b16 %v5425
    %v5490 = vunpack.c.l.b16 %v5426
    %v5491 = vunpack.c.l.b16 %v5427
    %v5492 = vunpack.c.l.b16 %v5428
    %v5493 = vunpack.c.l.b16 %v5429
    %v5494 = vunpack.c.l.b16 %v5430
    %v5495 = vunpack.c.l.b16 %v5431
    %v5496 = vunpack.c.l.b16 %v5432
    %v5497 = vunpack.c.l.b16 %v5433
    %v5498 = vunpack.c.l.b16 %v5434
    %v5499 = vunpack.c.l.b16 %v5435
    %v5500 = vunpack.c.l.b16 %v5436
    %v5501 = vunpack.c.l.b16 %v5437
    %v5502 = vunpack.c.l.b16 %v5438
    %v5503 = vunpack.c.l.b16 %v5439
    %v5504 = vunpack.c.l.b16 %v5440
    %v5505 = vunpack.c.l.b16 %v5441
    %v5506 = vunpack.c.l.b16 %v5442
    %v5507 = vunpack.c.l.b16 %v5443
    %v5508 = vunpack.c.l.b16 %v5444
    %v5509 = vunpack.c.l.b16 %v5445
    %v5510 = vpack.c.b16 %v5479, %v5478
    %v5511 = vpack.c.b16 %v5481, %v5480
    %v5512 = vpack.c.b16 %v5483, %v5482
    %v5513 = vpack.c.b16 %v5485, %v5484
    %v5514 = vpack.c.b16 %v5487, %v5486
    %v5515 = vpack.c.b16 %v5489, %v5488
    %v5516 = vpack.c.b16 %v5491, %v5490
    %v5517 = vpack.c.b16 %v5493, %v5492
    %v5518 = vpack.c.b16 %v5495, %v5494
    %v5519 = vpack.c.b16 %v5497, %v5496
    %v5520 = vpack.c.b16 %v5499, %v5498
    %v5521 = vpack.c.b16 %v5501, %v5500
    %v5522 = vpack.c.b16 %v5503, %v5502
    %v5523 = vpack.c.b16 %v5505, %v5504
    %v5524 = vpack.c.b16 %v5507, %v5506
    %v5525 = vpack.c.b16 %v5509, %v5508
    %5542 = vmatprep.subr.bf16.mxu0 0
    %5543 = vmatpush1.bf16.msra.mxu0 %v5517
    %5544 = vmatprep.subr.bf16.mxu0 0
    %5545 = vmatpush1.bf16.msra.mxu0 %v5516
    %5546 = vmatprep.subr.bf16.mxu0 0
    %5547 = vmatpush1.bf16.msra.mxu0 %v5515
    %5548 = vmatprep.subr.bf16.mxu0 0
    %5549 = vmatpush1.bf16.msra.mxu0 %v5514
    %5550 = vmatprep.subr.bf16.mxu0 0
    %5551 = vmatpush1.bf16.msra.mxu0 %v5513
    %5552 = vmatprep.subr.bf16.mxu0 0
    %5553 = vmatpush1.bf16.msra.mxu0 %v5512
    %5554 = vmatprep.subr.bf16.mxu0 0
    %5555 = vmatpush1.bf16.msra.mxu0 %v5511
    %5556 = vmatprep.subr.bf16.mxu0 0
    %5557 = vmatpush1.bf16.msra.mxu0 %v5510
    %5558 = vmatprep.subr.bf16.mxu0 0
    %5559 = vmatpush2.bf16.msra.mxu0 %v5525
    %5560 = vmatprep.subr.bf16.mxu0 0
    %5561 = vmatpush2.bf16.msra.mxu0 %v5524
    %5562 = vmatprep.subr.bf16.mxu0 0
    %5563 = vmatpush2.bf16.msra.mxu0 %v5523
    %5564 = vmatprep.subr.bf16.mxu0 0
    %5565 = vmatpush2.bf16.msra.mxu0 %v5522
    %5566 = vmatprep.subr.bf16.mxu0 0
    %5567 = vmatpush2.bf16.msra.mxu0 %v5521
    %5568 = vmatprep.subr.bf16.mxu0 0
    %5569 = vmatpush2.bf16.msra.mxu0 %v5520
    %5570 = vmatprep.subr.bf16.mxu0 0
    %5571 = vmatpush2.bf16.msra.mxu0 %v5519
    %5572 = vmatprep.subr.bf16.mxu0 0
    %5573 = vmatpush2.bf16.msra.mxu0 %v5518
    %5574 = vmatprep.mubr.bf16.mxu0 %v5385
    %5575 = vmatmul.mubr.bf16.gmra.mxu0 %v5382
    %v5576 = vpop.f32.mrf.mxu0
    %v5577 = vadd.f32 0.0, %v5576
    %v5578 = vpop.f32.mrf.mxu0
    %v5579 = vpop.f32.mrf.mxu0
    %v5580 = vadd.f32 0.0, %v5579
    %v5581 = vpop.f32.mrf.mxu0
    %5582 = vmatprep.mubr.bf16.mxu0 %v5389
    %5583 = vmatmul.mubr.bf16.gmra.mxu0 %v5387
    %v5584 = vpop.f32.mrf.mxu0
    %v5585 = vadd.f32 0.0, %v5584
    %v5586 = vpop.f32.mrf.mxu0
    %v5587 = vpop.f32.mrf.mxu0
    %v5588 = vadd.f32 0.0, %v5587
    %v5589 = vpop.f32.mrf.mxu0
    %5590 = vmatprep.mubr.bf16.mxu0 %v5404
    %5591 = vmatmul.mubr.bf16.gmra.mxu0 %v5401
    %v5592 = vpop.f32.mrf.mxu0
    %v5593 = vadd.f32 0.0, %v5592
    %v5594 = vpop.f32.mrf.mxu0
    %v5595 = vpop.f32.mrf.mxu0
    %v5596 = vadd.f32 0.0, %v5595
    %v5597 = vpop.f32.mrf.mxu0
    %5598 = vmatprep.mubr.bf16.mxu0 %v5408
    %5599 = vmatmul.mubr.bf16.gmra.mxu0 %v5406
    %v5600 = vpop.f32.mrf.mxu0
    %v5601 = vadd.f32 0.0, %v5600
    %v5602 = vpop.f32.mrf.mxu0
    %v5603 = vpop.f32.mrf.mxu0
    %v5604 = vadd.f32 0.0, %v5603
    %v5605 = vpop.f32.mrf.mxu0
    %5606 = vdwg.mxu0
    %v5607 = vadd.f32 %v5365, %v5577
    %v5608 = vadd.f32 %v5366, %v5580
    %v5609 = vadd.f32 %v5367, %v5585
    %v5610 = vadd.f32 %v5368, %v5588
    %v5611 = vadd.f32 %v5369, %v5593
    %v5612 = vadd.f32 %v5370, %v5596
    %v5613 = vadd.f32 %v5371, %v5601
    %v5614 = vadd.f32 %v5372, %v5604
    %v5615 = vadd.f32 %v5607, %v5608
    %v5616 = vadd.f32 %v5615, %v5609
    %v5617 = vadd.f32 %v5616, %v5610
    %v5618 = vadd.f32 %v5617, %v5611
    %v5619 = vadd.f32 %v5618, %v5612
    %v5620 = vadd.f32 %v5619, %v5613
    %v5621 = vadd.f32 %v5620, %v5614
    %v5622 = vrot.slane %v5621, 4
    %v5623 = vadd.f32 %v5621, %v5622
    %v5624 = vrot.slane %v5623, 2
    %v5625 = vadd.f32 %v5623, %v5624
    %v5626 = vrot.slane %v5625, 1
    %v5627 = vadd.f32 %v5625, %v5626
    %v5628 = vmul.f32 %v5607, %v5607
    %v5629 = vmul.f32 %v5608, %v5608
    %v5630 = vmul.f32 %v5609, %v5609
    %v5631 = vmul.f32 %v5610, %v5610
    %v5632 = vmul.f32 %v5611, %v5611
    %v5633 = vmul.f32 %v5612, %v5612
    %v5634 = vmul.f32 %v5613, %v5613
    %v5635 = vmul.f32 %v5614, %v5614
    %v5636 = vadd.f32 %v5628, %v5629
    %v5637 = vadd.f32 %v5636, %v5630
    %v5638 = vadd.f32 %v5637, %v5631
    %v5639 = vadd.f32 %v5638, %v5632
    %v5640 = vadd.f32 %v5639, %v5633
    %v5641 = vadd.f32 %v5640, %v5634
    %v5642 = vadd.f32 %v5641, %v5635
    %v5643 = vrot.slane %v5642, 4
    %v5644 = vadd.f32 %v5642, %v5643
    %v5645 = vrot.slane %v5644, 2
    %v5646 = vadd.f32 %v5644, %v5645
    %v5647 = vrot.slane %v5646, 1
    %v5648 = vadd.f32 %v5646, %v5647
    %v5649 = vmul.f32 %v5627, 0.015625
    %v5650 = vmul.f32 %v5648, 0.015625
    %v5651 = vmul.f32 %v5649, %v5649
    %v5652 = vsub.f32 %v5650, %v5651
    %v5653 = vmax.f32 %v5652, 0.0
    %v5654 = vld [vmem:[#allocation8 + $0x2] sm:$0x1]
    %v5655 = vld [vmem:[#allocation9 + $0x2] sm:$0x1]
    %v5656 = vld [vmem:[#allocation11 + $0x2] sm:$0x1]
    %v5657 = vadd.f32 %v5653, 1e-05
    %v5658 = vrsqrt.pop %v5657
    %v5659 = vmul.f32 %v5654, %v5658
    %v5660 = vmul.f32 %v5649, %v5659
    %v5661 = vsub.f32 %v5655, %v5660
    %v5662 = vlaneseq
    %v5663 = vshrl.u32 %v5662, 7
    %v5664 = vsub.s32 0, %v5663
    %v5665 = vrot.slane %v5659, %v5664
    %v5666 = vmul.f32 %v5607, %v5665
    %v5667 = vmul.f32 %v5608, %v5665
    %v5668 = vmul.f32 %v5609, %v5665
    %v5669 = vmul.f32 %v5610, %v5665
    %v5670 = vmul.f32 %v5611, %v5665
    %v5671 = vmul.f32 %v5612, %v5665
    %v5672 = vmul.f32 %v5613, %v5665
    %v5673 = vmul.f32 %v5614, %v5665
    %v5674 = vlaneseq
    %v5675 = vshrl.u32 %v5674, 7
    %v5676 = vsub.s32 0, %v5675
    %v5677 = vrot.slane %v5661, %v5676
    %v5678 = vadd.f32 %v5666, %v5677
    %v5679 = vadd.f32 %v5667, %v5677
    %v5680 = vadd.f32 %v5668, %v5677
    %v5681 = vadd.f32 %v5669, %v5677
    %v5682 = vadd.f32 %v5670, %v5677
    %v5683 = vadd.f32 %v5671, %v5677
    %v5684 = vadd.f32 %v5672, %v5677
    %v5685 = vadd.f32 %v5673, %v5677
    %vm5686 = vcmp.gt.f32.partialorder %v5678, 0.0
    %vm5687 = vcmp.gt.f32.partialorder %v5679, 0.0
    %vm5688 = vcmp.gt.f32.partialorder %v5680, 0.0
    %vm5689 = vcmp.gt.f32.partialorder %v5681, 0.0
    %vm5690 = vcmp.gt.f32.partialorder %v5682, 0.0
    %vm5691 = vcmp.gt.f32.partialorder %v5683, 0.0
    %vm5692 = vcmp.gt.f32.partialorder %v5684, 0.0
    %vm5693 = vcmp.gt.f32.partialorder %v5685, 0.0
    %v5694 = vlaneseq
    %v5695 = vshrl.u32 %v5694, 7
    %v5696 = vsub.s32 0, %v5695
    %v5697 = vrot.slane %v5656, %v5696
    %v5698 = vmul.f32 %v5697, %v5678
    %v5699 = vmul.f32 %v5697, %v5679
    %v5700 = vmul.f32 %v5697, %v5680
    %v5701 = vmul.f32 %v5697, %v5681
    %v5702 = vmul.f32 %v5697, %v5682
    %v5703 = vmul.f32 %v5697, %v5683
    %v5704 = vmul.f32 %v5697, %v5684
    %v5705 = vmul.f32 %v5697, %v5685
    %v5706 = vsel %vm5686, %v5678, %v5698
    %v5707 = vsel %vm5687, %v5679, %v5699
    %v5708 = vsel %vm5688, %v5680, %v5700
    %v5709 = vsel %vm5689, %v5681, %v5701
    %v5710 = vsel %vm5690, %v5682, %v5702
    %v5711 = vsel %vm5691, %v5683, %v5703
    %v5712 = vsel %vm5692, %v5684, %v5704
    %v5713 = vsel %vm5693, %v5685, %v5705
    %v5714 = vpack.c.bf16 %v5707, %v5706
    %v5715 = vpack.c.bf16 %v5709, %v5708
    %v5716 = vpack.c.bf16 %v5711, %v5710
    %v5717 = vpack.c.bf16 %v5713, %v5712
    %v5718 = vld [vmem:[%s3] sm:$0xf]
    %v5719 = vld [vmem:[%s3 + $0x8] sm:$0xf]
    %v5720 = vld [vmem:[%s3 + $0x10] sm:$0xf]
    %v5721 = vld [vmem:[%s3 + $0x18] sm:$0xf]
    %v5726 = vunpack.c.l.b16 %v5718
    %v5727 = vunpack.c.l.b16 %v5719
    %v5728 = vunpack.c.l.b16 %v5720
    %v5729 = vunpack.c.l.b16 %v5721
    %v5730 = vpack.c.b16 %v5727, %v5726
    %v5731 = vpack.c.b16 %v5729, %v5728
    %vm5732 = vcmask 523264
    %v5734 = vsel %vm5732, %v5730, 0
    %v5737 = vsel %vm5732, %v5731, 0
    %5739 = vmatprep.subr.bf16.mxu0 0
    %5740 = vmatpush1.bf16.msra.mxu0 0
    %5741 = vmatprep.subr.bf16.mxu0 0
    %5742 = vmatpush1.bf16.msra.mxu0 0
    %5743 = vmatprep.subr.bf16.mxu0 0
    %5744 = vmatpush1.bf16.msra.mxu0 0
    %5745 = vmatprep.subr.bf16.mxu0 0
    %5746 = vmatpush1.bf16.msra.mxu0 0
    %5747 = vmatprep.subr.bf16.mxu0 0
    %5748 = vmatpush1.bf16.msra.mxu0 %v5717
    %5749 = vmatprep.subr.bf16.mxu0 0
    %5750 = vmatpush1.bf16.msra.mxu0 %v5716
    %5751 = vmatprep.subr.bf16.mxu0 0
    %5752 = vmatpush1.bf16.msra.mxu0 %v5715
    %5753 = vmatprep.subr.bf16.mxu0 0
    %5754 = vmatpush1.bf16.msra.mxu0 %v5714
    %5755 = vmatprep.subr.bf16.mxu0 0
    %5756 = vmatpush2.bf16.msra.mxu0 0
    %5757 = vmatprep.subr.bf16.mxu0 0
    %5758 = vmatpush2.bf16.msra.mxu0 0
    %5759 = vmatprep.subr.bf16.mxu0 0
    %5760 = vmatpush2.bf16.msra.mxu0 0
    %5761 = vmatprep.subr.bf16.mxu0 0
    %5762 = vmatpush2.bf16.msra.mxu0 0
    %5763 = vmatprep.subr.bf16.mxu0 0
    %5764 = vmatpush2.bf16.msra.mxu0 0
    %5765 = vmatprep.subr.bf16.mxu0 0
    %5766 = vmatpush2.bf16.msra.mxu0 0
    %5767 = vmatprep.subr.bf16.mxu0 0
    %5768 = vmatpush2.bf16.msra.mxu0 0
    %5769 = vmatprep.subr.bf16.mxu0 0
    %5770 = vmatpush2.bf16.msra.mxu0 0
    %5771 = vmatprep.mubr.bf16.mxu0 0
    %5772 = vmatmul.mubr.bf16.gmra.mxu0 %v5734
    %v5773 = vpop.f32.mrf.mxu0
    %v5774 = vadd.f32 0.0, %v5773
    %v5775 = vpop.f32.mrf.mxu0
    %v5776 = vpop.f32.mrf.mxu0
    %v5777 = vadd.f32 0.0, %v5776
    %v5778 = vpop.f32.mrf.mxu0
    %5779 = vmatprep.mubr.bf16.mxu0 0
    %5780 = vmatmul.mubr.bf16.gmra.mxu0 %v5737
    %v5781 = vpop.f32.mrf.mxu0
    %v5782 = vadd.f32 0.0, %v5781
    %v5783 = vpop.f32.mrf.mxu0
    %v5784 = vpop.f32.mrf.mxu0
    %v5785 = vadd.f32 0.0, %v5784
    %v5786 = vpop.f32.mrf.mxu0
    %5787 = vdwg.mxu0
    %v5788 = vpack.c.bf16 %v5777, %v5774
    %v5789 = vpack.c.bf16 %v5785, %v5782
    %v5790 = vld [vmem:[%s4] sm:$0xf]
    %v5791 = vld [vmem:[%s4 + $0x8] sm:$0xf]
    %v5792 = vld [vmem:[%s4 + $0x10] sm:$0xf]
    %v5793 = vld [vmem:[%s4 + $0x18] sm:$0xf]
    %v5798 = vunpack.c.l.b16 %v5790
    %v5799 = vunpack.c.l.b16 %v5791
    %v5800 = vunpack.c.l.b16 %v5792
    %v5801 = vunpack.c.l.b16 %v5793
    %v5802 = vpack.c.b16 %v5799, %v5798
    %v5803 = vpack.c.b16 %v5801, %v5800
    %v5805 = vsel %vm5732, %v5802, 0
    %v5808 = vsel %vm5732, %v5803, 0
    %5810 = vmatprep.subr.bf16.mxu0 0
    %5811 = vmatpush1.bf16.msra.mxu0 0
    %5812 = vmatprep.subr.bf16.mxu0 0
    %5813 = vmatpush1.bf16.msra.mxu0 0
    %5814 = vmatprep.subr.bf16.mxu0 0
    %5815 = vmatpush1.bf16.msra.mxu0 0
    %5816 = vmatprep.subr.bf16.mxu0 0
    %5817 = vmatpush1.bf16.msra.mxu0 0
    %5818 = vmatprep.subr.bf16.mxu0 0
    %5819 = vmatpush1.bf16.msra.mxu0 %v5717
    %5820 = vmatprep.subr.bf16.mxu0 0
    %5821 = vmatpush1.bf16.msra.mxu0 %v5716
    %5822 = vmatprep.subr.bf16.mxu0 0
    %5823 = vmatpush1.bf16.msra.mxu0 %v5715
    %5824 = vmatprep.subr.bf16.mxu0 0
    %5825 = vmatpush1.bf16.msra.mxu0 %v5714
    %5826 = vmatprep.subr.bf16.mxu0 0
    %5827 = vmatpush2.bf16.msra.mxu0 0
    %5828 = vmatprep.subr.bf16.mxu0 0
    %5829 = vmatpush2.bf16.msra.mxu0 0
    %5830 = vmatprep.subr.bf16.mxu0 0
    %5831 = vmatpush2.bf16.msra.mxu0 0
    %5832 = vmatprep.subr.bf16.mxu0 0
    %5833 = vmatpush2.bf16.msra.mxu0 0
    %5834 = vmatprep.subr.bf16.mxu0 0
    %5835 = vmatpush2.bf16.msra.mxu0 0
    %5836 = vmatprep.subr.bf16.mxu0 0
    %5837 = vmatpush2.bf16.msra.mxu0 0
    %5838 = vmatprep.subr.bf16.mxu0 0
    %5839 = vmatpush2.bf16.msra.mxu0 0
    %5840 = vmatprep.subr.bf16.mxu0 0
    %5841 = vmatpush2.bf16.msra.mxu0 0
    %5842 = vmatprep.mubr.bf16.mxu0 0
    %5843 = vmatmul.mubr.bf16.gmra.mxu0 %v5805
    %v5844 = vpop.f32.mrf.mxu0
    %v5845 = vadd.f32 0.0, %v5844
    %v5846 = vpop.f32.mrf.mxu0
    %v5847 = vpop.f32.mrf.mxu0
    %v5848 = vadd.f32 0.0, %v5847
    %v5849 = vpop.f32.mrf.mxu0
    %5850 = vmatprep.mubr.bf16.mxu0 0
    %5851 = vmatmul.mubr.bf16.gmra.mxu0 %v5808
    %v5852 = vpop.f32.mrf.mxu0
    %v5853 = vadd.f32 0.0, %v5852
    %v5854 = vpop.f32.mrf.mxu0
    %v5855 = vpop.f32.mrf.mxu0
    %v5856 = vadd.f32 0.0, %v5855
    %v5857 = vpop.f32.mrf.mxu0
    %5858 = vdwg.mxu0
    %v5859 = vpack.c.bf16 %v5848, %v5845
    %v5860 = vpack.c.bf16 %v5856, %v5853
    %v5863 = vunpack.c.l.b16 %v5788
    %v5864 = vunpack.c.l.b16 %v5859
    %v5865 = vunpack.c.h.b16 %v5788
    %v5866 = vunpack.c.h.b16 %v5859
    %v5867 = vpack.c.b16 %v5864, %v5863
    %v5868 = vpack.c.b16 %v5866, %v5865
    %5871 = vst [vmem:[#allocation2 + $0xe8] sm:$0xff] %v5867
    %5872 = vst [vmem:[#allocation2 + $0xf0] sm:$0xff] %v5868
    %v5875 = vunpack.c.l.b16 %v5789
    %v5876 = vunpack.c.l.b16 %v5860
    %v5877 = vunpack.c.h.b16 %v5789
    %v5878 = vunpack.c.h.b16 %v5860
    %v5879 = vpack.c.b16 %v5876, %v5875
    %v5880 = vpack.c.b16 %v5878, %v5877
    %5883 = vst [vmem:[#allocation2 + $0x100] sm:$0xff] %v5879
    %5884 = vst [vmem:[#allocation2 + $0x108] sm:$0xff] %v5880
    %v5885 = vld [vmem:[#allocation2 + $0xe0] sm:$0xcc]
    %v5886 = vld [vmem:[#allocation2 + $0xe8] sm:$0xff]
    %v5887 = vld [vmem:[#allocation2 + $0xf0] sm:$0x77]
    %v5888 = vld [vmem:[#allocation2 + $0xf8] sm:$0xcc]
    %v5889 = vld [vmem:[#allocation2 + $0x100] sm:$0xff]
    %v5890 = vld [vmem:[#allocation2 + $0x108] sm:$0x77]
    %v5894 = vunpack.c.l.b16 %v5885
    %v5895 = vunpack.c.h.b16 %v5885
    %v5896 = vunpack.c.l.b16 %v5886
    %v5897 = vunpack.c.h.b16 %v5886
    %v5898 = vunpack.c.l.b16 %v5887
    %v5899 = vunpack.c.h.b16 %v5887
    %v5900 = vpack.c.b16 %v5896, %v5894
    %v5901 = vpack.c.b16 %v5897, %v5895
    %v5902 = vpack.c.b16 %v5898, %v5898
    %v5903 = vpack.c.b16 %v5899, %v5899
    %v5905 = vshrl.u32 %v5900, 16
    %v5907 = vrot.slane %v5905, 2
    %v5908 = vshll.u32 %v5900, 16
    %v5910 = vrot.slane %v5908, 3
    %v5911 = vor.u32 %v5907, %v5910
    %v5913 = vshrl.u32 %v5902, 16
    %v5915 = vrot.slane %v5913, 2
    %v5916 = vshll.u32 %v5902, 16
    %v5918 = vrot.slane %v5916, 3
    %v5919 = vor.u32 %v5915, %v5918
    %v5920 = vsel %vm1285, %v5911, %v5919
    %v5922 = vshrl.u32 %v5901, 16
    %v5924 = vrot.slane %v5922, 2
    %v5925 = vshll.u32 %v5901, 16
    %v5927 = vrot.slane %v5925, 3
    %v5928 = vor.u32 %v5924, %v5927
    %v5930 = vshrl.u32 %v5903, 16
    %v5932 = vrot.slane %v5930, 2
    %v5933 = vshll.u32 %v5903, 16
    %v5935 = vrot.slane %v5933, 3
    %v5936 = vor.u32 %v5932, %v5935
    %v5937 = vsel %vm1285, %v5928, %v5936
    %v5943 = vunpack.c.l.b16 %v5888
    %v5944 = vunpack.c.h.b16 %v5888
    %v5945 = vunpack.c.l.b16 %v5889
    %v5946 = vunpack.c.h.b16 %v5889
    %v5947 = vunpack.c.l.b16 %v5890
    %v5948 = vunpack.c.h.b16 %v5890
    %v5949 = vpack.c.b16 %v5945, %v5943
    %v5950 = vpack.c.b16 %v5946, %v5944
    %v5951 = vpack.c.b16 %v5947, %v5947
    %v5952 = vpack.c.b16 %v5948, %v5948
    %v5954 = vshrl.u32 %v5949, 16
    %v5956 = vrot.slane %v5954, 2
    %v5957 = vshll.u32 %v5949, 16
    %v5959 = vrot.slane %v5957, 3
    %v5960 = vor.u32 %v5956, %v5959
    %v5962 = vshrl.u32 %v5951, 16
    %v5964 = vrot.slane %v5962, 2
    %v5965 = vshll.u32 %v5951, 16
    %v5967 = vrot.slane %v5965, 3
    %v5968 = vor.u32 %v5964, %v5967
    %v5969 = vsel %vm1285, %v5960, %v5968
    %v5971 = vshrl.u32 %v5950, 16
    %v5973 = vrot.slane %v5971, 2
    %v5974 = vshll.u32 %v5950, 16
    %v5976 = vrot.slane %v5974, 3
    %v5977 = vor.u32 %v5973, %v5976
    %v5979 = vshrl.u32 %v5952, 16
    %v5981 = vrot.slane %v5979, 2
    %v5982 = vshll.u32 %v5952, 16
    %v5984 = vrot.slane %v5982, 3
    %v5985 = vor.u32 %v5981, %v5984
    %v5986 = vsel %vm1285, %v5977, %v5985
    %s5989 = scalar_lea.vmem [#allocation6], 1536
    %v5990 = vld [vmem:[%s5989] sm:$0xf]
    %v5991 = vld [vmem:[%s5989 + $0x4] sm:$0xf]
    %v5992 = vld [vmem:[%s5989 + $0x8] sm:$0xf]
    %v5993 = vld [vmem:[%s5989 + $0xc] sm:$0xf]
    %v5994 = vld [vmem:[%s5989 + $0x10] sm:$0xf]
    %v5995 = vld [vmem:[%s5989 + $0x14] sm:$0xf]
    %v5996 = vld [vmem:[%s5989 + $0x18] sm:$0xf]
    %v5997 = vld [vmem:[%s5989 + $0x1c] sm:$0xf]
    %v5998 = vld [vmem:[%s5989 + $0x20] sm:$0xf]
    %v5999 = vld [vmem:[%s5989 + $0x24] sm:$0xf]
    %v6000 = vld [vmem:[%s5989 + $0x28] sm:$0xf]
    %v6001 = vld [vmem:[%s5989 + $0x2c] sm:$0xf]
    %v6002 = vld [vmem:[%s5989 + $0x30] sm:$0xf]
    %v6003 = vld [vmem:[%s5989 + $0x34] sm:$0xf]
    %v6004 = vld [vmem:[%s5989 + $0x38] sm:$0xf]
    %v6005 = vld [vmem:[%s5989 + $0x3c] sm:$0xf]
    %v6006 = vld [vmem:[%s5989 + $0x40] sm:$0xf]
    %v6007 = vld [vmem:[%s5989 + $0x44] sm:$0xf]
    %v6008 = vld [vmem:[%s5989 + $0x48] sm:$0xf]
    %v6009 = vld [vmem:[%s5989 + $0x4c] sm:$0xf]
    %v6010 = vld [vmem:[%s5989 + $0x50] sm:$0xf]
    %v6011 = vld [vmem:[%s5989 + $0x54] sm:$0xf]
    %v6012 = vld [vmem:[%s5989 + $0x58] sm:$0xf]
    %v6013 = vld [vmem:[%s5989 + $0x5c] sm:$0xf]
    %v6014 = vld [vmem:[%s5989 + $0x60] sm:$0xf]
    %v6015 = vld [vmem:[%s5989 + $0x64] sm:$0xf]
    %v6016 = vld [vmem:[%s5989 + $0x68] sm:$0xf]
    %v6017 = vld [vmem:[%s5989 + $0x6c] sm:$0xf]
    %v6018 = vld [vmem:[%s5989 + $0x70] sm:$0xf]
    %v6019 = vld [vmem:[%s5989 + $0x74] sm:$0xf]
    %v6020 = vld [vmem:[%s5989 + $0x78] sm:$0xf]
    %v6021 = vld [vmem:[%s5989 + $0x7c] sm:$0xf]
    %v6022 = vld [vmem:[#allocation2 + $0xe0] sm:$0x88]
    %v6023 = vld [vmem:[#allocation2 + $0xf8] sm:$0x88]
    %v6025 = vunpack.c.l.b16 %v6022
    %v6026 = vunpack.c.h.b16 %v6022
    %v6027 = vpack.c.b16 %v5896, %v6025
    %v6028 = vpack.c.b16 %v5897, %v6026
    %v6029 = vrot.slane %v6027, 3
    %v6030 = vrot.slane %v5902, 3
    %v6031 = vsel %vm1554, %v6029, %v6030
    %v6032 = vrot.slane %v6028, 3
    %v6033 = vrot.slane %v5903, 3
    %v6034 = vsel %vm1554, %v6032, %v6033
    %v6038 = vunpack.c.l.b16 %v6023
    %v6039 = vunpack.c.h.b16 %v6023
    %v6040 = vpack.c.b16 %v5945, %v6038
    %v6041 = vpack.c.b16 %v5946, %v6039
    %v6042 = vrot.slane %v6040, 3
    %v6043 = vrot.slane %v5951, 3
    %v6044 = vsel %vm1554, %v6042, %v6043
    %v6045 = vrot.slane %v6041, 3
    %v6046 = vrot.slane %v5952, 3
    %v6047 = vsel %vm1554, %v6045, %v6046
    %s6050 = scalar_lea.vmem [#allocation6], 1664
    %v6051 = vld [vmem:[%s6050] sm:$0xf]
    %v6052 = vld [vmem:[%s6050 + $0x4] sm:$0xf]
    %v6053 = vld [vmem:[%s6050 + $0x8] sm:$0xf]
    %v6054 = vld [vmem:[%s6050 + $0xc] sm:$0xf]
    %v6055 = vld [vmem:[%s6050 + $0x10] sm:$0xf]
    %v6056 = vld [vmem:[%s6050 + $0x14] sm:$0xf]
    %v6057 = vld [vmem:[%s6050 + $0x18] sm:$0xf]
    %v6058 = vld [vmem:[%s6050 + $0x1c] sm:$0xf]
    %v6059 = vld [vmem:[%s6050 + $0x20] sm:$0xf]
    %v6060 = vld [vmem:[%s6050 + $0x24] sm:$0xf]
    %v6061 = vld [vmem:[%s6050 + $0x28] sm:$0xf]
    %v6062 = vld [vmem:[%s6050 + $0x2c] sm:$0xf]
    %v6063 = vld [vmem:[%s6050 + $0x30] sm:$0xf]
    %v6064 = vld [vmem:[%s6050 + $0x34] sm:$0xf]
    %v6065 = vld [vmem:[%s6050 + $0x38] sm:$0xf]
    %v6066 = vld [vmem:[%s6050 + $0x3c] sm:$0xf]
    %v6067 = vld [vmem:[%s6050 + $0x40] sm:$0xf]
    %v6068 = vld [vmem:[%s6050 + $0x44] sm:$0xf]
    %v6069 = vld [vmem:[%s6050 + $0x48] sm:$0xf]
    %v6070 = vld [vmem:[%s6050 + $0x4c] sm:$0xf]
    %v6071 = vld [vmem:[%s6050 + $0x50] sm:$0xf]
    %v6072 = vld [vmem:[%s6050 + $0x54] sm:$0xf]
    %v6073 = vld [vmem:[%s6050 + $0x58] sm:$0xf]
    %v6074 = vld [vmem:[%s6050 + $0x5c] sm:$0xf]
    %v6075 = vld [vmem:[%s6050 + $0x60] sm:$0xf]
    %v6076 = vld [vmem:[%s6050 + $0x64] sm:$0xf]
    %v6077 = vld [vmem:[%s6050 + $0x68] sm:$0xf]
    %v6078 = vld [vmem:[%s6050 + $0x6c] sm:$0xf]
    %v6079 = vld [vmem:[%s6050 + $0x70] sm:$0xf]
    %v6080 = vld [vmem:[%s6050 + $0x74] sm:$0xf]
    %v6081 = vld [vmem:[%s6050 + $0x78] sm:$0xf]
    %v6082 = vld [vmem:[%s6050 + $0x7c] sm:$0xf]
    %v6115 = vunpack.c.l.b16 %v6051
    %v6116 = vunpack.c.l.b16 %v6052
    %v6117 = vunpack.c.l.b16 %v6053
    %v6118 = vunpack.c.l.b16 %v6054
    %v6119 = vunpack.c.l.b16 %v6055
    %v6120 = vunpack.c.l.b16 %v6056
    %v6121 = vunpack.c.l.b16 %v6057
    %v6122 = vunpack.c.l.b16 %v6058
    %v6123 = vunpack.c.l.b16 %v6059
    %v6124 = vunpack.c.l.b16 %v6060
    %v6125 = vunpack.c.l.b16 %v6061
    %v6126 = vunpack.c.l.b16 %v6062
    %v6127 = vunpack.c.l.b16 %v6063
    %v6128 = vunpack.c.l.b16 %v6064
    %v6129 = vunpack.c.l.b16 %v6065
    %v6130 = vunpack.c.l.b16 %v6066
    %v6131 = vunpack.c.l.b16 %v6067
    %v6132 = vunpack.c.l.b16 %v6068
    %v6133 = vunpack.c.l.b16 %v6069
    %v6134 = vunpack.c.l.b16 %v6070
    %v6135 = vunpack.c.l.b16 %v6071
    %v6136 = vunpack.c.l.b16 %v6072
    %v6137 = vunpack.c.l.b16 %v6073
    %v6138 = vunpack.c.l.b16 %v6074
    %v6139 = vunpack.c.l.b16 %v6075
    %v6140 = vunpack.c.l.b16 %v6076
    %v6141 = vunpack.c.l.b16 %v6077
    %v6142 = vunpack.c.l.b16 %v6078
    %v6143 = vunpack.c.l.b16 %v6079
    %v6144 = vunpack.c.l.b16 %v6080
    %v6145 = vunpack.c.l.b16 %v6081
    %v6146 = vunpack.c.l.b16 %v6082
    %v6147 = vpack.c.b16 %v6116, %v6115
    %v6148 = vpack.c.b16 %v6118, %v6117
    %v6149 = vpack.c.b16 %v6120, %v6119
    %v6150 = vpack.c.b16 %v6122, %v6121
    %v6151 = vpack.c.b16 %v6124, %v6123
    %v6152 = vpack.c.b16 %v6126, %v6125
    %v6153 = vpack.c.b16 %v6128, %v6127
    %v6154 = vpack.c.b16 %v6130, %v6129
    %v6155 = vpack.c.b16 %v6132, %v6131
    %v6156 = vpack.c.b16 %v6134, %v6133
    %v6157 = vpack.c.b16 %v6136, %v6135
    %v6158 = vpack.c.b16 %v6138, %v6137
    %v6159 = vpack.c.b16 %v6140, %v6139
    %v6160 = vpack.c.b16 %v6142, %v6141
    %v6161 = vpack.c.b16 %v6144, %v6143
    %v6162 = vpack.c.b16 %v6146, %v6145
    %6179 = vmatprep.subr.bf16.mxu0 0
    %6180 = vmatpush1.bf16.msra.mxu0 %v6154
    %6181 = vmatprep.subr.bf16.mxu0 0
    %6182 = vmatpush1.bf16.msra.mxu0 %v6153
    %6183 = vmatprep.subr.bf16.mxu0 0
    %6184 = vmatpush1.bf16.msra.mxu0 %v6152
    %6185 = vmatprep.subr.bf16.mxu0 0
    %6186 = vmatpush1.bf16.msra.mxu0 %v6151
    %6187 = vmatprep.subr.bf16.mxu0 0
    %6188 = vmatpush1.bf16.msra.mxu0 %v6150
    %6189 = vmatprep.subr.bf16.mxu0 0
    %6190 = vmatpush1.bf16.msra.mxu0 %v6149
    %6191 = vmatprep.subr.bf16.mxu0 0
    %6192 = vmatpush1.bf16.msra.mxu0 %v6148
    %6193 = vmatprep.subr.bf16.mxu0 0
    %6194 = vmatpush1.bf16.msra.mxu0 %v6147
    %6195 = vmatprep.subr.bf16.mxu0 0
    %6196 = vmatpush2.bf16.msra.mxu0 %v6162
    %6197 = vmatprep.subr.bf16.mxu0 0
    %6198 = vmatpush2.bf16.msra.mxu0 %v6161
    %6199 = vmatprep.subr.bf16.mxu0 0
    %6200 = vmatpush2.bf16.msra.mxu0 %v6160
    %6201 = vmatprep.subr.bf16.mxu0 0
    %6202 = vmatpush2.bf16.msra.mxu0 %v6159
    %6203 = vmatprep.subr.bf16.mxu0 0
    %6204 = vmatpush2.bf16.msra.mxu0 %v6158
    %6205 = vmatprep.subr.bf16.mxu0 0
    %6206 = vmatpush2.bf16.msra.mxu0 %v6157
    %6207 = vmatprep.subr.bf16.mxu0 0
    %6208 = vmatpush2.bf16.msra.mxu0 %v6156
    %6209 = vmatprep.subr.bf16.mxu0 0
    %6210 = vmatpush2.bf16.msra.mxu0 %v6155
    %6211 = vmatprep.mubr.bf16.mxu0 %v6034
    %6212 = vmatmul.mubr.bf16.gmra.mxu0 %v6031
    %v6213 = vpop.f32.mrf.mxu0
    %v6214 = vadd.f32 0.0, %v6213
    %v6215 = vpop.f32.mrf.mxu0
    %v6216 = vpop.f32.mrf.mxu0
    %v6217 = vadd.f32 0.0, %v6216
    %v6218 = vpop.f32.mrf.mxu0
    %6219 = vmatprep.mubr.bf16.mxu0 %v6047
    %6220 = vmatmul.mubr.bf16.gmra.mxu0 %v6044
    %v6221 = vpop.f32.mrf.mxu0
    %v6222 = vadd.f32 0.0, %v6221
    %v6223 = vpop.f32.mrf.mxu0
    %v6224 = vpop.f32.mrf.mxu0
    %v6225 = vadd.f32 0.0, %v6224
    %v6226 = vpop.f32.mrf.mxu0
    %6227 = vdwg.mxu0
    %v6260 = vunpack.c.l.b16 %v5990
    %v6261 = vunpack.c.l.b16 %v5991
    %v6262 = vunpack.c.l.b16 %v5992
    %v6263 = vunpack.c.l.b16 %v5993
    %v6264 = vunpack.c.l.b16 %v5994
    %v6265 = vunpack.c.l.b16 %v5995
    %v6266 = vunpack.c.l.b16 %v5996
    %v6267 = vunpack.c.l.b16 %v5997
    %v6268 = vunpack.c.l.b16 %v5998
    %v6269 = vunpack.c.l.b16 %v5999
    %v6270 = vunpack.c.l.b16 %v6000
    %v6271 = vunpack.c.l.b16 %v6001
    %v6272 = vunpack.c.l.b16 %v6002
    %v6273 = vunpack.c.l.b16 %v6003
    %v6274 = vunpack.c.l.b16 %v6004
    %v6275 = vunpack.c.l.b16 %v6005
    %v6276 = vunpack.c.l.b16 %v6006
    %v6277 = vunpack.c.l.b16 %v6007
    %v6278 = vunpack.c.l.b16 %v6008
    %v6279 = vunpack.c.l.b16 %v6009
    %v6280 = vunpack.c.l.b16 %v6010
    %v6281 = vunpack.c.l.b16 %v6011
    %v6282 = vunpack.c.l.b16 %v6012
    %v6283 = vunpack.c.l.b16 %v6013
    %v6284 = vunpack.c.l.b16 %v6014
    %v6285 = vunpack.c.l.b16 %v6015
    %v6286 = vunpack.c.l.b16 %v6016
    %v6287 = vunpack.c.l.b16 %v6017
    %v6288 = vunpack.c.l.b16 %v6018
    %v6289 = vunpack.c.l.b16 %v6019
    %v6290 = vunpack.c.l.b16 %v6020
    %v6291 = vunpack.c.l.b16 %v6021
    %v6292 = vpack.c.b16 %v6261, %v6260
    %v6293 = vpack.c.b16 %v6263, %v6262
    %v6294 = vpack.c.b16 %v6265, %v6264
    %v6295 = vpack.c.b16 %v6267, %v6266
    %v6296 = vpack.c.b16 %v6269, %v6268
    %v6297 = vpack.c.b16 %v6271, %v6270
    %v6298 = vpack.c.b16 %v6273, %v6272
    %v6299 = vpack.c.b16 %v6275, %v6274
    %v6300 = vpack.c.b16 %v6277, %v6276
    %v6301 = vpack.c.b16 %v6279, %v6278
    %v6302 = vpack.c.b16 %v6281, %v6280
    %v6303 = vpack.c.b16 %v6283, %v6282
    %v6304 = vpack.c.b16 %v6285, %v6284
    %v6305 = vpack.c.b16 %v6287, %v6286
    %v6306 = vpack.c.b16 %v6289, %v6288
    %v6307 = vpack.c.b16 %v6291, %v6290
    %6324 = vmatprep.subr.bf16.mxu0 0
    %6325 = vmatpush1.bf16.msra.mxu0 %v6299
    %6326 = vmatprep.subr.bf16.mxu0 0
    %6327 = vmatpush1.bf16.msra.mxu0 %v6298
    %6328 = vmatprep.subr.bf16.mxu0 0
    %6329 = vmatpush1.bf16.msra.mxu0 %v6297
    %6330 = vmatprep.subr.bf16.mxu0 0
    %6331 = vmatpush1.bf16.msra.mxu0 %v6296
    %6332 = vmatprep.subr.bf16.mxu0 0
    %6333 = vmatpush1.bf16.msra.mxu0 %v6295
    %6334 = vmatprep.subr.bf16.mxu0 0
    %6335 = vmatpush1.bf16.msra.mxu0 %v6294
    %6336 = vmatprep.subr.bf16.mxu0 0
    %6337 = vmatpush1.bf16.msra.mxu0 %v6293
    %6338 = vmatprep.subr.bf16.mxu0 0
    %6339 = vmatpush1.bf16.msra.mxu0 %v6292
    %6340 = vmatprep.subr.bf16.mxu0 0
    %6341 = vmatpush2.bf16.msra.mxu0 %v6307
    %6342 = vmatprep.subr.bf16.mxu0 0
    %6343 = vmatpush2.bf16.msra.mxu0 %v6306
    %6344 = vmatprep.subr.bf16.mxu0 0
    %6345 = vmatpush2.bf16.msra.mxu0 %v6305
    %6346 = vmatprep.subr.bf16.mxu0 0
    %6347 = vmatpush2.bf16.msra.mxu0 %v6304
    %6348 = vmatprep.subr.bf16.mxu0 0
    %6349 = vmatpush2.bf16.msra.mxu0 %v6303
    %6350 = vmatprep.subr.bf16.mxu0 0
    %6351 = vmatpush2.bf16.msra.mxu0 %v6302
    %6352 = vmatprep.subr.bf16.mxu0 0
    %6353 = vmatpush2.bf16.msra.mxu0 %v6301
    %6354 = vmatprep.subr.bf16.mxu0 0
    %6355 = vmatpush2.bf16.msra.mxu0 %v6300
    %6356 = vmatprep.mubr.bf16.mxu0 %v5937
    %6357 = vmatmul.mubr.bf16.gmra.mxu0 %v5920
    %v6358 = vpop.f32.mrf.mxu0
    %v6359 = vadd.f32 %v6214, %v6358
    %v6360 = vpop.f32.mrf.mxu0
    %v6361 = vpop.f32.mrf.mxu0
    %v6362 = vadd.f32 %v6217, %v6361
    %v6363 = vpop.f32.mrf.mxu0
    %6364 = vmatprep.mubr.bf16.mxu0 %v5986
    %6365 = vmatmul.mubr.bf16.gmra.mxu0 %v5969
    %v6366 = vpop.f32.mrf.mxu0
    %v6367 = vadd.f32 %v6222, %v6366
    %v6368 = vpop.f32.mrf.mxu0
    %v6369 = vpop.f32.mrf.mxu0
    %v6370 = vadd.f32 %v6225, %v6369
    %v6371 = vpop.f32.mrf.mxu0
    %6372 = vdwg.mxu0
    %v6373 = vld [vmem:[#allocation2 + $0xf0] sm:$0xff]
    %v6374 = vld [vmem:[#allocation2 + $0x108] sm:$0xff]
    %v6376 = vunpack.c.l.b16 %v6373
    %v6377 = vunpack.c.h.b16 %v6373
    %v6378 = vpack.c.b16 %v6376, %v6376
    %v6379 = vpack.c.b16 %v6377, %v6377
    %v6381 = vshrl.u32 %v6027, 16
    %v6383 = vrot.slane %v6381, 3
    %v6384 = vshll.u32 %v6027, 16
    %v6386 = vrot.slane %v6384, 4
    %v6387 = vor.u32 %v6383, %v6386
    %v6389 = vshrl.u32 %v6378, 16
    %v6391 = vrot.slane %v6389, 3
    %v6392 = vshll.u32 %v6378, 16
    %v6394 = vrot.slane %v6392, 4
    %v6395 = vor.u32 %v6391, %v6394
    %v6396 = vsel %vm2038, %v6387, %v6395
    %v6398 = vshrl.u32 %v6028, 16
    %v6400 = vrot.slane %v6398, 3
    %v6401 = vshll.u32 %v6028, 16
    %v6403 = vrot.slane %v6401, 4
    %v6404 = vor.u32 %v6400, %v6403
    %v6406 = vshrl.u32 %v6379, 16
    %v6408 = vrot.slane %v6406, 3
    %v6409 = vshll.u32 %v6379, 16
    %v6411 = vrot.slane %v6409, 4
    %v6412 = vor.u32 %v6408, %v6411
    %v6413 = vsel %vm2038, %v6404, %v6412
    %v6417 = vunpack.c.l.b16 %v6374
    %v6418 = vunpack.c.h.b16 %v6374
    %v6419 = vpack.c.b16 %v6417, %v6417
    %v6420 = vpack.c.b16 %v6418, %v6418
    %v6422 = vshrl.u32 %v6040, 16
    %v6424 = vrot.slane %v6422, 3
    %v6425 = vshll.u32 %v6040, 16
    %v6427 = vrot.slane %v6425, 4
    %v6428 = vor.u32 %v6424, %v6427
    %v6430 = vshrl.u32 %v6419, 16
    %v6432 = vrot.slane %v6430, 3
    %v6433 = vshll.u32 %v6419, 16
    %v6435 = vrot.slane %v6433, 4
    %v6436 = vor.u32 %v6432, %v6435
    %v6437 = vsel %vm2038, %v6428, %v6436
    %v6439 = vshrl.u32 %v6041, 16
    %v6441 = vrot.slane %v6439, 3
    %v6442 = vshll.u32 %v6041, 16
    %v6444 = vrot.slane %v6442, 4
    %v6445 = vor.u32 %v6441, %v6444
    %v6447 = vshrl.u32 %v6420, 16
    %v6449 = vrot.slane %v6447, 3
    %v6450 = vshll.u32 %v6420, 16
    %v6452 = vrot.slane %v6450, 4
    %v6453 = vor.u32 %v6449, %v6452
    %v6454 = vsel %vm2038, %v6445, %v6453
    %s6457 = scalar_lea.vmem [#allocation6], 1792
    %v6458 = vld [vmem:[%s6457] sm:$0xf]
    %v6459 = vld [vmem:[%s6457 + $0x4] sm:$0xf]
    %v6460 = vld [vmem:[%s6457 + $0x8] sm:$0xf]
    %v6461 = vld [vmem:[%s6457 + $0xc] sm:$0xf]
    %v6462 = vld [vmem:[%s6457 + $0x10] sm:$0xf]
    %v6463 = vld [vmem:[%s6457 + $0x14] sm:$0xf]
    %v6464 = vld [vmem:[%s6457 + $0x18] sm:$0xf]
    %v6465 = vld [vmem:[%s6457 + $0x1c] sm:$0xf]
    %v6466 = vld [vmem:[%s6457 + $0x20] sm:$0xf]
    %v6467 = vld [vmem:[%s6457 + $0x24] sm:$0xf]
    %v6468 = vld [vmem:[%s6457 + $0x28] sm:$0xf]
    %v6469 = vld [vmem:[%s6457 + $0x2c] sm:$0xf]
    %v6470 = vld [vmem:[%s6457 + $0x30] sm:$0xf]
    %v6471 = vld [vmem:[%s6457 + $0x34] sm:$0xf]
    %v6472 = vld [vmem:[%s6457 + $0x38] sm:$0xf]
    %v6473 = vld [vmem:[%s6457 + $0x3c] sm:$0xf]
    %v6474 = vld [vmem:[%s6457 + $0x40] sm:$0xf]
    %v6475 = vld [vmem:[%s6457 + $0x44] sm:$0xf]
    %v6476 = vld [vmem:[%s6457 + $0x48] sm:$0xf]
    %v6477 = vld [vmem:[%s6457 + $0x4c] sm:$0xf]
    %v6478 = vld [vmem:[%s6457 + $0x50] sm:$0xf]
    %v6479 = vld [vmem:[%s6457 + $0x54] sm:$0xf]
    %v6480 = vld [vmem:[%s6457 + $0x58] sm:$0xf]
    %v6481 = vld [vmem:[%s6457 + $0x5c] sm:$0xf]
    %v6482 = vld [vmem:[%s6457 + $0x60] sm:$0xf]
    %v6483 = vld [vmem:[%s6457 + $0x64] sm:$0xf]
    %v6484 = vld [vmem:[%s6457 + $0x68] sm:$0xf]
    %v6485 = vld [vmem:[%s6457 + $0x6c] sm:$0xf]
    %v6486 = vld [vmem:[%s6457 + $0x70] sm:$0xf]
    %v6487 = vld [vmem:[%s6457 + $0x74] sm:$0xf]
    %v6488 = vld [vmem:[%s6457 + $0x78] sm:$0xf]
    %v6489 = vld [vmem:[%s6457 + $0x7c] sm:$0xf]
    %v6522 = vunpack.c.l.b16 %v6458
    %v6523 = vunpack.c.l.b16 %v6459
    %v6524 = vunpack.c.l.b16 %v6460
    %v6525 = vunpack.c.l.b16 %v6461
    %v6526 = vunpack.c.l.b16 %v6462
    %v6527 = vunpack.c.l.b16 %v6463
    %v6528 = vunpack.c.l.b16 %v6464
    %v6529 = vunpack.c.l.b16 %v6465
    %v6530 = vunpack.c.l.b16 %v6466
    %v6531 = vunpack.c.l.b16 %v6467
    %v6532 = vunpack.c.l.b16 %v6468
    %v6533 = vunpack.c.l.b16 %v6469
    %v6534 = vunpack.c.l.b16 %v6470
    %v6535 = vunpack.c.l.b16 %v6471
    %v6536 = vunpack.c.l.b16 %v6472
    %v6537 = vunpack.c.l.b16 %v6473
    %v6538 = vunpack.c.l.b16 %v6474
    %v6539 = vunpack.c.l.b16 %v6475
    %v6540 = vunpack.c.l.b16 %v6476
    %v6541 = vunpack.c.l.b16 %v6477
    %v6542 = vunpack.c.l.b16 %v6478
    %v6543 = vunpack.c.l.b16 %v6479
    %v6544 = vunpack.c.l.b16 %v6480
    %v6545 = vunpack.c.l.b16 %v6481
    %v6546 = vunpack.c.l.b16 %v6482
    %v6547 = vunpack.c.l.b16 %v6483
    %v6548 = vunpack.c.l.b16 %v6484
    %v6549 = vunpack.c.l.b16 %v6485
    %v6550 = vunpack.c.l.b16 %v6486
    %v6551 = vunpack.c.l.b16 %v6487
    %v6552 = vunpack.c.l.b16 %v6488
    %v6553 = vunpack.c.l.b16 %v6489
    %v6554 = vpack.c.b16 %v6523, %v6522
    %v6555 = vpack.c.b16 %v6525, %v6524
    %v6556 = vpack.c.b16 %v6527, %v6526
    %v6557 = vpack.c.b16 %v6529, %v6528
    %v6558 = vpack.c.b16 %v6531, %v6530
    %v6559 = vpack.c.b16 %v6533, %v6532
    %v6560 = vpack.c.b16 %v6535, %v6534
    %v6561 = vpack.c.b16 %v6537, %v6536
    %v6562 = vpack.c.b16 %v6539, %v6538
    %v6563 = vpack.c.b16 %v6541, %v6540
    %v6564 = vpack.c.b16 %v6543, %v6542
    %v6565 = vpack.c.b16 %v6545, %v6544
    %v6566 = vpack.c.b16 %v6547, %v6546
    %v6567 = vpack.c.b16 %v6549, %v6548
    %v6568 = vpack.c.b16 %v6551, %v6550
    %v6569 = vpack.c.b16 %v6553, %v6552
    %6586 = vmatprep.subr.bf16.mxu0 0
    %6587 = vmatpush1.bf16.msra.mxu0 %v6561
    %6588 = vmatprep.subr.bf16.mxu0 0
    %6589 = vmatpush1.bf16.msra.mxu0 %v6560
    %6590 = vmatprep.subr.bf16.mxu0 0
    %6591 = vmatpush1.bf16.msra.mxu0 %v6559
    %6592 = vmatprep.subr.bf16.mxu0 0
    %6593 = vmatpush1.bf16.msra.mxu0 %v6558
    %6594 = vmatprep.subr.bf16.mxu0 0
    %6595 = vmatpush1.bf16.msra.mxu0 %v6557
    %6596 = vmatprep.subr.bf16.mxu0 0
    %6597 = vmatpush1.bf16.msra.mxu0 %v6556
    %6598 = vmatprep.subr.bf16.mxu0 0
    %6599 = vmatpush1.bf16.msra.mxu0 %v6555
    %6600 = vmatprep.subr.bf16.mxu0 0
    %6601 = vmatpush1.bf16.msra.mxu0 %v6554
    %6602 = vmatprep.subr.bf16.mxu0 0
    %6603 = vmatpush2.bf16.msra.mxu0 %v6569
    %6604 = vmatprep.subr.bf16.mxu0 0
    %6605 = vmatpush2.bf16.msra.mxu0 %v6568
    %6606 = vmatprep.subr.bf16.mxu0 0
    %6607 = vmatpush2.bf16.msra.mxu0 %v6567
    %6608 = vmatprep.subr.bf16.mxu0 0
    %6609 = vmatpush2.bf16.msra.mxu0 %v6566
    %6610 = vmatprep.subr.bf16.mxu0 0
    %6611 = vmatpush2.bf16.msra.mxu0 %v6565
    %6612 = vmatprep.subr.bf16.mxu0 0
    %6613 = vmatpush2.bf16.msra.mxu0 %v6564
    %6614 = vmatprep.subr.bf16.mxu0 0
    %6615 = vmatpush2.bf16.msra.mxu0 %v6563
    %6616 = vmatprep.subr.bf16.mxu0 0
    %6617 = vmatpush2.bf16.msra.mxu0 %v6562
    %6618 = vmatprep.mubr.bf16.mxu0 %v6413
    %6619 = vmatmul.mubr.bf16.gmra.mxu0 %v6396
    %v6620 = vpop.f32.mrf.mxu0
    %v6621 = vadd.f32 0.0, %v6620
    %v6622 = vpop.f32.mrf.mxu0
    %v6623 = vpop.f32.mrf.mxu0
    %v6624 = vadd.f32 0.0, %v6623
    %v6625 = vpop.f32.mrf.mxu0
    %6626 = vmatprep.mubr.bf16.mxu0 %v6454
    %6627 = vmatmul.mubr.bf16.gmra.mxu0 %v6437
    %v6628 = vpop.f32.mrf.mxu0
    %v6629 = vadd.f32 0.0, %v6628
    %v6630 = vpop.f32.mrf.mxu0
    %v6631 = vpop.f32.mrf.mxu0
    %v6632 = vadd.f32 0.0, %v6631
    %v6633 = vpop.f32.mrf.mxu0
    %6634 = vdwg.mxu0
    %v6635 = vadd.f32 %v6359, %v6621
    %v6636 = vadd.f32 %v6362, %v6624
    %v6637 = vadd.f32 %v6367, %v6629
    %v6638 = vadd.f32 %v6370, %v6632
    %v6639 = vpack.c.b16 %v6376, %v5896
    %v6640 = vpack.c.b16 %v6377, %v5897
    %v6643 = vpack.c.b16 %v6417, %v5945
    %v6644 = vpack.c.b16 %v6418, %v5946
    %s6647 = scalar_lea.vmem [#allocation6], 1920
    %v6648 = vld [vmem:[%s6647] sm:$0xf]
    %v6649 = vld [vmem:[%s6647 + $0x4] sm:$0xf]
    %v6650 = vld [vmem:[%s6647 + $0x8] sm:$0xf]
    %v6651 = vld [vmem:[%s6647 + $0xc] sm:$0xf]
    %v6652 = vld [vmem:[%s6647 + $0x10] sm:$0xf]
    %v6653 = vld [vmem:[%s6647 + $0x14] sm:$0xf]
    %v6654 = vld [vmem:[%s6647 + $0x18] sm:$0xf]
    %v6655 = vld [vmem:[%s6647 + $0x1c] sm:$0xf]
    %v6656 = vld [vmem:[%s6647 + $0x20] sm:$0xf]
    %v6657 = vld [vmem:[%s6647 + $0x24] sm:$0xf]
    %v6658 = vld [vmem:[%s6647 + $0x28] sm:$0xf]
    %v6659 = vld [vmem:[%s6647 + $0x2c] sm:$0xf]
    %v6660 = vld [vmem:[%s6647 + $0x30] sm:$0xf]
    %v6661 = vld [vmem:[%s6647 + $0x34] sm:$0xf]
    %v6662 = vld [vmem:[%s6647 + $0x38] sm:$0xf]
    %v6663 = vld [vmem:[%s6647 + $0x3c] sm:$0xf]
    %v6664 = vld [vmem:[%s6647 + $0x40] sm:$0xf]
    %v6665 = vld [vmem:[%s6647 + $0x44] sm:$0xf]
    %v6666 = vld [vmem:[%s6647 + $0x48] sm:$0xf]
    %v6667 = vld [vmem:[%s6647 + $0x4c] sm:$0xf]
    %v6668 = vld [vmem:[%s6647 + $0x50] sm:$0xf]
    %v6669 = vld [vmem:[%s6647 + $0x54] sm:$0xf]
    %v6670 = vld [vmem:[%s6647 + $0x58] sm:$0xf]
    %v6671 = vld [vmem:[%s6647 + $0x5c] sm:$0xf]
    %v6672 = vld [vmem:[%s6647 + $0x60] sm:$0xf]
    %v6673 = vld [vmem:[%s6647 + $0x64] sm:$0xf]
    %v6674 = vld [vmem:[%s6647 + $0x68] sm:$0xf]
    %v6675 = vld [vmem:[%s6647 + $0x6c] sm:$0xf]
    %v6676 = vld [vmem:[%s6647 + $0x70] sm:$0xf]
    %v6677 = vld [vmem:[%s6647 + $0x74] sm:$0xf]
    %v6678 = vld [vmem:[%s6647 + $0x78] sm:$0xf]
    %v6679 = vld [vmem:[%s6647 + $0x7c] sm:$0xf]
    %v6712 = vunpack.c.l.b16 %v6648
    %v6713 = vunpack.c.l.b16 %v6649
    %v6714 = vunpack.c.l.b16 %v6650
    %v6715 = vunpack.c.l.b16 %v6651
    %v6716 = vunpack.c.l.b16 %v6652
    %v6717 = vunpack.c.l.b16 %v6653
    %v6718 = vunpack.c.l.b16 %v6654
    %v6719 = vunpack.c.l.b16 %v6655
    %v6720 = vunpack.c.l.b16 %v6656
    %v6721 = vunpack.c.l.b16 %v6657
    %v6722 = vunpack.c.l.b16 %v6658
    %v6723 = vunpack.c.l.b16 %v6659
    %v6724 = vunpack.c.l.b16 %v6660
    %v6725 = vunpack.c.l.b16 %v6661
    %v6726 = vunpack.c.l.b16 %v6662
    %v6727 = vunpack.c.l.b16 %v6663
    %v6728 = vunpack.c.l.b16 %v6664
    %v6729 = vunpack.c.l.b16 %v6665
    %v6730 = vunpack.c.l.b16 %v6666
    %v6731 = vunpack.c.l.b16 %v6667
    %v6732 = vunpack.c.l.b16 %v6668
    %v6733 = vunpack.c.l.b16 %v6669
    %v6734 = vunpack.c.l.b16 %v6670
    %v6735 = vunpack.c.l.b16 %v6671
    %v6736 = vunpack.c.l.b16 %v6672
    %v6737 = vunpack.c.l.b16 %v6673
    %v6738 = vunpack.c.l.b16 %v6674
    %v6739 = vunpack.c.l.b16 %v6675
    %v6740 = vunpack.c.l.b16 %v6676
    %v6741 = vunpack.c.l.b16 %v6677
    %v6742 = vunpack.c.l.b16 %v6678
    %v6743 = vunpack.c.l.b16 %v6679
    %v6744 = vpack.c.b16 %v6713, %v6712
    %v6745 = vpack.c.b16 %v6715, %v6714
    %v6746 = vpack.c.b16 %v6717, %v6716
    %v6747 = vpack.c.b16 %v6719, %v6718
    %v6748 = vpack.c.b16 %v6721, %v6720
    %v6749 = vpack.c.b16 %v6723, %v6722
    %v6750 = vpack.c.b16 %v6725, %v6724
    %v6751 = vpack.c.b16 %v6727, %v6726
    %v6752 = vpack.c.b16 %v6729, %v6728
    %v6753 = vpack.c.b16 %v6731, %v6730
    %v6754 = vpack.c.b16 %v6733, %v6732
    %v6755 = vpack.c.b16 %v6735, %v6734
    %v6756 = vpack.c.b16 %v6737, %v6736
    %v6757 = vpack.c.b16 %v6739, %v6738
    %v6758 = vpack.c.b16 %v6741, %v6740
    %v6759 = vpack.c.b16 %v6743, %v6742
    %6776 = vmatprep.subr.bf16.mxu0 0
    %6777 = vmatpush1.bf16.msra.mxu0 %v6751
    %6778 = vmatprep.subr.bf16.mxu0 0
    %6779 = vmatpush1.bf16.msra.mxu0 %v6750
    %6780 = vmatprep.subr.bf16.mxu0 0
    %6781 = vmatpush1.bf16.msra.mxu0 %v6749
    %6782 = vmatprep.subr.bf16.mxu0 0
    %6783 = vmatpush1.bf16.msra.mxu0 %v6748
    %6784 = vmatprep.subr.bf16.mxu0 0
    %6785 = vmatpush1.bf16.msra.mxu0 %v6747
    %6786 = vmatprep.subr.bf16.mxu0 0
    %6787 = vmatpush1.bf16.msra.mxu0 %v6746
    %6788 = vmatprep.subr.bf16.mxu0 0
    %6789 = vmatpush1.bf16.msra.mxu0 %v6745
    %6790 = vmatprep.subr.bf16.mxu0 0
    %6791 = vmatpush1.bf16.msra.mxu0 %v6744
    %6792 = vmatprep.subr.bf16.mxu0 0
    %6793 = vmatpush2.bf16.msra.mxu0 %v6759
    %6794 = vmatprep.subr.bf16.mxu0 0
    %6795 = vmatpush2.bf16.msra.mxu0 %v6758
    %6796 = vmatprep.subr.bf16.mxu0 0
    %6797 = vmatpush2.bf16.msra.mxu0 %v6757
    %6798 = vmatprep.subr.bf16.mxu0 0
    %6799 = vmatpush2.bf16.msra.mxu0 %v6756
    %6800 = vmatprep.subr.bf16.mxu0 0
    %6801 = vmatpush2.bf16.msra.mxu0 %v6755
    %6802 = vmatprep.subr.bf16.mxu0 0
    %6803 = vmatpush2.bf16.msra.mxu0 %v6754
    %6804 = vmatprep.subr.bf16.mxu0 0
    %6805 = vmatpush2.bf16.msra.mxu0 %v6753
    %6806 = vmatprep.subr.bf16.mxu0 0
    %6807 = vmatpush2.bf16.msra.mxu0 %v6752
    %6808 = vmatprep.mubr.bf16.mxu0 %v6640
    %6809 = vmatmul.mubr.bf16.gmra.mxu0 %v6639
    %v6810 = vpop.f32.mrf.mxu0
    %v6811 = vadd.f32 0.0, %v6810
    %v6812 = vpop.f32.mrf.mxu0
    %v6813 = vpop.f32.mrf.mxu0
    %v6814 = vadd.f32 0.0, %v6813
    %v6815 = vpop.f32.mrf.mxu0
    %6816 = vmatprep.mubr.bf16.mxu0 %v6644
    %6817 = vmatmul.mubr.bf16.gmra.mxu0 %v6643
    %v6818 = vpop.f32.mrf.mxu0
    %v6819 = vadd.f32 0.0, %v6818
    %v6820 = vpop.f32.mrf.mxu0
    %v6821 = vpop.f32.mrf.mxu0
    %v6822 = vadd.f32 0.0, %v6821
    %v6823 = vpop.f32.mrf.mxu0
    %6824 = vdwg.mxu0
    %v6825 = vadd.f32 %v6635, %v6811
    %v6826 = vadd.f32 %v6636, %v6814
    %v6827 = vadd.f32 %v6637, %v6819
    %v6828 = vadd.f32 %v6638, %v6822
    %v6829 = vld [vmem:[#allocation2 + $0xe8] sm:$0xff]
    %v6830 = vld [vmem:[#allocation2 + $0xf0] sm:$0xff]
    %v6831 = vld [vmem:[#allocation2 + $0xf8] sm:$0x11]
    %v6832 = vld [vmem:[#allocation2 + $0x100] sm:$0xff]
    %v6833 = vld [vmem:[#allocation2 + $0x108] sm:$0xff]
    %v6834 = vld [vmem:[#allocation2 + $0x110] sm:$0x11]
    %v6838 = vunpack.c.l.b16 %v6829
    %v6839 = vunpack.c.h.b16 %v6829
    %v6840 = vunpack.c.l.b16 %v6830
    %v6841 = vunpack.c.h.b16 %v6830
    %v6842 = vunpack.c.l.b16 %v6831
    %v6843 = vunpack.c.h.b16 %v6831
    %v6844 = vpack.c.b16 %v6840, %v6838
    %v6845 = vpack.c.b16 %v6841, %v6839
    %v6846 = vpack.c.b16 %v6842, %v6842
    %v6847 = vpack.c.b16 %v6843, %v6843
    %v6849 = vshrl.u32 %v6844, 16
    %v6851 = vshll.u32 %v6844, 16
    %v6853 = vrot.slane %v6851, 1
    %v6854 = vor.u32 %v6849, %v6853
    %v6856 = vshll.u32 %v6846, 16
    %v6858 = vrot.slane %v6856, 1
    %v6859 = vsel %vm2747, %v6854, %v6858
    %v6861 = vshrl.u32 %v6845, 16
    %v6863 = vshll.u32 %v6845, 16
    %v6865 = vrot.slane %v6863, 1
    %v6866 = vor.u32 %v6861, %v6865
    %v6868 = vshll.u32 %v6847, 16
    %v6870 = vrot.slane %v6868, 1
    %v6871 = vsel %vm2747, %v6866, %v6870
    %v6877 = vunpack.c.l.b16 %v6832
    %v6878 = vunpack.c.h.b16 %v6832
    %v6879 = vunpack.c.l.b16 %v6833
    %v6880 = vunpack.c.h.b16 %v6833
    %v6881 = vunpack.c.l.b16 %v6834
    %v6882 = vunpack.c.h.b16 %v6834
    %v6883 = vpack.c.b16 %v6879, %v6877
    %v6884 = vpack.c.b16 %v6880, %v6878
    %v6885 = vpack.c.b16 %v6881, %v6881
    %v6886 = vpack.c.b16 %v6882, %v6882
    %v6888 = vshrl.u32 %v6883, 16
    %v6890 = vshll.u32 %v6883, 16
    %v6892 = vrot.slane %v6890, 1
    %v6893 = vor.u32 %v6888, %v6892
    %v6895 = vshll.u32 %v6885, 16
    %v6897 = vrot.slane %v6895, 1
    %v6898 = vsel %vm2747, %v6893, %v6897
    %v6900 = vshrl.u32 %v6884, 16
    %v6902 = vshll.u32 %v6884, 16
    %v6904 = vrot.slane %v6902, 1
    %v6905 = vor.u32 %v6900, %v6904
    %v6907 = vshll.u32 %v6886, 16
    %v6909 = vrot.slane %v6907, 1
    %v6910 = vsel %vm2747, %v6905, %v6909
    %s6913 = scalar_lea.vmem [#allocation6], 2048
    %v6914 = vld [vmem:[%s6913] sm:$0xf]
    %v6915 = vld [vmem:[%s6913 + $0x4] sm:$0xf]
    %v6916 = vld [vmem:[%s6913 + $0x8] sm:$0xf]
    %v6917 = vld [vmem:[%s6913 + $0xc] sm:$0xf]
    %v6918 = vld [vmem:[%s6913 + $0x10] sm:$0xf]
    %v6919 = vld [vmem:[%s6913 + $0x14] sm:$0xf]
    %v6920 = vld [vmem:[%s6913 + $0x18] sm:$0xf]
    %v6921 = vld [vmem:[%s6913 + $0x1c] sm:$0xf]
    %v6922 = vld [vmem:[%s6913 + $0x20] sm:$0xf]
    %v6923 = vld [vmem:[%s6913 + $0x24] sm:$0xf]
    %v6924 = vld [vmem:[%s6913 + $0x28] sm:$0xf]
    %v6925 = vld [vmem:[%s6913 + $0x2c] sm:$0xf]
    %v6926 = vld [vmem:[%s6913 + $0x30] sm:$0xf]
    %v6927 = vld [vmem:[%s6913 + $0x34] sm:$0xf]
    %v6928 = vld [vmem:[%s6913 + $0x38] sm:$0xf]
    %v6929 = vld [vmem:[%s6913 + $0x3c] sm:$0xf]
    %v6930 = vld [vmem:[%s6913 + $0x40] sm:$0xf]
    %v6931 = vld [vmem:[%s6913 + $0x44] sm:$0xf]
    %v6932 = vld [vmem:[%s6913 + $0x48] sm:$0xf]
    %v6933 = vld [vmem:[%s6913 + $0x4c] sm:$0xf]
    %v6934 = vld [vmem:[%s6913 + $0x50] sm:$0xf]
    %v6935 = vld [vmem:[%s6913 + $0x54] sm:$0xf]
    %v6936 = vld [vmem:[%s6913 + $0x58] sm:$0xf]
    %v6937 = vld [vmem:[%s6913 + $0x5c] sm:$0xf]
    %v6938 = vld [vmem:[%s6913 + $0x60] sm:$0xf]
    %v6939 = vld [vmem:[%s6913 + $0x64] sm:$0xf]
    %v6940 = vld [vmem:[%s6913 + $0x68] sm:$0xf]
    %v6941 = vld [vmem:[%s6913 + $0x6c] sm:$0xf]
    %v6942 = vld [vmem:[%s6913 + $0x70] sm:$0xf]
    %v6943 = vld [vmem:[%s6913 + $0x74] sm:$0xf]
    %v6944 = vld [vmem:[%s6913 + $0x78] sm:$0xf]
    %v6945 = vld [vmem:[%s6913 + $0x7c] sm:$0xf]
    %v6978 = vunpack.c.l.b16 %v6914
    %v6979 = vunpack.c.l.b16 %v6915
    %v6980 = vunpack.c.l.b16 %v6916
    %v6981 = vunpack.c.l.b16 %v6917
    %v6982 = vunpack.c.l.b16 %v6918
    %v6983 = vunpack.c.l.b16 %v6919
    %v6984 = vunpack.c.l.b16 %v6920
    %v6985 = vunpack.c.l.b16 %v6921
    %v6986 = vunpack.c.l.b16 %v6922
    %v6987 = vunpack.c.l.b16 %v6923
    %v6988 = vunpack.c.l.b16 %v6924
    %v6989 = vunpack.c.l.b16 %v6925
    %v6990 = vunpack.c.l.b16 %v6926
    %v6991 = vunpack.c.l.b16 %v6927
    %v6992 = vunpack.c.l.b16 %v6928
    %v6993 = vunpack.c.l.b16 %v6929
    %v6994 = vunpack.c.l.b16 %v6930
    %v6995 = vunpack.c.l.b16 %v6931
    %v6996 = vunpack.c.l.b16 %v6932
    %v6997 = vunpack.c.l.b16 %v6933
    %v6998 = vunpack.c.l.b16 %v6934
    %v6999 = vunpack.c.l.b16 %v6935
    %v7000 = vunpack.c.l.b16 %v6936
    %v7001 = vunpack.c.l.b16 %v6937
    %v7002 = vunpack.c.l.b16 %v6938
    %v7003 = vunpack.c.l.b16 %v6939
    %v7004 = vunpack.c.l.b16 %v6940
    %v7005 = vunpack.c.l.b16 %v6941
    %v7006 = vunpack.c.l.b16 %v6942
    %v7007 = vunpack.c.l.b16 %v6943
    %v7008 = vunpack.c.l.b16 %v6944
    %v7009 = vunpack.c.l.b16 %v6945
    %v7010 = vpack.c.b16 %v6979, %v6978
    %v7011 = vpack.c.b16 %v6981, %v6980
    %v7012 = vpack.c.b16 %v6983, %v6982
    %v7013 = vpack.c.b16 %v6985, %v6984
    %v7014 = vpack.c.b16 %v6987, %v6986
    %v7015 = vpack.c.b16 %v6989, %v6988
    %v7016 = vpack.c.b16 %v6991, %v6990
    %v7017 = vpack.c.b16 %v6993, %v6992
    %v7018 = vpack.c.b16 %v6995, %v6994
    %v7019 = vpack.c.b16 %v6997, %v6996
    %v7020 = vpack.c.b16 %v6999, %v6998
    %v7021 = vpack.c.b16 %v7001, %v7000
    %v7022 = vpack.c.b16 %v7003, %v7002
    %v7023 = vpack.c.b16 %v7005, %v7004
    %v7024 = vpack.c.b16 %v7007, %v7006
    %v7025 = vpack.c.b16 %v7009, %v7008
    %7042 = vmatprep.subr.bf16.mxu0 0
    %7043 = vmatpush1.bf16.msra.mxu0 %v7017
    %7044 = vmatprep.subr.bf16.mxu0 0
    %7045 = vmatpush1.bf16.msra.mxu0 %v7016
    %7046 = vmatprep.subr.bf16.mxu0 0
    %7047 = vmatpush1.bf16.msra.mxu0 %v7015
    %7048 = vmatprep.subr.bf16.mxu0 0
    %7049 = vmatpush1.bf16.msra.mxu0 %v7014
    %7050 = vmatprep.subr.bf16.mxu0 0
    %7051 = vmatpush1.bf16.msra.mxu0 %v7013
    %7052 = vmatprep.subr.bf16.mxu0 0
    %7053 = vmatpush1.bf16.msra.mxu0 %v7012
    %7054 = vmatprep.subr.bf16.mxu0 0
    %7055 = vmatpush1.bf16.msra.mxu0 %v7011
    %7056 = vmatprep.subr.bf16.mxu0 0
    %7057 = vmatpush1.bf16.msra.mxu0 %v7010
    %7058 = vmatprep.subr.bf16.mxu0 0
    %7059 = vmatpush2.bf16.msra.mxu0 %v7025
    %7060 = vmatprep.subr.bf16.mxu0 0
    %7061 = vmatpush2.bf16.msra.mxu0 %v7024
    %7062 = vmatprep.subr.bf16.mxu0 0
    %7063 = vmatpush2.bf16.msra.mxu0 %v7023
    %7064 = vmatprep.subr.bf16.mxu0 0
    %7065 = vmatpush2.bf16.msra.mxu0 %v7022
    %7066 = vmatprep.subr.bf16.mxu0 0
    %7067 = vmatpush2.bf16.msra.mxu0 %v7021
    %7068 = vmatprep.subr.bf16.mxu0 0
    %7069 = vmatpush2.bf16.msra.mxu0 %v7020
    %7070 = vmatprep.subr.bf16.mxu0 0
    %7071 = vmatpush2.bf16.msra.mxu0 %v7019
    %7072 = vmatprep.subr.bf16.mxu0 0
    %7073 = vmatpush2.bf16.msra.mxu0 %v7018
    %7074 = vmatprep.mubr.bf16.mxu0 %v6871
    %7075 = vmatmul.mubr.bf16.gmra.mxu0 %v6859
    %v7076 = vpop.f32.mrf.mxu0
    %v7077 = vadd.f32 0.0, %v7076
    %v7078 = vpop.f32.mrf.mxu0
    %v7079 = vpop.f32.mrf.mxu0
    %v7080 = vadd.f32 0.0, %v7079
    %v7081 = vpop.f32.mrf.mxu0
    %7082 = vmatprep.mubr.bf16.mxu0 %v6910
    %7083 = vmatmul.mubr.bf16.gmra.mxu0 %v6898
    %v7084 = vpop.f32.mrf.mxu0
    %v7085 = vadd.f32 0.0, %v7084
    %v7086 = vpop.f32.mrf.mxu0
    %v7087 = vpop.f32.mrf.mxu0
    %v7088 = vadd.f32 0.0, %v7087
    %v7089 = vpop.f32.mrf.mxu0
    %7090 = vdwg.mxu0
    %v7091 = vadd.f32 %v6825, %v7077
    %v7092 = vadd.f32 %v6826, %v7080
    %v7093 = vadd.f32 %v6827, %v7085
    %v7094 = vadd.f32 %v6828, %v7088
    %v7095 = vld [vmem:[#allocation2 + $0xe8] sm:$0xee]
    %v7096 = vld [vmem:[#allocation2 + $0x100] sm:$0xee]
    %v7098 = vunpack.c.l.b16 %v7095
    %v7099 = vunpack.c.h.b16 %v7095
    %v7100 = vpack.c.b16 %v6840, %v7098
    %v7101 = vpack.c.b16 %v6841, %v7099
    %v7102 = vrot.slane %v7100, 1
    %v7103 = vrot.slane %v6846, 1
    %v7104 = vsel %vm3194, %v7102, %v7103
    %v7105 = vrot.slane %v7101, 1
    %v7106 = vrot.slane %v6847, 1
    %v7107 = vsel %vm3194, %v7105, %v7106
    %v7111 = vunpack.c.l.b16 %v7096
    %v7112 = vunpack.c.h.b16 %v7096
    %v7113 = vpack.c.b16 %v6879, %v7111
    %v7114 = vpack.c.b16 %v6880, %v7112
    %v7115 = vrot.slane %v7113, 1
    %v7116 = vrot.slane %v6885, 1
    %v7117 = vsel %vm3194, %v7115, %v7116
    %v7118 = vrot.slane %v7114, 1
    %v7119 = vrot.slane %v6886, 1
    %v7120 = vsel %vm3194, %v7118, %v7119
    %s7123 = scalar_lea.vmem [#allocation6], 2176
    %v7124 = vld [vmem:[%s7123] sm:$0xf]
    %v7125 = vld [vmem:[%s7123 + $0x4] sm:$0xf]
    %v7126 = vld [vmem:[%s7123 + $0x8] sm:$0xf]
    %v7127 = vld [vmem:[%s7123 + $0xc] sm:$0xf]
    %v7128 = vld [vmem:[%s7123 + $0x10] sm:$0xf]
    %v7129 = vld [vmem:[%s7123 + $0x14] sm:$0xf]
    %v7130 = vld [vmem:[%s7123 + $0x18] sm:$0xf]
    %v7131 = vld [vmem:[%s7123 + $0x1c] sm:$0xf]
    %v7132 = vld [vmem:[%s7123 + $0x20] sm:$0xf]
    %v7133 = vld [vmem:[%s7123 + $0x24] sm:$0xf]
    %v7134 = vld [vmem:[%s7123 + $0x28] sm:$0xf]
    %v7135 = vld [vmem:[%s7123 + $0x2c] sm:$0xf]
    %v7136 = vld [vmem:[%s7123 + $0x30] sm:$0xf]
    %v7137 = vld [vmem:[%s7123 + $0x34] sm:$0xf]
    %v7138 = vld [vmem:[%s7123 + $0x38] sm:$0xf]
    %v7139 = vld [vmem:[%s7123 + $0x3c] sm:$0xf]
    %v7140 = vld [vmem:[%s7123 + $0x40] sm:$0xf]
    %v7141 = vld [vmem:[%s7123 + $0x44] sm:$0xf]
    %v7142 = vld [vmem:[%s7123 + $0x48] sm:$0xf]
    %v7143 = vld [vmem:[%s7123 + $0x4c] sm:$0xf]
    %v7144 = vld [vmem:[%s7123 + $0x50] sm:$0xf]
    %v7145 = vld [vmem:[%s7123 + $0x54] sm:$0xf]
    %v7146 = vld [vmem:[%s7123 + $0x58] sm:$0xf]
    %v7147 = vld [vmem:[%s7123 + $0x5c] sm:$0xf]
    %v7148 = vld [vmem:[%s7123 + $0x60] sm:$0xf]
    %v7149 = vld [vmem:[%s7123 + $0x64] sm:$0xf]
    %v7150 = vld [vmem:[%s7123 + $0x68] sm:$0xf]
    %v7151 = vld [vmem:[%s7123 + $0x6c] sm:$0xf]
    %v7152 = vld [vmem:[%s7123 + $0x70] sm:$0xf]
    %v7153 = vld [vmem:[%s7123 + $0x74] sm:$0xf]
    %v7154 = vld [vmem:[%s7123 + $0x78] sm:$0xf]
    %v7155 = vld [vmem:[%s7123 + $0x7c] sm:$0xf]
    %v7188 = vunpack.c.l.b16 %v7124
    %v7189 = vunpack.c.l.b16 %v7125
    %v7190 = vunpack.c.l.b16 %v7126
    %v7191 = vunpack.c.l.b16 %v7127
    %v7192 = vunpack.c.l.b16 %v7128
    %v7193 = vunpack.c.l.b16 %v7129
    %v7194 = vunpack.c.l.b16 %v7130
    %v7195 = vunpack.c.l.b16 %v7131
    %v7196 = vunpack.c.l.b16 %v7132
    %v7197 = vunpack.c.l.b16 %v7133
    %v7198 = vunpack.c.l.b16 %v7134
    %v7199 = vunpack.c.l.b16 %v7135
    %v7200 = vunpack.c.l.b16 %v7136
    %v7201 = vunpack.c.l.b16 %v7137
    %v7202 = vunpack.c.l.b16 %v7138
    %v7203 = vunpack.c.l.b16 %v7139
    %v7204 = vunpack.c.l.b16 %v7140
    %v7205 = vunpack.c.l.b16 %v7141
    %v7206 = vunpack.c.l.b16 %v7142
    %v7207 = vunpack.c.l.b16 %v7143
    %v7208 = vunpack.c.l.b16 %v7144
    %v7209 = vunpack.c.l.b16 %v7145
    %v7210 = vunpack.c.l.b16 %v7146
    %v7211 = vunpack.c.l.b16 %v7147
    %v7212 = vunpack.c.l.b16 %v7148
    %v7213 = vunpack.c.l.b16 %v7149
    %v7214 = vunpack.c.l.b16 %v7150
    %v7215 = vunpack.c.l.b16 %v7151
    %v7216 = vunpack.c.l.b16 %v7152
    %v7217 = vunpack.c.l.b16 %v7153
    %v7218 = vunpack.c.l.b16 %v7154
    %v7219 = vunpack.c.l.b16 %v7155
    %v7220 = vpack.c.b16 %v7189, %v7188
    %v7221 = vpack.c.b16 %v7191, %v7190
    %v7222 = vpack.c.b16 %v7193, %v7192
    %v7223 = vpack.c.b16 %v7195, %v7194
    %v7224 = vpack.c.b16 %v7197, %v7196
    %v7225 = vpack.c.b16 %v7199, %v7198
    %v7226 = vpack.c.b16 %v7201, %v7200
    %v7227 = vpack.c.b16 %v7203, %v7202
    %v7228 = vpack.c.b16 %v7205, %v7204
    %v7229 = vpack.c.b16 %v7207, %v7206
    %v7230 = vpack.c.b16 %v7209, %v7208
    %v7231 = vpack.c.b16 %v7211, %v7210
    %v7232 = vpack.c.b16 %v7213, %v7212
    %v7233 = vpack.c.b16 %v7215, %v7214
    %v7234 = vpack.c.b16 %v7217, %v7216
    %v7235 = vpack.c.b16 %v7219, %v7218
    %7252 = vmatprep.subr.bf16.mxu0 0
    %7253 = vmatpush1.bf16.msra.mxu0 %v7227
    %7254 = vmatprep.subr.bf16.mxu0 0
    %7255 = vmatpush1.bf16.msra.mxu0 %v7226
    %7256 = vmatprep.subr.bf16.mxu0 0
    %7257 = vmatpush1.bf16.msra.mxu0 %v7225
    %7258 = vmatprep.subr.bf16.mxu0 0
    %7259 = vmatpush1.bf16.msra.mxu0 %v7224
    %7260 = vmatprep.subr.bf16.mxu0 0
    %7261 = vmatpush1.bf16.msra.mxu0 %v7223
    %7262 = vmatprep.subr.bf16.mxu0 0
    %7263 = vmatpush1.bf16.msra.mxu0 %v7222
    %7264 = vmatprep.subr.bf16.mxu0 0
    %7265 = vmatpush1.bf16.msra.mxu0 %v7221
    %7266 = vmatprep.subr.bf16.mxu0 0
    %7267 = vmatpush1.bf16.msra.mxu0 %v7220
    %7268 = vmatprep.subr.bf16.mxu0 0
    %7269 = vmatpush2.bf16.msra.mxu0 %v7235
    %7270 = vmatprep.subr.bf16.mxu0 0
    %7271 = vmatpush2.bf16.msra.mxu0 %v7234
    %7272 = vmatprep.subr.bf16.mxu0 0
    %7273 = vmatpush2.bf16.msra.mxu0 %v7233
    %7274 = vmatprep.subr.bf16.mxu0 0
    %7275 = vmatpush2.bf16.msra.mxu0 %v7232
    %7276 = vmatprep.subr.bf16.mxu0 0
    %7277 = vmatpush2.bf16.msra.mxu0 %v7231
    %7278 = vmatprep.subr.bf16.mxu0 0
    %7279 = vmatpush2.bf16.msra.mxu0 %v7230
    %7280 = vmatprep.subr.bf16.mxu0 0
    %7281 = vmatpush2.bf16.msra.mxu0 %v7229
    %7282 = vmatprep.subr.bf16.mxu0 0
    %7283 = vmatpush2.bf16.msra.mxu0 %v7228
    %7284 = vmatprep.mubr.bf16.mxu0 %v7107
    %7285 = vmatmul.mubr.bf16.gmra.mxu0 %v7104
    %v7286 = vpop.f32.mrf.mxu0
    %v7287 = vadd.f32 0.0, %v7286
    %v7288 = vpop.f32.mrf.mxu0
    %v7289 = vpop.f32.mrf.mxu0
    %v7290 = vadd.f32 0.0, %v7289
    %v7291 = vpop.f32.mrf.mxu0
    %7292 = vmatprep.mubr.bf16.mxu0 %v7120
    %7293 = vmatmul.mubr.bf16.gmra.mxu0 %v7117
    %v7294 = vpop.f32.mrf.mxu0
    %v7295 = vadd.f32 0.0, %v7294
    %v7296 = vpop.f32.mrf.mxu0
    %v7297 = vpop.f32.mrf.mxu0
    %v7298 = vadd.f32 0.0, %v7297
    %v7299 = vpop.f32.mrf.mxu0
    %7300 = vdwg.mxu0
    %v7301 = vadd.f32 %v7091, %v7287
    %v7302 = vadd.f32 %v7092, %v7290
    %v7303 = vadd.f32 %v7093, %v7295
    %v7304 = vadd.f32 %v7094, %v7298
    %v7305 = vadd.f32 %v7301, %v7302
    %v7306 = vadd.f32 %v7305, %v7303
    %v7307 = vadd.f32 %v7306, %v7304
    %v7308 = vrot.slane %v7307, 4
    %v7309 = vadd.f32 %v7307, %v7308
    %v7310 = vrot.slane %v7309, 2
    %v7311 = vadd.f32 %v7309, %v7310
    %v7312 = vrot.slane %v7311, 1
    %v7313 = vadd.f32 %v7311, %v7312
    %v7314 = vmul.f32 %v7301, %v7301
    %v7315 = vmul.f32 %v7302, %v7302
    %v7316 = vmul.f32 %v7303, %v7303
    %v7317 = vmul.f32 %v7304, %v7304
    %v7318 = vadd.f32 %v7314, %v7315
    %v7319 = vadd.f32 %v7318, %v7316
    %v7320 = vadd.f32 %v7319, %v7317
    %v7321 = vrot.slane %v7320, 4
    %v7322 = vadd.f32 %v7320, %v7321
    %v7323 = vrot.slane %v7322, 2
    %v7324 = vadd.f32 %v7322, %v7323
    %v7325 = vrot.slane %v7324, 1
    %v7326 = vadd.f32 %v7324, %v7325
    %v7327 = vmul.f32 %v7313, 0.03125
    %v7328 = vmul.f32 %v7326, 0.03125
    %v7329 = vmul.f32 %v7327, %v7327
    %v7330 = vsub.f32 %v7328, %v7329
    %v7331 = vmax.f32 %v7330, 0.0
    %v7332 = vld [vmem:[#allocation8 + $0x3] sm:$0x1]
    %v7333 = vld [vmem:[#allocation9 + $0x3] sm:$0x1]
    %v7334 = vld [vmem:[#allocation11 + $0x3] sm:$0x1]
    %v7335 = vadd.f32 %v7331, 1e-05
    %v7336 = vrsqrt.pop %v7335
    %v7337 = vmul.f32 %v7332, %v7336
    %v7338 = vmul.f32 %v7327, %v7337
    %v7339 = vsub.f32 %v7333, %v7338
    %v7340 = vlaneseq
    %v7341 = vshrl.u32 %v7340, 7
    %v7342 = vsub.s32 0, %v7341
    %v7343 = vrot.slane %v7337, %v7342
    %v7344 = vmul.f32 %v7301, %v7343
    %v7345 = vmul.f32 %v7302, %v7343
    %v7346 = vmul.f32 %v7303, %v7343
    %v7347 = vmul.f32 %v7304, %v7343
    %v7348 = vlaneseq
    %v7349 = vshrl.u32 %v7348, 7
    %v7350 = vsub.s32 0, %v7349
    %v7351 = vrot.slane %v7339, %v7350
    %v7352 = vadd.f32 %v7344, %v7351
    %v7353 = vadd.f32 %v7345, %v7351
    %v7354 = vadd.f32 %v7346, %v7351
    %v7355 = vadd.f32 %v7347, %v7351
    %vm7356 = vcmp.gt.f32.partialorder %v7352, 0.0
    %vm7357 = vcmp.gt.f32.partialorder %v7353, 0.0
    %vm7358 = vcmp.gt.f32.partialorder %v7354, 0.0
    %vm7359 = vcmp.gt.f32.partialorder %v7355, 0.0
    %v7360 = vlaneseq
    %v7361 = vshrl.u32 %v7360, 7
    %v7362 = vsub.s32 0, %v7361
    %v7363 = vrot.slane %v7334, %v7362
    %v7364 = vmul.f32 %v7363, %v7352
    %v7365 = vmul.f32 %v7363, %v7353
    %v7366 = vmul.f32 %v7363, %v7354
    %v7367 = vmul.f32 %v7363, %v7355
    %v7368 = vsel %vm7356, %v7352, %v7364
    %v7369 = vsel %vm7357, %v7353, %v7365
    %v7370 = vsel %vm7358, %v7354, %v7366
    %v7371 = vsel %vm7359, %v7355, %v7367
    %v7372 = vpack.c.bf16 %v7369, %v7368
    %v7373 = vpack.c.bf16 %v7371, %v7370
    %v7374 = vld [vmem:[%s3] sm:$0xf]
    %v7375 = vld [vmem:[%s3 + $0x8] sm:$0xf]
    %v7378 = vunpack.c.l.b16 %v7374
    %v7379 = vunpack.c.l.b16 %v7375
    %v7380 = vpack.c.b16 %v7379, %v7378
    %vm7381 = vcmask 261120
    %v7383 = vsel %vm7381, %v7380, 0
    %7385 = vmatprep.subr.bf16.mxu0 0
    %7386 = vmatpush1.bf16.msra.mxu0 0
    %7387 = vmatprep.subr.bf16.mxu0 0
    %7388 = vmatpush1.bf16.msra.mxu0 0
    %7389 = vmatprep.subr.bf16.mxu0 0
    %7390 = vmatpush1.bf16.msra.mxu0 0
    %7391 = vmatprep.subr.bf16.mxu0 0
    %7392 = vmatpush1.bf16.msra.mxu0 0
    %7393 = vmatprep.subr.bf16.mxu0 0
    %7394 = vmatpush1.bf16.msra.mxu0 0
    %7395 = vmatprep.subr.bf16.mxu0 0
    %7396 = vmatpush1.bf16.msra.mxu0 0
    %7397 = vmatprep.subr.bf16.mxu0 0
    %7398 = vmatpush1.bf16.msra.mxu0 %v7373
    %7399 = vmatprep.subr.bf16.mxu0 0
    %7400 = vmatpush1.bf16.msra.mxu0 %v7372
    %7401 = vmatprep.subr.bf16.mxu0 0
    %7402 = vmatpush2.bf16.msra.mxu0 0
    %7403 = vmatprep.subr.bf16.mxu0 0
    %7404 = vmatpush2.bf16.msra.mxu0 0
    %7405 = vmatprep.subr.bf16.mxu0 0
    %7406 = vmatpush2.bf16.msra.mxu0 0
    %7407 = vmatprep.subr.bf16.mxu0 0
    %7408 = vmatpush2.bf16.msra.mxu0 0
    %7409 = vmatprep.subr.bf16.mxu0 0
    %7410 = vmatpush2.bf16.msra.mxu0 0
    %7411 = vmatprep.subr.bf16.mxu0 0
    %7412 = vmatpush2.bf16.msra.mxu0 0
    %7413 = vmatprep.subr.bf16.mxu0 0
    %7414 = vmatpush2.bf16.msra.mxu0 0
    %7415 = vmatprep.subr.bf16.mxu0 0
    %7416 = vmatpush2.bf16.msra.mxu0 0
    %7417 = vmatprep.mubr.bf16.mxu0 0
    %7418 = vmatmul.mubr.bf16.gmra.mxu0 %v7383
    %v7419 = vpop.f32.mrf.mxu0
    %v7420 = vadd.f32 0.0, %v7419
    %v7421 = vpop.f32.mrf.mxu0
    %v7422 = vpop.f32.mrf.mxu0
    %v7423 = vadd.f32 0.0, %v7422
    %v7424 = vpop.f32.mrf.mxu0
    %7425 = vdwg.mxu0
    %v7426 = vpack.c.bf16 %v7423, %v7420
    %v7427 = vld [vmem:[%s4] sm:$0xf]
    %v7428 = vld [vmem:[%s4 + $0x8] sm:$0xf]
    %v7431 = vunpack.c.l.b16 %v7427
    %v7432 = vunpack.c.l.b16 %v7428
    %v7433 = vpack.c.b16 %v7432, %v7431
    %v7435 = vsel %vm7381, %v7433, 0
    %7437 = vmatprep.subr.bf16.mxu0 0
    %7438 = vmatpush1.bf16.msra.mxu0 0
    %7439 = vmatprep.subr.bf16.mxu0 0
    %7440 = vmatpush1.bf16.msra.mxu0 0
    %7441 = vmatprep.subr.bf16.mxu0 0
    %7442 = vmatpush1.bf16.msra.mxu0 0
    %7443 = vmatprep.subr.bf16.mxu0 0
    %7444 = vmatpush1.bf16.msra.mxu0 0
    %7445 = vmatprep.subr.bf16.mxu0 0
    %7446 = vmatpush1.bf16.msra.mxu0 0
    %7447 = vmatprep.subr.bf16.mxu0 0
    %7448 = vmatpush1.bf16.msra.mxu0 0
    %7449 = vmatprep.subr.bf16.mxu0 0
    %7450 = vmatpush1.bf16.msra.mxu0 %v7373
    %7451 = vmatprep.subr.bf16.mxu0 0
    %7452 = vmatpush1.bf16.msra.mxu0 %v7372
    %7453 = vmatprep.subr.bf16.mxu0 0
    %7454 = vmatpush2.bf16.msra.mxu0 0
    %7455 = vmatprep.subr.bf16.mxu0 0
    %7456 = vmatpush2.bf16.msra.mxu0 0
    %7457 = vmatprep.subr.bf16.mxu0 0
    %7458 = vmatpush2.bf16.msra.mxu0 0
    %7459 = vmatprep.subr.bf16.mxu0 0
    %7460 = vmatpush2.bf16.msra.mxu0 0
    %7461 = vmatprep.subr.bf16.mxu0 0
    %7462 = vmatpush2.bf16.msra.mxu0 0
    %7463 = vmatprep.subr.bf16.mxu0 0
    %7464 = vmatpush2.bf16.msra.mxu0 0
    %7465 = vmatprep.subr.bf16.mxu0 0
    %7466 = vmatpush2.bf16.msra.mxu0 0
    %7467 = vmatprep.subr.bf16.mxu0 0
    %7468 = vmatpush2.bf16.msra.mxu0 0
    %7469 = vmatprep.mubr.bf16.mxu0 0
    %7470 = vmatmul.mubr.bf16.gmra.mxu0 %v7435
    %v7471 = vpop.f32.mrf.mxu0
    %v7472 = vadd.f32 0.0, %v7471
    %v7473 = vpop.f32.mrf.mxu0
    %v7474 = vpop.f32.mrf.mxu0
    %v7475 = vadd.f32 0.0, %v7474
    %v7476 = vpop.f32.mrf.mxu0
    %7477 = vdwg.mxu0
    %v7478 = vpack.c.bf16 %v7475, %v7472
    %v7481 = vunpack.c.l.b16 %v7426
    %v7482 = vunpack.c.l.b16 %v7478
    %v7483 = vpack.c.b16 %v7482, %v7481
    %7485 = vst [vmem:[#allocation2 + $0x118] sm:$0xff] %v7483
    %v7486 = vunpack.c.h.b16 %v7426
    %v7487 = vunpack.c.h.b16 %v7478
    %v7488 = vpack.c.b16 %v7487, %v7486
    %7490 = vst [vmem:[#allocation2 + $0x128] sm:$0xff] %v7488
    %v7491 = vld [vmem:[#allocation2 + $0x110] sm:$0xcc]
    %v7492 = vld [vmem:[#allocation2 + $0x118] sm:$0x77]
    %v7493 = vld [vmem:[#allocation2 + $0x120] sm:$0xcc]
    %v7494 = vld [vmem:[#allocation2 + $0x128] sm:$0x77]
    %v7497 = vunpack.c.l.b16 %v7491
    %v7498 = vunpack.c.h.b16 %v7491
    %v7499 = vunpack.c.l.b16 %v7492
    %v7500 = vunpack.c.h.b16 %v7492
    %v7501 = vpack.c.b16 %v7499, %v7497
    %v7502 = vpack.c.b16 %v7500, %v7498
    %v7504 = vshrl.u32 %v7501, 16
    %v7506 = vrot.slane %v7504, 2
    %v7507 = vshll.u32 %v7501, 16
    %v7509 = vrot.slane %v7507, 3
    %v7510 = vor.u32 %v7506, %v7509
    %v7512 = vshrl.u32 %v7502, 16
    %v7514 = vrot.slane %v7512, 2
    %v7515 = vshll.u32 %v7502, 16
    %v7517 = vrot.slane %v7515, 3
    %v7518 = vor.u32 %v7514, %v7517
    %v7521 = vunpack.c.l.b16 %v7493
    %v7522 = vunpack.c.h.b16 %v7493
    %v7523 = vunpack.c.l.b16 %v7494
    %v7524 = vunpack.c.h.b16 %v7494
    %v7525 = vpack.c.b16 %v7523, %v7521
    %v7526 = vpack.c.b16 %v7524, %v7522
    %v7528 = vshrl.u32 %v7525, 16
    %v7530 = vrot.slane %v7528, 6
    %v7531 = vshll.u32 %v7525, 16
    %v7533 = vrot.slane %v7531, 7
    %v7534 = vor.u32 %v7530, %v7533
    %v7536 = vshrl.u32 %v7526, 16
    %v7538 = vrot.slane %v7536, 6
    %v7539 = vshll.u32 %v7526, 16
    %v7541 = vrot.slane %v7539, 7
    %v7542 = vor.u32 %v7538, %v7541
    %vm7543 = vcmask 1043456
    %v7546 = vsel %vm7543, %v7510, %v7534
    %v7550 = vsel %vm7543, %v7518, %v7542
    %s7552 = scalar_lea.vmem [#allocation6], 2304
    %v7553 = vld [vmem:[%s7552] sm:$0xf]
    %v7554 = vld [vmem:[%s7552 + $0x4] sm:$0xf]
    %v7555 = vld [vmem:[%s7552 + $0x8] sm:$0xf]
    %v7556 = vld [vmem:[%s7552 + $0xc] sm:$0xf]
    %v7557 = vld [vmem:[%s7552 + $0x10] sm:$0xf]
    %v7558 = vld [vmem:[%s7552 + $0x14] sm:$0xf]
    %v7559 = vld [vmem:[%s7552 + $0x18] sm:$0xf]
    %v7560 = vld [vmem:[%s7552 + $0x1c] sm:$0xf]
    %v7561 = vld [vmem:[%s7552 + $0x20] sm:$0xf]
    %v7562 = vld [vmem:[%s7552 + $0x24] sm:$0xf]
    %v7563 = vld [vmem:[%s7552 + $0x28] sm:$0xf]
    %v7564 = vld [vmem:[%s7552 + $0x2c] sm:$0xf]
    %v7565 = vld [vmem:[%s7552 + $0x30] sm:$0xf]
    %v7566 = vld [vmem:[%s7552 + $0x34] sm:$0xf]
    %v7567 = vld [vmem:[%s7552 + $0x38] sm:$0xf]
    %v7568 = vld [vmem:[%s7552 + $0x3c] sm:$0xf]
    %v7569 = vld [vmem:[%s7552 + $0x40] sm:$0xf]
    %v7570 = vld [vmem:[%s7552 + $0x44] sm:$0xf]
    %v7571 = vld [vmem:[%s7552 + $0x48] sm:$0xf]
    %v7572 = vld [vmem:[%s7552 + $0x4c] sm:$0xf]
    %v7573 = vld [vmem:[%s7552 + $0x50] sm:$0xf]
    %v7574 = vld [vmem:[%s7552 + $0x54] sm:$0xf]
    %v7575 = vld [vmem:[%s7552 + $0x58] sm:$0xf]
    %v7576 = vld [vmem:[%s7552 + $0x5c] sm:$0xf]
    %v7577 = vld [vmem:[%s7552 + $0x60] sm:$0xf]
    %v7578 = vld [vmem:[%s7552 + $0x64] sm:$0xf]
    %v7579 = vld [vmem:[%s7552 + $0x68] sm:$0xf]
    %v7580 = vld [vmem:[%s7552 + $0x6c] sm:$0xf]
    %v7581 = vld [vmem:[%s7552 + $0x70] sm:$0xf]
    %v7582 = vld [vmem:[%s7552 + $0x74] sm:$0xf]
    %v7583 = vld [vmem:[%s7552 + $0x78] sm:$0xf]
    %v7584 = vld [vmem:[%s7552 + $0x7c] sm:$0xf]
    %v7585 = vld [vmem:[#allocation2 + $0x110] sm:$0x88]
    %v7586 = vld [vmem:[#allocation2 + $0x120] sm:$0x88]
    %v7588 = vunpack.c.l.b16 %v7585
    %v7589 = vunpack.c.h.b16 %v7585
    %v7590 = vpack.c.b16 %v7499, %v7588
    %v7591 = vpack.c.b16 %v7500, %v7589
    %v7592 = vrot.slane %v7590, 3
    %v7593 = vrot.slane %v7591, 3
    %v7595 = vunpack.c.l.b16 %v7586
    %v7596 = vunpack.c.h.b16 %v7586
    %v7597 = vpack.c.b16 %v7523, %v7595
    %v7598 = vpack.c.b16 %v7524, %v7596
    %v7599 = vrot.slane %v7597, 7
    %v7600 = vrot.slane %v7598, 7
    %v7603 = vsel %vm7543, %v7592, %v7599
    %v7607 = vsel %vm7543, %v7593, %v7600
    %s7609 = scalar_lea.vmem [#allocation6], 2432
    %v7610 = vld [vmem:[%s7609] sm:$0xf]
    %v7611 = vld [vmem:[%s7609 + $0x4] sm:$0xf]
    %v7612 = vld [vmem:[%s7609 + $0x8] sm:$0xf]
    %v7613 = vld [vmem:[%s7609 + $0xc] sm:$0xf]
    %v7614 = vld [vmem:[%s7609 + $0x10] sm:$0xf]
    %v7615 = vld [vmem:[%s7609 + $0x14] sm:$0xf]
    %v7616 = vld [vmem:[%s7609 + $0x18] sm:$0xf]
    %v7617 = vld [vmem:[%s7609 + $0x1c] sm:$0xf]
    %v7618 = vld [vmem:[%s7609 + $0x20] sm:$0xf]
    %v7619 = vld [vmem:[%s7609 + $0x24] sm:$0xf]
    %v7620 = vld [vmem:[%s7609 + $0x28] sm:$0xf]
    %v7621 = vld [vmem:[%s7609 + $0x2c] sm:$0xf]
    %v7622 = vld [vmem:[%s7609 + $0x30] sm:$0xf]
    %v7623 = vld [vmem:[%s7609 + $0x34] sm:$0xf]
    %v7624 = vld [vmem:[%s7609 + $0x38] sm:$0xf]
    %v7625 = vld [vmem:[%s7609 + $0x3c] sm:$0xf]
    %v7626 = vld [vmem:[%s7609 + $0x40] sm:$0xf]
    %v7627 = vld [vmem:[%s7609 + $0x44] sm:$0xf]
    %v7628 = vld [vmem:[%s7609 + $0x48] sm:$0xf]
    %v7629 = vld [vmem:[%s7609 + $0x4c] sm:$0xf]
    %v7630 = vld [vmem:[%s7609 + $0x50] sm:$0xf]
    %v7631 = vld [vmem:[%s7609 + $0x54] sm:$0xf]
    %v7632 = vld [vmem:[%s7609 + $0x58] sm:$0xf]
    %v7633 = vld [vmem:[%s7609 + $0x5c] sm:$0xf]
    %v7634 = vld [vmem:[%s7609 + $0x60] sm:$0xf]
    %v7635 = vld [vmem:[%s7609 + $0x64] sm:$0xf]
    %v7636 = vld [vmem:[%s7609 + $0x68] sm:$0xf]
    %v7637 = vld [vmem:[%s7609 + $0x6c] sm:$0xf]
    %v7638 = vld [vmem:[%s7609 + $0x70] sm:$0xf]
    %v7639 = vld [vmem:[%s7609 + $0x74] sm:$0xf]
    %v7640 = vld [vmem:[%s7609 + $0x78] sm:$0xf]
    %v7641 = vld [vmem:[%s7609 + $0x7c] sm:$0xf]
    %v7674 = vunpack.c.l.b16 %v7610
    %v7675 = vunpack.c.l.b16 %v7611
    %v7676 = vunpack.c.l.b16 %v7612
    %v7677 = vunpack.c.l.b16 %v7613
    %v7678 = vunpack.c.l.b16 %v7614
    %v7679 = vunpack.c.l.b16 %v7615
    %v7680 = vunpack.c.l.b16 %v7616
    %v7681 = vunpack.c.l.b16 %v7617
    %v7682 = vunpack.c.l.b16 %v7618
    %v7683 = vunpack.c.l.b16 %v7619
    %v7684 = vunpack.c.l.b16 %v7620
    %v7685 = vunpack.c.l.b16 %v7621
    %v7686 = vunpack.c.l.b16 %v7622
    %v7687 = vunpack.c.l.b16 %v7623
    %v7688 = vunpack.c.l.b16 %v7624
    %v7689 = vunpack.c.l.b16 %v7625
    %v7690 = vunpack.c.l.b16 %v7626
    %v7691 = vunpack.c.l.b16 %v7627
    %v7692 = vunpack.c.l.b16 %v7628
    %v7693 = vunpack.c.l.b16 %v7629
    %v7694 = vunpack.c.l.b16 %v7630
    %v7695 = vunpack.c.l.b16 %v7631
    %v7696 = vunpack.c.l.b16 %v7632
    %v7697 = vunpack.c.l.b16 %v7633
    %v7698 = vunpack.c.l.b16 %v7634
    %v7699 = vunpack.c.l.b16 %v7635
    %v7700 = vunpack.c.l.b16 %v7636
    %v7701 = vunpack.c.l.b16 %v7637
    %v7702 = vunpack.c.l.b16 %v7638
    %v7703 = vunpack.c.l.b16 %v7639
    %v7704 = vunpack.c.l.b16 %v7640
    %v7705 = vunpack.c.l.b16 %v7641
    %v7706 = vpack.c.b16 %v7675, %v7674
    %v7707 = vpack.c.b16 %v7677, %v7676
    %v7708 = vpack.c.b16 %v7679, %v7678
    %v7709 = vpack.c.b16 %v7681, %v7680
    %v7710 = vpack.c.b16 %v7683, %v7682
    %v7711 = vpack.c.b16 %v7685, %v7684
    %v7712 = vpack.c.b16 %v7687, %v7686
    %v7713 = vpack.c.b16 %v7689, %v7688
    %v7714 = vpack.c.b16 %v7691, %v7690
    %v7715 = vpack.c.b16 %v7693, %v7692
    %v7716 = vpack.c.b16 %v7695, %v7694
    %v7717 = vpack.c.b16 %v7697, %v7696
    %v7718 = vpack.c.b16 %v7699, %v7698
    %v7719 = vpack.c.b16 %v7701, %v7700
    %v7720 = vpack.c.b16 %v7703, %v7702
    %v7721 = vpack.c.b16 %v7705, %v7704
    %7738 = vmatprep.subr.bf16.mxu0 0
    %7739 = vmatpush1.bf16.msra.mxu0 %v7713
    %7740 = vmatprep.subr.bf16.mxu0 0
    %7741 = vmatpush1.bf16.msra.mxu0 %v7712
    %7742 = vmatprep.subr.bf16.mxu0 0
    %7743 = vmatpush1.bf16.msra.mxu0 %v7711
    %7744 = vmatprep.subr.bf16.mxu0 0
    %7745 = vmatpush1.bf16.msra.mxu0 %v7710
    %7746 = vmatprep.subr.bf16.mxu0 0
    %7747 = vmatpush1.bf16.msra.mxu0 %v7709
    %7748 = vmatprep.subr.bf16.mxu0 0
    %7749 = vmatpush1.bf16.msra.mxu0 %v7708
    %7750 = vmatprep.subr.bf16.mxu0 0
    %7751 = vmatpush1.bf16.msra.mxu0 %v7707
    %7752 = vmatprep.subr.bf16.mxu0 0
    %7753 = vmatpush1.bf16.msra.mxu0 %v7706
    %7754 = vmatprep.subr.bf16.mxu0 0
    %7755 = vmatpush2.bf16.msra.mxu0 %v7721
    %7756 = vmatprep.subr.bf16.mxu0 0
    %7757 = vmatpush2.bf16.msra.mxu0 %v7720
    %7758 = vmatprep.subr.bf16.mxu0 0
    %7759 = vmatpush2.bf16.msra.mxu0 %v7719
    %7760 = vmatprep.subr.bf16.mxu0 0
    %7761 = vmatpush2.bf16.msra.mxu0 %v7718
    %7762 = vmatprep.subr.bf16.mxu0 0
    %7763 = vmatpush2.bf16.msra.mxu0 %v7717
    %7764 = vmatprep.subr.bf16.mxu0 0
    %7765 = vmatpush2.bf16.msra.mxu0 %v7716
    %7766 = vmatprep.subr.bf16.mxu0 0
    %7767 = vmatpush2.bf16.msra.mxu0 %v7715
    %7768 = vmatprep.subr.bf16.mxu0 0
    %7769 = vmatpush2.bf16.msra.mxu0 %v7714
    %7770 = vmatprep.mubr.bf16.mxu0 %v7607
    %7771 = vmatmul.mubr.bf16.gmra.mxu0 %v7603
    %v7772 = vpop.f32.mrf.mxu0
    %v7773 = vadd.f32 0.0, %v7772
    %v7774 = vpop.f32.mrf.mxu0
    %v7775 = vpop.f32.mrf.mxu0
    %v7776 = vadd.f32 0.0, %v7775
    %v7777 = vpop.f32.mrf.mxu0
    %7778 = vdwg.mxu0
    %v7811 = vunpack.c.l.b16 %v7553
    %v7812 = vunpack.c.l.b16 %v7554
    %v7813 = vunpack.c.l.b16 %v7555
    %v7814 = vunpack.c.l.b16 %v7556
    %v7815 = vunpack.c.l.b16 %v7557
    %v7816 = vunpack.c.l.b16 %v7558
    %v7817 = vunpack.c.l.b16 %v7559
    %v7818 = vunpack.c.l.b16 %v7560
    %v7819 = vunpack.c.l.b16 %v7561
    %v7820 = vunpack.c.l.b16 %v7562
    %v7821 = vunpack.c.l.b16 %v7563
    %v7822 = vunpack.c.l.b16 %v7564
    %v7823 = vunpack.c.l.b16 %v7565
    %v7824 = vunpack.c.l.b16 %v7566
    %v7825 = vunpack.c.l.b16 %v7567
    %v7826 = vunpack.c.l.b16 %v7568
    %v7827 = vunpack.c.l.b16 %v7569
    %v7828 = vunpack.c.l.b16 %v7570
    %v7829 = vunpack.c.l.b16 %v7571
    %v7830 = vunpack.c.l.b16 %v7572
    %v7831 = vunpack.c.l.b16 %v7573
    %v7832 = vunpack.c.l.b16 %v7574
    %v7833 = vunpack.c.l.b16 %v7575
    %v7834 = vunpack.c.l.b16 %v7576
    %v7835 = vunpack.c.l.b16 %v7577
    %v7836 = vunpack.c.l.b16 %v7578
    %v7837 = vunpack.c.l.b16 %v7579
    %v7838 = vunpack.c.l.b16 %v7580
    %v7839 = vunpack.c.l.b16 %v7581
    %v7840 = vunpack.c.l.b16 %v7582
    %v7841 = vunpack.c.l.b16 %v7583
    %v7842 = vunpack.c.l.b16 %v7584
    %v7843 = vpack.c.b16 %v7812, %v7811
    %v7844 = vpack.c.b16 %v7814, %v7813
    %v7845 = vpack.c.b16 %v7816, %v7815
    %v7846 = vpack.c.b16 %v7818, %v7817
    %v7847 = vpack.c.b16 %v7820, %v7819
    %v7848 = vpack.c.b16 %v7822, %v7821
    %v7849 = vpack.c.b16 %v7824, %v7823
    %v7850 = vpack.c.b16 %v7826, %v7825
    %v7851 = vpack.c.b16 %v7828, %v7827
    %v7852 = vpack.c.b16 %v7830, %v7829
    %v7853 = vpack.c.b16 %v7832, %v7831
    %v7854 = vpack.c.b16 %v7834, %v7833
    %v7855 = vpack.c.b16 %v7836, %v7835
    %v7856 = vpack.c.b16 %v7838, %v7837
    %v7857 = vpack.c.b16 %v7840, %v7839
    %v7858 = vpack.c.b16 %v7842, %v7841
    %7875 = vmatprep.subr.bf16.mxu0 0
    %7876 = vmatpush1.bf16.msra.mxu0 %v7850
    %7877 = vmatprep.subr.bf16.mxu0 0
    %7878 = vmatpush1.bf16.msra.mxu0 %v7849
    %7879 = vmatprep.subr.bf16.mxu0 0
    %7880 = vmatpush1.bf16.msra.mxu0 %v7848
    %7881 = vmatprep.subr.bf16.mxu0 0
    %7882 = vmatpush1.bf16.msra.mxu0 %v7847
    %7883 = vmatprep.subr.bf16.mxu0 0
    %7884 = vmatpush1.bf16.msra.mxu0 %v7846
    %7885 = vmatprep.subr.bf16.mxu0 0
    %7886 = vmatpush1.bf16.msra.mxu0 %v7845
    %7887 = vmatprep.subr.bf16.mxu0 0
    %7888 = vmatpush1.bf16.msra.mxu0 %v7844
    %7889 = vmatprep.subr.bf16.mxu0 0
    %7890 = vmatpush1.bf16.msra.mxu0 %v7843
    %7891 = vmatprep.subr.bf16.mxu0 0
    %7892 = vmatpush2.bf16.msra.mxu0 %v7858
    %7893 = vmatprep.subr.bf16.mxu0 0
    %7894 = vmatpush2.bf16.msra.mxu0 %v7857
    %7895 = vmatprep.subr.bf16.mxu0 0
    %7896 = vmatpush2.bf16.msra.mxu0 %v7856
    %7897 = vmatprep.subr.bf16.mxu0 0
    %7898 = vmatpush2.bf16.msra.mxu0 %v7855
    %7899 = vmatprep.subr.bf16.mxu0 0
    %7900 = vmatpush2.bf16.msra.mxu0 %v7854
    %7901 = vmatprep.subr.bf16.mxu0 0
    %7902 = vmatpush2.bf16.msra.mxu0 %v7853
    %7903 = vmatprep.subr.bf16.mxu0 0
    %7904 = vmatpush2.bf16.msra.mxu0 %v7852
    %7905 = vmatprep.subr.bf16.mxu0 0
    %7906 = vmatpush2.bf16.msra.mxu0 %v7851
    %7907 = vmatprep.mubr.bf16.mxu0 %v7550
    %7908 = vmatmul.mubr.bf16.gmra.mxu0 %v7546
    %v7909 = vpop.f32.mrf.mxu0
    %v7910 = vadd.f32 %v7773, %v7909
    %v7911 = vpop.f32.mrf.mxu0
    %v7912 = vpop.f32.mrf.mxu0
    %v7913 = vadd.f32 %v7776, %v7912
    %v7914 = vpop.f32.mrf.mxu0
    %7915 = vdwg.mxu0
    %v7916 = vld [vmem:[#allocation2 + $0x118] sm:$0xff]
    %v7917 = vld [vmem:[#allocation2 + $0x128] sm:$0xff]
    %v7919 = vunpack.c.l.b16 %v7916
    %v7920 = vunpack.c.h.b16 %v7916
    %v7921 = vpack.c.b16 %v7919, %v7588
    %v7922 = vpack.c.b16 %v7920, %v7589
    %v7924 = vshrl.u32 %v7921, 16
    %v7926 = vrot.slane %v7924, 3
    %v7927 = vshll.u32 %v7921, 16
    %v7929 = vrot.slane %v7927, 4
    %v7930 = vor.u32 %v7926, %v7929
    %v7932 = vshrl.u32 %v7922, 16
    %v7934 = vrot.slane %v7932, 3
    %v7935 = vshll.u32 %v7922, 16
    %v7937 = vrot.slane %v7935, 4
    %v7938 = vor.u32 %v7934, %v7937
    %v7940 = vunpack.c.l.b16 %v7917
    %v7941 = vunpack.c.h.b16 %v7917
    %v7942 = vpack.c.b16 %v7940, %v7595
    %v7943 = vpack.c.b16 %v7941, %v7596
    %v7945 = vshrl.u32 %v7942, 16
    %v7947 = vrot.slane %v7945, 7
    %v7948 = vshll.u32 %v7942, 16
    %v7950 = vor.u32 %v7947, %v7948
    %v7952 = vshrl.u32 %v7943, 16
    %v7954 = vrot.slane %v7952, 7
    %v7955 = vshll.u32 %v7943, 16
    %v7957 = vor.u32 %v7954, %v7955
    %v7960 = vsel %vm7543, %v7930, %v7950
    %v7964 = vsel %vm7543, %v7938, %v7957
    %s7966 = scalar_lea.vmem [#allocation6], 2560
    %v7967 = vld [vmem:[%s7966] sm:$0xf]
    %v7968 = vld [vmem:[%s7966 + $0x4] sm:$0xf]
    %v7969 = vld [vmem:[%s7966 + $0x8] sm:$0xf]
    %v7970 = vld [vmem:[%s7966 + $0xc] sm:$0xf]
    %v7971 = vld [vmem:[%s7966 + $0x10] sm:$0xf]
    %v7972 = vld [vmem:[%s7966 + $0x14] sm:$0xf]
    %v7973 = vld [vmem:[%s7966 + $0x18] sm:$0xf]
    %v7974 = vld [vmem:[%s7966 + $0x1c] sm:$0xf]
    %v7975 = vld [vmem:[%s7966 + $0x20] sm:$0xf]
    %v7976 = vld [vmem:[%s7966 + $0x24] sm:$0xf]
    %v7977 = vld [vmem:[%s7966 + $0x28] sm:$0xf]
    %v7978 = vld [vmem:[%s7966 + $0x2c] sm:$0xf]
    %v7979 = vld [vmem:[%s7966 + $0x30] sm:$0xf]
    %v7980 = vld [vmem:[%s7966 + $0x34] sm:$0xf]
    %v7981 = vld [vmem:[%s7966 + $0x38] sm:$0xf]
    %v7982 = vld [vmem:[%s7966 + $0x3c] sm:$0xf]
    %v7983 = vld [vmem:[%s7966 + $0x40] sm:$0xf]
    %v7984 = vld [vmem:[%s7966 + $0x44] sm:$0xf]
    %v7985 = vld [vmem:[%s7966 + $0x48] sm:$0xf]
    %v7986 = vld [vmem:[%s7966 + $0x4c] sm:$0xf]
    %v7987 = vld [vmem:[%s7966 + $0x50] sm:$0xf]
    %v7988 = vld [vmem:[%s7966 + $0x54] sm:$0xf]
    %v7989 = vld [vmem:[%s7966 + $0x58] sm:$0xf]
    %v7990 = vld [vmem:[%s7966 + $0x5c] sm:$0xf]
    %v7991 = vld [vmem:[%s7966 + $0x60] sm:$0xf]
    %v7992 = vld [vmem:[%s7966 + $0x64] sm:$0xf]
    %v7993 = vld [vmem:[%s7966 + $0x68] sm:$0xf]
    %v7994 = vld [vmem:[%s7966 + $0x6c] sm:$0xf]
    %v7995 = vld [vmem:[%s7966 + $0x70] sm:$0xf]
    %v7996 = vld [vmem:[%s7966 + $0x74] sm:$0xf]
    %v7997 = vld [vmem:[%s7966 + $0x78] sm:$0xf]
    %v7998 = vld [vmem:[%s7966 + $0x7c] sm:$0xf]
    %v8031 = vunpack.c.l.b16 %v7967
    %v8032 = vunpack.c.l.b16 %v7968
    %v8033 = vunpack.c.l.b16 %v7969
    %v8034 = vunpack.c.l.b16 %v7970
    %v8035 = vunpack.c.l.b16 %v7971
    %v8036 = vunpack.c.l.b16 %v7972
    %v8037 = vunpack.c.l.b16 %v7973
    %v8038 = vunpack.c.l.b16 %v7974
    %v8039 = vunpack.c.l.b16 %v7975
    %v8040 = vunpack.c.l.b16 %v7976
    %v8041 = vunpack.c.l.b16 %v7977
    %v8042 = vunpack.c.l.b16 %v7978
    %v8043 = vunpack.c.l.b16 %v7979
    %v8044 = vunpack.c.l.b16 %v7980
    %v8045 = vunpack.c.l.b16 %v7981
    %v8046 = vunpack.c.l.b16 %v7982
    %v8047 = vunpack.c.l.b16 %v7983
    %v8048 = vunpack.c.l.b16 %v7984
    %v8049 = vunpack.c.l.b16 %v7985
    %v8050 = vunpack.c.l.b16 %v7986
    %v8051 = vunpack.c.l.b16 %v7987
    %v8052 = vunpack.c.l.b16 %v7988
    %v8053 = vunpack.c.l.b16 %v7989
    %v8054 = vunpack.c.l.b16 %v7990
    %v8055 = vunpack.c.l.b16 %v7991
    %v8056 = vunpack.c.l.b16 %v7992
    %v8057 = vunpack.c.l.b16 %v7993
    %v8058 = vunpack.c.l.b16 %v7994
    %v8059 = vunpack.c.l.b16 %v7995
    %v8060 = vunpack.c.l.b16 %v7996
    %v8061 = vunpack.c.l.b16 %v7997
    %v8062 = vunpack.c.l.b16 %v7998
    %v8063 = vpack.c.b16 %v8032, %v8031
    %v8064 = vpack.c.b16 %v8034, %v8033
    %v8065 = vpack.c.b16 %v8036, %v8035
    %v8066 = vpack.c.b16 %v8038, %v8037
    %v8067 = vpack.c.b16 %v8040, %v8039
    %v8068 = vpack.c.b16 %v8042, %v8041
    %v8069 = vpack.c.b16 %v8044, %v8043
    %v8070 = vpack.c.b16 %v8046, %v8045
    %v8071 = vpack.c.b16 %v8048, %v8047
    %v8072 = vpack.c.b16 %v8050, %v8049
    %v8073 = vpack.c.b16 %v8052, %v8051
    %v8074 = vpack.c.b16 %v8054, %v8053
    %v8075 = vpack.c.b16 %v8056, %v8055
    %v8076 = vpack.c.b16 %v8058, %v8057
    %v8077 = vpack.c.b16 %v8060, %v8059
    %v8078 = vpack.c.b16 %v8062, %v8061
    %8095 = vmatprep.subr.bf16.mxu0 0
    %8096 = vmatpush1.bf16.msra.mxu0 %v8070
    %8097 = vmatprep.subr.bf16.mxu0 0
    %8098 = vmatpush1.bf16.msra.mxu0 %v8069
    %8099 = vmatprep.subr.bf16.mxu0 0
    %8100 = vmatpush1.bf16.msra.mxu0 %v8068
    %8101 = vmatprep.subr.bf16.mxu0 0
    %8102 = vmatpush1.bf16.msra.mxu0 %v8067
    %8103 = vmatprep.subr.bf16.mxu0 0
    %8104 = vmatpush1.bf16.msra.mxu0 %v8066
    %8105 = vmatprep.subr.bf16.mxu0 0
    %8106 = vmatpush1.bf16.msra.mxu0 %v8065
    %8107 = vmatprep.subr.bf16.mxu0 0
    %8108 = vmatpush1.bf16.msra.mxu0 %v8064
    %8109 = vmatprep.subr.bf16.mxu0 0
    %8110 = vmatpush1.bf16.msra.mxu0 %v8063
    %8111 = vmatprep.subr.bf16.mxu0 0
    %8112 = vmatpush2.bf16.msra.mxu0 %v8078
    %8113 = vmatprep.subr.bf16.mxu0 0
    %8114 = vmatpush2.bf16.msra.mxu0 %v8077
    %8115 = vmatprep.subr.bf16.mxu0 0
    %8116 = vmatpush2.bf16.msra.mxu0 %v8076
    %8117 = vmatprep.subr.bf16.mxu0 0
    %8118 = vmatpush2.bf16.msra.mxu0 %v8075
    %8119 = vmatprep.subr.bf16.mxu0 0
    %8120 = vmatpush2.bf16.msra.mxu0 %v8074
    %8121 = vmatprep.subr.bf16.mxu0 0
    %8122 = vmatpush2.bf16.msra.mxu0 %v8073
    %8123 = vmatprep.subr.bf16.mxu0 0
    %8124 = vmatpush2.bf16.msra.mxu0 %v8072
    %8125 = vmatprep.subr.bf16.mxu0 0
    %8126 = vmatpush2.bf16.msra.mxu0 %v8071
    %8127 = vmatprep.mubr.bf16.mxu0 %v7964
    %8128 = vmatmul.mubr.bf16.gmra.mxu0 %v7960
    %v8129 = vpop.f32.mrf.mxu0
    %v8130 = vadd.f32 0.0, %v8129
    %v8131 = vpop.f32.mrf.mxu0
    %v8132 = vpop.f32.mrf.mxu0
    %v8133 = vadd.f32 0.0, %v8132
    %v8134 = vpop.f32.mrf.mxu0
    %8135 = vdwg.mxu0
    %v8136 = vadd.f32 %v7910, %v8130
    %v8137 = vadd.f32 %v7913, %v8133
    %v8138 = vpack.c.b16 %v7919, %v7919
    %v8139 = vpack.c.b16 %v7920, %v7920
    %v8140 = vpack.c.b16 %v7940, %v7940
    %v8141 = vpack.c.b16 %v7941, %v7941
    %v8144 = vsel %vm7543, %v8138, %v8140
    %v8148 = vsel %vm7543, %v8139, %v8141
    %s8150 = scalar_lea.vmem [#allocation6], 2688
    %v8151 = vld [vmem:[%s8150] sm:$0xf]
    %v8152 = vld [vmem:[%s8150 + $0x4] sm:$0xf]
    %v8153 = vld [vmem:[%s8150 + $0x8] sm:$0xf]
    %v8154 = vld [vmem:[%s8150 + $0xc] sm:$0xf]
    %v8155 = vld [vmem:[%s8150 + $0x10] sm:$0xf]
    %v8156 = vld [vmem:[%s8150 + $0x14] sm:$0xf]
    %v8157 = vld [vmem:[%s8150 + $0x18] sm:$0xf]
    %v8158 = vld [vmem:[%s8150 + $0x1c] sm:$0xf]
    %v8159 = vld [vmem:[%s8150 + $0x20] sm:$0xf]
    %v8160 = vld [vmem:[%s8150 + $0x24] sm:$0xf]
    %v8161 = vld [vmem:[%s8150 + $0x28] sm:$0xf]
    %v8162 = vld [vmem:[%s8150 + $0x2c] sm:$0xf]
    %v8163 = vld [vmem:[%s8150 + $0x30] sm:$0xf]
    %v8164 = vld [vmem:[%s8150 + $0x34] sm:$0xf]
    %v8165 = vld [vmem:[%s8150 + $0x38] sm:$0xf]
    %v8166 = vld [vmem:[%s8150 + $0x3c] sm:$0xf]
    %v8167 = vld [vmem:[%s8150 + $0x40] sm:$0xf]
    %v8168 = vld [vmem:[%s8150 + $0x44] sm:$0xf]
    %v8169 = vld [vmem:[%s8150 + $0x48] sm:$0xf]
    %v8170 = vld [vmem:[%s8150 + $0x4c] sm:$0xf]
    %v8171 = vld [vmem:[%s8150 + $0x50] sm:$0xf]
    %v8172 = vld [vmem:[%s8150 + $0x54] sm:$0xf]
    %v8173 = vld [vmem:[%s8150 + $0x58] sm:$0xf]
    %v8174 = vld [vmem:[%s8150 + $0x5c] sm:$0xf]
    %v8175 = vld [vmem:[%s8150 + $0x60] sm:$0xf]
    %v8176 = vld [vmem:[%s8150 + $0x64] sm:$0xf]
    %v8177 = vld [vmem:[%s8150 + $0x68] sm:$0xf]
    %v8178 = vld [vmem:[%s8150 + $0x6c] sm:$0xf]
    %v8179 = vld [vmem:[%s8150 + $0x70] sm:$0xf]
    %v8180 = vld [vmem:[%s8150 + $0x74] sm:$0xf]
    %v8181 = vld [vmem:[%s8150 + $0x78] sm:$0xf]
    %v8182 = vld [vmem:[%s8150 + $0x7c] sm:$0xf]
    %v8215 = vunpack.c.l.b16 %v8151
    %v8216 = vunpack.c.l.b16 %v8152
    %v8217 = vunpack.c.l.b16 %v8153
    %v8218 = vunpack.c.l.b16 %v8154
    %v8219 = vunpack.c.l.b16 %v8155
    %v8220 = vunpack.c.l.b16 %v8156
    %v8221 = vunpack.c.l.b16 %v8157
    %v8222 = vunpack.c.l.b16 %v8158
    %v8223 = vunpack.c.l.b16 %v8159
    %v8224 = vunpack.c.l.b16 %v8160
    %v8225 = vunpack.c.l.b16 %v8161
    %v8226 = vunpack.c.l.b16 %v8162
    %v8227 = vunpack.c.l.b16 %v8163
    %v8228 = vunpack.c.l.b16 %v8164
    %v8229 = vunpack.c.l.b16 %v8165
    %v8230 = vunpack.c.l.b16 %v8166
    %v8231 = vunpack.c.l.b16 %v8167
    %v8232 = vunpack.c.l.b16 %v8168
    %v8233 = vunpack.c.l.b16 %v8169
    %v8234 = vunpack.c.l.b16 %v8170
    %v8235 = vunpack.c.l.b16 %v8171
    %v8236 = vunpack.c.l.b16 %v8172
    %v8237 = vunpack.c.l.b16 %v8173
    %v8238 = vunpack.c.l.b16 %v8174
    %v8239 = vunpack.c.l.b16 %v8175
    %v8240 = vunpack.c.l.b16 %v8176
    %v8241 = vunpack.c.l.b16 %v8177
    %v8242 = vunpack.c.l.b16 %v8178
    %v8243 = vunpack.c.l.b16 %v8179
    %v8244 = vunpack.c.l.b16 %v8180
    %v8245 = vunpack.c.l.b16 %v8181
    %v8246 = vunpack.c.l.b16 %v8182
    %v8247 = vpack.c.b16 %v8216, %v8215
    %v8248 = vpack.c.b16 %v8218, %v8217
    %v8249 = vpack.c.b16 %v8220, %v8219
    %v8250 = vpack.c.b16 %v8222, %v8221
    %v8251 = vpack.c.b16 %v8224, %v8223
    %v8252 = vpack.c.b16 %v8226, %v8225
    %v8253 = vpack.c.b16 %v8228, %v8227
    %v8254 = vpack.c.b16 %v8230, %v8229
    %v8255 = vpack.c.b16 %v8232, %v8231
    %v8256 = vpack.c.b16 %v8234, %v8233
    %v8257 = vpack.c.b16 %v8236, %v8235
    %v8258 = vpack.c.b16 %v8238, %v8237
    %v8259 = vpack.c.b16 %v8240, %v8239
    %v8260 = vpack.c.b16 %v8242, %v8241
    %v8261 = vpack.c.b16 %v8244, %v8243
    %v8262 = vpack.c.b16 %v8246, %v8245
    %8279 = vmatprep.subr.bf16.mxu0 0
    %8280 = vmatpush1.bf16.msra.mxu0 %v8254
    %8281 = vmatprep.subr.bf16.mxu0 0
    %8282 = vmatpush1.bf16.msra.mxu0 %v8253
    %8283 = vmatprep.subr.bf16.mxu0 0
    %8284 = vmatpush1.bf16.msra.mxu0 %v8252
    %8285 = vmatprep.subr.bf16.mxu0 0
    %8286 = vmatpush1.bf16.msra.mxu0 %v8251
    %8287 = vmatprep.subr.bf16.mxu0 0
    %8288 = vmatpush1.bf16.msra.mxu0 %v8250
    %8289 = vmatprep.subr.bf16.mxu0 0
    %8290 = vmatpush1.bf16.msra.mxu0 %v8249
    %8291 = vmatprep.subr.bf16.mxu0 0
    %8292 = vmatpush1.bf16.msra.mxu0 %v8248
    %8293 = vmatprep.subr.bf16.mxu0 0
    %8294 = vmatpush1.bf16.msra.mxu0 %v8247
    %8295 = vmatprep.subr.bf16.mxu0 0
    %8296 = vmatpush2.bf16.msra.mxu0 %v8262
    %8297 = vmatprep.subr.bf16.mxu0 0
    %8298 = vmatpush2.bf16.msra.mxu0 %v8261
    %8299 = vmatprep.subr.bf16.mxu0 0
    %8300 = vmatpush2.bf16.msra.mxu0 %v8260
    %8301 = vmatprep.subr.bf16.mxu0 0
    %8302 = vmatpush2.bf16.msra.mxu0 %v8259
    %8303 = vmatprep.subr.bf16.mxu0 0
    %8304 = vmatpush2.bf16.msra.mxu0 %v8258
    %8305 = vmatprep.subr.bf16.mxu0 0
    %8306 = vmatpush2.bf16.msra.mxu0 %v8257
    %8307 = vmatprep.subr.bf16.mxu0 0
    %8308 = vmatpush2.bf16.msra.mxu0 %v8256
    %8309 = vmatprep.subr.bf16.mxu0 0
    %8310 = vmatpush2.bf16.msra.mxu0 %v8255
    %8311 = vmatprep.mubr.bf16.mxu0 %v8148
    %8312 = vmatmul.mubr.bf16.gmra.mxu0 %v8144
    %v8313 = vpop.f32.mrf.mxu0
    %v8314 = vadd.f32 0.0, %v8313
    %v8315 = vpop.f32.mrf.mxu0
    %v8316 = vpop.f32.mrf.mxu0
    %v8317 = vadd.f32 0.0, %v8316
    %v8318 = vpop.f32.mrf.mxu0
    %8319 = vdwg.mxu0
    %v8320 = vadd.f32 %v8136, %v8314
    %v8321 = vadd.f32 %v8137, %v8317
    %v8322 = vld [vmem:[#allocation2 + $0x118] sm:$0xff]
    %v8323 = vld [vmem:[#allocation2 + $0x120] sm:$0x11]
    %v8324 = vld [vmem:[#allocation2 + $0x128] sm:$0xff]
    %v8325 = vld [vmem:[#allocation2 + $0x130] sm:$0x11]
    %v8328 = vunpack.c.l.b16 %v8322
    %v8329 = vunpack.c.h.b16 %v8322
    %v8330 = vunpack.c.l.b16 %v8323
    %v8331 = vunpack.c.h.b16 %v8323
    %v8332 = vpack.c.b16 %v8330, %v8328
    %v8333 = vpack.c.b16 %v8331, %v8329
    %v8335 = vshrl.u32 %v8332, 16
    %v8337 = vshll.u32 %v8332, 16
    %v8339 = vrot.slane %v8337, 1
    %v8340 = vor.u32 %v8335, %v8339
    %v8342 = vshrl.u32 %v8333, 16
    %v8344 = vshll.u32 %v8333, 16
    %v8346 = vrot.slane %v8344, 1
    %v8347 = vor.u32 %v8342, %v8346
    %v8350 = vunpack.c.l.b16 %v8324
    %v8351 = vunpack.c.h.b16 %v8324
    %v8352 = vunpack.c.l.b16 %v8325
    %v8353 = vunpack.c.h.b16 %v8325
    %v8354 = vpack.c.b16 %v8352, %v8350
    %v8355 = vpack.c.b16 %v8353, %v8351
    %v8357 = vshrl.u32 %v8354, 16
    %v8359 = vrot.slane %v8357, 4
    %v8360 = vshll.u32 %v8354, 16
    %v8362 = vrot.slane %v8360, 5
    %v8363 = vor.u32 %v8359, %v8362
    %v8365 = vshrl.u32 %v8355, 16
    %v8367 = vrot.slane %v8365, 4
    %v8368 = vshll.u32 %v8355, 16
    %v8370 = vrot.slane %v8368, 5
    %v8371 = vor.u32 %v8367, %v8370
    %v8374 = vsel %vm7543, %v8340, %v8363
    %v8378 = vsel %vm7543, %v8347, %v8371
    %s8380 = scalar_lea.vmem [#allocation6], 2816
    %v8381 = vld [vmem:[%s8380] sm:$0xf]
    %v8382 = vld [vmem:[%s8380 + $0x4] sm:$0xf]
    %v8383 = vld [vmem:[%s8380 + $0x8] sm:$0xf]
    %v8384 = vld [vmem:[%s8380 + $0xc] sm:$0xf]
    %v8385 = vld [vmem:[%s8380 + $0x10] sm:$0xf]
    %v8386 = vld [vmem:[%s8380 + $0x14] sm:$0xf]
    %v8387 = vld [vmem:[%s8380 + $0x18] sm:$0xf]
    %v8388 = vld [vmem:[%s8380 + $0x1c] sm:$0xf]
    %v8389 = vld [vmem:[%s8380 + $0x20] sm:$0xf]
    %v8390 = vld [vmem:[%s8380 + $0x24] sm:$0xf]
    %v8391 = vld [vmem:[%s8380 + $0x28] sm:$0xf]
    %v8392 = vld [vmem:[%s8380 + $0x2c] sm:$0xf]
    %v8393 = vld [vmem:[%s8380 + $0x30] sm:$0xf]
    %v8394 = vld [vmem:[%s8380 + $0x34] sm:$0xf]
    %v8395 = vld [vmem:[%s8380 + $0x38] sm:$0xf]
    %v8396 = vld [vmem:[%s8380 + $0x3c] sm:$0xf]
    %v8397 = vld [vmem:[%s8380 + $0x40] sm:$0xf]
    %v8398 = vld [vmem:[%s8380 + $0x44] sm:$0xf]
    %v8399 = vld [vmem:[%s8380 + $0x48] sm:$0xf]
    %v8400 = vld [vmem:[%s8380 + $0x4c] sm:$0xf]
    %v8401 = vld [vmem:[%s8380 + $0x50] sm:$0xf]
    %v8402 = vld [vmem:[%s8380 + $0x54] sm:$0xf]
    %v8403 = vld [vmem:[%s8380 + $0x58] sm:$0xf]
    %v8404 = vld [vmem:[%s8380 + $0x5c] sm:$0xf]
    %v8405 = vld [vmem:[%s8380 + $0x60] sm:$0xf]
    %v8406 = vld [vmem:[%s8380 + $0x64] sm:$0xf]
    %v8407 = vld [vmem:[%s8380 + $0x68] sm:$0xf]
    %v8408 = vld [vmem:[%s8380 + $0x6c] sm:$0xf]
    %v8409 = vld [vmem:[%s8380 + $0x70] sm:$0xf]
    %v8410 = vld [vmem:[%s8380 + $0x74] sm:$0xf]
    %v8411 = vld [vmem:[%s8380 + $0x78] sm:$0xf]
    %v8412 = vld [vmem:[%s8380 + $0x7c] sm:$0xf]
    %v8445 = vunpack.c.l.b16 %v8381
    %v8446 = vunpack.c.l.b16 %v8382
    %v8447 = vunpack.c.l.b16 %v8383
    %v8448 = vunpack.c.l.b16 %v8384
    %v8449 = vunpack.c.l.b16 %v8385
    %v8450 = vunpack.c.l.b16 %v8386
    %v8451 = vunpack.c.l.b16 %v8387
    %v8452 = vunpack.c.l.b16 %v8388
    %v8453 = vunpack.c.l.b16 %v8389
    %v8454 = vunpack.c.l.b16 %v8390
    %v8455 = vunpack.c.l.b16 %v8391
    %v8456 = vunpack.c.l.b16 %v8392
    %v8457 = vunpack.c.l.b16 %v8393
    %v8458 = vunpack.c.l.b16 %v8394
    %v8459 = vunpack.c.l.b16 %v8395
    %v8460 = vunpack.c.l.b16 %v8396
    %v8461 = vunpack.c.l.b16 %v8397
    %v8462 = vunpack.c.l.b16 %v8398
    %v8463 = vunpack.c.l.b16 %v8399
    %v8464 = vunpack.c.l.b16 %v8400
    %v8465 = vunpack.c.l.b16 %v8401
    %v8466 = vunpack.c.l.b16 %v8402
    %v8467 = vunpack.c.l.b16 %v8403
    %v8468 = vunpack.c.l.b16 %v8404
    %v8469 = vunpack.c.l.b16 %v8405
    %v8470 = vunpack.c.l.b16 %v8406
    %v8471 = vunpack.c.l.b16 %v8407
    %v8472 = vunpack.c.l.b16 %v8408
    %v8473 = vunpack.c.l.b16 %v8409
    %v8474 = vunpack.c.l.b16 %v8410
    %v8475 = vunpack.c.l.b16 %v8411
    %v8476 = vunpack.c.l.b16 %v8412
    %v8477 = vpack.c.b16 %v8446, %v8445
    %v8478 = vpack.c.b16 %v8448, %v8447
    %v8479 = vpack.c.b16 %v8450, %v8449
    %v8480 = vpack.c.b16 %v8452, %v8451
    %v8481 = vpack.c.b16 %v8454, %v8453
    %v8482 = vpack.c.b16 %v8456, %v8455
    %v8483 = vpack.c.b16 %v8458, %v8457
    %v8484 = vpack.c.b16 %v8460, %v8459
    %v8485 = vpack.c.b16 %v8462, %v8461
    %v8486 = vpack.c.b16 %v8464, %v8463
    %v8487 = vpack.c.b16 %v8466, %v8465
    %v8488 = vpack.c.b16 %v8468, %v8467
    %v8489 = vpack.c.b16 %v8470, %v8469
    %v8490 = vpack.c.b16 %v8472, %v8471
    %v8491 = vpack.c.b16 %v8474, %v8473
    %v8492 = vpack.c.b16 %v8476, %v8475
    %8509 = vmatprep.subr.bf16.mxu0 0
    %8510 = vmatpush1.bf16.msra.mxu0 %v8484
    %8511 = vmatprep.subr.bf16.mxu0 0
    %8512 = vmatpush1.bf16.msra.mxu0 %v8483
    %8513 = vmatprep.subr.bf16.mxu0 0
    %8514 = vmatpush1.bf16.msra.mxu0 %v8482
    %8515 = vmatprep.subr.bf16.mxu0 0
    %8516 = vmatpush1.bf16.msra.mxu0 %v8481
    %8517 = vmatprep.subr.bf16.mxu0 0
    %8518 = vmatpush1.bf16.msra.mxu0 %v8480
    %8519 = vmatprep.subr.bf16.mxu0 0
    %8520 = vmatpush1.bf16.msra.mxu0 %v8479
    %8521 = vmatprep.subr.bf16.mxu0 0
    %8522 = vmatpush1.bf16.msra.mxu0 %v8478
    %8523 = vmatprep.subr.bf16.mxu0 0
    %8524 = vmatpush1.bf16.msra.mxu0 %v8477
    %8525 = vmatprep.subr.bf16.mxu0 0
    %8526 = vmatpush2.bf16.msra.mxu0 %v8492
    %8527 = vmatprep.subr.bf16.mxu0 0
    %8528 = vmatpush2.bf16.msra.mxu0 %v8491
    %8529 = vmatprep.subr.bf16.mxu0 0
    %8530 = vmatpush2.bf16.msra.mxu0 %v8490
    %8531 = vmatprep.subr.bf16.mxu0 0
    %8532 = vmatpush2.bf16.msra.mxu0 %v8489
    %8533 = vmatprep.subr.bf16.mxu0 0
    %8534 = vmatpush2.bf16.msra.mxu0 %v8488
    %8535 = vmatprep.subr.bf16.mxu0 0
    %8536 = vmatpush2.bf16.msra.mxu0 %v8487
    %8537 = vmatprep.subr.bf16.mxu0 0
    %8538 = vmatpush2.bf16.msra.mxu0 %v8486
    %8539 = vmatprep.subr.bf16.mxu0 0
    %8540 = vmatpush2.bf16.msra.mxu0 %v8485
    %8541 = vmatprep.mubr.bf16.mxu0 %v8378
    %8542 = vmatmul.mubr.bf16.gmra.mxu0 %v8374
    %v8543 = vpop.f32.mrf.mxu0
    %v8544 = vadd.f32 0.0, %v8543
    %v8545 = vpop.f32.mrf.mxu0
    %v8546 = vpop.f32.mrf.mxu0
    %v8547 = vadd.f32 0.0, %v8546
    %v8548 = vpop.f32.mrf.mxu0
    %8549 = vdwg.mxu0
    %v8550 = vadd.f32 %v8320, %v8544
    %v8551 = vadd.f32 %v8321, %v8547
    %v8552 = vld [vmem:[#allocation2 + $0x118] sm:$0xee]
    %v8553 = vld [vmem:[#allocation2 + $0x128] sm:$0xee]
    %v8555 = vunpack.c.l.b16 %v8552
    %v8556 = vunpack.c.h.b16 %v8552
    %v8557 = vpack.c.b16 %v8330, %v8555
    %v8558 = vpack.c.b16 %v8331, %v8556
    %v8559 = vrot.slane %v8557, 1
    %v8560 = vrot.slane %v8558, 1
    %v8562 = vunpack.c.l.b16 %v8553
    %v8563 = vunpack.c.h.b16 %v8553
    %v8564 = vpack.c.b16 %v8352, %v8562
    %v8565 = vpack.c.b16 %v8353, %v8563
    %v8566 = vrot.slane %v8564, 5
    %v8567 = vrot.slane %v8565, 5
    %v8570 = vsel %vm7543, %v8559, %v8566
    %v8574 = vsel %vm7543, %v8560, %v8567
    %s8576 = scalar_lea.vmem [#allocation6], 2944
    %v8577 = vld [vmem:[%s8576] sm:$0xf]
    %v8578 = vld [vmem:[%s8576 + $0x4] sm:$0xf]
    %v8579 = vld [vmem:[%s8576 + $0x8] sm:$0xf]
    %v8580 = vld [vmem:[%s8576 + $0xc] sm:$0xf]
    %v8581 = vld [vmem:[%s8576 + $0x10] sm:$0xf]
    %v8582 = vld [vmem:[%s8576 + $0x14] sm:$0xf]
    %v8583 = vld [vmem:[%s8576 + $0x18] sm:$0xf]
    %v8584 = vld [vmem:[%s8576 + $0x1c] sm:$0xf]
    %v8585 = vld [vmem:[%s8576 + $0x20] sm:$0xf]
    %v8586 = vld [vmem:[%s8576 + $0x24] sm:$0xf]
    %v8587 = vld [vmem:[%s8576 + $0x28] sm:$0xf]
    %v8588 = vld [vmem:[%s8576 + $0x2c] sm:$0xf]
    %v8589 = vld [vmem:[%s8576 + $0x30] sm:$0xf]
    %v8590 = vld [vmem:[%s8576 + $0x34] sm:$0xf]
    %v8591 = vld [vmem:[%s8576 + $0x38] sm:$0xf]
    %v8592 = vld [vmem:[%s8576 + $0x3c] sm:$0xf]
    %v8593 = vld [vmem:[%s8576 + $0x40] sm:$0xf]
    %v8594 = vld [vmem:[%s8576 + $0x44] sm:$0xf]
    %v8595 = vld [vmem:[%s8576 + $0x48] sm:$0xf]
    %v8596 = vld [vmem:[%s8576 + $0x4c] sm:$0xf]
    %v8597 = vld [vmem:[%s8576 + $0x50] sm:$0xf]
    %v8598 = vld [vmem:[%s8576 + $0x54] sm:$0xf]
    %v8599 = vld [vmem:[%s8576 + $0x58] sm:$0xf]
    %v8600 = vld [vmem:[%s8576 + $0x5c] sm:$0xf]
    %v8601 = vld [vmem:[%s8576 + $0x60] sm:$0xf]
    %v8602 = vld [vmem:[%s8576 + $0x64] sm:$0xf]
    %v8603 = vld [vmem:[%s8576 + $0x68] sm:$0xf]
    %v8604 = vld [vmem:[%s8576 + $0x6c] sm:$0xf]
    %v8605 = vld [vmem:[%s8576 + $0x70] sm:$0xf]
    %v8606 = vld [vmem:[%s8576 + $0x74] sm:$0xf]
    %v8607 = vld [vmem:[%s8576 + $0x78] sm:$0xf]
    %v8608 = vld [vmem:[%s8576 + $0x7c] sm:$0xf]
    %v8641 = vunpack.c.l.b16 %v8577
    %v8642 = vunpack.c.l.b16 %v8578
    %v8643 = vunpack.c.l.b16 %v8579
    %v8644 = vunpack.c.l.b16 %v8580
    %v8645 = vunpack.c.l.b16 %v8581
    %v8646 = vunpack.c.l.b16 %v8582
    %v8647 = vunpack.c.l.b16 %v8583
    %v8648 = vunpack.c.l.b16 %v8584
    %v8649 = vunpack.c.l.b16 %v8585
    %v8650 = vunpack.c.l.b16 %v8586
    %v8651 = vunpack.c.l.b16 %v8587
    %v8652 = vunpack.c.l.b16 %v8588
    %v8653 = vunpack.c.l.b16 %v8589
    %v8654 = vunpack.c.l.b16 %v8590
    %v8655 = vunpack.c.l.b16 %v8591
    %v8656 = vunpack.c.l.b16 %v8592
    %v8657 = vunpack.c.l.b16 %v8593
    %v8658 = vunpack.c.l.b16 %v8594
    %v8659 = vunpack.c.l.b16 %v8595
    %v8660 = vunpack.c.l.b16 %v8596
    %v8661 = vunpack.c.l.b16 %v8597
    %v8662 = vunpack.c.l.b16 %v8598
    %v8663 = vunpack.c.l.b16 %v8599
    %v8664 = vunpack.c.l.b16 %v8600
    %v8665 = vunpack.c.l.b16 %v8601
    %v8666 = vunpack.c.l.b16 %v8602
    %v8667 = vunpack.c.l.b16 %v8603
    %v8668 = vunpack.c.l.b16 %v8604
    %v8669 = vunpack.c.l.b16 %v8605
    %v8670 = vunpack.c.l.b16 %v8606
    %v8671 = vunpack.c.l.b16 %v8607
    %v8672 = vunpack.c.l.b16 %v8608
    %v8673 = vpack.c.b16 %v8642, %v8641
    %v8674 = vpack.c.b16 %v8644, %v8643
    %v8675 = vpack.c.b16 %v8646, %v8645
    %v8676 = vpack.c.b16 %v8648, %v8647
    %v8677 = vpack.c.b16 %v8650, %v8649
    %v8678 = vpack.c.b16 %v8652, %v8651
    %v8679 = vpack.c.b16 %v8654, %v8653
    %v8680 = vpack.c.b16 %v8656, %v8655
    %v8681 = vpack.c.b16 %v8658, %v8657
    %v8682 = vpack.c.b16 %v8660, %v8659
    %v8683 = vpack.c.b16 %v8662, %v8661
    %v8684 = vpack.c.b16 %v8664, %v8663
    %v8685 = vpack.c.b16 %v8666, %v8665
    %v8686 = vpack.c.b16 %v8668, %v8667
    %v8687 = vpack.c.b16 %v8670, %v8669
    %v8688 = vpack.c.b16 %v8672, %v8671
    %8705 = vmatprep.subr.bf16.mxu0 0
    %8706 = vmatpush1.bf16.msra.mxu0 %v8680
    %8707 = vmatprep.subr.bf16.mxu0 0
    %8708 = vmatpush1.bf16.msra.mxu0 %v8679
    %8709 = vmatprep.subr.bf16.mxu0 0
    %8710 = vmatpush1.bf16.msra.mxu0 %v8678
    %8711 = vmatprep.subr.bf16.mxu0 0
    %8712 = vmatpush1.bf16.msra.mxu0 %v8677
    %8713 = vmatprep.subr.bf16.mxu0 0
    %8714 = vmatpush1.bf16.msra.mxu0 %v8676
    %8715 = vmatprep.subr.bf16.mxu0 0
    %8716 = vmatpush1.bf16.msra.mxu0 %v8675
    %8717 = vmatprep.subr.bf16.mxu0 0
    %8718 = vmatpush1.bf16.msra.mxu0 %v8674
    %8719 = vmatprep.subr.bf16.mxu0 0
    %8720 = vmatpush1.bf16.msra.mxu0 %v8673
    %8721 = vmatprep.subr.bf16.mxu0 0
    %8722 = vmatpush2.bf16.msra.mxu0 %v8688
    %8723 = vmatprep.subr.bf16.mxu0 0
    %8724 = vmatpush2.bf16.msra.mxu0 %v8687
    %8725 = vmatprep.subr.bf16.mxu0 0
    %8726 = vmatpush2.bf16.msra.mxu0 %v8686
    %8727 = vmatprep.subr.bf16.mxu0 0
    %8728 = vmatpush2.bf16.msra.mxu0 %v8685
    %8729 = vmatprep.subr.bf16.mxu0 0
    %8730 = vmatpush2.bf16.msra.mxu0 %v8684
    %8731 = vmatprep.subr.bf16.mxu0 0
    %8732 = vmatpush2.bf16.msra.mxu0 %v8683
    %8733 = vmatprep.subr.bf16.mxu0 0
    %8734 = vmatpush2.bf16.msra.mxu0 %v8682
    %8735 = vmatprep.subr.bf16.mxu0 0
    %8736 = vmatpush2.bf16.msra.mxu0 %v8681
    %8737 = vmatprep.mubr.bf16.mxu0 %v8574
    %8738 = vmatmul.mubr.bf16.gmra.mxu0 %v8570
    %v8739 = vpop.f32.mrf.mxu0
    %v8740 = vadd.f32 0.0, %v8739
    %v8741 = vpop.f32.mrf.mxu0
    %v8742 = vpop.f32.mrf.mxu0
    %v8743 = vadd.f32 0.0, %v8742
    %v8744 = vpop.f32.mrf.mxu0
    %8745 = vdwg.mxu0
    %v8746 = vadd.f32 %v8550, %v8740
    %v8747 = vadd.f32 %v8551, %v8743
    %v8748 = vadd.f32 %v8746, %v8747
    %v8749 = vrot.slane %v8748, 4
    %v8750 = vadd.f32 %v8748, %v8749
    %v8751 = vrot.slane %v8750, 2
    %v8752 = vadd.f32 %v8750, %v8751
    %v8753 = vrot.slane %v8752, 1
    %v8754 = vadd.f32 %v8752, %v8753
    %v8755 = vmul.f32 %v8746, %v8746
    %v8756 = vmul.f32 %v8747, %v8747
    %v8757 = vadd.f32 %v8755, %v8756
    %v8758 = vrot.slane %v8757, 4
    %v8759 = vadd.f32 %v8757, %v8758
    %v8760 = vrot.slane %v8759, 2
    %v8761 = vadd.f32 %v8759, %v8760
    %v8762 = vrot.slane %v8761, 1
    %v8763 = vadd.f32 %v8761, %v8762
    %v8764 = vmul.f32 %v8754, 0.0625
    %v8765 = vmul.f32 %v8763, 0.0625
    %v8766 = vmul.f32 %v8764, %v8764
    %v8767 = vsub.f32 %v8765, %v8766
    %v8768 = vmax.f32 %v8767, 0.0
    %v8769 = vld [vmem:[#allocation8 + $0x4] sm:$0x1]
    %v8770 = vld [vmem:[#allocation9 + $0x4] sm:$0x1]
    %v8771 = vld [vmem:[#allocation11 + $0x4] sm:$0x1]
    %v8772 = vadd.f32 %v8768, 1e-05
    %v8773 = vrsqrt.pop %v8772
    %v8774 = vmul.f32 %v8769, %v8773
    %v8775 = vmul.f32 %v8764, %v8774
    %v8776 = vsub.f32 %v8770, %v8775
    %v8777 = vlaneseq
    %v8778 = vshrl.u32 %v8777, 7
    %v8779 = vsub.s32 0, %v8778
    %v8780 = vrot.slane %v8774, %v8779
    %v8781 = vmul.f32 %v8746, %v8780
    %v8782 = vmul.f32 %v8747, %v8780
    %v8783 = vlaneseq
    %v8784 = vshrl.u32 %v8783, 7
    %v8785 = vsub.s32 0, %v8784
    %v8786 = vrot.slane %v8776, %v8785
    %v8787 = vadd.f32 %v8781, %v8786
    %v8788 = vadd.f32 %v8782, %v8786
    %vm8789 = vcmp.gt.f32.partialorder %v8787, 0.0
    %vm8790 = vcmp.gt.f32.partialorder %v8788, 0.0
    %v8791 = vlaneseq
    %v8792 = vshrl.u32 %v8791, 7
    %v8793 = vsub.s32 0, %v8792
    %v8794 = vrot.slane %v8771, %v8793
    %v8795 = vmul.f32 %v8794, %v8787
    %v8796 = vmul.f32 %v8794, %v8788
    %v8797 = vsel %vm8789, %v8787, %v8795
    %v8798 = vsel %vm8790, %v8788, %v8796
    %v8799 = vpack.c.bf16 %v8798, %v8797
    %v8800 = vld [vmem:[%s3] sm:$0xf]
    %v8802 = vsel %vm215, %v8800, 0
    %8804 = vmatprep.subr.bf16.mxu0 0
    %8805 = vmatpush1.bf16.msra.mxu0 0
    %8806 = vmatprep.subr.bf16.mxu0 0
    %8807 = vmatpush1.bf16.msra.mxu0 0
    %8808 = vmatprep.subr.bf16.mxu0 0
    %8809 = vmatpush1.bf16.msra.mxu0 0
    %8810 = vmatprep.subr.bf16.mxu0 0
    %8811 = vmatpush1.bf16.msra.mxu0 0
    %8812 = vmatprep.subr.bf16.mxu0 0
    %8813 = vmatpush1.bf16.msra.mxu0 0
    %8814 = vmatprep.subr.bf16.mxu0 0
    %8815 = vmatpush1.bf16.msra.mxu0 0
    %8816 = vmatprep.subr.bf16.mxu0 0
    %8817 = vmatpush1.bf16.msra.mxu0 0
    %8818 = vmatprep.subr.bf16.mxu0 0
    %8819 = vmatpush1.bf16.msra.mxu0 %v8799
    %8820 = vmatprep.subr.bf16.mxu0 0
    %8821 = vmatpush2.bf16.msra.mxu0 0
    %8822 = vmatprep.subr.bf16.mxu0 0
    %8823 = vmatpush2.bf16.msra.mxu0 0
    %8824 = vmatprep.subr.bf16.mxu0 0
    %8825 = vmatpush2.bf16.msra.mxu0 0
    %8826 = vmatprep.subr.bf16.mxu0 0
    %8827 = vmatpush2.bf16.msra.mxu0 0
    %8828 = vmatprep.subr.bf16.mxu0 0
    %8829 = vmatpush2.bf16.msra.mxu0 0
    %8830 = vmatprep.subr.bf16.mxu0 0
    %8831 = vmatpush2.bf16.msra.mxu0 0
    %8832 = vmatprep.subr.bf16.mxu0 0
    %8833 = vmatpush2.bf16.msra.mxu0 0
    %8834 = vmatprep.subr.bf16.mxu0 0
    %8835 = vmatpush2.bf16.msra.mxu0 0
    %8836 = vmatprep.mubr.bf16.mxu0 0
    %8837 = vmatmul.mubr.bf16.gmra.mxu0 %v8802
    %v8838 = vpop.f32.mrf.mxu0
    %v8839 = vadd.f32 0.0, %v8838
    %v8840 = vpop.f32.mrf.mxu0
    %v8841 = vpop.f32.mrf.mxu0
    %v8842 = vpop.f32.mrf.mxu0
    %8843 = vdwg.mxu0
    %v8844 = vpack.c.bf16 %v8839, %v8839
    %v8845 = vld [vmem:[%s4] sm:$0xf]
    %v8847 = vsel %vm215, %v8845, 0
    %8849 = vmatprep.subr.bf16.mxu0 0
    %8850 = vmatpush1.bf16.msra.mxu0 0
    %8851 = vmatprep.subr.bf16.mxu0 0
    %8852 = vmatpush1.bf16.msra.mxu0 0
    %8853 = vmatprep.subr.bf16.mxu0 0
    %8854 = vmatpush1.bf16.msra.mxu0 0
    %8855 = vmatprep.subr.bf16.mxu0 0
    %8856 = vmatpush1.bf16.msra.mxu0 0
    %8857 = vmatprep.subr.bf16.mxu0 0
    %8858 = vmatpush1.bf16.msra.mxu0 0
    %8859 = vmatprep.subr.bf16.mxu0 0
    %8860 = vmatpush1.bf16.msra.mxu0 0
    %8861 = vmatprep.subr.bf16.mxu0 0
    %8862 = vmatpush1.bf16.msra.mxu0 0
    %8863 = vmatprep.subr.bf16.mxu0 0
    %8864 = vmatpush1.bf16.msra.mxu0 %v8799
    %8865 = vmatprep.subr.bf16.mxu0 0
    %8866 = vmatpush2.bf16.msra.mxu0 0
    %8867 = vmatprep.subr.bf16.mxu0 0
    %8868 = vmatpush2.bf16.msra.mxu0 0
    %8869 = vmatprep.subr.bf16.mxu0 0
    %8870 = vmatpush2.bf16.msra.mxu0 0
    %8871 = vmatprep.subr.bf16.mxu0 0
    %8872 = vmatpush2.bf16.msra.mxu0 0
    %8873 = vmatprep.subr.bf16.mxu0 0
    %8874 = vmatpush2.bf16.msra.mxu0 0
    %8875 = vmatprep.subr.bf16.mxu0 0
    %8876 = vmatpush2.bf16.msra.mxu0 0
    %8877 = vmatprep.subr.bf16.mxu0 0
    %8878 = vmatpush2.bf16.msra.mxu0 0
    %8879 = vmatprep.subr.bf16.mxu0 0
    %8880 = vmatpush2.bf16.msra.mxu0 0
    %8881 = vmatprep.mubr.bf16.mxu0 0
    %8882 = vmatmul.mubr.bf16.gmra.mxu0 %v8847
    %v8883 = vpop.f32.mrf.mxu0
    %v8884 = vadd.f32 0.0, %v8883
    %v8885 = vpop.f32.mrf.mxu0
    %v8886 = vpop.f32.mrf.mxu0
    %v8887 = vpop.f32.mrf.mxu0
    %8888 = vdwg.mxu0
    %v8889 = vpack.c.bf16 %v8884, %v8884
    %v8892 = vunpack.c.l.b16 %v8844
    %v8893 = vunpack.c.l.b16 %v8889
    %v8894 = vpack.c.b16 %v8893, %v8892
    %8896 = vst [vmem:[#allocation2 + $0x138] sm:$0x33] %v8894
    %v8897 = vrot.slane %v8894, 6
    %v8898 = vrot.slane %v8897, 4
    %8900 = vst [vmem:[#allocation2 + $0x148] sm:$0x33] %v8898
    %v8901 = vld [vmem:[#allocation2 + $0x130] sm:$0xcc]
    %v8902 = vld [vmem:[#allocation2 + $0x138] sm:$0x11]
    %v8903 = vld [vmem:[#allocation2 + $0x140] sm:$0xcc]
    %v8904 = vld [vmem:[#allocation2 + $0x148] sm:$0x11]
    %v8907 = vunpack.c.l.b16 %v8901
    %v8908 = vunpack.c.h.b16 %v8901
    %v8909 = vunpack.c.l.b16 %v8902
    %v8910 = vunpack.c.h.b16 %v8902
    %v8911 = vpack.c.b16 %v8909, %v8907
    %v8912 = vpack.c.b16 %v8910, %v8908
    %v8914 = vshrl.u32 %v8911, 16
    %v8916 = vrot.slane %v8914, 2
    %v8917 = vshll.u32 %v8911, 16
    %v8919 = vrot.slane %v8917, 3
    %v8920 = vor.u32 %v8916, %v8919
    %v8922 = vshrl.u32 %v8912, 16
    %v8924 = vrot.slane %v8922, 2
    %v8925 = vshll.u32 %v8912, 16
    %v8927 = vrot.slane %v8925, 3
    %v8928 = vor.u32 %v8924, %v8927
    %v8931 = vunpack.c.l.b16 %v8903
    %v8932 = vunpack.c.h.b16 %v8903
    %v8933 = vunpack.c.l.b16 %v8904
    %v8934 = vunpack.c.h.b16 %v8904
    %v8935 = vpack.c.b16 %v8933, %v8931
    %v8936 = vpack.c.b16 %v8934, %v8932
    %v8938 = vshrl.u32 %v8935, 16
    %v8940 = vshll.u32 %v8935, 16
    %v8942 = vrot.slane %v8940, 1
    %v8943 = vor.u32 %v8938, %v8942
    %v8945 = vshrl.u32 %v8936, 16
    %v8947 = vshll.u32 %v8936, 16
    %v8949 = vrot.slane %v8947, 1
    %v8950 = vor.u32 %v8945, %v8949
    %vm8951 = vcmask 1041408
    %v8954 = vsel %vm8951, %v8920, %v8943
    %v8958 = vsel %vm8951, %v8928, %v8950
    %s8960 = scalar_lea.vmem [#allocation6], 3072
    %v8961 = vld [vmem:[%s8960] sm:$0xf]
    %v8962 = vld [vmem:[%s8960 + $0x4] sm:$0xf]
    %v8963 = vld [vmem:[%s8960 + $0x8] sm:$0xf]
    %v8964 = vld [vmem:[%s8960 + $0xc] sm:$0xf]
    %v8965 = vld [vmem:[%s8960 + $0x10] sm:$0xf]
    %v8966 = vld [vmem:[%s8960 + $0x14] sm:$0xf]
    %v8967 = vld [vmem:[%s8960 + $0x18] sm:$0xf]
    %v8968 = vld [vmem:[%s8960 + $0x1c] sm:$0xf]
    %v8969 = vld [vmem:[%s8960 + $0x20] sm:$0xf]
    %v8970 = vld [vmem:[%s8960 + $0x24] sm:$0xf]
    %v8971 = vld [vmem:[%s8960 + $0x28] sm:$0xf]
    %v8972 = vld [vmem:[%s8960 + $0x2c] sm:$0xf]
    %v8973 = vld [vmem:[%s8960 + $0x30] sm:$0xf]
    %v8974 = vld [vmem:[%s8960 + $0x34] sm:$0xf]
    %v8975 = vld [vmem:[%s8960 + $0x38] sm:$0xf]
    %v8976 = vld [vmem:[%s8960 + $0x3c] sm:$0xf]
    %v8977 = vld [vmem:[%s8960 + $0x40] sm:$0xf]
    %v8978 = vld [vmem:[%s8960 + $0x44] sm:$0xf]
    %v8979 = vld [vmem:[%s8960 + $0x48] sm:$0xf]
    %v8980 = vld [vmem:[%s8960 + $0x4c] sm:$0xf]
    %v8981 = vld [vmem:[%s8960 + $0x50] sm:$0xf]
    %v8982 = vld [vmem:[%s8960 + $0x54] sm:$0xf]
    %v8983 = vld [vmem:[%s8960 + $0x58] sm:$0xf]
    %v8984 = vld [vmem:[%s8960 + $0x5c] sm:$0xf]
    %v8985 = vld [vmem:[%s8960 + $0x60] sm:$0xf]
    %v8986 = vld [vmem:[%s8960 + $0x64] sm:$0xf]
    %v8987 = vld [vmem:[%s8960 + $0x68] sm:$0xf]
    %v8988 = vld [vmem:[%s8960 + $0x6c] sm:$0xf]
    %v8989 = vld [vmem:[%s8960 + $0x70] sm:$0xf]
    %v8990 = vld [vmem:[%s8960 + $0x74] sm:$0xf]
    %v8991 = vld [vmem:[%s8960 + $0x78] sm:$0xf]
    %v8992 = vld [vmem:[%s8960 + $0x7c] sm:$0xf]
    %v8993 = vld [vmem:[#allocation2 + $0x130] sm:$0x88]
    %v8994 = vld [vmem:[#allocation2 + $0x140] sm:$0x88]
    %v8996 = vunpack.c.l.b16 %v8993
    %v8997 = vunpack.c.h.b16 %v8993
    %v8998 = vpack.c.b16 %v8909, %v8996
    %v8999 = vpack.c.b16 %v8910, %v8997
    %v9000 = vrot.slane %v8998, 3
    %v9001 = vrot.slane %v8999, 3
    %v9003 = vunpack.c.l.b16 %v8994
    %v9004 = vunpack.c.h.b16 %v8994
    %v9005 = vpack.c.b16 %v8933, %v9003
    %v9006 = vpack.c.b16 %v8934, %v9004
    %v9007 = vrot.slane %v9005, 1
    %v9008 = vrot.slane %v9006, 1
    %v9011 = vsel %vm8951, %v9000, %v9007
    %v9015 = vsel %vm8951, %v9001, %v9008
    %s9017 = scalar_lea.vmem [#allocation6], 3200
    %v9018 = vld [vmem:[%s9017] sm:$0xf]
    %v9019 = vld [vmem:[%s9017 + $0x4] sm:$0xf]
    %v9020 = vld [vmem:[%s9017 + $0x8] sm:$0xf]
    %v9021 = vld [vmem:[%s9017 + $0xc] sm:$0xf]
    %v9022 = vld [vmem:[%s9017 + $0x10] sm:$0xf]
    %v9023 = vld [vmem:[%s9017 + $0x14] sm:$0xf]
    %v9024 = vld [vmem:[%s9017 + $0x18] sm:$0xf]
    %v9025 = vld [vmem:[%s9017 + $0x1c] sm:$0xf]
    %v9026 = vld [vmem:[%s9017 + $0x20] sm:$0xf]
    %v9027 = vld [vmem:[%s9017 + $0x24] sm:$0xf]
    %v9028 = vld [vmem:[%s9017 + $0x28] sm:$0xf]
    %v9029 = vld [vmem:[%s9017 + $0x2c] sm:$0xf]
    %v9030 = vld [vmem:[%s9017 + $0x30] sm:$0xf]
    %v9031 = vld [vmem:[%s9017 + $0x34] sm:$0xf]
    %v9032 = vld [vmem:[%s9017 + $0x38] sm:$0xf]
    %v9033 = vld [vmem:[%s9017 + $0x3c] sm:$0xf]
    %v9034 = vld [vmem:[%s9017 + $0x40] sm:$0xf]
    %v9035 = vld [vmem:[%s9017 + $0x44] sm:$0xf]
    %v9036 = vld [vmem:[%s9017 + $0x48] sm:$0xf]
    %v9037 = vld [vmem:[%s9017 + $0x4c] sm:$0xf]
    %v9038 = vld [vmem:[%s9017 + $0x50] sm:$0xf]
    %v9039 = vld [vmem:[%s9017 + $0x54] sm:$0xf]
    %v9040 = vld [vmem:[%s9017 + $0x58] sm:$0xf]
    %v9041 = vld [vmem:[%s9017 + $0x5c] sm:$0xf]
    %v9042 = vld [vmem:[%s9017 + $0x60] sm:$0xf]
    %v9043 = vld [vmem:[%s9017 + $0x64] sm:$0xf]
    %v9044 = vld [vmem:[%s9017 + $0x68] sm:$0xf]
    %v9045 = vld [vmem:[%s9017 + $0x6c] sm:$0xf]
    %v9046 = vld [vmem:[%s9017 + $0x70] sm:$0xf]
    %v9047 = vld [vmem:[%s9017 + $0x74] sm:$0xf]
    %v9048 = vld [vmem:[%s9017 + $0x78] sm:$0xf]
    %v9049 = vld [vmem:[%s9017 + $0x7c] sm:$0xf]
    %v9082 = vunpack.c.l.b16 %v9018
    %v9083 = vunpack.c.l.b16 %v9019
    %v9084 = vunpack.c.l.b16 %v9020
    %v9085 = vunpack.c.l.b16 %v9021
    %v9086 = vunpack.c.l.b16 %v9022
    %v9087 = vunpack.c.l.b16 %v9023
    %v9088 = vunpack.c.l.b16 %v9024
    %v9089 = vunpack.c.l.b16 %v9025
    %v9090 = vunpack.c.l.b16 %v9026
    %v9091 = vunpack.c.l.b16 %v9027
    %v9092 = vunpack.c.l.b16 %v9028
    %v9093 = vunpack.c.l.b16 %v9029
    %v9094 = vunpack.c.l.b16 %v9030
    %v9095 = vunpack.c.l.b16 %v9031
    %v9096 = vunpack.c.l.b16 %v9032
    %v9097 = vunpack.c.l.b16 %v9033
    %v9098 = vunpack.c.l.b16 %v9034
    %v9099 = vunpack.c.l.b16 %v9035
    %v9100 = vunpack.c.l.b16 %v9036
    %v9101 = vunpack.c.l.b16 %v9037
    %v9102 = vunpack.c.l.b16 %v9038
    %v9103 = vunpack.c.l.b16 %v9039
    %v9104 = vunpack.c.l.b16 %v9040
    %v9105 = vunpack.c.l.b16 %v9041
    %v9106 = vunpack.c.l.b16 %v9042
    %v9107 = vunpack.c.l.b16 %v9043
    %v9108 = vunpack.c.l.b16 %v9044
    %v9109 = vunpack.c.l.b16 %v9045
    %v9110 = vunpack.c.l.b16 %v9046
    %v9111 = vunpack.c.l.b16 %v9047
    %v9112 = vunpack.c.l.b16 %v9048
    %v9113 = vunpack.c.l.b16 %v9049
    %v9114 = vpack.c.b16 %v9083, %v9082
    %v9115 = vpack.c.b16 %v9085, %v9084
    %v9116 = vpack.c.b16 %v9087, %v9086
    %v9117 = vpack.c.b16 %v9089, %v9088
    %v9118 = vpack.c.b16 %v9091, %v9090
    %v9119 = vpack.c.b16 %v9093, %v9092
    %v9120 = vpack.c.b16 %v9095, %v9094
    %v9121 = vpack.c.b16 %v9097, %v9096
    %v9122 = vpack.c.b16 %v9099, %v9098
    %v9123 = vpack.c.b16 %v9101, %v9100
    %v9124 = vpack.c.b16 %v9103, %v9102
    %v9125 = vpack.c.b16 %v9105, %v9104
    %v9126 = vpack.c.b16 %v9107, %v9106
    %v9127 = vpack.c.b16 %v9109, %v9108
    %v9128 = vpack.c.b16 %v9111, %v9110
    %v9129 = vpack.c.b16 %v9113, %v9112
    %9146 = vmatprep.subr.bf16.mxu0 0
    %9147 = vmatpush1.bf16.msra.mxu0 %v9121
    %9148 = vmatprep.subr.bf16.mxu0 0
    %9149 = vmatpush1.bf16.msra.mxu0 %v9120
    %9150 = vmatprep.subr.bf16.mxu0 0
    %9151 = vmatpush1.bf16.msra.mxu0 %v9119
    %9152 = vmatprep.subr.bf16.mxu0 0
    %9153 = vmatpush1.bf16.msra.mxu0 %v9118
    %9154 = vmatprep.subr.bf16.mxu0 0
    %9155 = vmatpush1.bf16.msra.mxu0 %v9117
    %9156 = vmatprep.subr.bf16.mxu0 0
    %9157 = vmatpush1.bf16.msra.mxu0 %v9116
    %9158 = vmatprep.subr.bf16.mxu0 0
    %9159 = vmatpush1.bf16.msra.mxu0 %v9115
    %9160 = vmatprep.subr.bf16.mxu0 0
    %9161 = vmatpush1.bf16.msra.mxu0 %v9114
    %9162 = vmatprep.subr.bf16.mxu0 0
    %9163 = vmatpush2.bf16.msra.mxu0 %v9129
    %9164 = vmatprep.subr.bf16.mxu0 0
    %9165 = vmatpush2.bf16.msra.mxu0 %v9128
    %9166 = vmatprep.subr.bf16.mxu0 0
    %9167 = vmatpush2.bf16.msra.mxu0 %v9127
    %9168 = vmatprep.subr.bf16.mxu0 0
    %9169 = vmatpush2.bf16.msra.mxu0 %v9126
    %9170 = vmatprep.subr.bf16.mxu0 0
    %9171 = vmatpush2.bf16.msra.mxu0 %v9125
    %9172 = vmatprep.subr.bf16.mxu0 0
    %9173 = vmatpush2.bf16.msra.mxu0 %v9124
    %9174 = vmatprep.subr.bf16.mxu0 0
    %9175 = vmatpush2.bf16.msra.mxu0 %v9123
    %9176 = vmatprep.subr.bf16.mxu0 0
    %9177 = vmatpush2.bf16.msra.mxu0 %v9122
    %9178 = vmatprep.mubr.bf16.mxu0 %v9015
    %9179 = vmatmul.mubr.bf16.gmra.mxu0 %v9011
    %v9180 = vpop.f32.mrf.mxu0
    %v9181 = vadd.f32 0.0, %v9180
    %v9182 = vpop.f32.mrf.mxu0
    %v9183 = vpop.f32.mrf.mxu0
    %v9184 = vpop.f32.mrf.mxu0
    %9185 = vdwg.mxu0
    %v9218 = vunpack.c.l.b16 %v8961
    %v9219 = vunpack.c.l.b16 %v8962
    %v9220 = vunpack.c.l.b16 %v8963
    %v9221 = vunpack.c.l.b16 %v8964
    %v9222 = vunpack.c.l.b16 %v8965
    %v9223 = vunpack.c.l.b16 %v8966
    %v9224 = vunpack.c.l.b16 %v8967
    %v9225 = vunpack.c.l.b16 %v8968
    %v9226 = vunpack.c.l.b16 %v8969
    %v9227 = vunpack.c.l.b16 %v8970
    %v9228 = vunpack.c.l.b16 %v8971
    %v9229 = vunpack.c.l.b16 %v8972
    %v9230 = vunpack.c.l.b16 %v8973
    %v9231 = vunpack.c.l.b16 %v8974
    %v9232 = vunpack.c.l.b16 %v8975
    %v9233 = vunpack.c.l.b16 %v8976
    %v9234 = vunpack.c.l.b16 %v8977
    %v9235 = vunpack.c.l.b16 %v8978
    %v9236 = vunpack.c.l.b16 %v8979
    %v9237 = vunpack.c.l.b16 %v8980
    %v9238 = vunpack.c.l.b16 %v8981
    %v9239 = vunpack.c.l.b16 %v8982
    %v9240 = vunpack.c.l.b16 %v8983
    %v9241 = vunpack.c.l.b16 %v8984
    %v9242 = vunpack.c.l.b16 %v8985
    %v9243 = vunpack.c.l.b16 %v8986
    %v9244 = vunpack.c.l.b16 %v8987
    %v9245 = vunpack.c.l.b16 %v8988
    %v9246 = vunpack.c.l.b16 %v8989
    %v9247 = vunpack.c.l.b16 %v8990
    %v9248 = vunpack.c.l.b16 %v8991
    %v9249 = vunpack.c.l.b16 %v8992
    %v9250 = vpack.c.b16 %v9219, %v9218
    %v9251 = vpack.c.b16 %v9221, %v9220
    %v9252 = vpack.c.b16 %v9223, %v9222
    %v9253 = vpack.c.b16 %v9225, %v9224
    %v9254 = vpack.c.b16 %v9227, %v9226
    %v9255 = vpack.c.b16 %v9229, %v9228
    %v9256 = vpack.c.b16 %v9231, %v9230
    %v9257 = vpack.c.b16 %v9233, %v9232
    %v9258 = vpack.c.b16 %v9235, %v9234
    %v9259 = vpack.c.b16 %v9237, %v9236
    %v9260 = vpack.c.b16 %v9239, %v9238
    %v9261 = vpack.c.b16 %v9241, %v9240
    %v9262 = vpack.c.b16 %v9243, %v9242
    %v9263 = vpack.c.b16 %v9245, %v9244
    %v9264 = vpack.c.b16 %v9247, %v9246
    %v9265 = vpack.c.b16 %v9249, %v9248
    %9282 = vmatprep.subr.bf16.mxu0 0
    %9283 = vmatpush1.bf16.msra.mxu0 %v9257
    %9284 = vmatprep.subr.bf16.mxu0 0
    %9285 = vmatpush1.bf16.msra.mxu0 %v9256
    %9286 = vmatprep.subr.bf16.mxu0 0
    %9287 = vmatpush1.bf16.msra.mxu0 %v9255
    %9288 = vmatprep.subr.bf16.mxu0 0
    %9289 = vmatpush1.bf16.msra.mxu0 %v9254
    %9290 = vmatprep.subr.bf16.mxu0 0
    %9291 = vmatpush1.bf16.msra.mxu0 %v9253
    %9292 = vmatprep.subr.bf16.mxu0 0
    %9293 = vmatpush1.bf16.msra.mxu0 %v9252
    %9294 = vmatprep.subr.bf16.mxu0 0
    %9295 = vmatpush1.bf16.msra.mxu0 %v9251
    %9296 = vmatprep.subr.bf16.mxu0 0
    %9297 = vmatpush1.bf16.msra.mxu0 %v9250
    %9298 = vmatprep.subr.bf16.mxu0 0
    %9299 = vmatpush2.bf16.msra.mxu0 %v9265
    %9300 = vmatprep.subr.bf16.mxu0 0
    %9301 = vmatpush2.bf16.msra.mxu0 %v9264
    %9302 = vmatprep.subr.bf16.mxu0 0
    %9303 = vmatpush2.bf16.msra.mxu0 %v9263
    %9304 = vmatprep.subr.bf16.mxu0 0
    %9305 = vmatpush2.bf16.msra.mxu0 %v9262
    %9306 = vmatprep.subr.bf16.mxu0 0
    %9307 = vmatpush2.bf16.msra.mxu0 %v9261
    %9308 = vmatprep.subr.bf16.mxu0 0
    %9309 = vmatpush2.bf16.msra.mxu0 %v9260
    %9310 = vmatprep.subr.bf16.mxu0 0
    %9311 = vmatpush2.bf16.msra.mxu0 %v9259
    %9312 = vmatprep.subr.bf16.mxu0 0
    %9313 = vmatpush2.bf16.msra.mxu0 %v9258
    %9314 = vmatprep.mubr.bf16.mxu0 %v8958
    %9315 = vmatmul.mubr.bf16.gmra.mxu0 %v8954
    %v9316 = vpop.f32.mrf.mxu0
    %v9317 = vadd.f32 %v9181, %v9316
    %v9318 = vpop.f32.mrf.mxu0
    %v9319 = vpop.f32.mrf.mxu0
    %v9320 = vpop.f32.mrf.mxu0
    %9321 = vdwg.mxu0
    %v9322 = vld [vmem:[#allocation2 + $0x138] sm:$0x33]
    %v9323 = vld [vmem:[#allocation2 + $0x148] sm:$0x33]
    %v9325 = vunpack.c.l.b16 %v9322
    %v9326 = vunpack.c.h.b16 %v9322
    %v9327 = vpack.c.b16 %v9325, %v8996
    %v9328 = vpack.c.b16 %v9326, %v8997
    %v9330 = vshrl.u32 %v9327, 16
    %v9332 = vrot.slane %v9330, 3
    %v9333 = vshll.u32 %v9327, 16
    %v9335 = vrot.slane %v9333, 4
    %v9336 = vor.u32 %v9332, %v9335
    %v9338 = vshrl.u32 %v9328, 16
    %v9340 = vrot.slane %v9338, 3
    %v9341 = vshll.u32 %v9328, 16
    %v9343 = vrot.slane %v9341, 4
    %v9344 = vor.u32 %v9340, %v9343
    %v9346 = vunpack.c.l.b16 %v9323
    %v9347 = vunpack.c.h.b16 %v9323
    %v9348 = vpack.c.b16 %v9346, %v9003
    %v9349 = vpack.c.b16 %v9347, %v9004
    %v9351 = vshrl.u32 %v9348, 16
    %v9353 = vrot.slane %v9351, 1
    %v9354 = vshll.u32 %v9348, 16
    %v9356 = vrot.slane %v9354, 2
    %v9357 = vor.u32 %v9353, %v9356
    %v9359 = vshrl.u32 %v9349, 16
    %v9361 = vrot.slane %v9359, 1
    %v9362 = vshll.u32 %v9349, 16
    %v9364 = vrot.slane %v9362, 2
    %v9365 = vor.u32 %v9361, %v9364
    %v9368 = vsel %vm8951, %v9336, %v9357
    %v9372 = vsel %vm8951, %v9344, %v9365
    %s9374 = scalar_lea.vmem [#allocation6], 3328
    %v9375 = vld [vmem:[%s9374] sm:$0xf]
    %v9376 = vld [vmem:[%s9374 + $0x4] sm:$0xf]
    %v9377 = vld [vmem:[%s9374 + $0x8] sm:$0xf]
    %v9378 = vld [vmem:[%s9374 + $0xc] sm:$0xf]
    %v9379 = vld [vmem:[%s9374 + $0x10] sm:$0xf]
    %v9380 = vld [vmem:[%s9374 + $0x14] sm:$0xf]
    %v9381 = vld [vmem:[%s9374 + $0x18] sm:$0xf]
    %v9382 = vld [vmem:[%s9374 + $0x1c] sm:$0xf]
    %v9383 = vld [vmem:[%s9374 + $0x20] sm:$0xf]
    %v9384 = vld [vmem:[%s9374 + $0x24] sm:$0xf]
    %v9385 = vld [vmem:[%s9374 + $0x28] sm:$0xf]
    %v9386 = vld [vmem:[%s9374 + $0x2c] sm:$0xf]
    %v9387 = vld [vmem:[%s9374 + $0x30] sm:$0xf]
    %v9388 = vld [vmem:[%s9374 + $0x34] sm:$0xf]
    %v9389 = vld [vmem:[%s9374 + $0x38] sm:$0xf]
    %v9390 = vld [vmem:[%s9374 + $0x3c] sm:$0xf]
    %v9391 = vld [vmem:[%s9374 + $0x40] sm:$0xf]
    %v9392 = vld [vmem:[%s9374 + $0x44] sm:$0xf]
    %v9393 = vld [vmem:[%s9374 + $0x48] sm:$0xf]
    %v9394 = vld [vmem:[%s9374 + $0x4c] sm:$0xf]
    %v9395 = vld [vmem:[%s9374 + $0x50] sm:$0xf]
    %v9396 = vld [vmem:[%s9374 + $0x54] sm:$0xf]
    %v9397 = vld [vmem:[%s9374 + $0x58] sm:$0xf]
    %v9398 = vld [vmem:[%s9374 + $0x5c] sm:$0xf]
    %v9399 = vld [vmem:[%s9374 + $0x60] sm:$0xf]
    %v9400 = vld [vmem:[%s9374 + $0x64] sm:$0xf]
    %v9401 = vld [vmem:[%s9374 + $0x68] sm:$0xf]
    %v9402 = vld [vmem:[%s9374 + $0x6c] sm:$0xf]
    %v9403 = vld [vmem:[%s9374 + $0x70] sm:$0xf]
    %v9404 = vld [vmem:[%s9374 + $0x74] sm:$0xf]
    %v9405 = vld [vmem:[%s9374 + $0x78] sm:$0xf]
    %v9406 = vld [vmem:[%s9374 + $0x7c] sm:$0xf]
    %v9439 = vunpack.c.l.b16 %v9375
    %v9440 = vunpack.c.l.b16 %v9376
    %v9441 = vunpack.c.l.b16 %v9377
    %v9442 = vunpack.c.l.b16 %v9378
    %v9443 = vunpack.c.l.b16 %v9379
    %v9444 = vunpack.c.l.b16 %v9380
    %v9445 = vunpack.c.l.b16 %v9381
    %v9446 = vunpack.c.l.b16 %v9382
    %v9447 = vunpack.c.l.b16 %v9383
    %v9448 = vunpack.c.l.b16 %v9384
    %v9449 = vunpack.c.l.b16 %v9385
    %v9450 = vunpack.c.l.b16 %v9386
    %v9451 = vunpack.c.l.b16 %v9387
    %v9452 = vunpack.c.l.b16 %v9388
    %v9453 = vunpack.c.l.b16 %v9389
    %v9454 = vunpack.c.l.b16 %v9390
    %v9455 = vunpack.c.l.b16 %v9391
    %v9456 = vunpack.c.l.b16 %v9392
    %v9457 = vunpack.c.l.b16 %v9393
    %v9458 = vunpack.c.l.b16 %v9394
    %v9459 = vunpack.c.l.b16 %v9395
    %v9460 = vunpack.c.l.b16 %v9396
    %v9461 = vunpack.c.l.b16 %v9397
    %v9462 = vunpack.c.l.b16 %v9398
    %v9463 = vunpack.c.l.b16 %v9399
    %v9464 = vunpack.c.l.b16 %v9400
    %v9465 = vunpack.c.l.b16 %v9401
    %v9466 = vunpack.c.l.b16 %v9402
    %v9467 = vunpack.c.l.b16 %v9403
    %v9468 = vunpack.c.l.b16 %v9404
    %v9469 = vunpack.c.l.b16 %v9405
    %v9470 = vunpack.c.l.b16 %v9406
    %v9471 = vpack.c.b16 %v9440, %v9439
    %v9472 = vpack.c.b16 %v9442, %v9441
    %v9473 = vpack.c.b16 %v9444, %v9443
    %v9474 = vpack.c.b16 %v9446, %v9445
    %v9475 = vpack.c.b16 %v9448, %v9447
    %v9476 = vpack.c.b16 %v9450, %v9449
    %v9477 = vpack.c.b16 %v9452, %v9451
    %v9478 = vpack.c.b16 %v9454, %v9453
    %v9479 = vpack.c.b16 %v9456, %v9455
    %v9480 = vpack.c.b16 %v9458, %v9457
    %v9481 = vpack.c.b16 %v9460, %v9459
    %v9482 = vpack.c.b16 %v9462, %v9461
    %v9483 = vpack.c.b16 %v9464, %v9463
    %v9484 = vpack.c.b16 %v9466, %v9465
    %v9485 = vpack.c.b16 %v9468, %v9467
    %v9486 = vpack.c.b16 %v9470, %v9469
    %9503 = vmatprep.subr.bf16.mxu0 0
    %9504 = vmatpush1.bf16.msra.mxu0 %v9478
    %9505 = vmatprep.subr.bf16.mxu0 0
    %9506 = vmatpush1.bf16.msra.mxu0 %v9477
    %9507 = vmatprep.subr.bf16.mxu0 0
    %9508 = vmatpush1.bf16.msra.mxu0 %v9476
    %9509 = vmatprep.subr.bf16.mxu0 0
    %9510 = vmatpush1.bf16.msra.mxu0 %v9475
    %9511 = vmatprep.subr.bf16.mxu0 0
    %9512 = vmatpush1.bf16.msra.mxu0 %v9474
    %9513 = vmatprep.subr.bf16.mxu0 0
    %9514 = vmatpush1.bf16.msra.mxu0 %v9473
    %9515 = vmatprep.subr.bf16.mxu0 0
    %9516 = vmatpush1.bf16.msra.mxu0 %v9472
    %9517 = vmatprep.subr.bf16.mxu0 0
    %9518 = vmatpush1.bf16.msra.mxu0 %v9471
    %9519 = vmatprep.subr.bf16.mxu0 0
    %9520 = vmatpush2.bf16.msra.mxu0 %v9486
    %9521 = vmatprep.subr.bf16.mxu0 0
    %9522 = vmatpush2.bf16.msra.mxu0 %v9485
    %9523 = vmatprep.subr.bf16.mxu0 0
    %9524 = vmatpush2.bf16.msra.mxu0 %v9484
    %9525 = vmatprep.subr.bf16.mxu0 0
    %9526 = vmatpush2.bf16.msra.mxu0 %v9483
    %9527 = vmatprep.subr.bf16.mxu0 0
    %9528 = vmatpush2.bf16.msra.mxu0 %v9482
    %9529 = vmatprep.subr.bf16.mxu0 0
    %9530 = vmatpush2.bf16.msra.mxu0 %v9481
    %9531 = vmatprep.subr.bf16.mxu0 0
    %9532 = vmatpush2.bf16.msra.mxu0 %v9480
    %9533 = vmatprep.subr.bf16.mxu0 0
    %9534 = vmatpush2.bf16.msra.mxu0 %v9479
    %9535 = vmatprep.mubr.bf16.mxu0 %v9372
    %9536 = vmatmul.mubr.bf16.gmra.mxu0 %v9368
    %v9537 = vpop.f32.mrf.mxu0
    %v9538 = vadd.f32 0.0, %v9537
    %v9539 = vpop.f32.mrf.mxu0
    %v9540 = vpop.f32.mrf.mxu0
    %v9541 = vpop.f32.mrf.mxu0
    %9542 = vdwg.mxu0
    %v9543 = vadd.f32 %v9317, %v9538
    %v9544 = vpack.c.b16 %v9325, %v9325
    %v9545 = vpack.c.b16 %v9326, %v9326
    %v9546 = vpack.c.b16 %v9346, %v9346
    %v9547 = vpack.c.b16 %v9347, %v9347
    %v9548 = vrot.slane %v9546, 6
    %v9549 = vrot.slane %v9547, 6
    %v9552 = vsel %vm8951, %v9544, %v9548
    %v9556 = vsel %vm8951, %v9545, %v9549
    %s9558 = scalar_lea.vmem [#allocation6], 3456
    %v9559 = vld [vmem:[%s9558] sm:$0xf]
    %v9560 = vld [vmem:[%s9558 + $0x4] sm:$0xf]
    %v9561 = vld [vmem:[%s9558 + $0x8] sm:$0xf]
    %v9562 = vld [vmem:[%s9558 + $0xc] sm:$0xf]
    %v9563 = vld [vmem:[%s9558 + $0x10] sm:$0xf]
    %v9564 = vld [vmem:[%s9558 + $0x14] sm:$0xf]
    %v9565 = vld [vmem:[%s9558 + $0x18] sm:$0xf]
    %v9566 = vld [vmem:[%s9558 + $0x1c] sm:$0xf]
    %v9567 = vld [vmem:[%s9558 + $0x20] sm:$0xf]
    %v9568 = vld [vmem:[%s9558 + $0x24] sm:$0xf]
    %v9569 = vld [vmem:[%s9558 + $0x28] sm:$0xf]
    %v9570 = vld [vmem:[%s9558 + $0x2c] sm:$0xf]
    %v9571 = vld [vmem:[%s9558 + $0x30] sm:$0xf]
    %v9572 = vld [vmem:[%s9558 + $0x34] sm:$0xf]
    %v9573 = vld [vmem:[%s9558 + $0x38] sm:$0xf]
    %v9574 = vld [vmem:[%s9558 + $0x3c] sm:$0xf]
    %v9575 = vld [vmem:[%s9558 + $0x40] sm:$0xf]
    %v9576 = vld [vmem:[%s9558 + $0x44] sm:$0xf]
    %v9577 = vld [vmem:[%s9558 + $0x48] sm:$0xf]
    %v9578 = vld [vmem:[%s9558 + $0x4c] sm:$0xf]
    %v9579 = vld [vmem:[%s9558 + $0x50] sm:$0xf]
    %v9580 = vld [vmem:[%s9558 + $0x54] sm:$0xf]
    %v9581 = vld [vmem:[%s9558 + $0x58] sm:$0xf]
    %v9582 = vld [vmem:[%s9558 + $0x5c] sm:$0xf]
    %v9583 = vld [vmem:[%s9558 + $0x60] sm:$0xf]
    %v9584 = vld [vmem:[%s9558 + $0x64] sm:$0xf]
    %v9585 = vld [vmem:[%s9558 + $0x68] sm:$0xf]
    %v9586 = vld [vmem:[%s9558 + $0x6c] sm:$0xf]
    %v9587 = vld [vmem:[%s9558 + $0x70] sm:$0xf]
    %v9588 = vld [vmem:[%s9558 + $0x74] sm:$0xf]
    %v9589 = vld [vmem:[%s9558 + $0x78] sm:$0xf]
    %v9590 = vld [vmem:[%s9558 + $0x7c] sm:$0xf]
    %v9623 = vunpack.c.l.b16 %v9559
    %v9624 = vunpack.c.l.b16 %v9560
    %v9625 = vunpack.c.l.b16 %v9561
    %v9626 = vunpack.c.l.b16 %v9562
    %v9627 = vunpack.c.l.b16 %v9563
    %v9628 = vunpack.c.l.b16 %v9564
    %v9629 = vunpack.c.l.b16 %v9565
    %v9630 = vunpack.c.l.b16 %v9566
    %v9631 = vunpack.c.l.b16 %v9567
    %v9632 = vunpack.c.l.b16 %v9568
    %v9633 = vunpack.c.l.b16 %v9569
    %v9634 = vunpack.c.l.b16 %v9570
    %v9635 = vunpack.c.l.b16 %v9571
    %v9636 = vunpack.c.l.b16 %v9572
    %v9637 = vunpack.c.l.b16 %v9573
    %v9638 = vunpack.c.l.b16 %v9574
    %v9639 = vunpack.c.l.b16 %v9575
    %v9640 = vunpack.c.l.b16 %v9576
    %v9641 = vunpack.c.l.b16 %v9577
    %v9642 = vunpack.c.l.b16 %v9578
    %v9643 = vunpack.c.l.b16 %v9579
    %v9644 = vunpack.c.l.b16 %v9580
    %v9645 = vunpack.c.l.b16 %v9581
    %v9646 = vunpack.c.l.b16 %v9582
    %v9647 = vunpack.c.l.b16 %v9583
    %v9648 = vunpack.c.l.b16 %v9584
    %v9649 = vunpack.c.l.b16 %v9585
    %v9650 = vunpack.c.l.b16 %v9586
    %v9651 = vunpack.c.l.b16 %v9587
    %v9652 = vunpack.c.l.b16 %v9588
    %v9653 = vunpack.c.l.b16 %v9589
    %v9654 = vunpack.c.l.b16 %v9590
    %v9655 = vpack.c.b16 %v9624, %v9623
    %v9656 = vpack.c.b16 %v9626, %v9625
    %v9657 = vpack.c.b16 %v9628, %v9627
    %v9658 = vpack.c.b16 %v9630, %v9629
    %v9659 = vpack.c.b16 %v9632, %v9631
    %v9660 = vpack.c.b16 %v9634, %v9633
    %v9661 = vpack.c.b16 %v9636, %v9635
    %v9662 = vpack.c.b16 %v9638, %v9637
    %v9663 = vpack.c.b16 %v9640, %v9639
    %v9664 = vpack.c.b16 %v9642, %v9641
    %v9665 = vpack.c.b16 %v9644, %v9643
    %v9666 = vpack.c.b16 %v9646, %v9645
    %v9667 = vpack.c.b16 %v9648, %v9647
    %v9668 = vpack.c.b16 %v9650, %v9649
    %v9669 = vpack.c.b16 %v9652, %v9651
    %v9670 = vpack.c.b16 %v9654, %v9653
    %9687 = vmatprep.subr.bf16.mxu0 0
    %9688 = vmatpush1.bf16.msra.mxu0 %v9662
    %9689 = vmatprep.subr.bf16.mxu0 0
    %9690 = vmatpush1.bf16.msra.mxu0 %v9661
    %9691 = vmatprep.subr.bf16.mxu0 0
    %9692 = vmatpush1.bf16.msra.mxu0 %v9660
    %9693 = vmatprep.subr.bf16.mxu0 0
    %9694 = vmatpush1.bf16.msra.mxu0 %v9659
    %9695 = vmatprep.subr.bf16.mxu0 0
    %9696 = vmatpush1.bf16.msra.mxu0 %v9658
    %9697 = vmatprep.subr.bf16.mxu0 0
    %9698 = vmatpush1.bf16.msra.mxu0 %v9657
    %9699 = vmatprep.subr.bf16.mxu0 0
    %9700 = vmatpush1.bf16.msra.mxu0 %v9656
    %9701 = vmatprep.subr.bf16.mxu0 0
    %9702 = vmatpush1.bf16.msra.mxu0 %v9655
    %9703 = vmatprep.subr.bf16.mxu0 0
    %9704 = vmatpush2.bf16.msra.mxu0 %v9670
    %9705 = vmatprep.subr.bf16.mxu0 0
    %9706 = vmatpush2.bf16.msra.mxu0 %v9669
    %9707 = vmatprep.subr.bf16.mxu0 0
    %9708 = vmatpush2.bf16.msra.mxu0 %v9668
    %9709 = vmatprep.subr.bf16.mxu0 0
    %9710 = vmatpush2.bf16.msra.mxu0 %v9667
    %9711 = vmatprep.subr.bf16.mxu0 0
    %9712 = vmatpush2.bf16.msra.mxu0 %v9666
    %9713 = vmatprep.subr.bf16.mxu0 0
    %9714 = vmatpush2.bf16.msra.mxu0 %v9665
    %9715 = vmatprep.subr.bf16.mxu0 0
    %9716 = vmatpush2.bf16.msra.mxu0 %v9664
    %9717 = vmatprep.subr.bf16.mxu0 0
    %9718 = vmatpush2.bf16.msra.mxu0 %v9663
    %9719 = vmatprep.mubr.bf16.mxu0 %v9556
    %9720 = vmatmul.mubr.bf16.gmra.mxu0 %v9552
    %v9721 = vpop.f32.mrf.mxu0
    %v9722 = vadd.f32 0.0, %v9721
    %v9723 = vpop.f32.mrf.mxu0
    %v9724 = vpop.f32.mrf.mxu0
    %v9725 = vpop.f32.mrf.mxu0
    %9726 = vdwg.mxu0
    %v9727 = vadd.f32 %v9543, %v9722
    %v9728 = vld [vmem:[#allocation2 + $0x138] sm:$0x77]
    %v9729 = vld [vmem:[#allocation2 + $0x148] sm:$0x77]
    %v9731 = vunpack.c.l.b16 %v9728
    %v9732 = vunpack.c.h.b16 %v9728
    %v9733 = vpack.c.b16 %v9731, %v9731
    %v9734 = vpack.c.b16 %v9732, %v9732
    %v9736 = vshrl.u32 %v9733, 16
    %v9738 = vshll.u32 %v9733, 16
    %v9740 = vrot.slane %v9738, 1
    %v9741 = vor.u32 %v9736, %v9740
    %v9743 = vshrl.u32 %v9734, 16
    %v9745 = vshll.u32 %v9734, 16
    %v9747 = vrot.slane %v9745, 1
    %v9748 = vor.u32 %v9743, %v9747
    %v9750 = vunpack.c.l.b16 %v9729
    %v9751 = vunpack.c.h.b16 %v9729
    %v9752 = vpack.c.b16 %v9750, %v9750
    %v9753 = vpack.c.b16 %v9751, %v9751
    %v9755 = vshrl.u32 %v9752, 16
    %v9757 = vrot.slane %v9755, 6
    %v9758 = vshll.u32 %v9752, 16
    %v9760 = vrot.slane %v9758, 7
    %v9761 = vor.u32 %v9757, %v9760
    %v9763 = vshrl.u32 %v9753, 16
    %v9765 = vrot.slane %v9763, 6
    %v9766 = vshll.u32 %v9753, 16
    %v9768 = vrot.slane %v9766, 7
    %v9769 = vor.u32 %v9765, %v9768
    %v9772 = vsel %vm8951, %v9741, %v9761
    %v9776 = vsel %vm8951, %v9748, %v9769
    %s9778 = scalar_lea.vmem [#allocation6], 3584
    %v9779 = vld [vmem:[%s9778] sm:$0xf]
    %v9780 = vld [vmem:[%s9778 + $0x4] sm:$0xf]
    %v9781 = vld [vmem:[%s9778 + $0x8] sm:$0xf]
    %v9782 = vld [vmem:[%s9778 + $0xc] sm:$0xf]
    %v9783 = vld [vmem:[%s9778 + $0x10] sm:$0xf]
    %v9784 = vld [vmem:[%s9778 + $0x14] sm:$0xf]
    %v9785 = vld [vmem:[%s9778 + $0x18] sm:$0xf]
    %v9786 = vld [vmem:[%s9778 + $0x1c] sm:$0xf]
    %v9787 = vld [vmem:[%s9778 + $0x20] sm:$0xf]
    %v9788 = vld [vmem:[%s9778 + $0x24] sm:$0xf]
    %v9789 = vld [vmem:[%s9778 + $0x28] sm:$0xf]
    %v9790 = vld [vmem:[%s9778 + $0x2c] sm:$0xf]
    %v9791 = vld [vmem:[%s9778 + $0x30] sm:$0xf]
    %v9792 = vld [vmem:[%s9778 + $0x34] sm:$0xf]
    %v9793 = vld [vmem:[%s9778 + $0x38] sm:$0xf]
    %v9794 = vld [vmem:[%s9778 + $0x3c] sm:$0xf]
    %v9795 = vld [vmem:[%s9778 + $0x40] sm:$0xf]
    %v9796 = vld [vmem:[%s9778 + $0x44] sm:$0xf]
    %v9797 = vld [vmem:[%s9778 + $0x48] sm:$0xf]
    %v9798 = vld [vmem:[%s9778 + $0x4c] sm:$0xf]
    %v9799 = vld [vmem:[%s9778 + $0x50] sm:$0xf]
    %v9800 = vld [vmem:[%s9778 + $0x54] sm:$0xf]
    %v9801 = vld [vmem:[%s9778 + $0x58] sm:$0xf]
    %v9802 = vld [vmem:[%s9778 + $0x5c] sm:$0xf]
    %v9803 = vld [vmem:[%s9778 + $0x60] sm:$0xf]
    %v9804 = vld [vmem:[%s9778 + $0x64] sm:$0xf]
    %v9805 = vld [vmem:[%s9778 + $0x68] sm:$0xf]
    %v9806 = vld [vmem:[%s9778 + $0x6c] sm:$0xf]
    %v9807 = vld [vmem:[%s9778 + $0x70] sm:$0xf]
    %v9808 = vld [vmem:[%s9778 + $0x74] sm:$0xf]
    %v9809 = vld [vmem:[%s9778 + $0x78] sm:$0xf]
    %v9810 = vld [vmem:[%s9778 + $0x7c] sm:$0xf]
    %v9843 = vunpack.c.l.b16 %v9779
    %v9844 = vunpack.c.l.b16 %v9780
    %v9845 = vunpack.c.l.b16 %v9781
    %v9846 = vunpack.c.l.b16 %v9782
    %v9847 = vunpack.c.l.b16 %v9783
    %v9848 = vunpack.c.l.b16 %v9784
    %v9849 = vunpack.c.l.b16 %v9785
    %v9850 = vunpack.c.l.b16 %v9786
    %v9851 = vunpack.c.l.b16 %v9787
    %v9852 = vunpack.c.l.b16 %v9788
    %v9853 = vunpack.c.l.b16 %v9789
    %v9854 = vunpack.c.l.b16 %v9790
    %v9855 = vunpack.c.l.b16 %v9791
    %v9856 = vunpack.c.l.b16 %v9792
    %v9857 = vunpack.c.l.b16 %v9793
    %v9858 = vunpack.c.l.b16 %v9794
    %v9859 = vunpack.c.l.b16 %v9795
    %v9860 = vunpack.c.l.b16 %v9796
    %v9861 = vunpack.c.l.b16 %v9797
    %v9862 = vunpack.c.l.b16 %v9798
    %v9863 = vunpack.c.l.b16 %v9799
    %v9864 = vunpack.c.l.b16 %v9800
    %v9865 = vunpack.c.l.b16 %v9801
    %v9866 = vunpack.c.l.b16 %v9802
    %v9867 = vunpack.c.l.b16 %v9803
    %v9868 = vunpack.c.l.b16 %v9804
    %v9869 = vunpack.c.l.b16 %v9805
    %v9870 = vunpack.c.l.b16 %v9806
    %v9871 = vunpack.c.l.b16 %v9807
    %v9872 = vunpack.c.l.b16 %v9808
    %v9873 = vunpack.c.l.b16 %v9809
    %v9874 = vunpack.c.l.b16 %v9810
    %v9875 = vpack.c.b16 %v9844, %v9843
    %v9876 = vpack.c.b16 %v9846, %v9845
    %v9877 = vpack.c.b16 %v9848, %v9847
    %v9878 = vpack.c.b16 %v9850, %v9849
    %v9879 = vpack.c.b16 %v9852, %v9851
    %v9880 = vpack.c.b16 %v9854, %v9853
    %v9881 = vpack.c.b16 %v9856, %v9855
    %v9882 = vpack.c.b16 %v9858, %v9857
    %v9883 = vpack.c.b16 %v9860, %v9859
    %v9884 = vpack.c.b16 %v9862, %v9861
    %v9885 = vpack.c.b16 %v9864, %v9863
    %v9886 = vpack.c.b16 %v9866, %v9865
    %v9887 = vpack.c.b16 %v9868, %v9867
    %v9888 = vpack.c.b16 %v9870, %v9869
    %v9889 = vpack.c.b16 %v9872, %v9871
    %v9890 = vpack.c.b16 %v9874, %v9873
    %9907 = vmatprep.subr.bf16.mxu0 0
    %9908 = vmatpush1.bf16.msra.mxu0 %v9882
    %9909 = vmatprep.subr.bf16.mxu0 0
    %9910 = vmatpush1.bf16.msra.mxu0 %v9881
    %9911 = vmatprep.subr.bf16.mxu0 0
    %9912 = vmatpush1.bf16.msra.mxu0 %v9880
    %9913 = vmatprep.subr.bf16.mxu0 0
    %9914 = vmatpush1.bf16.msra.mxu0 %v9879
    %9915 = vmatprep.subr.bf16.mxu0 0
    %9916 = vmatpush1.bf16.msra.mxu0 %v9878
    %9917 = vmatprep.subr.bf16.mxu0 0
    %9918 = vmatpush1.bf16.msra.mxu0 %v9877
    %9919 = vmatprep.subr.bf16.mxu0 0
    %9920 = vmatpush1.bf16.msra.mxu0 %v9876
    %9921 = vmatprep.subr.bf16.mxu0 0
    %9922 = vmatpush1.bf16.msra.mxu0 %v9875
    %9923 = vmatprep.subr.bf16.mxu0 0
    %9924 = vmatpush2.bf16.msra.mxu0 %v9890
    %9925 = vmatprep.subr.bf16.mxu0 0
    %9926 = vmatpush2.bf16.msra.mxu0 %v9889
    %9927 = vmatprep.subr.bf16.mxu0 0
    %9928 = vmatpush2.bf16.msra.mxu0 %v9888
    %9929 = vmatprep.subr.bf16.mxu0 0
    %9930 = vmatpush2.bf16.msra.mxu0 %v9887
    %9931 = vmatprep.subr.bf16.mxu0 0
    %9932 = vmatpush2.bf16.msra.mxu0 %v9886
    %9933 = vmatprep.subr.bf16.mxu0 0
    %9934 = vmatpush2.bf16.msra.mxu0 %v9885
    %9935 = vmatprep.subr.bf16.mxu0 0
    %9936 = vmatpush2.bf16.msra.mxu0 %v9884
    %9937 = vmatprep.subr.bf16.mxu0 0
    %9938 = vmatpush2.bf16.msra.mxu0 %v9883
    %9939 = vmatprep.mubr.bf16.mxu0 %v9776
    %9940 = vmatmul.mubr.bf16.gmra.mxu0 %v9772
    %v9941 = vpop.f32.mrf.mxu0
    %v9942 = vadd.f32 0.0, %v9941
    %v9943 = vpop.f32.mrf.mxu0
    %v9944 = vpop.f32.mrf.mxu0
    %v9945 = vpop.f32.mrf.mxu0
    %9946 = vdwg.mxu0
    %v9947 = vadd.f32 %v9727, %v9942
    %v9948 = vld [vmem:[#allocation2 + $0x138] sm:$0x66]
    %v9949 = vld [vmem:[#allocation2 + $0x148] sm:$0x66]
    %v9951 = vunpack.c.l.b16 %v9948
    %v9952 = vunpack.c.h.b16 %v9948
    %v9953 = vpack.c.b16 %v9951, %v9951
    %v9954 = vpack.c.b16 %v9952, %v9952
    %v9955 = vrot.slane %v9953, 1
    %v9956 = vrot.slane %v9954, 1
    %v9958 = vunpack.c.l.b16 %v9949
    %v9959 = vunpack.c.h.b16 %v9949
    %v9960 = vpack.c.b16 %v9958, %v9958
    %v9961 = vpack.c.b16 %v9959, %v9959
    %v9962 = vrot.slane %v9960, 7
    %v9963 = vrot.slane %v9961, 7
    %v9966 = vsel %vm8951, %v9955, %v9962
    %v9970 = vsel %vm8951, %v9956, %v9963
    %s9972 = scalar_lea.vmem [#allocation6], 3712
    %v9973 = vld [vmem:[%s9972] sm:$0xf]
    %v9974 = vld [vmem:[%s9972 + $0x4] sm:$0xf]
    %v9975 = vld [vmem:[%s9972 + $0x8] sm:$0xf]
    %v9976 = vld [vmem:[%s9972 + $0xc] sm:$0xf]
    %v9977 = vld [vmem:[%s9972 + $0x10] sm:$0xf]
    %v9978 = vld [vmem:[%s9972 + $0x14] sm:$0xf]
    %v9979 = vld [vmem:[%s9972 + $0x18] sm:$0xf]
    %v9980 = vld [vmem:[%s9972 + $0x1c] sm:$0xf]
    %v9981 = vld [vmem:[%s9972 + $0x20] sm:$0xf]
    %v9982 = vld [vmem:[%s9972 + $0x24] sm:$0xf]
    %v9983 = vld [vmem:[%s9972 + $0x28] sm:$0xf]
    %v9984 = vld [vmem:[%s9972 + $0x2c] sm:$0xf]
    %v9985 = vld [vmem:[%s9972 + $0x30] sm:$0xf]
    %v9986 = vld [vmem:[%s9972 + $0x34] sm:$0xf]
    %v9987 = vld [vmem:[%s9972 + $0x38] sm:$0xf]
    %v9988 = vld [vmem:[%s9972 + $0x3c] sm:$0xf]
    %v9989 = vld [vmem:[%s9972 + $0x40] sm:$0xf]
    %v9990 = vld [vmem:[%s9972 + $0x44] sm:$0xf]
    %v9991 = vld [vmem:[%s9972 + $0x48] sm:$0xf]
    %v9992 = vld [vmem:[%s9972 + $0x4c] sm:$0xf]
    %v9993 = vld [vmem:[%s9972 + $0x50] sm:$0xf]
    %v9994 = vld [vmem:[%s9972 + $0x54] sm:$0xf]
    %v9995 = vld [vmem:[%s9972 + $0x58] sm:$0xf]
    %v9996 = vld [vmem:[%s9972 + $0x5c] sm:$0xf]
    %v9997 = vld [vmem:[%s9972 + $0x60] sm:$0xf]
    %v9998 = vld [vmem:[%s9972 + $0x64] sm:$0xf]
    %v9999 = vld [vmem:[%s9972 + $0x68] sm:$0xf]
    %v10000 = vld [vmem:[%s9972 + $0x6c] sm:$0xf]
    %v10001 = vld [vmem:[%s9972 + $0x70] sm:$0xf]
    %v10002 = vld [vmem:[%s9972 + $0x74] sm:$0xf]
    %v10003 = vld [vmem:[%s9972 + $0x78] sm:$0xf]
    %v10004 = vld [vmem:[%s9972 + $0x7c] sm:$0xf]
    %v10037 = vunpack.c.l.b16 %v9973
    %v10038 = vunpack.c.l.b16 %v9974
    %v10039 = vunpack.c.l.b16 %v9975
    %v10040 = vunpack.c.l.b16 %v9976
    %v10041 = vunpack.c.l.b16 %v9977
    %v10042 = vunpack.c.l.b16 %v9978
    %v10043 = vunpack.c.l.b16 %v9979
    %v10044 = vunpack.c.l.b16 %v9980
    %v10045 = vunpack.c.l.b16 %v9981
    %v10046 = vunpack.c.l.b16 %v9982
    %v10047 = vunpack.c.l.b16 %v9983
    %v10048 = vunpack.c.l.b16 %v9984
    %v10049 = vunpack.c.l.b16 %v9985
    %v10050 = vunpack.c.l.b16 %v9986
    %v10051 = vunpack.c.l.b16 %v9987
    %v10052 = vunpack.c.l.b16 %v9988
    %v10053 = vunpack.c.l.b16 %v9989
    %v10054 = vunpack.c.l.b16 %v9990
    %v10055 = vunpack.c.l.b16 %v9991
    %v10056 = vunpack.c.l.b16 %v9992
    %v10057 = vunpack.c.l.b16 %v9993
    %v10058 = vunpack.c.l.b16 %v9994
    %v10059 = vunpack.c.l.b16 %v9995
    %v10060 = vunpack.c.l.b16 %v9996
    %v10061 = vunpack.c.l.b16 %v9997
    %v10062 = vunpack.c.l.b16 %v9998
    %v10063 = vunpack.c.l.b16 %v9999
    %v10064 = vunpack.c.l.b16 %v10000
    %v10065 = vunpack.c.l.b16 %v10001
    %v10066 = vunpack.c.l.b16 %v10002
    %v10067 = vunpack.c.l.b16 %v10003
    %v10068 = vunpack.c.l.b16 %v10004
    %v10069 = vpack.c.b16 %v10038, %v10037
    %v10070 = vpack.c.b16 %v10040, %v10039
    %v10071 = vpack.c.b16 %v10042, %v10041
    %v10072 = vpack.c.b16 %v10044, %v10043
    %v10073 = vpack.c.b16 %v10046, %v10045
    %v10074 = vpack.c.b16 %v10048, %v10047
    %v10075 = vpack.c.b16 %v10050, %v10049
    %v10076 = vpack.c.b16 %v10052, %v10051
    %v10077 = vpack.c.b16 %v10054, %v10053
    %v10078 = vpack.c.b16 %v10056, %v10055
    %v10079 = vpack.c.b16 %v10058, %v10057
    %v10080 = vpack.c.b16 %v10060, %v10059
    %v10081 = vpack.c.b16 %v10062, %v10061
    %v10082 = vpack.c.b16 %v10064, %v10063
    %v10083 = vpack.c.b16 %v10066, %v10065
    %v10084 = vpack.c.b16 %v10068, %v10067
    %10101 = vmatprep.subr.bf16.mxu0 0
    %10102 = vmatpush1.bf16.msra.mxu0 %v10076
    %10103 = vmatprep.subr.bf16.mxu0 0
    %10104 = vmatpush1.bf16.msra.mxu0 %v10075
    %10105 = vmatprep.subr.bf16.mxu0 0
    %10106 = vmatpush1.bf16.msra.mxu0 %v10074
    %10107 = vmatprep.subr.bf16.mxu0 0
    %10108 = vmatpush1.bf16.msra.mxu0 %v10073
    %10109 = vmatprep.subr.bf16.mxu0 0
    %10110 = vmatpush1.bf16.msra.mxu0 %v10072
    %10111 = vmatprep.subr.bf16.mxu0 0
    %10112 = vmatpush1.bf16.msra.mxu0 %v10071
    %10113 = vmatprep.subr.bf16.mxu0 0
    %10114 = vmatpush1.bf16.msra.mxu0 %v10070
    %10115 = vmatprep.subr.bf16.mxu0 0
    %10116 = vmatpush1.bf16.msra.mxu0 %v10069
    %10117 = vmatprep.subr.bf16.mxu0 0
    %10118 = vmatpush2.bf16.msra.mxu0 %v10084
    %10119 = vmatprep.subr.bf16.mxu0 0
    %10120 = vmatpush2.bf16.msra.mxu0 %v10083
    %10121 = vmatprep.subr.bf16.mxu0 0
    %10122 = vmatpush2.bf16.msra.mxu0 %v10082
    %10123 = vmatprep.subr.bf16.mxu0 0
    %10124 = vmatpush2.bf16.msra.mxu0 %v10081
    %10125 = vmatprep.subr.bf16.mxu0 0
    %10126 = vmatpush2.bf16.msra.mxu0 %v10080
    %10127 = vmatprep.subr.bf16.mxu0 0
    %10128 = vmatpush2.bf16.msra.mxu0 %v10079
    %10129 = vmatprep.subr.bf16.mxu0 0
    %10130 = vmatpush2.bf16.msra.mxu0 %v10078
    %10131 = vmatprep.subr.bf16.mxu0 0
    %10132 = vmatpush2.bf16.msra.mxu0 %v10077
    %10133 = vmatprep.mubr.bf16.mxu0 %v9970
    %10134 = vmatmul.mubr.bf16.gmra.mxu0 %v9966
    %v10135 = vpop.f32.mrf.mxu0
    %v10136 = vadd.f32 0.0, %v10135
    %v10137 = vpop.f32.mrf.mxu0
    %v10138 = vpop.f32.mrf.mxu0
    %v10139 = vpop.f32.mrf.mxu0
    %10140 = vdwg.mxu0
    %v10141 = vadd.f32 %v9947, %v10136
    %v10142 = vrot.slane %v10141, 4
    %v10143 = vadd.f32 %v10141, %v10142
    %v10144 = vrot.slane %v10143, 2
    %v10145 = vadd.f32 %v10143, %v10144
    %v10146 = vrot.slane %v10145, 1
    %v10147 = vadd.f32 %v10145, %v10146
    %v10148 = vmul.f32 %v10141, %v10141
    %v10149 = vrot.slane %v10148, 4
    %v10150 = vadd.f32 %v10148, %v10149
    %v10151 = vrot.slane %v10150, 2
    %v10152 = vadd.f32 %v10150, %v10151
    %v10153 = vrot.slane %v10152, 1
    %v10154 = vadd.f32 %v10152, %v10153
    %v10155 = vmul.f32 %v10147, 0.125
    %v10156 = vmul.f32 %v10154, 0.125
    %v10157 = vmul.f32 %v10155, %v10155
    %v10158 = vsub.f32 %v10156, %v10157
    %v10159 = vmax.f32 %v10158, 0.0
    %v10160 = vld [vmem:[#allocation8 + $0x5] sm:$0x1]
    %v10161 = vld [vmem:[#allocation9 + $0x5] sm:$0x1]
    %v10162 = vld [vmem:[#allocation11 + $0x5] sm:$0x1]
    %v10163 = vadd.f32 %v10159, 1e-05
    %v10164 = vrsqrt.pop %v10163
    %v10165 = vmul.f32 %v10160, %v10164
    %v10166 = vmul.f32 %v10155, %v10165
    %v10167 = vsub.f32 %v10161, %v10166
    %v10168 = vlaneseq
    %v10169 = vshrl.u32 %v10168, 7
    %v10170 = vsub.s32 0, %v10169
    %v10171 = vrot.slane %v10165, %v10170
    %v10172 = vmul.f32 %v10141, %v10171
    %v10173 = vlaneseq
    %v10174 = vshrl.u32 %v10173, 7
    %v10175 = vsub.s32 0, %v10174
    %v10176 = vrot.slane %v10167, %v10175
    %v10177 = vadd.f32 %v10172, %v10176
    %vm10178 = vcmp.gt.f32.partialorder %v10177, 0.0
    %v10179 = vlaneseq
    %v10180 = vshrl.u32 %v10179, 7
    %v10181 = vsub.s32 0, %v10180
    %v10182 = vrot.slane %v10162, %v10181
    %v10183 = vmul.f32 %v10182, %v10177
    %v10184 = vsel %vm10178, %v10177, %v10183
    %v10185 = vpack.c.bf16 %v10184, %v10184
    %v10186 = vld [vmem:[%s3] sm:$0x3]
    %vm10187 = vcmask 64512
    %v10189 = vsel %vm10187, %v10186, 0
    %v10192 = vsel %vm7543, %v10185, 0
    %10194 = vmatprep.subr.bf16.mxu0 0
    %10195 = vmatpush1.bf16.msra.mxu0 0
    %10196 = vmatprep.subr.bf16.mxu0 0
    %10197 = vmatpush1.bf16.msra.mxu0 0
    %10198 = vmatprep.subr.bf16.mxu0 0
    %10199 = vmatpush1.bf16.msra.mxu0 0
    %10200 = vmatprep.subr.bf16.mxu0 0
    %10201 = vmatpush1.bf16.msra.mxu0 0
    %10202 = vmatprep.subr.bf16.mxu0 0
    %10203 = vmatpush1.bf16.msra.mxu0 0
    %10204 = vmatprep.subr.bf16.mxu0 0
    %10205 = vmatpush1.bf16.msra.mxu0 0
    %10206 = vmatprep.subr.bf16.mxu0 0
    %10207 = vmatpush1.bf16.msra.mxu0 0
    %10208 = vmatprep.subr.bf16.mxu0 0
    %10209 = vmatpush1.bf16.msra.mxu0 %v10192
    %10210 = vmatprep.subr.bf16.mxu0 0
    %10211 = vmatpush2.bf16.msra.mxu0 0
    %10212 = vmatprep.subr.bf16.mxu0 0
    %10213 = vmatpush2.bf16.msra.mxu0 0
    %10214 = vmatprep.subr.bf16.mxu0 0
    %10215 = vmatpush2.bf16.msra.mxu0 0
    %10216 = vmatprep.subr.bf16.mxu0 0
    %10217 = vmatpush2.bf16.msra.mxu0 0
    %10218 = vmatprep.subr.bf16.mxu0 0
    %10219 = vmatpush2.bf16.msra.mxu0 0
    %10220 = vmatprep.subr.bf16.mxu0 0
    %10221 = vmatpush2.bf16.msra.mxu0 0
    %10222 = vmatprep.subr.bf16.mxu0 0
    %10223 = vmatpush2.bf16.msra.mxu0 0
    %10224 = vmatprep.subr.bf16.mxu0 0
    %10225 = vmatpush2.bf16.msra.mxu0 0
    %10226 = vmatprep.mubr.bf16.mxu0 0
    %10227 = vmatmul.mubr.bf16.gmra.mxu0 %v10189
    %v10228 = vpop.f32.mrf.mxu0
    %v10229 = vadd.f32 0.0, %v10228
    %v10230 = vpop.f32.mrf.mxu0
    %v10231 = vpop.f32.mrf.mxu0
    %v10232 = vpop.f32.mrf.mxu0
    %10233 = vdwg.mxu0
    %v10234 = vpack.c.bf16 %v10229, %v10229
    %v10235 = vld [vmem:[%s4] sm:$0x3]
    %v10237 = vsel %vm10187, %v10235, 0
    %10239 = vmatprep.subr.bf16.mxu0 0
    %10240 = vmatpush1.bf16.msra.mxu0 0
    %10241 = vmatprep.subr.bf16.mxu0 0
    %10242 = vmatpush1.bf16.msra.mxu0 0
    %10243 = vmatprep.subr.bf16.mxu0 0
    %10244 = vmatpush1.bf16.msra.mxu0 0
    %10245 = vmatprep.subr.bf16.mxu0 0
    %10246 = vmatpush1.bf16.msra.mxu0 0
    %10247 = vmatprep.subr.bf16.mxu0 0
    %10248 = vmatpush1.bf16.msra.mxu0 0
    %10249 = vmatprep.subr.bf16.mxu0 0
    %10250 = vmatpush1.bf16.msra.mxu0 0
    %10251 = vmatprep.subr.bf16.mxu0 0
    %10252 = vmatpush1.bf16.msra.mxu0 0
    %10253 = vmatprep.subr.bf16.mxu0 0
    %10254 = vmatpush1.bf16.msra.mxu0 %v10192
    %10255 = vmatprep.subr.bf16.mxu0 0
    %10256 = vmatpush2.bf16.msra.mxu0 0
    %10257 = vmatprep.subr.bf16.mxu0 0
    %10258 = vmatpush2.bf16.msra.mxu0 0
    %10259 = vmatprep.subr.bf16.mxu0 0
    %10260 = vmatpush2.bf16.msra.mxu0 0
    %10261 = vmatprep.subr.bf16.mxu0 0
    %10262 = vmatpush2.bf16.msra.mxu0 0
    %10263 = vmatprep.subr.bf16.mxu0 0
    %10264 = vmatpush2.bf16.msra.mxu0 0
    %10265 = vmatprep.subr.bf16.mxu0 0
    %10266 = vmatpush2.bf16.msra.mxu0 0
    %10267 = vmatprep.subr.bf16.mxu0 0
    %10268 = vmatpush2.bf16.msra.mxu0 0
    %10269 = vmatprep.subr.bf16.mxu0 0
    %10270 = vmatpush2.bf16.msra.mxu0 0
    %10271 = vmatprep.mubr.bf16.mxu0 0
    %10272 = vmatmul.mubr.bf16.gmra.mxu0 %v10237
    %v10273 = vpop.f32.mrf.mxu0
    %v10274 = vadd.f32 0.0, %v10273
    %v10275 = vpop.f32.mrf.mxu0
    %v10276 = vpop.f32.mrf.mxu0
    %v10277 = vpop.f32.mrf.mxu0
    %10278 = vdwg.mxu0
    %v10279 = vpack.c.bf16 %v10274, %v10274
    %v10282 = vunpack.c.l.b16 %v10234
    %v10283 = vunpack.c.l.b16 %v10279
    %v10284 = vpack.c.b16 %v10283, %v10282
    %10286 = vst [vmem:[#allocation2 + $0x158] sm:$0x11] %v10284
    %v10287 = vrot.slane %v10284, 5
    %v10288 = vrot.slane %v10287, 4
    %10290 = vst [vmem:[#allocation2 + $0x168] sm:$0x11] %v10288
    %v10291 = vld [vmem:[#allocation2 + $0x150] sm:$0xcc]
    %v10292 = vld [vmem:[#allocation2 + $0x160] sm:$0xcc]
    %v10294 = vunpack.c.l.b16 %v10291
    %v10295 = vunpack.c.h.b16 %v10291
    %v10296 = vpack.c.b16 %v10294, %v10294
    %v10297 = vpack.c.b16 %v10295, %v10295
    %v10299 = vshrl.u32 %v10296, 16
    %v10301 = vrot.slane %v10299, 2
    %v10302 = vshll.u32 %v10296, 16
    %v10304 = vrot.slane %v10302, 3
    %v10305 = vor.u32 %v10301, %v10304
    %v10307 = vshrl.u32 %v10297, 16
    %v10309 = vrot.slane %v10307, 2
    %v10310 = vshll.u32 %v10297, 16
    %v10312 = vrot.slane %v10310, 3
    %v10313 = vor.u32 %v10309, %v10312
    %v10315 = vunpack.c.l.b16 %v10292
    %v10316 = vunpack.c.h.b16 %v10292
    %v10317 = vpack.c.b16 %v10315, %v10315
    %v10318 = vpack.c.b16 %v10316, %v10316
    %v10320 = vshrl.u32 %v10317, 16
    %v10322 = vrot.slane %v10320, 1
    %v10323 = vshll.u32 %v10317, 16
    %v10325 = vrot.slane %v10323, 2
    %v10326 = vor.u32 %v10322, %v10325
    %v10328 = vshrl.u32 %v10318, 16
    %v10330 = vrot.slane %v10328, 1
    %v10331 = vshll.u32 %v10318, 16
    %v10333 = vrot.slane %v10331, 2
    %v10334 = vor.u32 %v10330, %v10333
    %vm10335 = vcmask 1040384
    %v10338 = vsel %vm10335, %v10305, %v10326
    %v10342 = vsel %vm10335, %v10313, %v10334
    %s10344 = scalar_lea.vmem [#allocation6], 3840
    %v10345 = vld [vmem:[%s10344] sm:$0xf]
    %v10346 = vld [vmem:[%s10344 + $0x4] sm:$0xf]
    %v10347 = vld [vmem:[%s10344 + $0x8] sm:$0xf]
    %v10348 = vld [vmem:[%s10344 + $0xc] sm:$0xf]
    %v10349 = vld [vmem:[%s10344 + $0x10] sm:$0xf]
    %v10350 = vld [vmem:[%s10344 + $0x14] sm:$0xf]
    %v10351 = vld [vmem:[%s10344 + $0x18] sm:$0xf]
    %v10352 = vld [vmem:[%s10344 + $0x1c] sm:$0xf]
    %v10353 = vld [vmem:[%s10344 + $0x20] sm:$0xf]
    %v10354 = vld [vmem:[%s10344 + $0x24] sm:$0xf]
    %v10355 = vld [vmem:[%s10344 + $0x28] sm:$0xf]
    %v10356 = vld [vmem:[%s10344 + $0x2c] sm:$0xf]
    %v10357 = vld [vmem:[%s10344 + $0x30] sm:$0xf]
    %v10358 = vld [vmem:[%s10344 + $0x34] sm:$0xf]
    %v10359 = vld [vmem:[%s10344 + $0x38] sm:$0xf]
    %v10360 = vld [vmem:[%s10344 + $0x3c] sm:$0xf]
    %v10361 = vld [vmem:[%s10344 + $0x40] sm:$0xf]
    %v10362 = vld [vmem:[%s10344 + $0x44] sm:$0xf]
    %v10363 = vld [vmem:[%s10344 + $0x48] sm:$0xf]
    %v10364 = vld [vmem:[%s10344 + $0x4c] sm:$0xf]
    %v10365 = vld [vmem:[%s10344 + $0x50] sm:$0xf]
    %v10366 = vld [vmem:[%s10344 + $0x54] sm:$0xf]
    %v10367 = vld [vmem:[%s10344 + $0x58] sm:$0xf]
    %v10368 = vld [vmem:[%s10344 + $0x5c] sm:$0xf]
    %v10369 = vld [vmem:[%s10344 + $0x60] sm:$0xf]
    %v10370 = vld [vmem:[%s10344 + $0x64] sm:$0xf]
    %v10371 = vld [vmem:[%s10344 + $0x68] sm:$0xf]
    %v10372 = vld [vmem:[%s10344 + $0x6c] sm:$0xf]
    %v10373 = vld [vmem:[%s10344 + $0x70] sm:$0xf]
    %v10374 = vld [vmem:[%s10344 + $0x74] sm:$0xf]
    %v10375 = vld [vmem:[%s10344 + $0x78] sm:$0xf]
    %v10376 = vld [vmem:[%s10344 + $0x7c] sm:$0xf]
    %v10377 = vld [vmem:[#allocation2 + $0x150] sm:$0x88]
    %v10378 = vld [vmem:[#allocation2 + $0x160] sm:$0x88]
    %v10380 = vunpack.c.l.b16 %v10377
    %v10381 = vunpack.c.h.b16 %v10377
    %v10382 = vpack.c.b16 %v10380, %v10380
    %v10383 = vpack.c.b16 %v10381, %v10381
    %v10384 = vrot.slane %v10382, 3
    %v10385 = vrot.slane %v10383, 3
    %v10387 = vunpack.c.l.b16 %v10378
    %v10388 = vunpack.c.h.b16 %v10378
    %v10389 = vpack.c.b16 %v10387, %v10387
    %v10390 = vpack.c.b16 %v10388, %v10388
    %v10391 = vrot.slane %v10389, 2
    %v10392 = vrot.slane %v10390, 2
    %v10395 = vsel %vm10335, %v10384, %v10391
    %v10399 = vsel %vm10335, %v10385, %v10392
    %s10401 = scalar_lea.vmem [#allocation6], 3968
    %v10402 = vld [vmem:[%s10401] sm:$0xf]
    %v10403 = vld [vmem:[%s10401 + $0x4] sm:$0xf]
    %v10404 = vld [vmem:[%s10401 + $0x8] sm:$0xf]
    %v10405 = vld [vmem:[%s10401 + $0xc] sm:$0xf]
    %v10406 = vld [vmem:[%s10401 + $0x10] sm:$0xf]
    %v10407 = vld [vmem:[%s10401 + $0x14] sm:$0xf]
    %v10408 = vld [vmem:[%s10401 + $0x18] sm:$0xf]
    %v10409 = vld [vmem:[%s10401 + $0x1c] sm:$0xf]
    %v10410 = vld [vmem:[%s10401 + $0x20] sm:$0xf]
    %v10411 = vld [vmem:[%s10401 + $0x24] sm:$0xf]
    %v10412 = vld [vmem:[%s10401 + $0x28] sm:$0xf]
    %v10413 = vld [vmem:[%s10401 + $0x2c] sm:$0xf]
    %v10414 = vld [vmem:[%s10401 + $0x30] sm:$0xf]
    %v10415 = vld [vmem:[%s10401 + $0x34] sm:$0xf]
    %v10416 = vld [vmem:[%s10401 + $0x38] sm:$0xf]
    %v10417 = vld [vmem:[%s10401 + $0x3c] sm:$0xf]
    %v10418 = vld [vmem:[%s10401 + $0x40] sm:$0xf]
    %v10419 = vld [vmem:[%s10401 + $0x44] sm:$0xf]
    %v10420 = vld [vmem:[%s10401 + $0x48] sm:$0xf]
    %v10421 = vld [vmem:[%s10401 + $0x4c] sm:$0xf]
    %v10422 = vld [vmem:[%s10401 + $0x50] sm:$0xf]
    %v10423 = vld [vmem:[%s10401 + $0x54] sm:$0xf]
    %v10424 = vld [vmem:[%s10401 + $0x58] sm:$0xf]
    %v10425 = vld [vmem:[%s10401 + $0x5c] sm:$0xf]
    %v10426 = vld [vmem:[%s10401 + $0x60] sm:$0xf]
    %v10427 = vld [vmem:[%s10401 + $0x64] sm:$0xf]
    %v10428 = vld [vmem:[%s10401 + $0x68] sm:$0xf]
    %v10429 = vld [vmem:[%s10401 + $0x6c] sm:$0xf]
    %v10430 = vld [vmem:[%s10401 + $0x70] sm:$0xf]
    %v10431 = vld [vmem:[%s10401 + $0x74] sm:$0xf]
    %v10432 = vld [vmem:[%s10401 + $0x78] sm:$0xf]
    %v10433 = vld [vmem:[%s10401 + $0x7c] sm:$0xf]
    %v10466 = vunpack.c.l.b16 %v10402
    %v10467 = vunpack.c.l.b16 %v10403
    %v10468 = vunpack.c.l.b16 %v10404
    %v10469 = vunpack.c.l.b16 %v10405
    %v10470 = vunpack.c.l.b16 %v10406
    %v10471 = vunpack.c.l.b16 %v10407
    %v10472 = vunpack.c.l.b16 %v10408
    %v10473 = vunpack.c.l.b16 %v10409
    %v10474 = vunpack.c.l.b16 %v10410
    %v10475 = vunpack.c.l.b16 %v10411
    %v10476 = vunpack.c.l.b16 %v10412
    %v10477 = vunpack.c.l.b16 %v10413
    %v10478 = vunpack.c.l.b16 %v10414
    %v10479 = vunpack.c.l.b16 %v10415
    %v10480 = vunpack.c.l.b16 %v10416
    %v10481 = vunpack.c.l.b16 %v10417
    %v10482 = vunpack.c.l.b16 %v10418
    %v10483 = vunpack.c.l.b16 %v10419
    %v10484 = vunpack.c.l.b16 %v10420
    %v10485 = vunpack.c.l.b16 %v10421
    %v10486 = vunpack.c.l.b16 %v10422
    %v10487 = vunpack.c.l.b16 %v10423
    %v10488 = vunpack.c.l.b16 %v10424
    %v10489 = vunpack.c.l.b16 %v10425
    %v10490 = vunpack.c.l.b16 %v10426
    %v10491 = vunpack.c.l.b16 %v10427
    %v10492 = vunpack.c.l.b16 %v10428
    %v10493 = vunpack.c.l.b16 %v10429
    %v10494 = vunpack.c.l.b16 %v10430
    %v10495 = vunpack.c.l.b16 %v10431
    %v10496 = vunpack.c.l.b16 %v10432
    %v10497 = vunpack.c.l.b16 %v10433
    %v10498 = vpack.c.b16 %v10467, %v10466
    %v10499 = vpack.c.b16 %v10469, %v10468
    %v10500 = vpack.c.b16 %v10471, %v10470
    %v10501 = vpack.c.b16 %v10473, %v10472
    %v10502 = vpack.c.b16 %v10475, %v10474
    %v10503 = vpack.c.b16 %v10477, %v10476
    %v10504 = vpack.c.b16 %v10479, %v10478
    %v10505 = vpack.c.b16 %v10481, %v10480
    %v10506 = vpack.c.b16 %v10483, %v10482
    %v10507 = vpack.c.b16 %v10485, %v10484
    %v10508 = vpack.c.b16 %v10487, %v10486
    %v10509 = vpack.c.b16 %v10489, %v10488
    %v10510 = vpack.c.b16 %v10491, %v10490
    %v10511 = vpack.c.b16 %v10493, %v10492
    %v10512 = vpack.c.b16 %v10495, %v10494
    %v10513 = vpack.c.b16 %v10497, %v10496
    %10530 = vmatprep.subr.bf16.mxu0 0
    %10531 = vmatpush1.bf16.msra.mxu0 %v10505
    %10532 = vmatprep.subr.bf16.mxu0 0
    %10533 = vmatpush1.bf16.msra.mxu0 %v10504
    %10534 = vmatprep.subr.bf16.mxu0 0
    %10535 = vmatpush1.bf16.msra.mxu0 %v10503
    %10536 = vmatprep.subr.bf16.mxu0 0
    %10537 = vmatpush1.bf16.msra.mxu0 %v10502
    %10538 = vmatprep.subr.bf16.mxu0 0
    %10539 = vmatpush1.bf16.msra.mxu0 %v10501
    %10540 = vmatprep.subr.bf16.mxu0 0
    %10541 = vmatpush1.bf16.msra.mxu0 %v10500
    %10542 = vmatprep.subr.bf16.mxu0 0
    %10543 = vmatpush1.bf16.msra.mxu0 %v10499
    %10544 = vmatprep.subr.bf16.mxu0 0
    %10545 = vmatpush1.bf16.msra.mxu0 %v10498
    %10546 = vmatprep.subr.bf16.mxu0 0
    %10547 = vmatpush2.bf16.msra.mxu0 %v10513
    %10548 = vmatprep.subr.bf16.mxu0 0
    %10549 = vmatpush2.bf16.msra.mxu0 %v10512
    %10550 = vmatprep.subr.bf16.mxu0 0
    %10551 = vmatpush2.bf16.msra.mxu0 %v10511
    %10552 = vmatprep.subr.bf16.mxu0 0
    %10553 = vmatpush2.bf16.msra.mxu0 %v10510
    %10554 = vmatprep.subr.bf16.mxu0 0
    %10555 = vmatpush2.bf16.msra.mxu0 %v10509
    %10556 = vmatprep.subr.bf16.mxu0 0
    %10557 = vmatpush2.bf16.msra.mxu0 %v10508
    %10558 = vmatprep.subr.bf16.mxu0 0
    %10559 = vmatpush2.bf16.msra.mxu0 %v10507
    %10560 = vmatprep.subr.bf16.mxu0 0
    %10561 = vmatpush2.bf16.msra.mxu0 %v10506
    %10562 = vmatprep.mubr.bf16.mxu0 %v10399
    %10563 = vmatmul.mubr.bf16.gmra.mxu0 %v10395
    %v10564 = vpop.f32.mrf.mxu0
    %v10565 = vadd.f32 0.0, %v10564
    %v10566 = vpop.f32.mrf.mxu0
    %v10567 = vpop.f32.mrf.mxu0
    %v10568 = vpop.f32.mrf.mxu0
    %10569 = vdwg.mxu0
    %v10602 = vunpack.c.l.b16 %v10345
    %v10603 = vunpack.c.l.b16 %v10346
    %v10604 = vunpack.c.l.b16 %v10347
    %v10605 = vunpack.c.l.b16 %v10348
    %v10606 = vunpack.c.l.b16 %v10349
    %v10607 = vunpack.c.l.b16 %v10350
    %v10608 = vunpack.c.l.b16 %v10351
    %v10609 = vunpack.c.l.b16 %v10352
    %v10610 = vunpack.c.l.b16 %v10353
    %v10611 = vunpack.c.l.b16 %v10354
    %v10612 = vunpack.c.l.b16 %v10355
    %v10613 = vunpack.c.l.b16 %v10356
    %v10614 = vunpack.c.l.b16 %v10357
    %v10615 = vunpack.c.l.b16 %v10358
    %v10616 = vunpack.c.l.b16 %v10359
    %v10617 = vunpack.c.l.b16 %v10360
    %v10618 = vunpack.c.l.b16 %v10361
    %v10619 = vunpack.c.l.b16 %v10362
    %v10620 = vunpack.c.l.b16 %v10363
    %v10621 = vunpack.c.l.b16 %v10364
    %v10622 = vunpack.c.l.b16 %v10365
    %v10623 = vunpack.c.l.b16 %v10366
    %v10624 = vunpack.c.l.b16 %v10367
    %v10625 = vunpack.c.l.b16 %v10368
    %v10626 = vunpack.c.l.b16 %v10369
    %v10627 = vunpack.c.l.b16 %v10370
    %v10628 = vunpack.c.l.b16 %v10371
    %v10629 = vunpack.c.l.b16 %v10372
    %v10630 = vunpack.c.l.b16 %v10373
    %v10631 = vunpack.c.l.b16 %v10374
    %v10632 = vunpack.c.l.b16 %v10375
    %v10633 = vunpack.c.l.b16 %v10376
    %v10634 = vpack.c.b16 %v10603, %v10602
    %v10635 = vpack.c.b16 %v10605, %v10604
    %v10636 = vpack.c.b16 %v10607, %v10606
    %v10637 = vpack.c.b16 %v10609, %v10608
    %v10638 = vpack.c.b16 %v10611, %v10610
    %v10639 = vpack.c.b16 %v10613, %v10612
    %v10640 = vpack.c.b16 %v10615, %v10614
    %v10641 = vpack.c.b16 %v10617, %v10616
    %v10642 = vpack.c.b16 %v10619, %v10618
    %v10643 = vpack.c.b16 %v10621, %v10620
    %v10644 = vpack.c.b16 %v10623, %v10622
    %v10645 = vpack.c.b16 %v10625, %v10624
    %v10646 = vpack.c.b16 %v10627, %v10626
    %v10647 = vpack.c.b16 %v10629, %v10628
    %v10648 = vpack.c.b16 %v10631, %v10630
    %v10649 = vpack.c.b16 %v10633, %v10632
    %10666 = vmatprep.subr.bf16.mxu0 0
    %10667 = vmatpush1.bf16.msra.mxu0 %v10641
    %10668 = vmatprep.subr.bf16.mxu0 0
    %10669 = vmatpush1.bf16.msra.mxu0 %v10640
    %10670 = vmatprep.subr.bf16.mxu0 0
    %10671 = vmatpush1.bf16.msra.mxu0 %v10639
    %10672 = vmatprep.subr.bf16.mxu0 0
    %10673 = vmatpush1.bf16.msra.mxu0 %v10638
    %10674 = vmatprep.subr.bf16.mxu0 0
    %10675 = vmatpush1.bf16.msra.mxu0 %v10637
    %10676 = vmatprep.subr.bf16.mxu0 0
    %10677 = vmatpush1.bf16.msra.mxu0 %v10636
    %10678 = vmatprep.subr.bf16.mxu0 0
    %10679 = vmatpush1.bf16.msra.mxu0 %v10635
    %10680 = vmatprep.subr.bf16.mxu0 0
    %10681 = vmatpush1.bf16.msra.mxu0 %v10634
    %10682 = vmatprep.subr.bf16.mxu0 0
    %10683 = vmatpush2.bf16.msra.mxu0 %v10649
    %10684 = vmatprep.subr.bf16.mxu0 0
    %10685 = vmatpush2.bf16.msra.mxu0 %v10648
    %10686 = vmatprep.subr.bf16.mxu0 0
    %10687 = vmatpush2.bf16.msra.mxu0 %v10647
    %10688 = vmatprep.subr.bf16.mxu0 0
    %10689 = vmatpush2.bf16.msra.mxu0 %v10646
    %10690 = vmatprep.subr.bf16.mxu0 0
    %10691 = vmatpush2.bf16.msra.mxu0 %v10645
    %10692 = vmatprep.subr.bf16.mxu0 0
    %10693 = vmatpush2.bf16.msra.mxu0 %v10644
    %10694 = vmatprep.subr.bf16.mxu0 0
    %10695 = vmatpush2.bf16.msra.mxu0 %v10643
    %10696 = vmatprep.subr.bf16.mxu0 0
    %10697 = vmatpush2.bf16.msra.mxu0 %v10642
    %10698 = vmatprep.mubr.bf16.mxu0 %v10342
    %10699 = vmatmul.mubr.bf16.gmra.mxu0 %v10338
    %v10700 = vpop.f32.mrf.mxu0
    %v10701 = vadd.f32 %v10565, %v10700
    %v10702 = vpop.f32.mrf.mxu0
    %v10703 = vpop.f32.mrf.mxu0
    %v10704 = vpop.f32.mrf.mxu0
    %10705 = vdwg.mxu0
    %v10706 = vld [vmem:[#allocation2 + $0x150] sm:$0x88]
    %v10707 = vld [vmem:[#allocation2 + $0x158] sm:$0x11]
    %v10708 = vld [vmem:[#allocation2 + $0x160] sm:$0x88]
    %v10709 = vld [vmem:[#allocation2 + $0x168] sm:$0x11]
    %v10712 = vunpack.c.l.b16 %v10706
    %v10713 = vunpack.c.h.b16 %v10706
    %v10714 = vunpack.c.l.b16 %v10707
    %v10715 = vunpack.c.h.b16 %v10707
    %v10716 = vpack.c.b16 %v10714, %v10712
    %v10717 = vpack.c.b16 %v10715, %v10713
    %v10719 = vshrl.u32 %v10716, 16
    %v10721 = vrot.slane %v10719, 3
    %v10722 = vshll.u32 %v10716, 16
    %v10724 = vrot.slane %v10722, 4
    %v10725 = vor.u32 %v10721, %v10724
    %v10727 = vshrl.u32 %v10717, 16
    %v10729 = vrot.slane %v10727, 3
    %v10730 = vshll.u32 %v10717, 16
    %v10732 = vrot.slane %v10730, 4
    %v10733 = vor.u32 %v10729, %v10732
    %v10736 = vunpack.c.l.b16 %v10708
    %v10737 = vunpack.c.h.b16 %v10708
    %v10738 = vunpack.c.l.b16 %v10709
    %v10739 = vunpack.c.h.b16 %v10709
    %v10740 = vpack.c.b16 %v10738, %v10736
    %v10741 = vpack.c.b16 %v10739, %v10737
    %v10743 = vshrl.u32 %v10740, 16
    %v10745 = vrot.slane %v10743, 2
    %v10746 = vshll.u32 %v10740, 16
    %v10748 = vrot.slane %v10746, 3
    %v10749 = vor.u32 %v10745, %v10748
    %v10751 = vshrl.u32 %v10741, 16
    %v10753 = vrot.slane %v10751, 2
    %v10754 = vshll.u32 %v10741, 16
    %v10756 = vrot.slane %v10754, 3
    %v10757 = vor.u32 %v10753, %v10756
    %v10760 = vsel %vm10335, %v10725, %v10749
    %v10764 = vsel %vm10335, %v10733, %v10757
    %s10766 = scalar_lea.vmem [#allocation6], 4096
    %v10767 = vld [vmem:[%s10766] sm:$0xf]
    %v10768 = vld [vmem:[%s10766 + $0x4] sm:$0xf]
    %v10769 = vld [vmem:[%s10766 + $0x8] sm:$0xf]
    %v10770 = vld [vmem:[%s10766 + $0xc] sm:$0xf]
    %v10771 = vld [vmem:[%s10766 + $0x10] sm:$0xf]
    %v10772 = vld [vmem:[%s10766 + $0x14] sm:$0xf]
    %v10773 = vld [vmem:[%s10766 + $0x18] sm:$0xf]
    %v10774 = vld [vmem:[%s10766 + $0x1c] sm:$0xf]
    %v10775 = vld [vmem:[%s10766 + $0x20] sm:$0xf]
    %v10776 = vld [vmem:[%s10766 + $0x24] sm:$0xf]
    %v10777 = vld [vmem:[%s10766 + $0x28] sm:$0xf]
    %v10778 = vld [vmem:[%s10766 + $0x2c] sm:$0xf]
    %v10779 = vld [vmem:[%s10766 + $0x30] sm:$0xf]
    %v10780 = vld [vmem:[%s10766 + $0x34] sm:$0xf]
    %v10781 = vld [vmem:[%s10766 + $0x38] sm:$0xf]
    %v10782 = vld [vmem:[%s10766 + $0x3c] sm:$0xf]
    %v10783 = vld [vmem:[%s10766 + $0x40] sm:$0xf]
    %v10784 = vld [vmem:[%s10766 + $0x44] sm:$0xf]
    %v10785 = vld [vmem:[%s10766 + $0x48] sm:$0xf]
    %v10786 = vld [vmem:[%s10766 + $0x4c] sm:$0xf]
    %v10787 = vld [vmem:[%s10766 + $0x50] sm:$0xf]
    %v10788 = vld [vmem:[%s10766 + $0x54] sm:$0xf]
    %v10789 = vld [vmem:[%s10766 + $0x58] sm:$0xf]
    %v10790 = vld [vmem:[%s10766 + $0x5c] sm:$0xf]
    %v10791 = vld [vmem:[%s10766 + $0x60] sm:$0xf]
    %v10792 = vld [vmem:[%s10766 + $0x64] sm:$0xf]
    %v10793 = vld [vmem:[%s10766 + $0x68] sm:$0xf]
    %v10794 = vld [vmem:[%s10766 + $0x6c] sm:$0xf]
    %v10795 = vld [vmem:[%s10766 + $0x70] sm:$0xf]
    %v10796 = vld [vmem:[%s10766 + $0x74] sm:$0xf]
    %v10797 = vld [vmem:[%s10766 + $0x78] sm:$0xf]
    %v10798 = vld [vmem:[%s10766 + $0x7c] sm:$0xf]
    %v10831 = vunpack.c.l.b16 %v10767
    %v10832 = vunpack.c.l.b16 %v10768
    %v10833 = vunpack.c.l.b16 %v10769
    %v10834 = vunpack.c.l.b16 %v10770
    %v10835 = vunpack.c.l.b16 %v10771
    %v10836 = vunpack.c.l.b16 %v10772
    %v10837 = vunpack.c.l.b16 %v10773
    %v10838 = vunpack.c.l.b16 %v10774
    %v10839 = vunpack.c.l.b16 %v10775
    %v10840 = vunpack.c.l.b16 %v10776
    %v10841 = vunpack.c.l.b16 %v10777
    %v10842 = vunpack.c.l.b16 %v10778
    %v10843 = vunpack.c.l.b16 %v10779
    %v10844 = vunpack.c.l.b16 %v10780
    %v10845 = vunpack.c.l.b16 %v10781
    %v10846 = vunpack.c.l.b16 %v10782
    %v10847 = vunpack.c.l.b16 %v10783
    %v10848 = vunpack.c.l.b16 %v10784
    %v10849 = vunpack.c.l.b16 %v10785
    %v10850 = vunpack.c.l.b16 %v10786
    %v10851 = vunpack.c.l.b16 %v10787
    %v10852 = vunpack.c.l.b16 %v10788
    %v10853 = vunpack.c.l.b16 %v10789
    %v10854 = vunpack.c.l.b16 %v10790
    %v10855 = vunpack.c.l.b16 %v10791
    %v10856 = vunpack.c.l.b16 %v10792
    %v10857 = vunpack.c.l.b16 %v10793
    %v10858 = vunpack.c.l.b16 %v10794
    %v10859 = vunpack.c.l.b16 %v10795
    %v10860 = vunpack.c.l.b16 %v10796
    %v10861 = vunpack.c.l.b16 %v10797
    %v10862 = vunpack.c.l.b16 %v10798
    %v10863 = vpack.c.b16 %v10832, %v10831
    %v10864 = vpack.c.b16 %v10834, %v10833
    %v10865 = vpack.c.b16 %v10836, %v10835
    %v10866 = vpack.c.b16 %v10838, %v10837
    %v10867 = vpack.c.b16 %v10840, %v10839
    %v10868 = vpack.c.b16 %v10842, %v10841
    %v10869 = vpack.c.b16 %v10844, %v10843
    %v10870 = vpack.c.b16 %v10846, %v10845
    %v10871 = vpack.c.b16 %v10848, %v10847
    %v10872 = vpack.c.b16 %v10850, %v10849
    %v10873 = vpack.c.b16 %v10852, %v10851
    %v10874 = vpack.c.b16 %v10854, %v10853
    %v10875 = vpack.c.b16 %v10856, %v10855
    %v10876 = vpack.c.b16 %v10858, %v10857
    %v10877 = vpack.c.b16 %v10860, %v10859
    %v10878 = vpack.c.b16 %v10862, %v10861
    %10895 = vmatprep.subr.bf16.mxu0 0
    %10896 = vmatpush1.bf16.msra.mxu0 %v10870
    %10897 = vmatprep.subr.bf16.mxu0 0
    %10898 = vmatpush1.bf16.msra.mxu0 %v10869
    %10899 = vmatprep.subr.bf16.mxu0 0
    %10900 = vmatpush1.bf16.msra.mxu0 %v10868
    %10901 = vmatprep.subr.bf16.mxu0 0
    %10902 = vmatpush1.bf16.msra.mxu0 %v10867
    %10903 = vmatprep.subr.bf16.mxu0 0
    %10904 = vmatpush1.bf16.msra.mxu0 %v10866
    %10905 = vmatprep.subr.bf16.mxu0 0
    %10906 = vmatpush1.bf16.msra.mxu0 %v10865
    %10907 = vmatprep.subr.bf16.mxu0 0
    %10908 = vmatpush1.bf16.msra.mxu0 %v10864
    %10909 = vmatprep.subr.bf16.mxu0 0
    %10910 = vmatpush1.bf16.msra.mxu0 %v10863
    %10911 = vmatprep.subr.bf16.mxu0 0
    %10912 = vmatpush2.bf16.msra.mxu0 %v10878
    %10913 = vmatprep.subr.bf16.mxu0 0
    %10914 = vmatpush2.bf16.msra.mxu0 %v10877
    %10915 = vmatprep.subr.bf16.mxu0 0
    %10916 = vmatpush2.bf16.msra.mxu0 %v10876
    %10917 = vmatprep.subr.bf16.mxu0 0
    %10918 = vmatpush2.bf16.msra.mxu0 %v10875
    %10919 = vmatprep.subr.bf16.mxu0 0
    %10920 = vmatpush2.bf16.msra.mxu0 %v10874
    %10921 = vmatprep.subr.bf16.mxu0 0
    %10922 = vmatpush2.bf16.msra.mxu0 %v10873
    %10923 = vmatprep.subr.bf16.mxu0 0
    %10924 = vmatpush2.bf16.msra.mxu0 %v10872
    %10925 = vmatprep.subr.bf16.mxu0 0
    %10926 = vmatpush2.bf16.msra.mxu0 %v10871
    %10927 = vmatprep.mubr.bf16.mxu0 %v10764
    %10928 = vmatmul.mubr.bf16.gmra.mxu0 %v10760
    %v10929 = vpop.f32.mrf.mxu0
    %v10930 = vadd.f32 0.0, %v10929
    %v10931 = vpop.f32.mrf.mxu0
    %v10932 = vpop.f32.mrf.mxu0
    %v10933 = vpop.f32.mrf.mxu0
    %10934 = vdwg.mxu0
    %v10935 = vadd.f32 %v10701, %v10930
    %v10936 = vpack.c.b16 %v10714, %v10714
    %v10937 = vpack.c.b16 %v10715, %v10715
    %v10938 = vpack.c.b16 %v10738, %v10738
    %v10939 = vpack.c.b16 %v10739, %v10739
    %v10940 = vrot.slane %v10938, 7
    %v10941 = vrot.slane %v10939, 7
    %v10944 = vsel %vm10335, %v10936, %v10940
    %v10948 = vsel %vm10335, %v10937, %v10941
    %s10950 = scalar_lea.vmem [#allocation6], 4224
    %v10951 = vld [vmem:[%s10950] sm:$0xf]
    %v10952 = vld [vmem:[%s10950 + $0x4] sm:$0xf]
    %v10953 = vld [vmem:[%s10950 + $0x8] sm:$0xf]
    %v10954 = vld [vmem:[%s10950 + $0xc] sm:$0xf]
    %v10955 = vld [vmem:[%s10950 + $0x10] sm:$0xf]
    %v10956 = vld [vmem:[%s10950 + $0x14] sm:$0xf]
    %v10957 = vld [vmem:[%s10950 + $0x18] sm:$0xf]
    %v10958 = vld [vmem:[%s10950 + $0x1c] sm:$0xf]
    %v10959 = vld [vmem:[%s10950 + $0x20] sm:$0xf]
    %v10960 = vld [vmem:[%s10950 + $0x24] sm:$0xf]
    %v10961 = vld [vmem:[%s10950 + $0x28] sm:$0xf]
    %v10962 = vld [vmem:[%s10950 + $0x2c] sm:$0xf]
    %v10963 = vld [vmem:[%s10950 + $0x30] sm:$0xf]
    %v10964 = vld [vmem:[%s10950 + $0x34] sm:$0xf]
    %v10965 = vld [vmem:[%s10950 + $0x38] sm:$0xf]
    %v10966 = vld [vmem:[%s10950 + $0x3c] sm:$0xf]
    %v10967 = vld [vmem:[%s10950 + $0x40] sm:$0xf]
    %v10968 = vld [vmem:[%s10950 + $0x44] sm:$0xf]
    %v10969 = vld [vmem:[%s10950 + $0x48] sm:$0xf]
    %v10970 = vld [vmem:[%s10950 + $0x4c] sm:$0xf]
    %v10971 = vld [vmem:[%s10950 + $0x50] sm:$0xf]
    %v10972 = vld [vmem:[%s10950 + $0x54] sm:$0xf]
    %v10973 = vld [vmem:[%s10950 + $0x58] sm:$0xf]
    %v10974 = vld [vmem:[%s10950 + $0x5c] sm:$0xf]
    %v10975 = vld [vmem:[%s10950 + $0x60] sm:$0xf]
    %v10976 = vld [vmem:[%s10950 + $0x64] sm:$0xf]
    %v10977 = vld [vmem:[%s10950 + $0x68] sm:$0xf]
    %v10978 = vld [vmem:[%s10950 + $0x6c] sm:$0xf]
    %v10979 = vld [vmem:[%s10950 + $0x70] sm:$0xf]
    %v10980 = vld [vmem:[%s10950 + $0x74] sm:$0xf]
    %v10981 = vld [vmem:[%s10950 + $0x78] sm:$0xf]
    %v10982 = vld [vmem:[%s10950 + $0x7c] sm:$0xf]
    %v11015 = vunpack.c.l.b16 %v10951
    %v11016 = vunpack.c.l.b16 %v10952
    %v11017 = vunpack.c.l.b16 %v10953
    %v11018 = vunpack.c.l.b16 %v10954
    %v11019 = vunpack.c.l.b16 %v10955
    %v11020 = vunpack.c.l.b16 %v10956
    %v11021 = vunpack.c.l.b16 %v10957
    %v11022 = vunpack.c.l.b16 %v10958
    %v11023 = vunpack.c.l.b16 %v10959
    %v11024 = vunpack.c.l.b16 %v10960
    %v11025 = vunpack.c.l.b16 %v10961
    %v11026 = vunpack.c.l.b16 %v10962
    %v11027 = vunpack.c.l.b16 %v10963
    %v11028 = vunpack.c.l.b16 %v10964
    %v11029 = vunpack.c.l.b16 %v10965
    %v11030 = vunpack.c.l.b16 %v10966
    %v11031 = vunpack.c.l.b16 %v10967
    %v11032 = vunpack.c.l.b16 %v10968
    %v11033 = vunpack.c.l.b16 %v10969
    %v11034 = vunpack.c.l.b16 %v10970
    %v11035 = vunpack.c.l.b16 %v10971
    %v11036 = vunpack.c.l.b16 %v10972
    %v11037 = vunpack.c.l.b16 %v10973
    %v11038 = vunpack.c.l.b16 %v10974
    %v11039 = vunpack.c.l.b16 %v10975
    %v11040 = vunpack.c.l.b16 %v10976
    %v11041 = vunpack.c.l.b16 %v10977
    %v11042 = vunpack.c.l.b16 %v10978
    %v11043 = vunpack.c.l.b16 %v10979
    %v11044 = vunpack.c.l.b16 %v10980
    %v11045 = vunpack.c.l.b16 %v10981
    %v11046 = vunpack.c.l.b16 %v10982
    %v11047 = vpack.c.b16 %v11016, %v11015
    %v11048 = vpack.c.b16 %v11018, %v11017
    %v11049 = vpack.c.b16 %v11020, %v11019
    %v11050 = vpack.c.b16 %v11022, %v11021
    %v11051 = vpack.c.b16 %v11024, %v11023
    %v11052 = vpack.c.b16 %v11026, %v11025
    %v11053 = vpack.c.b16 %v11028, %v11027
    %v11054 = vpack.c.b16 %v11030, %v11029
    %v11055 = vpack.c.b16 %v11032, %v11031
    %v11056 = vpack.c.b16 %v11034, %v11033
    %v11057 = vpack.c.b16 %v11036, %v11035
    %v11058 = vpack.c.b16 %v11038, %v11037
    %v11059 = vpack.c.b16 %v11040, %v11039
    %v11060 = vpack.c.b16 %v11042, %v11041
    %v11061 = vpack.c.b16 %v11044, %v11043
    %v11062 = vpack.c.b16 %v11046, %v11045
    %11079 = vmatprep.subr.bf16.mxu0 0
    %11080 = vmatpush1.bf16.msra.mxu0 %v11054
    %11081 = vmatprep.subr.bf16.mxu0 0
    %11082 = vmatpush1.bf16.msra.mxu0 %v11053
    %11083 = vmatprep.subr.bf16.mxu0 0
    %11084 = vmatpush1.bf16.msra.mxu0 %v11052
    %11085 = vmatprep.subr.bf16.mxu0 0
    %11086 = vmatpush1.bf16.msra.mxu0 %v11051
    %11087 = vmatprep.subr.bf16.mxu0 0
    %11088 = vmatpush1.bf16.msra.mxu0 %v11050
    %11089 = vmatprep.subr.bf16.mxu0 0
    %11090 = vmatpush1.bf16.msra.mxu0 %v11049
    %11091 = vmatprep.subr.bf16.mxu0 0
    %11092 = vmatpush1.bf16.msra.mxu0 %v11048
    %11093 = vmatprep.subr.bf16.mxu0 0
    %11094 = vmatpush1.bf16.msra.mxu0 %v11047
    %11095 = vmatprep.subr.bf16.mxu0 0
    %11096 = vmatpush2.bf16.msra.mxu0 %v11062
    %11097 = vmatprep.subr.bf16.mxu0 0
    %11098 = vmatpush2.bf16.msra.mxu0 %v11061
    %11099 = vmatprep.subr.bf16.mxu0 0
    %11100 = vmatpush2.bf16.msra.mxu0 %v11060
    %11101 = vmatprep.subr.bf16.mxu0 0
    %11102 = vmatpush2.bf16.msra.mxu0 %v11059
    %11103 = vmatprep.subr.bf16.mxu0 0
    %11104 = vmatpush2.bf16.msra.mxu0 %v11058
    %11105 = vmatprep.subr.bf16.mxu0 0
    %11106 = vmatpush2.bf16.msra.mxu0 %v11057
    %11107 = vmatprep.subr.bf16.mxu0 0
    %11108 = vmatpush2.bf16.msra.mxu0 %v11056
    %11109 = vmatprep.subr.bf16.mxu0 0
    %11110 = vmatpush2.bf16.msra.mxu0 %v11055
    %11111 = vmatprep.mubr.bf16.mxu0 %v10948
    %11112 = vmatmul.mubr.bf16.gmra.mxu0 %v10944
    %v11113 = vpop.f32.mrf.mxu0
    %v11114 = vadd.f32 0.0, %v11113
    %v11115 = vpop.f32.mrf.mxu0
    %v11116 = vpop.f32.mrf.mxu0
    %v11117 = vpop.f32.mrf.mxu0
    %11118 = vdwg.mxu0
    %v11119 = vadd.f32 %v10935, %v11114
    %v11120 = vld [vmem:[#allocation2 + $0x158] sm:$0x33]
    %v11121 = vld [vmem:[#allocation2 + $0x168] sm:$0x33]
    %v11123 = vunpack.c.l.b16 %v11120
    %v11124 = vunpack.c.h.b16 %v11120
    %v11125 = vpack.c.b16 %v11123, %v11123
    %v11126 = vpack.c.b16 %v11124, %v11124
    %v11128 = vshrl.u32 %v11125, 16
    %v11130 = vshll.u32 %v11125, 16
    %v11132 = vrot.slane %v11130, 1
    %v11133 = vor.u32 %v11128, %v11132
    %v11135 = vshrl.u32 %v11126, 16
    %v11137 = vshll.u32 %v11126, 16
    %v11139 = vrot.slane %v11137, 1
    %v11140 = vor.u32 %v11135, %v11139
    %v11142 = vunpack.c.l.b16 %v11121
    %v11143 = vunpack.c.h.b16 %v11121
    %v11144 = vpack.c.b16 %v11142, %v11142
    %v11145 = vpack.c.b16 %v11143, %v11143
    %v11147 = vshrl.u32 %v11144, 16
    %v11149 = vrot.slane %v11147, 7
    %v11150 = vshll.u32 %v11144, 16
    %v11152 = vor.u32 %v11149, %v11150
    %v11154 = vshrl.u32 %v11145, 16
    %v11156 = vrot.slane %v11154, 7
    %v11157 = vshll.u32 %v11145, 16
    %v11159 = vor.u32 %v11156, %v11157
    %v11162 = vsel %vm10335, %v11133, %v11152
    %v11166 = vsel %vm10335, %v11140, %v11159
    %s11168 = scalar_lea.vmem [#allocation6], 4352
    %v11169 = vld [vmem:[%s11168] sm:$0xf]
    %v11170 = vld [vmem:[%s11168 + $0x4] sm:$0xf]
    %v11171 = vld [vmem:[%s11168 + $0x8] sm:$0xf]
    %v11172 = vld [vmem:[%s11168 + $0xc] sm:$0xf]
    %v11173 = vld [vmem:[%s11168 + $0x10] sm:$0xf]
    %v11174 = vld [vmem:[%s11168 + $0x14] sm:$0xf]
    %v11175 = vld [vmem:[%s11168 + $0x18] sm:$0xf]
    %v11176 = vld [vmem:[%s11168 + $0x1c] sm:$0xf]
    %v11177 = vld [vmem:[%s11168 + $0x20] sm:$0xf]
    %v11178 = vld [vmem:[%s11168 + $0x24] sm:$0xf]
    %v11179 = vld [vmem:[%s11168 + $0x28] sm:$0xf]
    %v11180 = vld [vmem:[%s11168 + $0x2c] sm:$0xf]
    %v11181 = vld [vmem:[%s11168 + $0x30] sm:$0xf]
    %v11182 = vld [vmem:[%s11168 + $0x34] sm:$0xf]
    %v11183 = vld [vmem:[%s11168 + $0x38] sm:$0xf]
    %v11184 = vld [vmem:[%s11168 + $0x3c] sm:$0xf]
    %v11185 = vld [vmem:[%s11168 + $0x40] sm:$0xf]
    %v11186 = vld [vmem:[%s11168 + $0x44] sm:$0xf]
    %v11187 = vld [vmem:[%s11168 + $0x48] sm:$0xf]
    %v11188 = vld [vmem:[%s11168 + $0x4c] sm:$0xf]
    %v11189 = vld [vmem:[%s11168 + $0x50] sm:$0xf]
    %v11190 = vld [vmem:[%s11168 + $0x54] sm:$0xf]
    %v11191 = vld [vmem:[%s11168 + $0x58] sm:$0xf]
    %v11192 = vld [vmem:[%s11168 + $0x5c] sm:$0xf]
    %v11193 = vld [vmem:[%s11168 + $0x60] sm:$0xf]
    %v11194 = vld [vmem:[%s11168 + $0x64] sm:$0xf]
    %v11195 = vld [vmem:[%s11168 + $0x68] sm:$0xf]
    %v11196 = vld [vmem:[%s11168 + $0x6c] sm:$0xf]
    %v11197 = vld [vmem:[%s11168 + $0x70] sm:$0xf]
    %v11198 = vld [vmem:[%s11168 + $0x74] sm:$0xf]
    %v11199 = vld [vmem:[%s11168 + $0x78] sm:$0xf]
    %v11200 = vld [vmem:[%s11168 + $0x7c] sm:$0xf]
    %v11233 = vunpack.c.l.b16 %v11169
    %v11234 = vunpack.c.l.b16 %v11170
    %v11235 = vunpack.c.l.b16 %v11171
    %v11236 = vunpack.c.l.b16 %v11172
    %v11237 = vunpack.c.l.b16 %v11173
    %v11238 = vunpack.c.l.b16 %v11174
    %v11239 = vunpack.c.l.b16 %v11175
    %v11240 = vunpack.c.l.b16 %v11176
    %v11241 = vunpack.c.l.b16 %v11177
    %v11242 = vunpack.c.l.b16 %v11178
    %v11243 = vunpack.c.l.b16 %v11179
    %v11244 = vunpack.c.l.b16 %v11180
    %v11245 = vunpack.c.l.b16 %v11181
    %v11246 = vunpack.c.l.b16 %v11182
    %v11247 = vunpack.c.l.b16 %v11183
    %v11248 = vunpack.c.l.b16 %v11184
    %v11249 = vunpack.c.l.b16 %v11185
    %v11250 = vunpack.c.l.b16 %v11186
    %v11251 = vunpack.c.l.b16 %v11187
    %v11252 = vunpack.c.l.b16 %v11188
    %v11253 = vunpack.c.l.b16 %v11189
    %v11254 = vunpack.c.l.b16 %v11190
    %v11255 = vunpack.c.l.b16 %v11191
    %v11256 = vunpack.c.l.b16 %v11192
    %v11257 = vunpack.c.l.b16 %v11193
    %v11258 = vunpack.c.l.b16 %v11194
    %v11259 = vunpack.c.l.b16 %v11195
    %v11260 = vunpack.c.l.b16 %v11196
    %v11261 = vunpack.c.l.b16 %v11197
    %v11262 = vunpack.c.l.b16 %v11198
    %v11263 = vunpack.c.l.b16 %v11199
    %v11264 = vunpack.c.l.b16 %v11200
    %v11265 = vpack.c.b16 %v11234, %v11233
    %v11266 = vpack.c.b16 %v11236, %v11235
    %v11267 = vpack.c.b16 %v11238, %v11237
    %v11268 = vpack.c.b16 %v11240, %v11239
    %v11269 = vpack.c.b16 %v11242, %v11241
    %v11270 = vpack.c.b16 %v11244, %v11243
    %v11271 = vpack.c.b16 %v11246, %v11245
    %v11272 = vpack.c.b16 %v11248, %v11247
    %v11273 = vpack.c.b16 %v11250, %v11249
    %v11274 = vpack.c.b16 %v11252, %v11251
    %v11275 = vpack.c.b16 %v11254, %v11253
    %v11276 = vpack.c.b16 %v11256, %v11255
    %v11277 = vpack.c.b16 %v11258, %v11257
    %v11278 = vpack.c.b16 %v11260, %v11259
    %v11279 = vpack.c.b16 %v11262, %v11261
    %v11280 = vpack.c.b16 %v11264, %v11263
    %11297 = vmatprep.subr.bf16.mxu0 0
    %11298 = vmatpush1.bf16.msra.mxu0 %v11272
    %11299 = vmatprep.subr.bf16.mxu0 0
    %11300 = vmatpush1.bf16.msra.mxu0 %v11271
    %11301 = vmatprep.subr.bf16.mxu0 0
    %11302 = vmatpush1.bf16.msra.mxu0 %v11270
    %11303 = vmatprep.subr.bf16.mxu0 0
    %11304 = vmatpush1.bf16.msra.mxu0 %v11269
    %11305 = vmatprep.subr.bf16.mxu0 0
    %11306 = vmatpush1.bf16.msra.mxu0 %v11268
    %11307 = vmatprep.subr.bf16.mxu0 0
    %11308 = vmatpush1.bf16.msra.mxu0 %v11267
    %11309 = vmatprep.subr.bf16.mxu0 0
    %11310 = vmatpush1.bf16.msra.mxu0 %v11266
    %11311 = vmatprep.subr.bf16.mxu0 0
    %11312 = vmatpush1.bf16.msra.mxu0 %v11265
    %11313 = vmatprep.subr.bf16.mxu0 0
    %11314 = vmatpush2.bf16.msra.mxu0 %v11280
    %11315 = vmatprep.subr.bf16.mxu0 0
    %11316 = vmatpush2.bf16.msra.mxu0 %v11279
    %11317 = vmatprep.subr.bf16.mxu0 0
    %11318 = vmatpush2.bf16.msra.mxu0 %v11278
    %11319 = vmatprep.subr.bf16.mxu0 0
    %11320 = vmatpush2.bf16.msra.mxu0 %v11277
    %11321 = vmatprep.subr.bf16.mxu0 0
    %11322 = vmatpush2.bf16.msra.mxu0 %v11276
    %11323 = vmatprep.subr.bf16.mxu0 0
    %11324 = vmatpush2.bf16.msra.mxu0 %v11275
    %11325 = vmatprep.subr.bf16.mxu0 0
    %11326 = vmatpush2.bf16.msra.mxu0 %v11274
    %11327 = vmatprep.subr.bf16.mxu0 0
    %11328 = vmatpush2.bf16.msra.mxu0 %v11273
    %11329 = vmatprep.mubr.bf16.mxu0 %v11166
    %11330 = vmatmul.mubr.bf16.gmra.mxu0 %v11162
    %v11331 = vpop.f32.mrf.mxu0
    %v11332 = vadd.f32 0.0, %v11331
    %v11333 = vpop.f32.mrf.mxu0
    %v11334 = vpop.f32.mrf.mxu0
    %v11335 = vpop.f32.mrf.mxu0
    %11336 = vdwg.mxu0
    %v11337 = vadd.f32 %v11119, %v11332
    %v11338 = vld [vmem:[#allocation2 + $0x158] sm:$0x22]
    %v11339 = vld [vmem:[#allocation2 + $0x168] sm:$0x22]
    %v11341 = vunpack.c.l.b16 %v11338
    %v11342 = vunpack.c.h.b16 %v11338
    %v11343 = vpack.c.b16 %v11341, %v11341
    %v11344 = vpack.c.b16 %v11342, %v11342
    %v11345 = vrot.slane %v11343, 1
    %v11346 = vrot.slane %v11344, 1
    %v11348 = vunpack.c.l.b16 %v11339
    %v11349 = vunpack.c.h.b16 %v11339
    %v11350 = vpack.c.b16 %v11348, %v11348
    %v11351 = vpack.c.b16 %v11349, %v11349
    %v11354 = vsel %vm10335, %v11345, %v11350
    %v11358 = vsel %vm10335, %v11346, %v11351
    %s11360 = scalar_lea.vmem [#allocation6], 4480
    %v11361 = vld [vmem:[%s11360] sm:$0xf]
    %v11362 = vld [vmem:[%s11360 + $0x4] sm:$0xf]
    %v11363 = vld [vmem:[%s11360 + $0x8] sm:$0xf]
    %v11364 = vld [vmem:[%s11360 + $0xc] sm:$0xf]
    %v11365 = vld [vmem:[%s11360 + $0x10] sm:$0xf]
    %v11366 = vld [vmem:[%s11360 + $0x14] sm:$0xf]
    %v11367 = vld [vmem:[%s11360 + $0x18] sm:$0xf]
    %v11368 = vld [vmem:[%s11360 + $0x1c] sm:$0xf]
    %v11369 = vld [vmem:[%s11360 + $0x20] sm:$0xf]
    %v11370 = vld [vmem:[%s11360 + $0x24] sm:$0xf]
    %v11371 = vld [vmem:[%s11360 + $0x28] sm:$0xf]
    %v11372 = vld [vmem:[%s11360 + $0x2c] sm:$0xf]
    %v11373 = vld [vmem:[%s11360 + $0x30] sm:$0xf]
    %v11374 = vld [vmem:[%s11360 + $0x34] sm:$0xf]
    %v11375 = vld [vmem:[%s11360 + $0x38] sm:$0xf]
    %v11376 = vld [vmem:[%s11360 + $0x3c] sm:$0xf]
    %v11377 = vld [vmem:[%s11360 + $0x40] sm:$0xf]
    %v11378 = vld [vmem:[%s11360 + $0x44] sm:$0xf]
    %v11379 = vld [vmem:[%s11360 + $0x48] sm:$0xf]
    %v11380 = vld [vmem:[%s11360 + $0x4c] sm:$0xf]
    %v11381 = vld [vmem:[%s11360 + $0x50] sm:$0xf]
    %v11382 = vld [vmem:[%s11360 + $0x54] sm:$0xf]
    %v11383 = vld [vmem:[%s11360 + $0x58] sm:$0xf]
    %v11384 = vld [vmem:[%s11360 + $0x5c] sm:$0xf]
    %v11385 = vld [vmem:[%s11360 + $0x60] sm:$0xf]
    %v11386 = vld [vmem:[%s11360 + $0x64] sm:$0xf]
    %v11387 = vld [vmem:[%s11360 + $0x68] sm:$0xf]
    %v11388 = vld [vmem:[%s11360 + $0x6c] sm:$0xf]
    %v11389 = vld [vmem:[%s11360 + $0x70] sm:$0xf]
    %v11390 = vld [vmem:[%s11360 + $0x74] sm:$0xf]
    %v11391 = vld [vmem:[%s11360 + $0x78] sm:$0xf]
    %v11392 = vld [vmem:[%s11360 + $0x7c] sm:$0xf]
    %v11425 = vunpack.c.l.b16 %v11361
    %v11426 = vunpack.c.l.b16 %v11362
    %v11427 = vunpack.c.l.b16 %v11363
    %v11428 = vunpack.c.l.b16 %v11364
    %v11429 = vunpack.c.l.b16 %v11365
    %v11430 = vunpack.c.l.b16 %v11366
    %v11431 = vunpack.c.l.b16 %v11367
    %v11432 = vunpack.c.l.b16 %v11368
    %v11433 = vunpack.c.l.b16 %v11369
    %v11434 = vunpack.c.l.b16 %v11370
    %v11435 = vunpack.c.l.b16 %v11371
    %v11436 = vunpack.c.l.b16 %v11372
    %v11437 = vunpack.c.l.b16 %v11373
    %v11438 = vunpack.c.l.b16 %v11374
    %v11439 = vunpack.c.l.b16 %v11375
    %v11440 = vunpack.c.l.b16 %v11376
    %v11441 = vunpack.c.l.b16 %v11377
    %v11442 = vunpack.c.l.b16 %v11378
    %v11443 = vunpack.c.l.b16 %v11379
    %v11444 = vunpack.c.l.b16 %v11380
    %v11445 = vunpack.c.l.b16 %v11381
    %v11446 = vunpack.c.l.b16 %v11382
    %v11447 = vunpack.c.l.b16 %v11383
    %v11448 = vunpack.c.l.b16 %v11384
    %v11449 = vunpack.c.l.b16 %v11385
    %v11450 = vunpack.c.l.b16 %v11386
    %v11451 = vunpack.c.l.b16 %v11387
    %v11452 = vunpack.c.l.b16 %v11388
    %v11453 = vunpack.c.l.b16 %v11389
    %v11454 = vunpack.c.l.b16 %v11390
    %v11455 = vunpack.c.l.b16 %v11391
    %v11456 = vunpack.c.l.b16 %v11392
    %v11457 = vpack.c.b16 %v11426, %v11425
    %v11458 = vpack.c.b16 %v11428, %v11427
    %v11459 = vpack.c.b16 %v11430, %v11429
    %v11460 = vpack.c.b16 %v11432, %v11431
    %v11461 = vpack.c.b16 %v11434, %v11433
    %v11462 = vpack.c.b16 %v11436, %v11435
    %v11463 = vpack.c.b16 %v11438, %v11437
    %v11464 = vpack.c.b16 %v11440, %v11439
    %v11465 = vpack.c.b16 %v11442, %v11441
    %v11466 = vpack.c.b16 %v11444, %v11443
    %v11467 = vpack.c.b16 %v11446, %v11445
    %v11468 = vpack.c.b16 %v11448, %v11447
    %v11469 = vpack.c.b16 %v11450, %v11449
    %v11470 = vpack.c.b16 %v11452, %v11451
    %v11471 = vpack.c.b16 %v11454, %v11453
    %v11472 = vpack.c.b16 %v11456, %v11455
    %11489 = vmatprep.subr.bf16.mxu0 0
    %11490 = vmatpush1.bf16.msra.mxu0 %v11464
    %11491 = vmatprep.subr.bf16.mxu0 0
    %11492 = vmatpush1.bf16.msra.mxu0 %v11463
    %11493 = vmatprep.subr.bf16.mxu0 0
    %11494 = vmatpush1.bf16.msra.mxu0 %v11462
    %11495 = vmatprep.subr.bf16.mxu0 0
    %11496 = vmatpush1.bf16.msra.mxu0 %v11461
    %11497 = vmatprep.subr.bf16.mxu0 0
    %11498 = vmatpush1.bf16.msra.mxu0 %v11460
    %11499 = vmatprep.subr.bf16.mxu0 0
    %11500 = vmatpush1.bf16.msra.mxu0 %v11459
    %11501 = vmatprep.subr.bf16.mxu0 0
    %11502 = vmatpush1.bf16.msra.mxu0 %v11458
    %11503 = vmatprep.subr.bf16.mxu0 0
    %11504 = vmatpush1.bf16.msra.mxu0 %v11457
    %11505 = vmatprep.subr.bf16.mxu0 0
    %11506 = vmatpush2.bf16.msra.mxu0 %v11472
    %11507 = vmatprep.subr.bf16.mxu0 0
    %11508 = vmatpush2.bf16.msra.mxu0 %v11471
    %11509 = vmatprep.subr.bf16.mxu0 0
    %11510 = vmatpush2.bf16.msra.mxu0 %v11470
    %11511 = vmatprep.subr.bf16.mxu0 0
    %11512 = vmatpush2.bf16.msra.mxu0 %v11469
    %11513 = vmatprep.subr.bf16.mxu0 0
    %11514 = vmatpush2.bf16.msra.mxu0 %v11468
    %11515 = vmatprep.subr.bf16.mxu0 0
    %11516 = vmatpush2.bf16.msra.mxu0 %v11467
    %11517 = vmatprep.subr.bf16.mxu0 0
    %11518 = vmatpush2.bf16.msra.mxu0 %v11466
    %11519 = vmatprep.subr.bf16.mxu0 0
    %11520 = vmatpush2.bf16.msra.mxu0 %v11465
    %11521 = vmatprep.mubr.bf16.mxu0 %v11358
    %11522 = vmatmul.mubr.bf16.gmra.mxu0 %v11354
    %v11523 = vpop.f32.mrf.mxu0
    %v11524 = vadd.f32 0.0, %v11523
    %v11525 = vpop.f32.mrf.mxu0
    %v11526 = vpop.f32.mrf.mxu0
    %v11527 = vpop.f32.mrf.mxu0
    %11528 = vdwg.mxu0
    %v11529 = vadd.f32 %v11337, %v11524
    %v11530 = vsel %vm7543, %v11529, 0.0
    %v11531 = vrot.slane %v11530, 4
    %v11532 = vadd.f32 %v11530, %v11531
    %v11533 = vrot.slane %v11532, 2
    %v11534 = vadd.f32 %v11532, %v11533
    %v11535 = vrot.slane %v11534, 1
    %v11536 = vadd.f32 %v11534, %v11535
    %v11537 = vmul.f32 %v11529, %v11529
    %v11538 = vsel %vm7543, %v11537, 0.0
    %v11539 = vrot.slane %v11538, 4
    %v11540 = vadd.f32 %v11538, %v11539
    %v11541 = vrot.slane %v11540, 2
    %v11542 = vadd.f32 %v11540, %v11541
    %v11543 = vrot.slane %v11542, 1
    %v11544 = vadd.f32 %v11542, %v11543
    %v11545 = vmul.f32 %v11536, 0.25
    %v11546 = vmul.f32 %v11544, 0.25
    %v11547 = vmul.f32 %v11545, %v11545
    %v11548 = vsub.f32 %v11546, %v11547
    %v11549 = vmax.f32 %v11548, 0.0
    %v11550 = vld [vmem:[#allocation8 + $0x6] sm:$0x1]
    %v11551 = vld [vmem:[#allocation9 + $0x6] sm:$0x1]
    %v11552 = vld [vmem:[#allocation11 + $0x6] sm:$0x1]
    %v11553 = vadd.f32 %v11549, 1e-05
    %v11554 = vrsqrt.pop %v11553
    %v11555 = vmul.f32 %v11550, %v11554
    %v11556 = vmul.f32 %v11545, %v11555
    %v11557 = vsub.f32 %v11551, %v11556
    %v11558 = vlaneseq
    %v11559 = vshrl.u32 %v11558, 7
    %v11560 = vsub.s32 0, %v11559
    %v11561 = vrot.slane %v11555, %v11560
    %v11562 = vmul.f32 %v11529, %v11561
    %v11563 = vlaneseq
    %v11564 = vshrl.u32 %v11563, 7
    %v11565 = vsub.s32 0, %v11564
    %v11566 = vrot.slane %v11557, %v11565
    %v11567 = vadd.f32 %v11562, %v11566
    %vm11568 = vcmp.gt.f32.partialorder %v11567, 0.0
    %v11569 = vlaneseq
    %v11570 = vshrl.u32 %v11569, 7
    %v11571 = vsub.s32 0, %v11570
    %v11572 = vrot.slane %v11552, %v11571
    %v11573 = vmul.f32 %v11572, %v11567
    %v11574 = vsel %vm11568, %v11567, %v11573
    %v11575 = vld [vmem:[#allocation12] sm:$0x3]
    %v11576 = vld [vmem:[#allocation3] sm:$0x1]
    %v11577 = vmul.f32 %v11574, %v11575
    %v11578 = vsel %vm8951, %v11577, 0.0
    %11579 = vadd.xlane.f32.xlu0 %v11578
    %v11580 = vpop.xlane.xlu0 %11579
    %v11581 = vrot.slane %v11580, 4
    %v11582 = vadd.f32 %v11580, %v11581
    %v11583 = vrot.slane %v11582, 2
    %v11584 = vadd.f32 %v11582, %v11583
    %v11585 = vrot.slane %v11584, 1
    %v11586 = vadd.f32 %v11584, %v11585
    %s11587 = vtos %v11586
    %v11588 = vstv %s11587
    %v11590 = vrot.slane %v11575, 6
    %v11592 = vmul.f32 %v11574, %v11590
    %v11594 = vrot.slane %v11592, 2
    %v11596 = vsel %vm8951, %v11594, 0.0
    %11597 = vadd.xlane.f32.xlu0 %v11596
    %v11598 = vpop.xlane.xlu0 %11597
    %v11599 = vrot.slane %v11598, 4
    %v11600 = vadd.f32 %v11598, %v11599
    %v11601 = vrot.slane %v11600, 2
    %v11602 = vadd.f32 %v11600, %v11601
    %v11603 = vrot.slane %v11602, 1
    %v11604 = vadd.f32 %v11602, %v11603
    %s11605 = vtos %v11604
    %v11606 = vstv %s11605
    %v11607 = vsel %vm10335, %v11588, %v11606
    %v11609 = vlaneseq
    %v11610 = vshrl.u32 %v11609, 7
    %v11611 = vsub.s32 0, %v11610
    %v11612 = vrot.slane %v11576, %v11611
    %v11614 = vadd.f32 %v11607, %v11612
    %vm11615 = vcmask 1024
    %11616 = vst.msk [vmem:[%s10] sm:$0x3] %vm11615, %v11614
    // Predicated region
    $region66: #{time_discriminator_forward.1} parent=1 // pred_check
      _
    $region67: #{time_discriminator_forward.1} parent=1 // pred_check_branch
      %11618 = sbr.rel (0) target = $region69
    $region68: #{time_discriminator_forward.1} parent=1 // pred_region
      _
    $region69: #{time_discriminator_forward.1} parent=1 // pred_fallthru
      _
    // Predicated region
    $region70: #{time_discriminator_forward.1} parent=1 // pred_check
      _
    $region71: #{time_discriminator_forward.1} parent=1 // pred_check_branch
      %11620 = sbr.rel (0) target = $region73
    $region72: #{time_discriminator_forward.1} parent=1 // pred_region
      _
    $region73: #{time_discriminator_forward.1} parent=1 // pred_fallthru
      _
    %11621 = vsyncpa [#allocation5], 1
    %11622 = vsyncpa [#allocation7], 1
    %11623 = vsyncpa [#allocation10], 1
    %11624 = vsyncpa [#allocation13], 1

</llo_original>
